<compile_context>
chip_gen: v7x
topology: tpu7x:2x2x1
jax: 0.10.0
libtpu: 0.0.40
codegen_flags: <defaults>
</compile_context>

<pallas_src>
import numpy as np
import jax
import jax.numpy as jnp
from jax import lax
from jax.experimental import pallas as pl
from jax.experimental.pallas import tpu as pltpu

# Set to jnp.bfloat16 on v5e/v6e/v7x to hit native MXU rate (accumulation stays f32 via
# preferred_element_type); re-validate tolerance (~1e-2) if enabled.  Default keeps exact f32.
MXU_DTYPE = jnp.float32


# ----------------------------------------------------------------------------
# Fused Pallas kernel
# ----------------------------------------------------------------------------
def _make_fused_kernel(N, C1, C2, Cmid, Cout, H1, W1, H2, W2, H2u, W2u,
                       pad_t, pad_b, pad_l, pad_r):
    Cin = C1 + C2
    Hp, Wp = H2 + 2, W2 + 2
    R = N * H2 * W2
    HW = H2 * W2

    def kernel(x1_ref, k_ref, x2_ref, w1_ref, b1_ref, w2t_ref, b2t_ref,
               out_ref, xpad_ref, midpad_ref):
        f32 = jnp.float32

        # ---- zero only the 1-pixel border ring of both padded scratch buffers ----
        for ref, c in ((xpad_ref, Cin), (midpad_ref, Cmid)):
            ref[:, 0:1, :, :] = jnp.zeros((N, 1, Wp, c), f32)
            ref[:, Hp - 1:Hp, :, :] = jnp.zeros((N, 1, Wp, c), f32)
            ref[:, :, 0:1, :] = jnp.zeros((N, Hp, 1, c), f32)
            ref[:, :, Wp - 1:Wp, :] = jnp.zeros((N, Hp, 1, c), f32)

        # ---- bilinear x2 upsample (matmul with precomputed operator) + concat with x2 ----
        if pad_t == 0 and pad_b == 0 and pad_l == 0 and pad_r == 0:
            # Even-size fast path: upsampled map exactly matches x2 spatial size.
            for n in range(N):
                up_n = jnp.dot(k_ref[...].astype(MXU_DTYPE),
                               x1_ref[n].astype(MXU_DTYPE),
                               preferred_element_type=f32)              # (H2u*W2u, C1)
                xin_n = jnp.concatenate(
                    [x2_ref[n], up_n.reshape(H2u, W2u, C1)], axis=-1)   # (H2, W2, Cin)
                xpad_ref[n, 1:1 + H2, 1:1 + W2, :] = xin_n
        else:
            # General odd-size path (diffY/diffX zero padding of the upsampled map).
            xpad_ref[:, 1:1 + H2, 1:1 + W2, 0:C2] = x2_ref[...]
            xpad_ref[:, 1:1 + H2, 1:1 + W2, C2:Cin] = jnp.zeros((N, H2, W2, C1), f32)
            for n in range(N):
                up_n = jnp.dot(k_ref[...].astype(MXU_DTYPE),
                               x1_ref[n].astype(MXU_DTYPE),
                               preferred_element_type=f32)
                xpad_ref[n, 1 + pad_t:1 + pad_t + H2u,
                         1 + pad_l:1 + pad_l + W2u, C2:Cin] = up_n.reshape(H2u, W2u, C1)

        # ---- conv1 (3x3, pad=1): one im2col gather + a single wide-K MXU matmul ----
        cols = [xpad_ref[:, ky:ky + H2, kx:kx + W2, :]
                for ky in range(3) for kx in range(3)]
        patches = jnp.concatenate(cols, axis=-1).reshape(R, 9 * Cin)     # (R, 9*Cin)
        h1 = jnp.dot(patches.astype(MXU_DTYPE), w1_ref[...].astype(MXU_DTYPE),
                     preferred_element_type=f32)                         # (R, Cmid)
        h1 = jnp.maximum(h1 + b1_ref[...], 0.0)   # BN folded into weights; bias + ReLU
        # Dropout(0.1) is identity in eval mode.
        midpad_ref[:, 1:1 + H2, 1:1 + W2, :] = h1.reshape(N, H2, W2, Cmid)

        # ---- conv2 (3x3, pad=1), "NT" form -> channel-major result, lane-dense store ----
        cols2 = [midpad_ref[:, ky:ky + H2, kx:kx + W2, :]
                 for ky in range(3) for kx in range(3)]
        patches2 = jnp.concatenate(cols2, axis=-1).reshape(R, 9 * Cmid)  # (R, 9*Cmid)
        h2t = lax.dot_general(w2t_ref[...].astype(MXU_DTYPE),
                              patches2.astype(MXU_DTYPE),
                              (((1,), (1,)), ((), ())),
                              preferred_element_type=f32)                # (Cout, R)
        h2t = jnp.maximum(h2t + b2t_ref[...], 0.0)
        # Output is NCHW-flattened: per image a (Cout, H2*W2) slab (256-lane dense store).
        for n in range(N):
            out_ref[n] = h2t[:, n * HW:(n + 1) * HW]

    return kernel


# ----------------------------------------------------------------------------
# Glue / wrapper
# ----------------------------------------------------------------------------
def bilinear_matrix(out_size, in_size):
    """Row-stochastic interpolation matrix, torch Upsample(bilinear, align_corners=True)."""
    A = np.zeros((out_size, in_size), dtype=np.float32)
    if in_size == 1:
        A[:, 0] = 1.0
        return A
    src = np.arange(out_size, dtype=np.float64) * (in_size - 1) / (out_size - 1)
    i0 = np.clip(np.floor(src).astype(np.int64), 0, in_size - 2)
    frac = src - i0
    for o in range(out_size):
        A[o, i0[o]] += 1.0 - frac[o]
        A[o, i0[o] + 1] += frac[o]
    return A


def up_combine_forward(x1_nchw, x2_nchw, params):
    """Full UpCombine forward (bilinear=True). NCHW in / NCHW out, eval-mode semantics."""
    N, C1, H1, W1 = x1_nchw.shape
    N2, C2, H2, W2 = x2_nchw.shape
    assert N == N2
    Cin = C1 + C2
    w1, s1, bias1 = params["w1"], params["s1"], params["bias1"]
    w2, s2, bias2 = params["w2"], params["s2"], params["bias2"]
    Cmid, Cout = w1.shape[-1], w2.shape[-1]

    H2u, W2u = 2 * H1, 2 * W1
    diffY, diffX = H2 - H2u, W2 - W2u
    pad_t, pad_b = diffY // 2, diffY - diffY // 2
    pad_l, pad_r = diffX // 2, diffX - diffX // 2

    # Precomputed align_corners=True bilinear operator; lives in VMEM for the fused kernel.
    Ah = bilinear_matrix(H2u, H1)
    Aw = bilinear_matrix(W2u, W1)
    K = jnp.asarray(np.kron(Ah, Aw))                                    # (H2u*W2u, H1*W1)

    # Channels-last operands (channels -> lane axis).
    x1r = jnp.transpose(x1_nchw, (0, 2, 3, 1)).reshape(N, H1 * W1, C1).astype(jnp.float32)
    x2_nhwc = jnp.transpose(x2_nchw, (0, 2, 3, 1)).astype(jnp.float32)

    # Fold the BatchNorm scale into the HWIO conv weights host-side.
    w1f = (w1 * s1).reshape(9 * Cin, Cmid).astype(jnp.float32)          # (9*Cin, Cmid)
    b1 = bias1.reshape(1, Cmid).astype(jnp.float32)
    w2t = jnp.transpose((w2 * s2).reshape(9 * Cmid, Cout)).astype(jnp.float32)  # (Cout, 9*Cmid)
    b2t = bias2.reshape(Cout, 1).astype(jnp.float32)

    kernel = _make_fused_kernel(N, C1, C2, Cmid, Cout, H1, W1, H2, W2, H2u, W2u,
                                pad_t, pad_b, pad_l, pad_r)
    vmem = pl.BlockSpec(memory_space=pltpu.MemorySpace.VMEM)
    out = pl.pallas_call(
        kernel,
        out_shape=jax.ShapeDtypeStruct((N, Cout, H2 * W2), jnp.float32),
        in_specs=[vmem] * 7,
        out_specs=vmem,
        scratch_shapes=[pltpu.VMEM((N, H2 + 2, W2 + 2, Cin), jnp.float32),
                        pltpu.VMEM((N, H2 + 2, W2 + 2, Cmid), jnp.float32)],
        compiler_params=pltpu.CompilerParams(vmem_limit_bytes=32 * 1024 * 1024),
    )(x1r, K, x2_nhwc, w1f, b1, w2t, b2t)
    return out.reshape(N, Cout, H2, W2)                                 # already NCHW


# ----------------------------------------------------------------------------
# Pure-JAX reference (for correctness check)
# ----------------------------------------------------------------------------
def reference_forward(x1_nchw, x2_nchw, raw, Ah, Aw, eps=1e-5):
    x1_nhwc = jnp.transpose(x1_nchw, (0, 2, 3, 1)).astype(jnp.float32)
    x2_nhwc = jnp.transpose(x2_nchw, (0, 2, 3, 1)).astype(jnp.float32)
    up = jnp.einsum("oh,pw,nhwc->nopc", jnp.asarray(Ah), jnp.asarray(Aw), x1_nhwc)
    diffY = x2_nhwc.shape[1] - up.shape[1]
    diffX = x2_nhwc.shape[2] - up.shape[2]
    up = jnp.pad(up, ((0, 0), (diffY // 2, diffY - diffY // 2),
                      (diffX // 2, diffX - diffX // 2), (0, 0)))
    x = jnp.concatenate([x2_nhwc, up], axis=-1)

    def conv_bn_relu(x, w, cb, gamma, beta, mean, var):
        y = lax.conv_general_dilated(x, w, (1, 1), "SAME",
                                     dimension_numbers=("NHWC", "HWIO", "NHWC"))
        y = y + cb
        y = (y - mean) / jnp.sqrt(var + eps) * gamma + beta
        return jnp.maximum(y, 0.0)

    h = conv_bn_relu(x, raw["w1"], raw["cb1"], raw["g1"], raw["be1"], raw["m1"], raw["v1"])
    h = conv_bn_relu(h, raw["w2"], raw["cb2"], raw["g2"], raw["be2"], raw["m2"], raw["v2"])
    return jnp.transpose(h, (0, 3, 1, 2))


# ----------------------------------------------------------------------------
# Main
# ----------------------------------------------------------------------------
if __name__ == "__main__":
    # UpCombine(in_channels=8, out_channels=4, bilinear=True)
    # x1: (N, 4, 8, 8)   deep feature (upsampled x2)
    # x2: (N, 4, 16, 16) skip connection ; concat -> 8 channels, mid = 8 // 2 = 4
    N, C1, H1, W1 = 2, 4, 8, 8
    C2, H2, W2 = 4, 16, 16
    Cin, Cmid, Cout = C2 + C1, (C2 + C1) // 2, 4
    eps = 1e-5

    key = jax.random.PRNGKey(0)
    ks = jax.random.split(key, 16)
    x1 = jax.random.normal(ks[0], (N, C1, H1, W1), jnp.float32)
    x2 = jax.random.normal(ks[1], (N, C2, H2, W2), jnp.float32)

    # Deterministic synthetic parameters (conv HWIO, BN per-channel).
    raw = dict(
        w1=jax.random.normal(ks[2], (3, 3, Cin, Cmid), jnp.float32) * 0.1,
        cb1=jax.random.normal(ks[3], (Cmid,), jnp.float32) * 0.1,
        g1=1.0 + 0.1 * jax.random.normal(ks[4], (Cmid,), jnp.float32),
        be1=0.1 * jax.random.normal(ks[5], (Cmid,), jnp.float32),
        m1=0.1 * jax.random.normal(ks[6], (Cmid,), jnp.float32),
        v1=jax.random.uniform(ks[7], (Cmid,), jnp.float32, 0.5, 1.5),
        w2=jax.random.normal(ks[8], (3, 3, Cmid, Cout), jnp.float32) * 0.1,
        cb2=jax.random.normal(ks[9], (Cout,), jnp.float32) * 0.1,
        g2=1.0 + 0.1 * jax.random.normal(ks[10], (Cout,), jnp.float32),
        be2=0.1 * jax.random.normal(ks[11], (Cout,), jnp.float32),
        m2=0.1 * jax.random.normal(ks[12], (Cout,), jnp.float32),
        v2=jax.random.uniform(ks[13], (Cout,), jnp.float32, 0.5, 1.5),
    )

    # Fold BatchNorm (eval mode, running stats) + conv bias into per-channel scale/bias.
    s1 = raw["g1"] / jnp.sqrt(raw["v1"] + eps)
    bias1 = (raw["cb1"] - raw["m1"]) * s1 + raw["be1"]
    s2 = raw["g2"] / jnp.sqrt(raw["v2"] + eps)
    bias2 = (raw["cb2"] - raw["m2"]) * s2 + raw["be2"]

    params = dict(w1=raw["w1"], s1=s1, bias1=bias1,
                  w2=raw["w2"], s2=s2, bias2=bias2)

    fwd = jax.jit(up_combine_forward)
    out = jax.block_until_ready(fwd(x1, x2, params))

    Ah = bilinear_matrix(2 * H1, H1)
    Aw = bilinear_matrix(2 * W1, W1)
    ref = jax.block_until_ready(reference_forward(x1, x2, raw, Ah, Aw, eps))
    np.testing.assert_allclose(np.asarray(out), np.asarray(ref), rtol=1e-3, atol=1e-3)

    assert out.shape == (N, Cout, H2, W2)
    print("KERNEL_OK")
</pallas_src>

<mosaic_0001>
module attributes {stable_mosaic.version = 11 : i64} {
  func.func @kernel(%arg0: memref<2x64x4xf32, #tpu.memory_space<vmem>>, %arg1: memref<256x64xf32, #tpu.memory_space<vmem>>, %arg2: memref<2x16x16x4xf32, #tpu.memory_space<vmem>>, %arg3: memref<72x4xf32, #tpu.memory_space<vmem>>, %arg4: memref<1x4xf32, #tpu.memory_space<vmem>>, %arg5: memref<4x36xf32, #tpu.memory_space<vmem>>, %arg6: memref<4x1xf32, #tpu.memory_space<vmem>>, %arg7: memref<2x4x256xf32, #tpu.memory_space<vmem>>, %arg8: memref<2x18x18x8xf32, #tpu.memory_space<vmem>>, %arg9: memref<2x18x18x4xf32, #tpu.memory_space<vmem>>) attributes {dimension_semantics = [], scalar_prefetch = 0 : i64, scratch_operands = 2 : i64, tpu.core_type = #tpu.core_type<tc>} {
    %cst = arith.constant 0.000000e+00 : f32
    %0 = vector.broadcast %cst : f32 to vector<2x1x18x8xf32>
    %c0 = arith.constant 0 : index
    %c0_0 = arith.constant 0 : index
    %c0_1 = arith.constant 0 : index
    %c0_2 = arith.constant 0 : index
    %1 = vector.load %arg8[%c0, %c0_0, %c0_1, %c0_2] : memref<2x18x18x8xf32, #tpu.memory_space<vmem>>, vector<2x1x18x8xf32>
    tpu.vector_store %arg8[%c0, %c0_0, %c0_1, %c0_2], %0 {strides = array<i32>} : memref<2x18x18x8xf32, #tpu.memory_space<vmem>>, vector<2x1x18x8xf32>,
    %cst_3 = arith.constant 0.000000e+00 : f32
    %2 = vector.broadcast %cst_3 : f32 to vector<2x1x18x8xf32>
    %c0_4 = arith.constant 0 : index
    %c17 = arith.constant 17 : index
    %c0_5 = arith.constant 0 : index
    %c0_6 = arith.constant 0 : index
    %3 = vector.load %arg8[%c0_4, %c17, %c0_5, %c0_6] : memref<2x18x18x8xf32, #tpu.memory_space<vmem>>, vector<2x1x18x8xf32>
    tpu.vector_store %arg8[%c0_4, %c17, %c0_5, %c0_6], %2 {strides = array<i32>} : memref<2x18x18x8xf32, #tpu.memory_space<vmem>>, vector<2x1x18x8xf32>,
    %cst_7 = arith.constant 0.000000e+00 : f32
    %4 = vector.broadcast %cst_7 : f32 to vector<2x18x1x8xf32>
    %c0_8 = arith.constant 0 : index
    %c0_9 = arith.constant 0 : index
    %c0_10 = arith.constant 0 : index
    %c0_11 = arith.constant 0 : index
    %5 = vector.load %arg8[%c0_8, %c0_9, %c0_10, %c0_11] : memref<2x18x18x8xf32, #tpu.memory_space<vmem>>, vector<2x18x1x8xf32>
    tpu.vector_store %arg8[%c0_8, %c0_9, %c0_10, %c0_11], %4 {strides = array<i32>} : memref<2x18x18x8xf32, #tpu.memory_space<vmem>>, vector<2x18x1x8xf32>,
    %cst_12 = arith.constant 0.000000e+00 : f32
    %6 = vector.broadcast %cst_12 : f32 to vector<2x18x1x8xf32>
    %c0_13 = arith.constant 0 : index
    %c0_14 = arith.constant 0 : index
    %c17_15 = arith.constant 17 : index
    %c0_16 = arith.constant 0 : index
    %7 = vector.load %arg8[%c0_13, %c0_14, %c17_15, %c0_16] : memref<2x18x18x8xf32, #tpu.memory_space<vmem>>, vector<2x18x1x8xf32>
    tpu.vector_store %arg8[%c0_13, %c0_14, %c17_15, %c0_16], %6 {strides = array<i32>} : memref<2x18x18x8xf32, #tpu.memory_space<vmem>>, vector<2x18x1x8xf32>,
    %cst_17 = arith.constant 0.000000e+00 : f32
    %8 = vector.broadcast %cst_17 : f32 to vector<2x1x18x4xf32>
    %c0_18 = arith.constant 0 : index
    %c0_19 = arith.constant 0 : index
    %c0_20 = arith.constant 0 : index
    %c0_21 = arith.constant 0 : index
    %9 = vector.load %arg9[%c0_18, %c0_19, %c0_20, %c0_21] : memref<2x18x18x4xf32, #tpu.memory_space<vmem>>, vector<2x1x18x4xf32>
    tpu.vector_store %arg9[%c0_18, %c0_19, %c0_20, %c0_21], %8 {strides = array<i32>} : memref<2x18x18x4xf32, #tpu.memory_space<vmem>>, vector<2x1x18x4xf32>,
    %cst_22 = arith.constant 0.000000e+00 : f32
    %10 = vector.broadcast %cst_22 : f32 to vector<2x1x18x4xf32>
    %c0_23 = arith.constant 0 : index
    %c17_24 = arith.constant 17 : index
    %c0_25 = arith.constant 0 : index
    %c0_26 = arith.constant 0 : index
    %11 = vector.load %arg9[%c0_23, %c17_24, %c0_25, %c0_26] : memref<2x18x18x4xf32, #tpu.memory_space<vmem>>, vector<2x1x18x4xf32>
    tpu.vector_store %arg9[%c0_23, %c17_24, %c0_25, %c0_26], %10 {strides = array<i32>} : memref<2x18x18x4xf32, #tpu.memory_space<vmem>>, vector<2x1x18x4xf32>,
    %cst_27 = arith.constant 0.000000e+00 : f32
    %12 = vector.broadcast %cst_27 : f32 to vector<2x18x1x4xf32>
    %c0_28 = arith.constant 0 : index
    %c0_29 = arith.constant 0 : index
    %c0_30 = arith.constant 0 : index
    %c0_31 = arith.constant 0 : index
    %13 = vector.load %arg9[%c0_28, %c0_29, %c0_30, %c0_31] : memref<2x18x18x4xf32, #tpu.memory_space<vmem>>, vector<2x18x1x4xf32>
    tpu.vector_store %arg9[%c0_28, %c0_29, %c0_30, %c0_31], %12 {strides = array<i32>} : memref<2x18x18x4xf32, #tpu.memory_space<vmem>>, vector<2x18x1x4xf32>,
    %cst_32 = arith.constant 0.000000e+00 : f32
    %14 = vector.broadcast %cst_32 : f32 to vector<2x18x1x4xf32>
    %c0_33 = arith.constant 0 : index
    %c0_34 = arith.constant 0 : index
    %c17_35 = arith.constant 17 : index
    %c0_36 = arith.constant 0 : index
    %15 = vector.load %arg9[%c0_33, %c0_34, %c17_35, %c0_36] : memref<2x18x18x4xf32, #tpu.memory_space<vmem>>, vector<2x18x1x4xf32>
    tpu.vector_store %arg9[%c0_33, %c0_34, %c17_35, %c0_36], %14 {strides = array<i32>} : memref<2x18x18x4xf32, #tpu.memory_space<vmem>>, vector<2x18x1x4xf32>,
    %c0_37 = arith.constant 0 : index
    %c0_38 = arith.constant 0 : index
    %16 = vector.load %arg1[%c0_37, %c0_38] : memref<256x64xf32, #tpu.memory_space<vmem>>, vector<256x64xf32>
    %c0_39 = arith.constant 0 : index
    %c0_40 = arith.constant 0 : index
    %c0_41 = arith.constant 0 : index
    %17 = vector.load %arg0[%c0_39, %c0_40, %c0_41] : memref<2x64x4xf32, #tpu.memory_space<vmem>>, vector<1x64x4xf32>
    %18 = vector.shape_cast %17 : vector<1x64x4xf32> to vector<64x4xf32>
    %cst_42 = arith.constant dense<0.000000e+00> : vector<256x4xf32>
    %19 = tpu.matmul %16, %18, %cst_42 {dimension_numbers = #tpu.dot_dimension_numbers<[1], [0], [0], [1], [0, 0, 1, 1], [], []>} : vector<256x64xf32>, vector<64x4xf32>, vector<256x4xf32> -> vector<256x4xf32>
    %c0_43 = arith.constant 0 : index
    %c0_44 = arith.constant 0 : index
    %c0_45 = arith.constant 0 : index
    %c0_46 = arith.constant 0 : index
    %20 = vector.load %arg2[%c0_43, %c0_44, %c0_45, %c0_46] : memref<2x16x16x4xf32, #tpu.memory_space<vmem>>, vector<1x16x16x4xf32>
    %21 = vector.shape_cast %20 : vector<1x16x16x4xf32> to vector<16x16x4xf32>
    %22 = vector.shape_cast %19 : vector<256x4xf32> to vector<16x16x4xf32>
    %23 = tpu.concatenate %21, %22 in 2 : vector<16x16x4xf32>, vector<16x16x4xf32> -> vector<16x16x8xf32>
    %c0_47 = arith.constant 0 : index
    %c1 = arith.constant 1 : index
    %c1_48 = arith.constant 1 : index
    %c0_49 = arith.constant 0 : index
    %24 = vector.load %arg8[%c0_47, %c1, %c1_48, %c0_49] : memref<2x18x18x8xf32, #tpu.memory_space<vmem>>, vector<1x16x16x8xf32>
    %25 = vector.shape_cast %24 : vector<1x16x16x8xf32> to vector<16x16x8xf32>
    %26 = vector.shape_cast %23 : vector<16x16x8xf32> to vector<1x16x16x8xf32>
    tpu.vector_store %arg8[%c0_47, %c1, %c1_48, %c0_49], %26 {strides = array<i32>} : memref<2x18x18x8xf32, #tpu.memory_space<vmem>>, vector<1x16x16x8xf32>,
    %c0_50 = arith.constant 0 : index
    %c0_51 = arith.constant 0 : index
    %27 = vector.load %arg1[%c0_50, %c0_51] : memref<256x64xf32, #tpu.memory_space<vmem>>, vector<256x64xf32>
    %c1_52 = arith.constant 1 : index
    %c0_53 = arith.constant 0 : index
    %c0_54 = arith.constant 0 : index
    %28 = vector.load %arg0[%c1_52, %c0_53, %c0_54] : memref<2x64x4xf32, #tpu.memory_space<vmem>>, vector<1x64x4xf32>
    %29 = vector.shape_cast %28 : vector<1x64x4xf32> to vector<64x4xf32>
    %cst_55 = arith.constant dense<0.000000e+00> : vector<256x4xf32>
    %30 = tpu.matmul %27, %29, %cst_55 {dimension_numbers = #tpu.dot_dimension_numbers<[1], [0], [0], [1], [0, 0, 1, 1], [], []>} : vector<256x64xf32>, vector<64x4xf32>, vector<256x4xf32> -> vector<256x4xf32>
    %c1_56 = arith.constant 1 : index
    %c0_57 = arith.constant 0 : index
    %c0_58 = arith.constant 0 : index
    %c0_59 = arith.constant 0 : index
    %31 = vector.load %arg2[%c1_56, %c0_57, %c0_58, %c0_59] : memref<2x16x16x4xf32, #tpu.memory_space<vmem>>, vector<1x16x16x4xf32>
    %32 = vector.shape_cast %31 : vector<1x16x16x4xf32> to vector<16x16x4xf32>
    %33 = vector.shape_cast %30 : vector<256x4xf32> to vector<16x16x4xf32>
    %34 = tpu.concatenate %32, %33 in 2 : vector<16x16x4xf32>, vector<16x16x4xf32> -> vector<16x16x8xf32>
    %c1_60 = arith.constant 1 : index
    %c1_61 = arith.constant 1 : index
    %c1_62 = arith.constant 1 : index
    %c0_63 = arith.constant 0 : index
    %35 = vector.load %arg8[%c1_60, %c1_61, %c1_62, %c0_63] : memref<2x18x18x8xf32, #tpu.memory_space<vmem>>, vector<1x16x16x8xf32>
    %36 = vector.shape_cast %35 : vector<1x16x16x8xf32> to vector<16x16x8xf32>
    %37 = vector.shape_cast %34 : vector<16x16x8xf32> to vector<1x16x16x8xf32>
    tpu.vector_store %arg8[%c1_60, %c1_61, %c1_62, %c0_63], %37 {strides = array<i32>} : memref<2x18x18x8xf32, #tpu.memory_space<vmem>>, vector<1x16x16x8xf32>,
    %c0_64 = arith.constant 0 : index
    %c0_65 = arith.constant 0 : index
    %c0_66 = arith.constant 0 : index
    %c0_67 = arith.constant 0 : index
    %38 = vector.load %arg8[%c0_64, %c0_65, %c0_66, %c0_67] : memref<2x18x18x8xf32, #tpu.memory_space<vmem>>, vector<2x16x16x8xf32>
    %c0_68 = arith.constant 0 : index
    %c0_69 = arith.constant 0 : index
    %c1_70 = arith.constant 1 : index
    %c0_71 = arith.constant 0 : index
    %39 = vector.load %arg8[%c0_68, %c0_69, %c1_70, %c0_71] : memref<2x18x18x8xf32, #tpu.memory_space<vmem>>, vector<2x16x16x8xf32>
    %c0_72 = arith.constant 0 : index
    %c0_73 = arith.constant 0 : index
    %c2 = arith.constant 2 : index
    %c0_74 = arith.constant 0 : index
    %40 = vector.load %arg8[%c0_72, %c0_73, %c2, %c0_74] : memref<2x18x18x8xf32, #tpu.memory_space<vmem>>, vector<2x16x16x8xf32>
    %c0_75 = arith.constant 0 : index
    %c1_76 = arith.constant 1 : index
    %c0_77 = arith.constant 0 : index
    %c0_78 = arith.constant 0 : index
    %41 = vector.load %arg8[%c0_75, %c1_76, %c0_77, %c0_78] : memref<2x18x18x8xf32, #tpu.memory_space<vmem>>, vector<2x16x16x8xf32>
    %c0_79 = arith.constant 0 : index
    %c1_80 = arith.constant 1 : index
    %c1_81 = arith.constant 1 : index
    %c0_82 = arith.constant 0 : index
    %42 = vector.load %arg8[%c0_79, %c1_80, %c1_81, %c0_82] : memref<2x18x18x8xf32, #tpu.memory_space<vmem>>, vector<2x16x16x8xf32>
    %c0_83 = arith.constant 0 : index
    %c1_84 = arith.constant 1 : index
    %c2_85 = arith.constant 2 : index
    %c0_86 = arith.constant 0 : index
    %43 = vector.load %arg8[%c0_83, %c1_84, %c2_85, %c0_86] : memref<2x18x18x8xf32, #tpu.memory_space<vmem>>, vector<2x16x16x8xf32>
    %c0_87 = arith.constant 0 : index
    %c2_88 = arith.constant 2 : index
    %c0_89 = arith.constant 0 : index
    %c0_90 = arith.constant 0 : index
    %44 = vector.load %arg8[%c0_87, %c2_88, %c0_89, %c0_90] : memref<2x18x18x8xf32, #tpu.memory_space<vmem>>, vector<2x16x16x8xf32>
    %c0_91 = arith.constant 0 : index
    %c2_92 = arith.constant 2 : index
    %c1_93 = arith.constant 1 : index
    %c0_94 = arith.constant 0 : index
    %45 = vector.load %arg8[%c0_91, %c2_92, %c1_93, %c0_94] : memref<2x18x18x8xf32, #tpu.memory_space<vmem>>, vector<2x16x16x8xf32>
    %c0_95 = arith.constant 0 : index
    %c2_96 = arith.constant 2 : index
    %c2_97 = arith.constant 2 : index
    %c0_98 = arith.constant 0 : index
    %46 = vector.load %arg8[%c0_95, %c2_96, %c2_97, %c0_98] : memref<2x18x18x8xf32, #tpu.memory_space<vmem>>, vector<2x16x16x8xf32>
    %47 = tpu.concatenate %38, %39, %40, %41, %42, %43, %44, %45, %46 in 3 : vector<2x16x16x8xf32>, vector<2x16x16x8xf32>, vector<2x16x16x8xf32>, vector<2x16x16x8xf32>, vector<2x16x16x8xf32>, vector<2x16x16x8xf32>, vector<2x16x16x8xf32>, vector<2x16x16x8xf32>, vector<2x16x16x8xf32> -> vector<2x16x16x72xf32>
    %48 = vector.shape_cast %47 : vector<2x16x16x72xf32> to vector<512x72xf32>
    %c0_99 = arith.constant 0 : index
    %c0_100 = arith.constant 0 : index
    %49 = vector.load %arg3[%c0_99, %c0_100] : memref<72x4xf32, #tpu.memory_space<vmem>>, vector<72x4xf32>
    %cst_101 = arith.constant dense<0.000000e+00> : vector<512x4xf32>
    %50 = tpu.matmul %48, %49, %cst_101 {dimension_numbers = #tpu.dot_dimension_numbers<[1], [0], [0], [1], [0, 0, 1, 1], [], []>} : vector<512x72xf32>, vector<72x4xf32>, vector<512x4xf32> -> vector<512x4xf32>
    %c0_102 = arith.constant 0 : index
    %c0_103 = arith.constant 0 : index
    %51 = vector.load %arg4[%c0_102, %c0_103] : memref<1x4xf32, #tpu.memory_space<vmem>>, vector<1x4xf32>
    %52 = vector.broadcast %51 : vector<1x4xf32> to vector<512x4xf32>
    %53 = arith.addf %50, %52 : vector<512x4xf32>
    %cst_104 = arith.constant 0.000000e+00 : f32
    %54 = vector.broadcast %cst_104 : f32 to vector<512x4xf32>
    %55 = arith.maximumf %53, %54 : vector<512x4xf32>
    %56 = vector.shape_cast %55 : vector<512x4xf32> to vector<2x16x16x4xf32>
    %c0_105 = arith.constant 0 : index
    %c1_106 = arith.constant 1 : index
    %c1_107 = arith.constant 1 : index
    %c0_108 = arith.constant 0 : index
    %57 = vector.load %arg9[%c0_105, %c1_106, %c1_107, %c0_108] : memref<2x18x18x4xf32, #tpu.memory_space<vmem>>, vector<2x16x16x4xf32>
    tpu.vector_store %arg9[%c0_105, %c1_106, %c1_107, %c0_108], %56 {strides = array<i32>} : memref<2x18x18x4xf32, #tpu.memory_space<vmem>>, vector<2x16x16x4xf32>,
    %c0_109 = arith.constant 0 : index
    %c0_110 = arith.constant 0 : index
    %c0_111 = arith.constant 0 : index
    %c0_112 = arith.constant 0 : index
    %58 = vector.load %arg9[%c0_109, %c0_110, %c0_111, %c0_112] : memref<2x18x18x4xf32, #tpu.memory_space<vmem>>, vector<2x16x16x4xf32>
    %c0_113 = arith.constant 0 : index
    %c0_114 = arith.constant 0 : index
    %c1_115 = arith.constant 1 : index
    %c0_116 = arith.constant 0 : index
    %59 = vector.load %arg9[%c0_113, %c0_114, %c1_115, %c0_116] : memref<2x18x18x4xf32, #tpu.memory_space<vmem>>, vector<2x16x16x4xf32>
    %c0_117 = arith.constant 0 : index
    %c0_118 = arith.constant 0 : index
    %c2_119 = arith.constant 2 : index
    %c0_120 = arith.constant 0 : index
    %60 = vector.load %arg9[%c0_117, %c0_118, %c2_119, %c0_120] : memref<2x18x18x4xf32, #tpu.memory_space<vmem>>, vector<2x16x16x4xf32>
    %c0_121 = arith.constant 0 : index
    %c1_122 = arith.constant 1 : index
    %c0_123 = arith.constant 0 : index
    %c0_124 = arith.constant 0 : index
    %61 = vector.load %arg9[%c0_121, %c1_122, %c0_123, %c0_124] : memref<2x18x18x4xf32, #tpu.memory_space<vmem>>, vector<2x16x16x4xf32>
    %c0_125 = arith.constant 0 : index
    %c1_126 = arith.constant 1 : index
    %c1_127 = arith.constant 1 : index
    %c0_128 = arith.constant 0 : index
    %62 = vector.load %arg9[%c0_125, %c1_126, %c1_127, %c0_128] : memref<2x18x18x4xf32, #tpu.memory_space<vmem>>, vector<2x16x16x4xf32>
    %c0_129 = arith.constant 0 : index
    %c1_130 = arith.constant 1 : index
    %c2_131 = arith.constant 2 : index
    %c0_132 = arith.constant 0 : index
    %63 = vector.load %arg9[%c0_129, %c1_130, %c2_131, %c0_132] : memref<2x18x18x4xf32, #tpu.memory_space<vmem>>, vector<2x16x16x4xf32>
    %c0_133 = arith.constant 0 : index
    %c2_134 = arith.constant 2 : index
    %c0_135 = arith.constant 0 : index
    %c0_136 = arith.constant 0 : index
    %64 = vector.load %arg9[%c0_133, %c2_134, %c0_135, %c0_136] : memref<2x18x18x4xf32, #tpu.memory_space<vmem>>, vector<2x16x16x4xf32>
    %c0_137 = arith.constant 0 : index
    %c2_138 = arith.constant 2 : index
    %c1_139 = arith.constant 1 : index
    %c0_140 = arith.constant 0 : index
    %65 = vector.load %arg9[%c0_137, %c2_138, %c1_139, %c0_140] : memref<2x18x18x4xf32, #tpu.memory_space<vmem>>, vector<2x16x16x4xf32>
    %c0_141 = arith.constant 0 : index
    %c2_142 = arith.constant 2 : index
    %c2_143 = arith.constant 2 : index
    %c0_144 = arith.constant 0 : index
    %66 = vector.load %arg9[%c0_141, %c2_142, %c2_143, %c0_144] : memref<2x18x18x4xf32, #tpu.memory_space<vmem>>, vector<2x16x16x4xf32>
    %67 = tpu.concatenate %58, %59, %60, %61, %62, %63, %64, %65, %66 in 3 : vector<2x16x16x4xf32>, vector<2x16x16x4xf32>, vector<2x16x16x4xf32>, vector<2x16x16x4xf32>, vector<2x16x16x4xf32>, vector<2x16x16x4xf32>, vector<2x16x16x4xf32>, vector<2x16x16x4xf32>, vector<2x16x16x4xf32> -> vector<2x16x16x36xf32>
    %68 = vector.shape_cast %67 : vector<2x16x16x36xf32> to vector<512x36xf32>
    %c0_145 = arith.constant 0 : index
    %c0_146 = arith.constant 0 : index
    %69 = vector.load %arg5[%c0_145, %c0_146] : memref<4x36xf32, #tpu.memory_space<vmem>>, vector<4x36xf32>
    %cst_147 = arith.constant dense<0.000000e+00> : vector<4x512xf32>
    %70 = tpu.matmul %69, %68, %cst_147 {dimension_numbers = #tpu.dot_dimension_numbers<[1], [1], [0], [0], [0, 0, 1, 0], [], []>} : vector<4x36xf32>, vector<512x36xf32>, vector<4x512xf32> -> vector<4x512xf32>
    %c0_148 = arith.constant 0 : index
    %c0_149 = arith.constant 0 : index
    %71 = vector.load %arg6[%c0_148, %c0_149] : memref<4x1xf32, #tpu.memory_space<vmem>>, vector<4x1xf32>
    %72 = vector.broadcast %71 : vector<4x1xf32> to vector<4x512xf32>
    %73 = arith.addf %70, %72 : vector<4x512xf32>
    %cst_150 = arith.constant 0.000000e+00 : f32
    %74 = vector.broadcast %cst_150 : f32 to vector<4x512xf32>
    %75 = arith.maximumf %73, %74 : vector<4x512xf32>
    %76 = vector.extract_strided_slice %75 {offsets = [0, 0], sizes = [4, 256], strides = [1, 1]} : vector<4x512xf32> to vector<4x256xf32>
    %c0_151 = arith.constant 0 : index
    %c0_152 = arith.constant 0 : index
    %c0_153 = arith.constant 0 : index
    %77 = vector.load %arg7[%c0_151, %c0_152, %c0_153] : memref<2x4x256xf32, #tpu.memory_space<vmem>>, vector<1x4x256xf32>
    %78 = vector.shape_cast %77 : vector<1x4x256xf32> to vector<4x256xf32>
    %79 = vector.shape_cast %76 : vector<4x256xf32> to vector<1x4x256xf32>
    tpu.vector_store %arg7[%c0_151, %c0_152, %c0_153], %79 {strides = array<i32>} : memref<2x4x256xf32, #tpu.memory_space<vmem>>, vector<1x4x256xf32>,
    %80 = vector.extract_strided_slice %75 {offsets = [0, 256], sizes = [4, 256], strides = [1, 1]} : vector<4x512xf32> to vector<4x256xf32>
    %c1_154 = arith.constant 1 : index
    %c0_155 = arith.constant 0 : index
    %c0_156 = arith.constant 0 : index
    %81 = vector.load %arg7[%c1_154, %c0_155, %c0_156] : memref<2x4x256xf32, #tpu.memory_space<vmem>>, vector<1x4x256xf32>
    %82 = vector.shape_cast %81 : vector<1x4x256xf32> to vector<4x256xf32>
    %83 = vector.shape_cast %80 : vector<4x256xf32> to vector<1x4x256xf32>
    tpu.vector_store %arg7[%c1_154, %c0_155, %c0_156], %83 {strides = array<i32>} : memref<2x4x256xf32, #tpu.memory_space<vmem>>, vector<1x4x256xf32>,
    return
  }
}

</mosaic_0001>

<llo_original>
// kernel: up_combine_forward.1
$region0: #{up_combine_forward.1}
  #allocation0 [shape = 'u32[]', space=smem, size = 0x4, offset = 0x4, fixed_abs, tag = 'smem constant byte address 0x4 - core index']
  #allocation1 [shape = 'u32[144,128]{1,0:T(1,128)}', space=vmem, size = 0x12000, scoped, tag = 'internal scratch']
  #allocation2 [shape = 'f32[2,18,18,8]{3,2,1,0:T(8,128)}', space=vmem, size = 0x6c000, scoped, tag = 'scratch operand']
  #allocation3 [shape = 'f32[2,18,18,4]{3,2,1,0:T(8,128)}', space=vmem, size = 0x6c000, scoped, tag = 'scratch operand']
  %s0 = inlined_call_operand.vmem [shape: f32[2,64,4], index: 0, kind: input, shape index: {}]
  %s1 = inlined_call_operand.vmem [shape: f32[256,64], index: 1, kind: input, shape index: {}]
  %s2 = inlined_call_operand.vmem [shape: f32[2,16,16,4], index: 2, kind: input, shape index: {}]
  %s3 = inlined_call_operand.vmem [shape: f32[72,4], index: 3, kind: input, shape index: {}]
  %s4 = inlined_call_operand.vmem [shape: f32[1,4], index: 4, kind: input, shape index: {}]
  %s5 = inlined_call_operand.vmem [shape: f32[4,36], index: 5, kind: input, shape index: {}]
  %s6 = inlined_call_operand.vmem [shape: f32[4,1], index: 6, kind: input, shape index: {}]
  %s7 = inlined_call_operand.vmem [shape: f32[2,4,256], index: 7, kind: output, shape index: {}]
  %s8 = sld [smem:[#allocation0]]
  $region38: #{up_combine_forward.1} parent=0
    _
  %s10 = ssub.s32 1, %s8
  %s11 = scalar_select 0, %s10, %s8
  // Predicated region
  $region2: #{up_combine_forward.1} parent=0 // pred_check
    _
  $region3: #{up_combine_forward.1} parent=0 // pred_check_branch
    %13 = sbr.rel (0) target = $region5
  $region4: #{up_combine_forward.1} parent=0 // pred_region
    _
  $region5: #{up_combine_forward.1} parent=0 // pred_fallthru
    _
  // Predicated region
  $region6: #{up_combine_forward.1} parent=0 // pred_check
    _
  $region7: #{up_combine_forward.1} parent=0 // pred_check_branch
    %15 = sbr.rel (0) target = $region9
  $region8: #{up_combine_forward.1} parent=0 // pred_region
    _
  $region9: #{up_combine_forward.1} parent=0 // pred_fallthru
    _
  // Predicated region
  $region10: #{up_combine_forward.1} parent=0 // pred_check
    _
  $region11: #{up_combine_forward.1} parent=0 // pred_check_branch
    %17 = sbr.rel (0) target = $region13
  $region12: #{up_combine_forward.1} parent=0 // pred_region
    _
  $region13: #{up_combine_forward.1} parent=0 // pred_fallthru
    _
  // Predicated region
  $region14: #{up_combine_forward.1} parent=0 // pred_check
    _
  $region15: #{up_combine_forward.1} parent=0 // pred_check_branch
    %19 = sbr.rel (0) target = $region17
  $region16: #{up_combine_forward.1} parent=0 // pred_region
    _
  $region17: #{up_combine_forward.1} parent=0 // pred_fallthru
    _
  // Predicated region
  $region18: #{up_combine_forward.1} parent=0 // pred_check
    _
  $region19: #{up_combine_forward.1} parent=0 // pred_check_branch
    %21 = sbr.rel (0) target = $region21
  $region20: #{up_combine_forward.1} parent=0 // pred_region
    _
  $region21: #{up_combine_forward.1} parent=0 // pred_fallthru
    _
  // Predicated region
  $region22: #{up_combine_forward.1} parent=0 // pred_check
    _
  $region23: #{up_combine_forward.1} parent=0 // pred_check_branch
    %23 = sbr.rel (0) target = $region25
  $region24: #{up_combine_forward.1} parent=0 // pred_region
    _
  $region25: #{up_combine_forward.1} parent=0 // pred_fallthru
    _
  // Predicated region
  $region26: #{up_combine_forward.1} parent=0 // pred_check
    _
  $region27: #{up_combine_forward.1} parent=0 // pred_check_branch
    %25 = sbr.rel (0) target = $region29
  $region28: #{up_combine_forward.1} parent=0 // pred_region
    _
  $region29: #{up_combine_forward.1} parent=0 // pred_fallthru
    _
  %vm26 = vcmask 64512
  %27 = vst.msk [vmem:[#allocation2] sm:$0xff] %vm26, 0.0
  %28 = vst.msk [vmem:[#allocation2 + $0x8] sm:$0xff] %vm26, 0.0
  %vm29 = vcmask 58368
  %30 = vst.msk [vmem:[#allocation2 + $0x10] sm:$0x3] %vm29, 0.0
  %31 = vst.msk [vmem:[#allocation2 + $0x1b0] sm:$0xff] %vm26, 0.0
  %32 = vst.msk [vmem:[#allocation2 + $0x1b8] sm:$0xff] %vm26, 0.0
  %33 = vst.msk [vmem:[#allocation2 + $0x1c0] sm:$0x3] %vm29, 0.0
  %s34 = scalar_lea.vmem [#allocation2], 408
  %35 = vst.msk [vmem:[%s34] sm:$0xff] %vm26, 0.0
  %36 = vst.msk [vmem:[%s34 + $0x8] sm:$0xff] %vm26, 0.0
  %37 = vst.msk [vmem:[%s34 + $0x10] sm:$0x3] %vm29, 0.0
  %38 = vst.msk [vmem:[%s34 + $0x1b0] sm:$0xff] %vm26, 0.0
  %39 = vst.msk [vmem:[%s34 + $0x1b8] sm:$0xff] %vm26, 0.0
  %40 = vst.msk [vmem:[%s34 + $0x1c0] sm:$0x3] %vm29, 0.0
  %vm41 = vcmask 57344
  %42 = vst.msk [vmem:[#allocation2] sm:$0x1] %vm41, 0.0
  %43 = vst.msk [vmem:[#allocation2 + $0x18] sm:$0x1] %vm41, 0.0
  %44 = vst.msk [vmem:[#allocation2 + $0x30] sm:$0x1] %vm41, 0.0
  %45 = vst.msk [vmem:[#allocation2 + $0x48] sm:$0x1] %vm41, 0.0
  %46 = vst.msk [vmem:[#allocation2 + $0x60] sm:$0x1] %vm41, 0.0
  %47 = vst.msk [vmem:[#allocation2 + $0x78] sm:$0x1] %vm41, 0.0
  %48 = vst.msk [vmem:[#allocation2 + $0x90] sm:$0x1] %vm41, 0.0
  %49 = vst.msk [vmem:[#allocation2 + $0xa8] sm:$0x1] %vm41, 0.0
  %50 = vst.msk [vmem:[#allocation2 + $0xc0] sm:$0x1] %vm41, 0.0
  %51 = vst.msk [vmem:[#allocation2 + $0xd8] sm:$0x1] %vm41, 0.0
  %52 = vst.msk [vmem:[#allocation2 + $0xf0] sm:$0x1] %vm41, 0.0
  %53 = vst.msk [vmem:[#allocation2 + $0x108] sm:$0x1] %vm41, 0.0
  %54 = vst.msk [vmem:[#allocation2 + $0x120] sm:$0x1] %vm41, 0.0
  %55 = vst.msk [vmem:[#allocation2 + $0x138] sm:$0x1] %vm41, 0.0
  %56 = vst.msk [vmem:[#allocation2 + $0x150] sm:$0x1] %vm41, 0.0
  %57 = vst.msk [vmem:[#allocation2 + $0x168] sm:$0x1] %vm41, 0.0
  %58 = vst.msk [vmem:[#allocation2 + $0x180] sm:$0x1] %vm41, 0.0
  %59 = vst.msk [vmem:[#allocation2 + $0x198] sm:$0x1] %vm41, 0.0
  %60 = vst.msk [vmem:[#allocation2 + $0x1b0] sm:$0x1] %vm41, 0.0
  %61 = vst.msk [vmem:[#allocation2 + $0x1c8] sm:$0x1] %vm41, 0.0
  %62 = vst.msk [vmem:[#allocation2 + $0x1e0] sm:$0x1] %vm41, 0.0
  %63 = vst.msk [vmem:[#allocation2 + $0x1f8] sm:$0x1] %vm41, 0.0
  %64 = vst.msk [vmem:[#allocation2 + $0x210] sm:$0x1] %vm41, 0.0
  %65 = vst.msk [vmem:[#allocation2 + $0x228] sm:$0x1] %vm41, 0.0
  %66 = vst.msk [vmem:[#allocation2 + $0x240] sm:$0x1] %vm41, 0.0
  %67 = vst.msk [vmem:[#allocation2 + $0x258] sm:$0x1] %vm41, 0.0
  %68 = vst.msk [vmem:[#allocation2 + $0x270] sm:$0x1] %vm41, 0.0
  %69 = vst.msk [vmem:[#allocation2 + $0x288] sm:$0x1] %vm41, 0.0
  %70 = vst.msk [vmem:[#allocation2 + $0x2a0] sm:$0x1] %vm41, 0.0
  %71 = vst.msk [vmem:[#allocation2 + $0x2b8] sm:$0x1] %vm41, 0.0
  %72 = vst.msk [vmem:[#allocation2 + $0x2d0] sm:$0x1] %vm41, 0.0
  %73 = vst.msk [vmem:[#allocation2 + $0x2e8] sm:$0x1] %vm41, 0.0
  %74 = vst.msk [vmem:[#allocation2 + $0x300] sm:$0x1] %vm41, 0.0
  %75 = vst.msk [vmem:[#allocation2 + $0x318] sm:$0x1] %vm41, 0.0
  %76 = vst.msk [vmem:[#allocation2 + $0x330] sm:$0x1] %vm41, 0.0
  %77 = vst.msk [vmem:[#allocation2 + $0x348] sm:$0x1] %vm41, 0.0
  %78 = vst.msk [vmem:[#allocation2 + $0x11] sm:$0x1] %vm41, 0.0
  %79 = vst.msk [vmem:[#allocation2 + $0x29] sm:$0x1] %vm41, 0.0
  %80 = vst.msk [vmem:[#allocation2 + $0x41] sm:$0x1] %vm41, 0.0
  %81 = vst.msk [vmem:[#allocation2 + $0x59] sm:$0x1] %vm41, 0.0
  %82 = vst.msk [vmem:[#allocation2 + $0x71] sm:$0x1] %vm41, 0.0
  %83 = vst.msk [vmem:[#allocation2 + $0x89] sm:$0x1] %vm41, 0.0
  %84 = vst.msk [vmem:[#allocation2 + $0xa1] sm:$0x1] %vm41, 0.0
  %85 = vst.msk [vmem:[#allocation2 + $0xb9] sm:$0x1] %vm41, 0.0
  %86 = vst.msk [vmem:[#allocation2 + $0xd1] sm:$0x1] %vm41, 0.0
  %87 = vst.msk [vmem:[#allocation2 + $0xe9] sm:$0x1] %vm41, 0.0
  %88 = vst.msk [vmem:[#allocation2 + $0x101] sm:$0x1] %vm41, 0.0
  %89 = vst.msk [vmem:[#allocation2 + $0x119] sm:$0x1] %vm41, 0.0
  %90 = vst.msk [vmem:[#allocation2 + $0x131] sm:$0x1] %vm41, 0.0
  %91 = vst.msk [vmem:[#allocation2 + $0x149] sm:$0x1] %vm41, 0.0
  %92 = vst.msk [vmem:[#allocation2 + $0x161] sm:$0x1] %vm41, 0.0
  %93 = vst.msk [vmem:[#allocation2 + $0x179] sm:$0x1] %vm41, 0.0
  %94 = vst.msk [vmem:[#allocation2 + $0x191] sm:$0x1] %vm41, 0.0
  %95 = vst.msk [vmem:[#allocation2 + $0x1a9] sm:$0x1] %vm41, 0.0
  %96 = vst.msk [vmem:[#allocation2 + $0x1c1] sm:$0x1] %vm41, 0.0
  %97 = vst.msk [vmem:[#allocation2 + $0x1d9] sm:$0x1] %vm41, 0.0
  %98 = vst.msk [vmem:[#allocation2 + $0x1f1] sm:$0x1] %vm41, 0.0
  %99 = vst.msk [vmem:[#allocation2 + $0x209] sm:$0x1] %vm41, 0.0
  %100 = vst.msk [vmem:[#allocation2 + $0x221] sm:$0x1] %vm41, 0.0
  %101 = vst.msk [vmem:[#allocation2 + $0x239] sm:$0x1] %vm41, 0.0
  %102 = vst.msk [vmem:[#allocation2 + $0x251] sm:$0x1] %vm41, 0.0
  %103 = vst.msk [vmem:[#allocation2 + $0x269] sm:$0x1] %vm41, 0.0
  %104 = vst.msk [vmem:[#allocation2 + $0x281] sm:$0x1] %vm41, 0.0
  %105 = vst.msk [vmem:[#allocation2 + $0x299] sm:$0x1] %vm41, 0.0
  %106 = vst.msk [vmem:[#allocation2 + $0x2b1] sm:$0x1] %vm41, 0.0
  %107 = vst.msk [vmem:[#allocation2 + $0x2c9] sm:$0x1] %vm41, 0.0
  %108 = vst.msk [vmem:[#allocation2 + $0x2e1] sm:$0x1] %vm41, 0.0
  %109 = vst.msk [vmem:[#allocation2 + $0x2f9] sm:$0x1] %vm41, 0.0
  %110 = vst.msk [vmem:[#allocation2 + $0x311] sm:$0x1] %vm41, 0.0
  %111 = vst.msk [vmem:[#allocation2 + $0x329] sm:$0x1] %vm41, 0.0
  %112 = vst.msk [vmem:[#allocation2 + $0x341] sm:$0x1] %vm41, 0.0
  %113 = vst.msk [vmem:[#allocation2 + $0x359] sm:$0x1] %vm41, 0.0
  %vm114 = vcmask 31744
  %115 = vst.msk [vmem:[#allocation3] sm:$0xff] %vm114, 0.0
  %116 = vst.msk [vmem:[#allocation3 + $0x8] sm:$0xff] %vm114, 0.0
  %vm117 = vcmask 25600
  %118 = vst.msk [vmem:[#allocation3 + $0x10] sm:$0x3] %vm117, 0.0
  %119 = vst.msk [vmem:[#allocation3 + $0x1b0] sm:$0xff] %vm114, 0.0
  %120 = vst.msk [vmem:[#allocation3 + $0x1b8] sm:$0xff] %vm114, 0.0
  %121 = vst.msk [vmem:[#allocation3 + $0x1c0] sm:$0x3] %vm117, 0.0
  %s122 = scalar_lea.vmem [#allocation3], 408
  %123 = vst.msk [vmem:[%s122] sm:$0xff] %vm114, 0.0
  %124 = vst.msk [vmem:[%s122 + $0x8] sm:$0xff] %vm114, 0.0
  %125 = vst.msk [vmem:[%s122 + $0x10] sm:$0x3] %vm117, 0.0
  %126 = vst.msk [vmem:[%s122 + $0x1b0] sm:$0xff] %vm114, 0.0
  %127 = vst.msk [vmem:[%s122 + $0x1b8] sm:$0xff] %vm114, 0.0
  %128 = vst.msk [vmem:[%s122 + $0x1c0] sm:$0x3] %vm117, 0.0
  %vm129 = vcmask 24576
  %130 = vst.msk [vmem:[#allocation3] sm:$0x1] %vm129, 0.0
  %131 = vst.msk [vmem:[#allocation3 + $0x18] sm:$0x1] %vm129, 0.0
  %132 = vst.msk [vmem:[#allocation3 + $0x30] sm:$0x1] %vm129, 0.0
  %133 = vst.msk [vmem:[#allocation3 + $0x48] sm:$0x1] %vm129, 0.0
  %134 = vst.msk [vmem:[#allocation3 + $0x60] sm:$0x1] %vm129, 0.0
  %135 = vst.msk [vmem:[#allocation3 + $0x78] sm:$0x1] %vm129, 0.0
  %136 = vst.msk [vmem:[#allocation3 + $0x90] sm:$0x1] %vm129, 0.0
  %137 = vst.msk [vmem:[#allocation3 + $0xa8] sm:$0x1] %vm129, 0.0
  %138 = vst.msk [vmem:[#allocation3 + $0xc0] sm:$0x1] %vm129, 0.0
  %139 = vst.msk [vmem:[#allocation3 + $0xd8] sm:$0x1] %vm129, 0.0
  %140 = vst.msk [vmem:[#allocation3 + $0xf0] sm:$0x1] %vm129, 0.0
  %141 = vst.msk [vmem:[#allocation3 + $0x108] sm:$0x1] %vm129, 0.0
  %142 = vst.msk [vmem:[#allocation3 + $0x120] sm:$0x1] %vm129, 0.0
  %143 = vst.msk [vmem:[#allocation3 + $0x138] sm:$0x1] %vm129, 0.0
  %144 = vst.msk [vmem:[#allocation3 + $0x150] sm:$0x1] %vm129, 0.0
  %145 = vst.msk [vmem:[#allocation3 + $0x168] sm:$0x1] %vm129, 0.0
  %146 = vst.msk [vmem:[#allocation3 + $0x180] sm:$0x1] %vm129, 0.0
  %147 = vst.msk [vmem:[#allocation3 + $0x198] sm:$0x1] %vm129, 0.0
  %148 = vst.msk [vmem:[#allocation3 + $0x1b0] sm:$0x1] %vm129, 0.0
  %149 = vst.msk [vmem:[#allocation3 + $0x1c8] sm:$0x1] %vm129, 0.0
  %150 = vst.msk [vmem:[#allocation3 + $0x1e0] sm:$0x1] %vm129, 0.0
  %151 = vst.msk [vmem:[#allocation3 + $0x1f8] sm:$0x1] %vm129, 0.0
  %152 = vst.msk [vmem:[#allocation3 + $0x210] sm:$0x1] %vm129, 0.0
  %153 = vst.msk [vmem:[#allocation3 + $0x228] sm:$0x1] %vm129, 0.0
  %154 = vst.msk [vmem:[#allocation3 + $0x240] sm:$0x1] %vm129, 0.0
  %155 = vst.msk [vmem:[#allocation3 + $0x258] sm:$0x1] %vm129, 0.0
  %156 = vst.msk [vmem:[#allocation3 + $0x270] sm:$0x1] %vm129, 0.0
  %157 = vst.msk [vmem:[#allocation3 + $0x288] sm:$0x1] %vm129, 0.0
  %158 = vst.msk [vmem:[#allocation3 + $0x2a0] sm:$0x1] %vm129, 0.0
  %159 = vst.msk [vmem:[#allocation3 + $0x2b8] sm:$0x1] %vm129, 0.0
  %160 = vst.msk [vmem:[#allocation3 + $0x2d0] sm:$0x1] %vm129, 0.0
  %161 = vst.msk [vmem:[#allocation3 + $0x2e8] sm:$0x1] %vm129, 0.0
  %162 = vst.msk [vmem:[#allocation3 + $0x300] sm:$0x1] %vm129, 0.0
  %163 = vst.msk [vmem:[#allocation3 + $0x318] sm:$0x1] %vm129, 0.0
  %164 = vst.msk [vmem:[#allocation3 + $0x330] sm:$0x1] %vm129, 0.0
  %165 = vst.msk [vmem:[#allocation3 + $0x348] sm:$0x1] %vm129, 0.0
  %166 = vst.msk [vmem:[#allocation3 + $0x11] sm:$0x1] %vm129, 0.0
  %167 = vst.msk [vmem:[#allocation3 + $0x29] sm:$0x1] %vm129, 0.0
  %168 = vst.msk [vmem:[#allocation3 + $0x41] sm:$0x1] %vm129, 0.0
  %169 = vst.msk [vmem:[#allocation3 + $0x59] sm:$0x1] %vm129, 0.0
  %170 = vst.msk [vmem:[#allocation3 + $0x71] sm:$0x1] %vm129, 0.0
  %171 = vst.msk [vmem:[#allocation3 + $0x89] sm:$0x1] %vm129, 0.0
  %172 = vst.msk [vmem:[#allocation3 + $0xa1] sm:$0x1] %vm129, 0.0
  %173 = vst.msk [vmem:[#allocation3 + $0xb9] sm:$0x1] %vm129, 0.0
  %174 = vst.msk [vmem:[#allocation3 + $0xd1] sm:$0x1] %vm129, 0.0
  %175 = vst.msk [vmem:[#allocation3 + $0xe9] sm:$0x1] %vm129, 0.0
  %176 = vst.msk [vmem:[#allocation3 + $0x101] sm:$0x1] %vm129, 0.0
  %177 = vst.msk [vmem:[#allocation3 + $0x119] sm:$0x1] %vm129, 0.0
  %178 = vst.msk [vmem:[#allocation3 + $0x131] sm:$0x1] %vm129, 0.0
  %179 = vst.msk [vmem:[#allocation3 + $0x149] sm:$0x1] %vm129, 0.0
  %180 = vst.msk [vmem:[#allocation3 + $0x161] sm:$0x1] %vm129, 0.0
  %181 = vst.msk [vmem:[#allocation3 + $0x179] sm:$0x1] %vm129, 0.0
  %182 = vst.msk [vmem:[#allocation3 + $0x191] sm:$0x1] %vm129, 0.0
  %183 = vst.msk [vmem:[#allocation3 + $0x1a9] sm:$0x1] %vm129, 0.0
  %184 = vst.msk [vmem:[#allocation3 + $0x1c1] sm:$0x1] %vm129, 0.0
  %185 = vst.msk [vmem:[#allocation3 + $0x1d9] sm:$0x1] %vm129, 0.0
  %186 = vst.msk [vmem:[#allocation3 + $0x1f1] sm:$0x1] %vm129, 0.0
  %187 = vst.msk [vmem:[#allocation3 + $0x209] sm:$0x1] %vm129, 0.0
  %188 = vst.msk [vmem:[#allocation3 + $0x221] sm:$0x1] %vm129, 0.0
  %189 = vst.msk [vmem:[#allocation3 + $0x239] sm:$0x1] %vm129, 0.0
  %190 = vst.msk [vmem:[#allocation3 + $0x251] sm:$0x1] %vm129, 0.0
  %191 = vst.msk [vmem:[#allocation3 + $0x269] sm:$0x1] %vm129, 0.0
  %192 = vst.msk [vmem:[#allocation3 + $0x281] sm:$0x1] %vm129, 0.0
  %193 = vst.msk [vmem:[#allocation3 + $0x299] sm:$0x1] %vm129, 0.0
  %194 = vst.msk [vmem:[#allocation3 + $0x2b1] sm:$0x1] %vm129, 0.0
  %195 = vst.msk [vmem:[#allocation3 + $0x2c9] sm:$0x1] %vm129, 0.0
  %196 = vst.msk [vmem:[#allocation3 + $0x2e1] sm:$0x1] %vm129, 0.0
  %197 = vst.msk [vmem:[#allocation3 + $0x2f9] sm:$0x1] %vm129, 0.0
  %198 = vst.msk [vmem:[#allocation3 + $0x311] sm:$0x1] %vm129, 0.0
  %199 = vst.msk [vmem:[#allocation3 + $0x329] sm:$0x1] %vm129, 0.0
  %200 = vst.msk [vmem:[#allocation3 + $0x341] sm:$0x1] %vm129, 0.0
  %201 = vst.msk [vmem:[#allocation3 + $0x359] sm:$0x1] %vm129, 0.0
  %v202 = vld [vmem:[%s1] sm:$0xff]
  %v203 = vld [vmem:[%s1 + $0x8] sm:$0xff]
  %v204 = vld [vmem:[%s1 + $0x10] sm:$0xff]
  %v205 = vld [vmem:[%s1 + $0x18] sm:$0xff]
  %v206 = vld [vmem:[%s1 + $0x20] sm:$0xff]
  %v207 = vld [vmem:[%s1 + $0x28] sm:$0xff]
  %v208 = vld [vmem:[%s1 + $0x30] sm:$0xff]
  %v209 = vld [vmem:[%s1 + $0x38] sm:$0xff]
  %v210 = vld [vmem:[%s1 + $0x40] sm:$0xff]
  %v211 = vld [vmem:[%s1 + $0x48] sm:$0xff]
  %v212 = vld [vmem:[%s1 + $0x50] sm:$0xff]
  %v213 = vld [vmem:[%s1 + $0x58] sm:$0xff]
  %v214 = vld [vmem:[%s1 + $0x60] sm:$0xff]
  %v215 = vld [vmem:[%s1 + $0x68] sm:$0xff]
  %v216 = vld [vmem:[%s1 + $0x70] sm:$0xff]
  %v217 = vld [vmem:[%s1 + $0x78] sm:$0xff]
  %v218 = vld [vmem:[%s1 + $0x80] sm:$0xff]
  %v219 = vld [vmem:[%s1 + $0x88] sm:$0xff]
  %v220 = vld [vmem:[%s1 + $0x90] sm:$0xff]
  %v221 = vld [vmem:[%s1 + $0x98] sm:$0xff]
  %v222 = vld [vmem:[%s1 + $0xa0] sm:$0xff]
  %v223 = vld [vmem:[%s1 + $0xa8] sm:$0xff]
  %v224 = vld [vmem:[%s1 + $0xb0] sm:$0xff]
  %v225 = vld [vmem:[%s1 + $0xb8] sm:$0xff]
  %v226 = vld [vmem:[%s1 + $0xc0] sm:$0xff]
  %v227 = vld [vmem:[%s1 + $0xc8] sm:$0xff]
  %v228 = vld [vmem:[%s1 + $0xd0] sm:$0xff]
  %v229 = vld [vmem:[%s1 + $0xd8] sm:$0xff]
  %v230 = vld [vmem:[%s1 + $0xe0] sm:$0xff]
  %v231 = vld [vmem:[%s1 + $0xe8] sm:$0xff]
  %v232 = vld [vmem:[%s1 + $0xf0] sm:$0xff]
  %v233 = vld [vmem:[%s1 + $0xf8] sm:$0xff]
  %v234 = vld [vmem:[%s0] sm:$0xff]
  %v235 = vld [vmem:[%s0 + $0x8] sm:$0xff]
  %v236 = vld [vmem:[%s0 + $0x10] sm:$0xff]
  %v237 = vld [vmem:[%s0 + $0x18] sm:$0xff]
  %v238 = vld [vmem:[%s0 + $0x20] sm:$0xff]
  %v239 = vld [vmem:[%s0 + $0x28] sm:$0xff]
  %v240 = vld [vmem:[%s0 + $0x30] sm:$0xff]
  %v241 = vld [vmem:[%s0 + $0x38] sm:$0xff]
  %vm242 = vcmask 523264
  %v244 = vsel %vm242, %v202, 0
  %v247 = vsel %vm242, %v203, 0
  %v250 = vsel %vm242, %v204, 0
  %v253 = vsel %vm242, %v205, 0
  %v256 = vsel %vm242, %v206, 0
  %v259 = vsel %vm242, %v207, 0
  %v262 = vsel %vm242, %v208, 0
  %v265 = vsel %vm242, %v209, 0
  %v268 = vsel %vm242, %v210, 0
  %v271 = vsel %vm242, %v211, 0
  %v274 = vsel %vm242, %v212, 0
  %v277 = vsel %vm242, %v213, 0
  %v280 = vsel %vm242, %v214, 0
  %v283 = vsel %vm242, %v215, 0
  %v286 = vsel %vm242, %v216, 0
  %v289 = vsel %vm242, %v217, 0
  %v292 = vsel %vm242, %v218, 0
  %v295 = vsel %vm242, %v219, 0
  %v298 = vsel %vm242, %v220, 0
  %v301 = vsel %vm242, %v221, 0
  %v304 = vsel %vm242, %v222, 0
  %v307 = vsel %vm242, %v223, 0
  %v310 = vsel %vm242, %v224, 0
  %v313 = vsel %vm242, %v225, 0
  %v316 = vsel %vm242, %v226, 0
  %v319 = vsel %vm242, %v227, 0
  %v322 = vsel %vm242, %v228, 0
  %v325 = vsel %vm242, %v229, 0
  %v328 = vsel %vm242, %v230, 0
  %v331 = vsel %vm242, %v231, 0
  %v334 = vsel %vm242, %v232, 0
  %v337 = vsel %vm242, %v233, 0
  %339 = vmatprep.subr.mxu0 0.0
  %340 = vmatpush1.msra.mxu0 %v234
  %341 = vmatprep.subr.mxu0 0.0
  %342 = vmatpush1.msra.mxu0 %v235
  %343 = vmatprep.subr.mxu0 0.0
  %344 = vmatpush1.msra.mxu0 %v236
  %345 = vmatprep.subr.mxu0 0.0
  %346 = vmatpush1.msra.mxu0 %v237
  %347 = vmatprep.subr.mxu0 0.0
  %348 = vmatpush1.msra.mxu0 %v238
  %349 = vmatprep.subr.mxu0 0.0
  %350 = vmatpush1.msra.mxu0 %v239
  %351 = vmatprep.subr.mxu0 0.0
  %352 = vmatpush1.msra.mxu0 %v240
  %353 = vmatprep.subr.mxu0 0.0
  %354 = vmatpush1.msra.mxu0 %v241
  %355 = vmatprep.subr.mxu0 0.0
  %356 = vmatpush1.msra.mxu0 0.0
  %357 = vmatprep.subr.mxu0 0.0
  %358 = vmatpush1.msra.mxu0 0.0
  %359 = vmatprep.subr.mxu0 0.0
  %360 = vmatpush1.msra.mxu0 0.0
  %361 = vmatprep.subr.mxu0 0.0
  %362 = vmatpush1.msra.mxu0 0.0
  %363 = vmatprep.subr.mxu0 0.0
  %364 = vmatpush1.msra.mxu0 0.0
  %365 = vmatprep.subr.mxu0 0.0
  %366 = vmatpush1.msra.mxu0 0.0
  %367 = vmatprep.subr.mxu0 0.0
  %368 = vmatpush1.msra.mxu0 0.0
  %369 = vmatprep.subr.mxu0 0.0
  %370 = vmatpush1.msra.mxu0 0.0
  %371 = vmatprep.subr.mxu0 0.0
  %372 = vmatpush1.msra.mxu0 0.0
  %373 = vmatprep.subr.mxu0 0.0
  %374 = vmatpush1.msra.mxu0 0.0
  %375 = vmatprep.subr.mxu0 0.0
  %376 = vmatpush1.msra.mxu0 0.0
  %377 = vmatprep.subr.mxu0 0.0
  %378 = vmatpush1.msra.mxu0 0.0
  %379 = vmatprep.subr.mxu0 0.0
  %380 = vmatpush1.msra.mxu0 0.0
  %381 = vmatprep.subr.mxu0 0.0
  %382 = vmatpush1.msra.mxu0 0.0
  %383 = vmatprep.subr.mxu0 0.0
  %384 = vmatpush1.msra.mxu0 0.0
  %385 = vmatprep.subr.mxu0 0.0
  %386 = vmatpush1.msra.mxu0 0.0
  %387 = vmatprep.subr.mxu0 0.0
  %388 = vmatpush1.msra.mxu0 0.0
  %389 = vmatprep.subr.mxu0 0.0
  %390 = vmatpush1.msra.mxu0 0.0
  %391 = vmatprep.subr.mxu0 0.0
  %392 = vmatpush1.msra.mxu0 0.0
  %393 = vmatprep.subr.mxu0 0.0
  %394 = vmatpush1.msra.mxu0 0.0
  %395 = vmatprep.subr.mxu0 0.0
  %396 = vmatpush1.msra.mxu0 0.0
  %397 = vmatprep.subr.mxu0 0.0
  %398 = vmatpush1.msra.mxu0 0.0
  %399 = vmatprep.subr.mxu0 0.0
  %400 = vmatpush1.msra.mxu0 0.0
  %401 = vmatprep.subr.mxu0 0.0
  %402 = vmatpush1.msra.mxu0 0.0
  %403 = vmatprep.mubr.f32.mxu0 0.0
  %404 = vmatmul.mubr.f32.gmra.mrb[0].mxu0 %v244
  %v405 = vpop.f32.mrb[0].mxu0
  %v406 = vadd.f32 0.0, %v405
  %v407 = vpop.f32.mrb[0].mxu0
  %408 = vmatprep.mubr.f32.mxu0 0.0
  %409 = vmatmul.mubr.f32.gmra.mrb[0].mxu0 %v247
  %v410 = vpop.f32.mrb[0].mxu0
  %v411 = vadd.f32 0.0, %v410
  %v412 = vpop.f32.mrb[0].mxu0
  %413 = vmatprep.mubr.f32.mxu0 0.0
  %414 = vmatmul.mubr.f32.gmra.mrb[0].mxu0 %v250
  %v415 = vpop.f32.mrb[0].mxu0
  %v416 = vadd.f32 0.0, %v415
  %v417 = vpop.f32.mrb[0].mxu0
  %418 = vmatprep.mubr.f32.mxu0 0.0
  %419 = vmatmul.mubr.f32.gmra.mrb[0].mxu0 %v253
  %v420 = vpop.f32.mrb[0].mxu0
  %v421 = vadd.f32 0.0, %v420
  %v422 = vpop.f32.mrb[0].mxu0
  %423 = vmatprep.mubr.f32.mxu0 0.0
  %424 = vmatmul.mubr.f32.gmra.mrb[0].mxu0 %v256
  %v425 = vpop.f32.mrb[0].mxu0
  %v426 = vadd.f32 0.0, %v425
  %v427 = vpop.f32.mrb[0].mxu0
  %428 = vmatprep.mubr.f32.mxu0 0.0
  %429 = vmatmul.mubr.f32.gmra.mrb[0].mxu0 %v259
  %v430 = vpop.f32.mrb[0].mxu0
  %v431 = vadd.f32 0.0, %v430
  %v432 = vpop.f32.mrb[0].mxu0
  %433 = vmatprep.mubr.f32.mxu0 0.0
  %434 = vmatmul.mubr.f32.gmra.mrb[0].mxu0 %v262
  %v435 = vpop.f32.mrb[0].mxu0
  %v436 = vadd.f32 0.0, %v435
  %v437 = vpop.f32.mrb[0].mxu0
  %438 = vmatprep.mubr.f32.mxu0 0.0
  %439 = vmatmul.mubr.f32.gmra.mrb[0].mxu0 %v265
  %v440 = vpop.f32.mrb[0].mxu0
  %v441 = vadd.f32 0.0, %v440
  %v442 = vpop.f32.mrb[0].mxu0
  %443 = vmatprep.mubr.f32.mxu0 0.0
  %444 = vmatmul.mubr.f32.gmra.mrb[0].mxu0 %v268
  %v445 = vpop.f32.mrb[0].mxu0
  %v446 = vadd.f32 0.0, %v445
  %v447 = vpop.f32.mrb[0].mxu0
  %448 = vmatprep.mubr.f32.mxu0 0.0
  %449 = vmatmul.mubr.f32.gmra.mrb[0].mxu0 %v271
  %v450 = vpop.f32.mrb[0].mxu0
  %v451 = vadd.f32 0.0, %v450
  %v452 = vpop.f32.mrb[0].mxu0
  %453 = vmatprep.mubr.f32.mxu0 0.0
  %454 = vmatmul.mubr.f32.gmra.mrb[0].mxu0 %v274
  %v455 = vpop.f32.mrb[0].mxu0
  %v456 = vadd.f32 0.0, %v455
  %v457 = vpop.f32.mrb[0].mxu0
  %458 = vmatprep.mubr.f32.mxu0 0.0
  %459 = vmatmul.mubr.f32.gmra.mrb[0].mxu0 %v277
  %v460 = vpop.f32.mrb[0].mxu0
  %v461 = vadd.f32 0.0, %v460
  %v462 = vpop.f32.mrb[0].mxu0
  %463 = vmatprep.mubr.f32.mxu0 0.0
  %464 = vmatmul.mubr.f32.gmra.mrb[0].mxu0 %v280
  %v465 = vpop.f32.mrb[0].mxu0
  %v466 = vadd.f32 0.0, %v465
  %v467 = vpop.f32.mrb[0].mxu0
  %468 = vmatprep.mubr.f32.mxu0 0.0
  %469 = vmatmul.mubr.f32.gmra.mrb[0].mxu0 %v283
  %v470 = vpop.f32.mrb[0].mxu0
  %v471 = vadd.f32 0.0, %v470
  %v472 = vpop.f32.mrb[0].mxu0
  %473 = vmatprep.mubr.f32.mxu0 0.0
  %474 = vmatmul.mubr.f32.gmra.mrb[0].mxu0 %v286
  %v475 = vpop.f32.mrb[0].mxu0
  %v476 = vadd.f32 0.0, %v475
  %v477 = vpop.f32.mrb[0].mxu0
  %478 = vmatprep.mubr.f32.mxu0 0.0
  %479 = vmatmul.mubr.f32.gmra.mrb[0].mxu0 %v289
  %v480 = vpop.f32.mrb[0].mxu0
  %v481 = vadd.f32 0.0, %v480
  %v482 = vpop.f32.mrb[0].mxu0
  %483 = vmatprep.mubr.f32.mxu0 0.0
  %484 = vmatmul.mubr.f32.gmra.mrb[0].mxu0 %v292
  %v485 = vpop.f32.mrb[0].mxu0
  %v486 = vadd.f32 0.0, %v485
  %v487 = vpop.f32.mrb[0].mxu0
  %488 = vmatprep.mubr.f32.mxu0 0.0
  %489 = vmatmul.mubr.f32.gmra.mrb[0].mxu0 %v295
  %v490 = vpop.f32.mrb[0].mxu0
  %v491 = vadd.f32 0.0, %v490
  %v492 = vpop.f32.mrb[0].mxu0
  %493 = vmatprep.mubr.f32.mxu0 0.0
  %494 = vmatmul.mubr.f32.gmra.mrb[0].mxu0 %v298
  %v495 = vpop.f32.mrb[0].mxu0
  %v496 = vadd.f32 0.0, %v495
  %v497 = vpop.f32.mrb[0].mxu0
  %498 = vmatprep.mubr.f32.mxu0 0.0
  %499 = vmatmul.mubr.f32.gmra.mrb[0].mxu0 %v301
  %v500 = vpop.f32.mrb[0].mxu0
  %v501 = vadd.f32 0.0, %v500
  %v502 = vpop.f32.mrb[0].mxu0
  %503 = vmatprep.mubr.f32.mxu0 0.0
  %504 = vmatmul.mubr.f32.gmra.mrb[0].mxu0 %v304
  %v505 = vpop.f32.mrb[0].mxu0
  %v506 = vadd.f32 0.0, %v505
  %v507 = vpop.f32.mrb[0].mxu0
  %508 = vmatprep.mubr.f32.mxu0 0.0
  %509 = vmatmul.mubr.f32.gmra.mrb[0].mxu0 %v307
  %v510 = vpop.f32.mrb[0].mxu0
  %v511 = vadd.f32 0.0, %v510
  %v512 = vpop.f32.mrb[0].mxu0
  %513 = vmatprep.mubr.f32.mxu0 0.0
  %514 = vmatmul.mubr.f32.gmra.mrb[0].mxu0 %v310
  %v515 = vpop.f32.mrb[0].mxu0
  %v516 = vadd.f32 0.0, %v515
  %v517 = vpop.f32.mrb[0].mxu0
  %518 = vmatprep.mubr.f32.mxu0 0.0
  %519 = vmatmul.mubr.f32.gmra.mrb[0].mxu0 %v313
  %v520 = vpop.f32.mrb[0].mxu0
  %v521 = vadd.f32 0.0, %v520
  %v522 = vpop.f32.mrb[0].mxu0
  %523 = vmatprep.mubr.f32.mxu0 0.0
  %524 = vmatmul.mubr.f32.gmra.mrb[0].mxu0 %v316
  %v525 = vpop.f32.mrb[0].mxu0
  %v526 = vadd.f32 0.0, %v525
  %v527 = vpop.f32.mrb[0].mxu0
  %528 = vmatprep.mubr.f32.mxu0 0.0
  %529 = vmatmul.mubr.f32.gmra.mrb[0].mxu0 %v319
  %v530 = vpop.f32.mrb[0].mxu0
  %v531 = vadd.f32 0.0, %v530
  %v532 = vpop.f32.mrb[0].mxu0
  %533 = vmatprep.mubr.f32.mxu0 0.0
  %534 = vmatmul.mubr.f32.gmra.mrb[0].mxu0 %v322
  %v535 = vpop.f32.mrb[0].mxu0
  %v536 = vadd.f32 0.0, %v535
  %v537 = vpop.f32.mrb[0].mxu0
  %538 = vmatprep.mubr.f32.mxu0 0.0
  %539 = vmatmul.mubr.f32.gmra.mrb[0].mxu0 %v325
  %v540 = vpop.f32.mrb[0].mxu0
  %v541 = vadd.f32 0.0, %v540
  %v542 = vpop.f32.mrb[0].mxu0
  %543 = vmatprep.mubr.f32.mxu0 0.0
  %544 = vmatmul.mubr.f32.gmra.mrb[0].mxu0 %v328
  %v545 = vpop.f32.mrb[0].mxu0
  %v546 = vadd.f32 0.0, %v545
  %v547 = vpop.f32.mrb[0].mxu0
  %548 = vmatprep.mubr.f32.mxu0 0.0
  %549 = vmatmul.mubr.f32.gmra.mrb[0].mxu0 %v331
  %v550 = vpop.f32.mrb[0].mxu0
  %v551 = vadd.f32 0.0, %v550
  %v552 = vpop.f32.mrb[0].mxu0
  %553 = vmatprep.mubr.f32.mxu0 0.0
  %554 = vmatmul.mubr.f32.gmra.mrb[0].mxu0 %v334
  %v555 = vpop.f32.mrb[0].mxu0
  %v556 = vadd.f32 0.0, %v555
  %v557 = vpop.f32.mrb[0].mxu0
  %558 = vmatprep.mubr.f32.mxu0 0.0
  %559 = vmatmul.mubr.f32.gmra.mrb[0].mxu0 %v337
  %v560 = vpop.f32.mrb[0].mxu0
  %v561 = vadd.f32 0.0, %v560
  %v562 = vpop.f32.mrb[0].mxu0
  %563 = vdwg.mxu0
  %v564 = vld [vmem:[%s2] sm:$0xff]
  %v565 = vld [vmem:[%s2 + $0x8] sm:$0xff]
  %v566 = vld [vmem:[%s2 + $0x10] sm:$0xff]
  %v567 = vld [vmem:[%s2 + $0x18] sm:$0xff]
  %v568 = vld [vmem:[%s2 + $0x20] sm:$0xff]
  %v569 = vld [vmem:[%s2 + $0x28] sm:$0xff]
  %v570 = vld [vmem:[%s2 + $0x30] sm:$0xff]
  %v571 = vld [vmem:[%s2 + $0x38] sm:$0xff]
  %v572 = vld [vmem:[%s2 + $0x40] sm:$0xff]
  %v573 = vld [vmem:[%s2 + $0x48] sm:$0xff]
  %v574 = vld [vmem:[%s2 + $0x50] sm:$0xff]
  %v575 = vld [vmem:[%s2 + $0x58] sm:$0xff]
  %v576 = vld [vmem:[%s2 + $0x60] sm:$0xff]
  %v577 = vld [vmem:[%s2 + $0x68] sm:$0xff]
  %v578 = vld [vmem:[%s2 + $0x70] sm:$0xff]
  %v579 = vld [vmem:[%s2 + $0x78] sm:$0xff]
  %v580 = vld [vmem:[%s2 + $0x80] sm:$0xff]
  %v581 = vld [vmem:[%s2 + $0x88] sm:$0xff]
  %v582 = vld [vmem:[%s2 + $0x90] sm:$0xff]
  %v583 = vld [vmem:[%s2 + $0x98] sm:$0xff]
  %v584 = vld [vmem:[%s2 + $0xa0] sm:$0xff]
  %v585 = vld [vmem:[%s2 + $0xa8] sm:$0xff]
  %v586 = vld [vmem:[%s2 + $0xb0] sm:$0xff]
  %v587 = vld [vmem:[%s2 + $0xb8] sm:$0xff]
  %v588 = vld [vmem:[%s2 + $0xc0] sm:$0xff]
  %v589 = vld [vmem:[%s2 + $0xc8] sm:$0xff]
  %v590 = vld [vmem:[%s2 + $0xd0] sm:$0xff]
  %v591 = vld [vmem:[%s2 + $0xd8] sm:$0xff]
  %v592 = vld [vmem:[%s2 + $0xe0] sm:$0xff]
  %v593 = vld [vmem:[%s2 + $0xe8] sm:$0xff]
  %v594 = vld [vmem:[%s2 + $0xf0] sm:$0xff]
  %v595 = vld [vmem:[%s2 + $0xf8] sm:$0xff]
  %628 = vrot.lane.b32.xlu0 %v406, 4
  %v629 = vpop.permute.xlu0 %628
  %630 = vrot.lane.b32.xlu0 %v411, 4
  %v631 = vpop.permute.xlu0 %630
  %632 = vrot.lane.b32.xlu0 %v416, 4
  %v633 = vpop.permute.xlu0 %632
  %634 = vrot.lane.b32.xlu0 %v421, 4
  %v635 = vpop.permute.xlu0 %634
  %636 = vrot.lane.b32.xlu0 %v426, 4
  %v637 = vpop.permute.xlu0 %636
  %638 = vrot.lane.b32.xlu0 %v431, 4
  %v639 = vpop.permute.xlu0 %638
  %640 = vrot.lane.b32.xlu0 %v436, 4
  %v641 = vpop.permute.xlu0 %640
  %642 = vrot.lane.b32.xlu0 %v441, 4
  %v643 = vpop.permute.xlu0 %642
  %644 = vrot.lane.b32.xlu0 %v446, 4
  %v645 = vpop.permute.xlu0 %644
  %646 = vrot.lane.b32.xlu0 %v451, 4
  %v647 = vpop.permute.xlu0 %646
  %648 = vrot.lane.b32.xlu0 %v456, 4
  %v649 = vpop.permute.xlu0 %648
  %650 = vrot.lane.b32.xlu0 %v461, 4
  %v651 = vpop.permute.xlu0 %650
  %652 = vrot.lane.b32.xlu0 %v466, 4
  %v653 = vpop.permute.xlu0 %652
  %654 = vrot.lane.b32.xlu0 %v471, 4
  %v655 = vpop.permute.xlu0 %654
  %656 = vrot.lane.b32.xlu0 %v476, 4
  %v657 = vpop.permute.xlu0 %656
  %658 = vrot.lane.b32.xlu0 %v481, 4
  %v659 = vpop.permute.xlu0 %658
  %660 = vrot.lane.b32.xlu0 %v486, 4
  %v661 = vpop.permute.xlu0 %660
  %662 = vrot.lane.b32.xlu0 %v491, 4
  %v663 = vpop.permute.xlu0 %662
  %664 = vrot.lane.b32.xlu0 %v496, 4
  %v665 = vpop.permute.xlu0 %664
  %666 = vrot.lane.b32.xlu0 %v501, 4
  %v667 = vpop.permute.xlu0 %666
  %668 = vrot.lane.b32.xlu0 %v506, 4
  %v669 = vpop.permute.xlu0 %668
  %670 = vrot.lane.b32.xlu0 %v511, 4
  %v671 = vpop.permute.xlu0 %670
  %672 = vrot.lane.b32.xlu0 %v516, 4
  %v673 = vpop.permute.xlu0 %672
  %674 = vrot.lane.b32.xlu0 %v521, 4
  %v675 = vpop.permute.xlu0 %674
  %676 = vrot.lane.b32.xlu0 %v526, 4
  %v677 = vpop.permute.xlu0 %676
  %678 = vrot.lane.b32.xlu0 %v531, 4
  %v679 = vpop.permute.xlu0 %678
  %680 = vrot.lane.b32.xlu0 %v536, 4
  %v681 = vpop.permute.xlu0 %680
  %682 = vrot.lane.b32.xlu0 %v541, 4
  %v683 = vpop.permute.xlu0 %682
  %684 = vrot.lane.b32.xlu0 %v546, 4
  %v685 = vpop.permute.xlu0 %684
  %686 = vrot.lane.b32.xlu0 %v551, 4
  %v687 = vpop.permute.xlu0 %686
  %688 = vrot.lane.b32.xlu0 %v556, 4
  %v689 = vpop.permute.xlu0 %688
  %690 = vrot.lane.b32.xlu0 %v561, 4
  %v691 = vpop.permute.xlu0 %690
  %v724 = vsel %vm114, %v564, %v629
  %v725 = vsel %vm114, %v565, %v631
  %v726 = vsel %vm114, %v566, %v633
  %v727 = vsel %vm114, %v567, %v635
  %v728 = vsel %vm114, %v568, %v637
  %v729 = vsel %vm114, %v569, %v639
  %v730 = vsel %vm114, %v570, %v641
  %v731 = vsel %vm114, %v571, %v643
  %v732 = vsel %vm114, %v572, %v645
  %v733 = vsel %vm114, %v573, %v647
  %v734 = vsel %vm114, %v574, %v649
  %v735 = vsel %vm114, %v575, %v651
  %v736 = vsel %vm114, %v576, %v653
  %v737 = vsel %vm114, %v577, %v655
  %v738 = vsel %vm114, %v578, %v657
  %v739 = vsel %vm114, %v579, %v659
  %v740 = vsel %vm114, %v580, %v661
  %v741 = vsel %vm114, %v581, %v663
  %v742 = vsel %vm114, %v582, %v665
  %v743 = vsel %vm114, %v583, %v667
  %v744 = vsel %vm114, %v584, %v669
  %v745 = vsel %vm114, %v585, %v671
  %v746 = vsel %vm114, %v586, %v673
  %v747 = vsel %vm114, %v587, %v675
  %v748 = vsel %vm114, %v588, %v677
  %v749 = vsel %vm114, %v589, %v679
  %v750 = vsel %vm114, %v590, %v681
  %v751 = vsel %vm114, %v591, %v683
  %v752 = vsel %vm114, %v592, %v685
  %v753 = vsel %vm114, %v593, %v687
  %v754 = vsel %vm114, %v594, %v689
  %v755 = vsel %vm114, %v595, %v691
  %s756 = scalar_lea.vmem [#allocation2], 24
  %757 = vst.msk [vmem:[%s756 + $0x1] sm:$0xff] %vm26, %v724
  %758 = vst.msk [vmem:[%s756 + $0x9] sm:$0xff] %vm26, %v725
  %759 = vst.msk [vmem:[%s756 + $0x19] sm:$0xff] %vm26, %v726
  %760 = vst.msk [vmem:[%s756 + $0x21] sm:$0xff] %vm26, %v727
  %761 = vst.msk [vmem:[%s756 + $0x31] sm:$0xff] %vm26, %v728
  %762 = vst.msk [vmem:[%s756 + $0x39] sm:$0xff] %vm26, %v729
  %763 = vst.msk [vmem:[%s756 + $0x49] sm:$0xff] %vm26, %v730
  %764 = vst.msk [vmem:[%s756 + $0x51] sm:$0xff] %vm26, %v731
  %765 = vst.msk [vmem:[%s756 + $0x61] sm:$0xff] %vm26, %v732
  %766 = vst.msk [vmem:[%s756 + $0x69] sm:$0xff] %vm26, %v733
  %767 = vst.msk [vmem:[%s756 + $0x79] sm:$0xff] %vm26, %v734
  %768 = vst.msk [vmem:[%s756 + $0x81] sm:$0xff] %vm26, %v735
  %769 = vst.msk [vmem:[%s756 + $0x91] sm:$0xff] %vm26, %v736
  %770 = vst.msk [vmem:[%s756 + $0x99] sm:$0xff] %vm26, %v737
  %771 = vst.msk [vmem:[%s756 + $0xa9] sm:$0xff] %vm26, %v738
  %772 = vst.msk [vmem:[%s756 + $0xb1] sm:$0xff] %vm26, %v739
  %773 = vst.msk [vmem:[%s756 + $0xc1] sm:$0xff] %vm26, %v740
  %774 = vst.msk [vmem:[%s756 + $0xc9] sm:$0xff] %vm26, %v741
  %775 = vst.msk [vmem:[%s756 + $0xd9] sm:$0xff] %vm26, %v742
  %776 = vst.msk [vmem:[%s756 + $0xe1] sm:$0xff] %vm26, %v743
  %777 = vst.msk [vmem:[%s756 + $0xf1] sm:$0xff] %vm26, %v744
  %778 = vst.msk [vmem:[%s756 + $0xf9] sm:$0xff] %vm26, %v745
  %779 = vst.msk [vmem:[%s756 + $0x109] sm:$0xff] %vm26, %v746
  %780 = vst.msk [vmem:[%s756 + $0x111] sm:$0xff] %vm26, %v747
  %781 = vst.msk [vmem:[%s756 + $0x121] sm:$0xff] %vm26, %v748
  %782 = vst.msk [vmem:[%s756 + $0x129] sm:$0xff] %vm26, %v749
  %783 = vst.msk [vmem:[%s756 + $0x139] sm:$0xff] %vm26, %v750
  %784 = vst.msk [vmem:[%s756 + $0x141] sm:$0xff] %vm26, %v751
  %785 = vst.msk [vmem:[%s756 + $0x151] sm:$0xff] %vm26, %v752
  %786 = vst.msk [vmem:[%s756 + $0x159] sm:$0xff] %vm26, %v753
  %787 = vst.msk [vmem:[%s756 + $0x169] sm:$0xff] %vm26, %v754
  %788 = vst.msk [vmem:[%s756 + $0x171] sm:$0xff] %vm26, %v755
  %v789 = vld [vmem:[%s1] sm:$0xff]
  %v790 = vld [vmem:[%s1 + $0x8] sm:$0xff]
  %v791 = vld [vmem:[%s1 + $0x10] sm:$0xff]
  %v792 = vld [vmem:[%s1 + $0x18] sm:$0xff]
  %v793 = vld [vmem:[%s1 + $0x20] sm:$0xff]
  %v794 = vld [vmem:[%s1 + $0x28] sm:$0xff]
  %v795 = vld [vmem:[%s1 + $0x30] sm:$0xff]
  %v796 = vld [vmem:[%s1 + $0x38] sm:$0xff]
  %v797 = vld [vmem:[%s1 + $0x40] sm:$0xff]
  %v798 = vld [vmem:[%s1 + $0x48] sm:$0xff]
  %v799 = vld [vmem:[%s1 + $0x50] sm:$0xff]
  %v800 = vld [vmem:[%s1 + $0x58] sm:$0xff]
  %v801 = vld [vmem:[%s1 + $0x60] sm:$0xff]
  %v802 = vld [vmem:[%s1 + $0x68] sm:$0xff]
  %v803 = vld [vmem:[%s1 + $0x70] sm:$0xff]
  %v804 = vld [vmem:[%s1 + $0x78] sm:$0xff]
  %v805 = vld [vmem:[%s1 + $0x80] sm:$0xff]
  %v806 = vld [vmem:[%s1 + $0x88] sm:$0xff]
  %v807 = vld [vmem:[%s1 + $0x90] sm:$0xff]
  %v808 = vld [vmem:[%s1 + $0x98] sm:$0xff]
  %v809 = vld [vmem:[%s1 + $0xa0] sm:$0xff]
  %v810 = vld [vmem:[%s1 + $0xa8] sm:$0xff]
  %v811 = vld [vmem:[%s1 + $0xb0] sm:$0xff]
  %v812 = vld [vmem:[%s1 + $0xb8] sm:$0xff]
  %v813 = vld [vmem:[%s1 + $0xc0] sm:$0xff]
  %v814 = vld [vmem:[%s1 + $0xc8] sm:$0xff]
  %v815 = vld [vmem:[%s1 + $0xd0] sm:$0xff]
  %v816 = vld [vmem:[%s1 + $0xd8] sm:$0xff]
  %v817 = vld [vmem:[%s1 + $0xe0] sm:$0xff]
  %v818 = vld [vmem:[%s1 + $0xe8] sm:$0xff]
  %v819 = vld [vmem:[%s1 + $0xf0] sm:$0xff]
  %v820 = vld [vmem:[%s1 + $0xf8] sm:$0xff]
  %s821 = scalar_lea.vmem %s0, 64
  %v822 = vld [vmem:[%s821] sm:$0xff]
  %v823 = vld [vmem:[%s821 + $0x8] sm:$0xff]
  %v824 = vld [vmem:[%s821 + $0x10] sm:$0xff]
  %v825 = vld [vmem:[%s821 + $0x18] sm:$0xff]
  %v826 = vld [vmem:[%s821 + $0x20] sm:$0xff]
  %v827 = vld [vmem:[%s821 + $0x28] sm:$0xff]
  %v828 = vld [vmem:[%s821 + $0x30] sm:$0xff]
  %v829 = vld [vmem:[%s821 + $0x38] sm:$0xff]
  %v831 = vsel %vm242, %v789, 0
  %v834 = vsel %vm242, %v790, 0
  %v837 = vsel %vm242, %v791, 0
  %v840 = vsel %vm242, %v792, 0
  %v843 = vsel %vm242, %v793, 0
  %v846 = vsel %vm242, %v794, 0
  %v849 = vsel %vm242, %v795, 0
  %v852 = vsel %vm242, %v796, 0
  %v855 = vsel %vm242, %v797, 0
  %v858 = vsel %vm242, %v798, 0
  %v861 = vsel %vm242, %v799, 0
  %v864 = vsel %vm242, %v800, 0
  %v867 = vsel %vm242, %v801, 0
  %v870 = vsel %vm242, %v802, 0
  %v873 = vsel %vm242, %v803, 0
  %v876 = vsel %vm242, %v804, 0
  %v879 = vsel %vm242, %v805, 0
  %v882 = vsel %vm242, %v806, 0
  %v885 = vsel %vm242, %v807, 0
  %v888 = vsel %vm242, %v808, 0
  %v891 = vsel %vm242, %v809, 0
  %v894 = vsel %vm242, %v810, 0
  %v897 = vsel %vm242, %v811, 0
  %v900 = vsel %vm242, %v812, 0
  %v903 = vsel %vm242, %v813, 0
  %v906 = vsel %vm242, %v814, 0
  %v909 = vsel %vm242, %v815, 0
  %v912 = vsel %vm242, %v816, 0
  %v915 = vsel %vm242, %v817, 0
  %v918 = vsel %vm242, %v818, 0
  %v921 = vsel %vm242, %v819, 0
  %v924 = vsel %vm242, %v820, 0
  %926 = vmatprep.subr.mxu0 0.0
  %927 = vmatpush1.msra.mxu0 %v822
  %928 = vmatprep.subr.mxu0 0.0
  %929 = vmatpush1.msra.mxu0 %v823
  %930 = vmatprep.subr.mxu0 0.0
  %931 = vmatpush1.msra.mxu0 %v824
  %932 = vmatprep.subr.mxu0 0.0
  %933 = vmatpush1.msra.mxu0 %v825
  %934 = vmatprep.subr.mxu0 0.0
  %935 = vmatpush1.msra.mxu0 %v826
  %936 = vmatprep.subr.mxu0 0.0
  %937 = vmatpush1.msra.mxu0 %v827
  %938 = vmatprep.subr.mxu0 0.0
  %939 = vmatpush1.msra.mxu0 %v828
  %940 = vmatprep.subr.mxu0 0.0
  %941 = vmatpush1.msra.mxu0 %v829
  %942 = vmatprep.subr.mxu0 0.0
  %943 = vmatpush1.msra.mxu0 0.0
  %944 = vmatprep.subr.mxu0 0.0
  %945 = vmatpush1.msra.mxu0 0.0
  %946 = vmatprep.subr.mxu0 0.0
  %947 = vmatpush1.msra.mxu0 0.0
  %948 = vmatprep.subr.mxu0 0.0
  %949 = vmatpush1.msra.mxu0 0.0
  %950 = vmatprep.subr.mxu0 0.0
  %951 = vmatpush1.msra.mxu0 0.0
  %952 = vmatprep.subr.mxu0 0.0
  %953 = vmatpush1.msra.mxu0 0.0
  %954 = vmatprep.subr.mxu0 0.0
  %955 = vmatpush1.msra.mxu0 0.0
  %956 = vmatprep.subr.mxu0 0.0
  %957 = vmatpush1.msra.mxu0 0.0
  %958 = vmatprep.subr.mxu0 0.0
  %959 = vmatpush1.msra.mxu0 0.0
  %960 = vmatprep.subr.mxu0 0.0
  %961 = vmatpush1.msra.mxu0 0.0
  %962 = vmatprep.subr.mxu0 0.0
  %963 = vmatpush1.msra.mxu0 0.0
  %964 = vmatprep.subr.mxu0 0.0
  %965 = vmatpush1.msra.mxu0 0.0
  %966 = vmatprep.subr.mxu0 0.0
  %967 = vmatpush1.msra.mxu0 0.0
  %968 = vmatprep.subr.mxu0 0.0
  %969 = vmatpush1.msra.mxu0 0.0
  %970 = vmatprep.subr.mxu0 0.0
  %971 = vmatpush1.msra.mxu0 0.0
  %972 = vmatprep.subr.mxu0 0.0
  %973 = vmatpush1.msra.mxu0 0.0
  %974 = vmatprep.subr.mxu0 0.0
  %975 = vmatpush1.msra.mxu0 0.0
  %976 = vmatprep.subr.mxu0 0.0
  %977 = vmatpush1.msra.mxu0 0.0
  %978 = vmatprep.subr.mxu0 0.0
  %979 = vmatpush1.msra.mxu0 0.0
  %980 = vmatprep.subr.mxu0 0.0
  %981 = vmatpush1.msra.mxu0 0.0
  %982 = vmatprep.subr.mxu0 0.0
  %983 = vmatpush1.msra.mxu0 0.0
  %984 = vmatprep.subr.mxu0 0.0
  %985 = vmatpush1.msra.mxu0 0.0
  %986 = vmatprep.subr.mxu0 0.0
  %987 = vmatpush1.msra.mxu0 0.0
  %988 = vmatprep.subr.mxu0 0.0
  %989 = vmatpush1.msra.mxu0 0.0
  %990 = vmatprep.mubr.f32.mxu0 0.0
  %991 = vmatmul.mubr.f32.gmra.mrb[0].mxu0 %v831
  %v992 = vpop.f32.mrb[0].mxu0
  %v993 = vadd.f32 0.0, %v992
  %v994 = vpop.f32.mrb[0].mxu0
  %995 = vmatprep.mubr.f32.mxu0 0.0
  %996 = vmatmul.mubr.f32.gmra.mrb[0].mxu0 %v834
  %v997 = vpop.f32.mrb[0].mxu0
  %v998 = vadd.f32 0.0, %v997
  %v999 = vpop.f32.mrb[0].mxu0
  %1000 = vmatprep.mubr.f32.mxu0 0.0
  %1001 = vmatmul.mubr.f32.gmra.mrb[0].mxu0 %v837
  %v1002 = vpop.f32.mrb[0].mxu0
  %v1003 = vadd.f32 0.0, %v1002
  %v1004 = vpop.f32.mrb[0].mxu0
  %1005 = vmatprep.mubr.f32.mxu0 0.0
  %1006 = vmatmul.mubr.f32.gmra.mrb[0].mxu0 %v840
  %v1007 = vpop.f32.mrb[0].mxu0
  %v1008 = vadd.f32 0.0, %v1007
  %v1009 = vpop.f32.mrb[0].mxu0
  %1010 = vmatprep.mubr.f32.mxu0 0.0
  %1011 = vmatmul.mubr.f32.gmra.mrb[0].mxu0 %v843
  %v1012 = vpop.f32.mrb[0].mxu0
  %v1013 = vadd.f32 0.0, %v1012
  %v1014 = vpop.f32.mrb[0].mxu0
  %1015 = vmatprep.mubr.f32.mxu0 0.0
  %1016 = vmatmul.mubr.f32.gmra.mrb[0].mxu0 %v846
  %v1017 = vpop.f32.mrb[0].mxu0
  %v1018 = vadd.f32 0.0, %v1017
  %v1019 = vpop.f32.mrb[0].mxu0
  %1020 = vmatprep.mubr.f32.mxu0 0.0
  %1021 = vmatmul.mubr.f32.gmra.mrb[0].mxu0 %v849
  %v1022 = vpop.f32.mrb[0].mxu0
  %v1023 = vadd.f32 0.0, %v1022
  %v1024 = vpop.f32.mrb[0].mxu0
  %1025 = vmatprep.mubr.f32.mxu0 0.0
  %1026 = vmatmul.mubr.f32.gmra.mrb[0].mxu0 %v852
  %v1027 = vpop.f32.mrb[0].mxu0
  %v1028 = vadd.f32 0.0, %v1027
  %v1029 = vpop.f32.mrb[0].mxu0
  %1030 = vmatprep.mubr.f32.mxu0 0.0
  %1031 = vmatmul.mubr.f32.gmra.mrb[0].mxu0 %v855
  %v1032 = vpop.f32.mrb[0].mxu0
  %v1033 = vadd.f32 0.0, %v1032
  %v1034 = vpop.f32.mrb[0].mxu0
  %1035 = vmatprep.mubr.f32.mxu0 0.0
  %1036 = vmatmul.mubr.f32.gmra.mrb[0].mxu0 %v858
  %v1037 = vpop.f32.mrb[0].mxu0
  %v1038 = vadd.f32 0.0, %v1037
  %v1039 = vpop.f32.mrb[0].mxu0
  %1040 = vmatprep.mubr.f32.mxu0 0.0
  %1041 = vmatmul.mubr.f32.gmra.mrb[0].mxu0 %v861
  %v1042 = vpop.f32.mrb[0].mxu0
  %v1043 = vadd.f32 0.0, %v1042
  %v1044 = vpop.f32.mrb[0].mxu0
  %1045 = vmatprep.mubr.f32.mxu0 0.0
  %1046 = vmatmul.mubr.f32.gmra.mrb[0].mxu0 %v864
  %v1047 = vpop.f32.mrb[0].mxu0
  %v1048 = vadd.f32 0.0, %v1047
  %v1049 = vpop.f32.mrb[0].mxu0
  %1050 = vmatprep.mubr.f32.mxu0 0.0
  %1051 = vmatmul.mubr.f32.gmra.mrb[0].mxu0 %v867
  %v1052 = vpop.f32.mrb[0].mxu0
  %v1053 = vadd.f32 0.0, %v1052
  %v1054 = vpop.f32.mrb[0].mxu0
  %1055 = vmatprep.mubr.f32.mxu0 0.0
  %1056 = vmatmul.mubr.f32.gmra.mrb[0].mxu0 %v870
  %v1057 = vpop.f32.mrb[0].mxu0
  %v1058 = vadd.f32 0.0, %v1057
  %v1059 = vpop.f32.mrb[0].mxu0
  %1060 = vmatprep.mubr.f32.mxu0 0.0
  %1061 = vmatmul.mubr.f32.gmra.mrb[0].mxu0 %v873
  %v1062 = vpop.f32.mrb[0].mxu0
  %v1063 = vadd.f32 0.0, %v1062
  %v1064 = vpop.f32.mrb[0].mxu0
  %1065 = vmatprep.mubr.f32.mxu0 0.0
  %1066 = vmatmul.mubr.f32.gmra.mrb[0].mxu0 %v876
  %v1067 = vpop.f32.mrb[0].mxu0
  %v1068 = vadd.f32 0.0, %v1067
  %v1069 = vpop.f32.mrb[0].mxu0
  %1070 = vmatprep.mubr.f32.mxu0 0.0
  %1071 = vmatmul.mubr.f32.gmra.mrb[0].mxu0 %v879
  %v1072 = vpop.f32.mrb[0].mxu0
  %v1073 = vadd.f32 0.0, %v1072
  %v1074 = vpop.f32.mrb[0].mxu0
  %1075 = vmatprep.mubr.f32.mxu0 0.0
  %1076 = vmatmul.mubr.f32.gmra.mrb[0].mxu0 %v882
  %v1077 = vpop.f32.mrb[0].mxu0
  %v1078 = vadd.f32 0.0, %v1077
  %v1079 = vpop.f32.mrb[0].mxu0
  %1080 = vmatprep.mubr.f32.mxu0 0.0
  %1081 = vmatmul.mubr.f32.gmra.mrb[0].mxu0 %v885
  %v1082 = vpop.f32.mrb[0].mxu0
  %v1083 = vadd.f32 0.0, %v1082
  %v1084 = vpop.f32.mrb[0].mxu0
  %1085 = vmatprep.mubr.f32.mxu0 0.0
  %1086 = vmatmul.mubr.f32.gmra.mrb[0].mxu0 %v888
  %v1087 = vpop.f32.mrb[0].mxu0
  %v1088 = vadd.f32 0.0, %v1087
  %v1089 = vpop.f32.mrb[0].mxu0
  %1090 = vmatprep.mubr.f32.mxu0 0.0
  %1091 = vmatmul.mubr.f32.gmra.mrb[0].mxu0 %v891
  %v1092 = vpop.f32.mrb[0].mxu0
  %v1093 = vadd.f32 0.0, %v1092
  %v1094 = vpop.f32.mrb[0].mxu0
  %1095 = vmatprep.mubr.f32.mxu0 0.0
  %1096 = vmatmul.mubr.f32.gmra.mrb[0].mxu0 %v894
  %v1097 = vpop.f32.mrb[0].mxu0
  %v1098 = vadd.f32 0.0, %v1097
  %v1099 = vpop.f32.mrb[0].mxu0
  %1100 = vmatprep.mubr.f32.mxu0 0.0
  %1101 = vmatmul.mubr.f32.gmra.mrb[0].mxu0 %v897
  %v1102 = vpop.f32.mrb[0].mxu0
  %v1103 = vadd.f32 0.0, %v1102
  %v1104 = vpop.f32.mrb[0].mxu0
  %1105 = vmatprep.mubr.f32.mxu0 0.0
  %1106 = vmatmul.mubr.f32.gmra.mrb[0].mxu0 %v900
  %v1107 = vpop.f32.mrb[0].mxu0
  %v1108 = vadd.f32 0.0, %v1107
  %v1109 = vpop.f32.mrb[0].mxu0
  %1110 = vmatprep.mubr.f32.mxu0 0.0
  %1111 = vmatmul.mubr.f32.gmra.mrb[0].mxu0 %v903
  %v1112 = vpop.f32.mrb[0].mxu0
  %v1113 = vadd.f32 0.0, %v1112
  %v1114 = vpop.f32.mrb[0].mxu0
  %1115 = vmatprep.mubr.f32.mxu0 0.0
  %1116 = vmatmul.mubr.f32.gmra.mrb[0].mxu0 %v906
  %v1117 = vpop.f32.mrb[0].mxu0
  %v1118 = vadd.f32 0.0, %v1117
  %v1119 = vpop.f32.mrb[0].mxu0
  %1120 = vmatprep.mubr.f32.mxu0 0.0
  %1121 = vmatmul.mubr.f32.gmra.mrb[0].mxu0 %v909
  %v1122 = vpop.f32.mrb[0].mxu0
  %v1123 = vadd.f32 0.0, %v1122
  %v1124 = vpop.f32.mrb[0].mxu0
  %1125 = vmatprep.mubr.f32.mxu0 0.0
  %1126 = vmatmul.mubr.f32.gmra.mrb[0].mxu0 %v912
  %v1127 = vpop.f32.mrb[0].mxu0
  %v1128 = vadd.f32 0.0, %v1127
  %v1129 = vpop.f32.mrb[0].mxu0
  %1130 = vmatprep.mubr.f32.mxu0 0.0
  %1131 = vmatmul.mubr.f32.gmra.mrb[0].mxu0 %v915
  %v1132 = vpop.f32.mrb[0].mxu0
  %v1133 = vadd.f32 0.0, %v1132
  %v1134 = vpop.f32.mrb[0].mxu0
  %1135 = vmatprep.mubr.f32.mxu0 0.0
  %1136 = vmatmul.mubr.f32.gmra.mrb[0].mxu0 %v918
  %v1137 = vpop.f32.mrb[0].mxu0
  %v1138 = vadd.f32 0.0, %v1137
  %v1139 = vpop.f32.mrb[0].mxu0
  %1140 = vmatprep.mubr.f32.mxu0 0.0
  %1141 = vmatmul.mubr.f32.gmra.mrb[0].mxu0 %v921
  %v1142 = vpop.f32.mrb[0].mxu0
  %v1143 = vadd.f32 0.0, %v1142
  %v1144 = vpop.f32.mrb[0].mxu0
  %1145 = vmatprep.mubr.f32.mxu0 0.0
  %1146 = vmatmul.mubr.f32.gmra.mrb[0].mxu0 %v924
  %v1147 = vpop.f32.mrb[0].mxu0
  %v1148 = vadd.f32 0.0, %v1147
  %v1149 = vpop.f32.mrb[0].mxu0
  %1150 = vdwg.mxu0
  %s1151 = scalar_lea.vmem %s2, 256
  %v1152 = vld [vmem:[%s1151] sm:$0xff]
  %v1153 = vld [vmem:[%s1151 + $0x8] sm:$0xff]
  %v1154 = vld [vmem:[%s1151 + $0x10] sm:$0xff]
  %v1155 = vld [vmem:[%s1151 + $0x18] sm:$0xff]
  %v1156 = vld [vmem:[%s1151 + $0x20] sm:$0xff]
  %v1157 = vld [vmem:[%s1151 + $0x28] sm:$0xff]
  %v1158 = vld [vmem:[%s1151 + $0x30] sm:$0xff]
  %v1159 = vld [vmem:[%s1151 + $0x38] sm:$0xff]
  %v1160 = vld [vmem:[%s1151 + $0x40] sm:$0xff]
  %v1161 = vld [vmem:[%s1151 + $0x48] sm:$0xff]
  %v1162 = vld [vmem:[%s1151 + $0x50] sm:$0xff]
  %v1163 = vld [vmem:[%s1151 + $0x58] sm:$0xff]
  %v1164 = vld [vmem:[%s1151 + $0x60] sm:$0xff]
  %v1165 = vld [vmem:[%s1151 + $0x68] sm:$0xff]
  %v1166 = vld [vmem:[%s1151 + $0x70] sm:$0xff]
  %v1167 = vld [vmem:[%s1151 + $0x78] sm:$0xff]
  %v1168 = vld [vmem:[%s1151 + $0x80] sm:$0xff]
  %v1169 = vld [vmem:[%s1151 + $0x88] sm:$0xff]
  %v1170 = vld [vmem:[%s1151 + $0x90] sm:$0xff]
  %v1171 = vld [vmem:[%s1151 + $0x98] sm:$0xff]
  %v1172 = vld [vmem:[%s1151 + $0xa0] sm:$0xff]
  %v1173 = vld [vmem:[%s1151 + $0xa8] sm:$0xff]
  %v1174 = vld [vmem:[%s1151 + $0xb0] sm:$0xff]
  %v1175 = vld [vmem:[%s1151 + $0xb8] sm:$0xff]
  %v1176 = vld [vmem:[%s1151 + $0xc0] sm:$0xff]
  %v1177 = vld [vmem:[%s1151 + $0xc8] sm:$0xff]
  %v1178 = vld [vmem:[%s1151 + $0xd0] sm:$0xff]
  %v1179 = vld [vmem:[%s1151 + $0xd8] sm:$0xff]
  %v1180 = vld [vmem:[%s1151 + $0xe0] sm:$0xff]
  %v1181 = vld [vmem:[%s1151 + $0xe8] sm:$0xff]
  %v1182 = vld [vmem:[%s1151 + $0xf0] sm:$0xff]
  %v1183 = vld [vmem:[%s1151 + $0xf8] sm:$0xff]
  %1216 = vrot.lane.b32.xlu0 %v993, 4
  %v1217 = vpop.permute.xlu0 %1216
  %1218 = vrot.lane.b32.xlu0 %v998, 4
  %v1219 = vpop.permute.xlu0 %1218
  %1220 = vrot.lane.b32.xlu0 %v1003, 4
  %v1221 = vpop.permute.xlu0 %1220
  %1222 = vrot.lane.b32.xlu0 %v1008, 4
  %v1223 = vpop.permute.xlu0 %1222
  %1224 = vrot.lane.b32.xlu0 %v1013, 4
  %v1225 = vpop.permute.xlu0 %1224
  %1226 = vrot.lane.b32.xlu0 %v1018, 4
  %v1227 = vpop.permute.xlu0 %1226
  %1228 = vrot.lane.b32.xlu0 %v1023, 4
  %v1229 = vpop.permute.xlu0 %1228
  %1230 = vrot.lane.b32.xlu0 %v1028, 4
  %v1231 = vpop.permute.xlu0 %1230
  %1232 = vrot.lane.b32.xlu0 %v1033, 4
  %v1233 = vpop.permute.xlu0 %1232
  %1234 = vrot.lane.b32.xlu0 %v1038, 4
  %v1235 = vpop.permute.xlu0 %1234
  %1236 = vrot.lane.b32.xlu0 %v1043, 4
  %v1237 = vpop.permute.xlu0 %1236
  %1238 = vrot.lane.b32.xlu0 %v1048, 4
  %v1239 = vpop.permute.xlu0 %1238
  %1240 = vrot.lane.b32.xlu0 %v1053, 4
  %v1241 = vpop.permute.xlu0 %1240
  %1242 = vrot.lane.b32.xlu0 %v1058, 4
  %v1243 = vpop.permute.xlu0 %1242
  %1244 = vrot.lane.b32.xlu0 %v1063, 4
  %v1245 = vpop.permute.xlu0 %1244
  %1246 = vrot.lane.b32.xlu0 %v1068, 4
  %v1247 = vpop.permute.xlu0 %1246
  %1248 = vrot.lane.b32.xlu0 %v1073, 4
  %v1249 = vpop.permute.xlu0 %1248
  %1250 = vrot.lane.b32.xlu0 %v1078, 4
  %v1251 = vpop.permute.xlu0 %1250
  %1252 = vrot.lane.b32.xlu0 %v1083, 4
  %v1253 = vpop.permute.xlu0 %1252
  %1254 = vrot.lane.b32.xlu0 %v1088, 4
  %v1255 = vpop.permute.xlu0 %1254
  %1256 = vrot.lane.b32.xlu0 %v1093, 4
  %v1257 = vpop.permute.xlu0 %1256
  %1258 = vrot.lane.b32.xlu0 %v1098, 4
  %v1259 = vpop.permute.xlu0 %1258
  %1260 = vrot.lane.b32.xlu0 %v1103, 4
  %v1261 = vpop.permute.xlu0 %1260
  %1262 = vrot.lane.b32.xlu0 %v1108, 4
  %v1263 = vpop.permute.xlu0 %1262
  %1264 = vrot.lane.b32.xlu0 %v1113, 4
  %v1265 = vpop.permute.xlu0 %1264
  %1266 = vrot.lane.b32.xlu0 %v1118, 4
  %v1267 = vpop.permute.xlu0 %1266
  %1268 = vrot.lane.b32.xlu0 %v1123, 4
  %v1269 = vpop.permute.xlu0 %1268
  %1270 = vrot.lane.b32.xlu0 %v1128, 4
  %v1271 = vpop.permute.xlu0 %1270
  %1272 = vrot.lane.b32.xlu0 %v1133, 4
  %v1273 = vpop.permute.xlu0 %1272
  %1274 = vrot.lane.b32.xlu0 %v1138, 4
  %v1275 = vpop.permute.xlu0 %1274
  %1276 = vrot.lane.b32.xlu0 %v1143, 4
  %v1277 = vpop.permute.xlu0 %1276
  %1278 = vrot.lane.b32.xlu0 %v1148, 4
  %v1279 = vpop.permute.xlu0 %1278
  %v1312 = vsel %vm114, %v1152, %v1217
  %v1313 = vsel %vm114, %v1153, %v1219
  %v1314 = vsel %vm114, %v1154, %v1221
  %v1315 = vsel %vm114, %v1155, %v1223
  %v1316 = vsel %vm114, %v1156, %v1225
  %v1317 = vsel %vm114, %v1157, %v1227
  %v1318 = vsel %vm114, %v1158, %v1229
  %v1319 = vsel %vm114, %v1159, %v1231
  %v1320 = vsel %vm114, %v1160, %v1233
  %v1321 = vsel %vm114, %v1161, %v1235
  %v1322 = vsel %vm114, %v1162, %v1237
  %v1323 = vsel %vm114, %v1163, %v1239
  %v1324 = vsel %vm114, %v1164, %v1241
  %v1325 = vsel %vm114, %v1165, %v1243
  %v1326 = vsel %vm114, %v1166, %v1245
  %v1327 = vsel %vm114, %v1167, %v1247
  %v1328 = vsel %vm114, %v1168, %v1249
  %v1329 = vsel %vm114, %v1169, %v1251
  %v1330 = vsel %vm114, %v1170, %v1253
  %v1331 = vsel %vm114, %v1171, %v1255
  %v1332 = vsel %vm114, %v1172, %v1257
  %v1333 = vsel %vm114, %v1173, %v1259
  %v1334 = vsel %vm114, %v1174, %v1261
  %v1335 = vsel %vm114, %v1175, %v1263
  %v1336 = vsel %vm114, %v1176, %v1265
  %v1337 = vsel %vm114, %v1177, %v1267
  %v1338 = vsel %vm114, %v1178, %v1269
  %v1339 = vsel %vm114, %v1179, %v1271
  %v1340 = vsel %vm114, %v1180, %v1273
  %v1341 = vsel %vm114, %v1181, %v1275
  %v1342 = vsel %vm114, %v1182, %v1277
  %v1343 = vsel %vm114, %v1183, %v1279
  %s1344 = scalar_lea.vmem [#allocation2], 456
  %1345 = vst.msk [vmem:[%s1344 + $0x1] sm:$0xff] %vm26, %v1312
  %1346 = vst.msk [vmem:[%s1344 + $0x9] sm:$0xff] %vm26, %v1313
  %1347 = vst.msk [vmem:[%s1344 + $0x19] sm:$0xff] %vm26, %v1314
  %1348 = vst.msk [vmem:[%s1344 + $0x21] sm:$0xff] %vm26, %v1315
  %1349 = vst.msk [vmem:[%s1344 + $0x31] sm:$0xff] %vm26, %v1316
  %1350 = vst.msk [vmem:[%s1344 + $0x39] sm:$0xff] %vm26, %v1317
  %1351 = vst.msk [vmem:[%s1344 + $0x49] sm:$0xff] %vm26, %v1318
  %1352 = vst.msk [vmem:[%s1344 + $0x51] sm:$0xff] %vm26, %v1319
  %1353 = vst.msk [vmem:[%s1344 + $0x61] sm:$0xff] %vm26, %v1320
  %1354 = vst.msk [vmem:[%s1344 + $0x69] sm:$0xff] %vm26, %v1321
  %1355 = vst.msk [vmem:[%s1344 + $0x79] sm:$0xff] %vm26, %v1322
  %1356 = vst.msk [vmem:[%s1344 + $0x81] sm:$0xff] %vm26, %v1323
  %1357 = vst.msk [vmem:[%s1344 + $0x91] sm:$0xff] %vm26, %v1324
  %1358 = vst.msk [vmem:[%s1344 + $0x99] sm:$0xff] %vm26, %v1325
  %1359 = vst.msk [vmem:[%s1344 + $0xa9] sm:$0xff] %vm26, %v1326
  %1360 = vst.msk [vmem:[%s1344 + $0xb1] sm:$0xff] %vm26, %v1327
  %1361 = vst.msk [vmem:[%s1344 + $0xc1] sm:$0xff] %vm26, %v1328
  %1362 = vst.msk [vmem:[%s1344 + $0xc9] sm:$0xff] %vm26, %v1329
  %1363 = vst.msk [vmem:[%s1344 + $0xd9] sm:$0xff] %vm26, %v1330
  %1364 = vst.msk [vmem:[%s1344 + $0xe1] sm:$0xff] %vm26, %v1331
  %1365 = vst.msk [vmem:[%s1344 + $0xf1] sm:$0xff] %vm26, %v1332
  %1366 = vst.msk [vmem:[%s1344 + $0xf9] sm:$0xff] %vm26, %v1333
  %1367 = vst.msk [vmem:[%s1344 + $0x109] sm:$0xff] %vm26, %v1334
  %1368 = vst.msk [vmem:[%s1344 + $0x111] sm:$0xff] %vm26, %v1335
  %1369 = vst.msk [vmem:[%s1344 + $0x121] sm:$0xff] %vm26, %v1336
  %1370 = vst.msk [vmem:[%s1344 + $0x129] sm:$0xff] %vm26, %v1337
  %1371 = vst.msk [vmem:[%s1344 + $0x139] sm:$0xff] %vm26, %v1338
  %1372 = vst.msk [vmem:[%s1344 + $0x141] sm:$0xff] %vm26, %v1339
  %1373 = vst.msk [vmem:[%s1344 + $0x151] sm:$0xff] %vm26, %v1340
  %1374 = vst.msk [vmem:[%s1344 + $0x159] sm:$0xff] %vm26, %v1341
  %1375 = vst.msk [vmem:[%s1344 + $0x169] sm:$0xff] %vm26, %v1342
  %1376 = vst.msk [vmem:[%s1344 + $0x171] sm:$0xff] %vm26, %v1343
  %v1377 = vld [vmem:[#allocation2] sm:$0xff]
  %v1378 = vld [vmem:[#allocation2 + $0x8] sm:$0xff]
  %v1379 = vld [vmem:[#allocation2 + $0x18] sm:$0xff]
  %v1380 = vld [vmem:[#allocation2 + $0x20] sm:$0xff]
  %v1381 = vld [vmem:[#allocation2 + $0x30] sm:$0xff]
  %v1382 = vld [vmem:[#allocation2 + $0x38] sm:$0xff]
  %v1383 = vld [vmem:[#allocation2 + $0x48] sm:$0xff]
  %v1384 = vld [vmem:[#allocation2 + $0x50] sm:$0xff]
  %v1385 = vld [vmem:[#allocation2 + $0x60] sm:$0xff]
  %v1386 = vld [vmem:[#allocation2 + $0x68] sm:$0xff]
  %v1387 = vld [vmem:[#allocation2 + $0x78] sm:$0xff]
  %v1388 = vld [vmem:[#allocation2 + $0x80] sm:$0xff]
  %v1389 = vld [vmem:[#allocation2 + $0x90] sm:$0xff]
  %v1390 = vld [vmem:[#allocation2 + $0x98] sm:$0xff]
  %v1391 = vld [vmem:[#allocation2 + $0xa8] sm:$0xff]
  %v1392 = vld [vmem:[#allocation2 + $0xb0] sm:$0xff]
  %v1393 = vld [vmem:[#allocation2 + $0xc0] sm:$0xff]
  %v1394 = vld [vmem:[#allocation2 + $0xc8] sm:$0xff]
  %v1395 = vld [vmem:[#allocation2 + $0xd8] sm:$0xff]
  %v1396 = vld [vmem:[#allocation2 + $0xe0] sm:$0xff]
  %v1397 = vld [vmem:[#allocation2 + $0xf0] sm:$0xff]
  %v1398 = vld [vmem:[#allocation2 + $0xf8] sm:$0xff]
  %v1399 = vld [vmem:[#allocation2 + $0x108] sm:$0xff]
  %v1400 = vld [vmem:[#allocation2 + $0x110] sm:$0xff]
  %v1401 = vld [vmem:[#allocation2 + $0x120] sm:$0xff]
  %v1402 = vld [vmem:[#allocation2 + $0x128] sm:$0xff]
  %v1403 = vld [vmem:[#allocation2 + $0x138] sm:$0xff]
  %v1404 = vld [vmem:[#allocation2 + $0x140] sm:$0xff]
  %v1405 = vld [vmem:[#allocation2 + $0x150] sm:$0xff]
  %v1406 = vld [vmem:[#allocation2 + $0x158] sm:$0xff]
  %v1407 = vld [vmem:[#allocation2 + $0x168] sm:$0xff]
  %v1408 = vld [vmem:[#allocation2 + $0x170] sm:$0xff]
  %v1409 = vld [vmem:[#allocation2 + $0x1b0] sm:$0xff]
  %v1410 = vld [vmem:[#allocation2 + $0x1b8] sm:$0xff]
  %v1411 = vld [vmem:[#allocation2 + $0x1c8] sm:$0xff]
  %v1412 = vld [vmem:[#allocation2 + $0x1d0] sm:$0xff]
  %v1413 = vld [vmem:[#allocation2 + $0x1e0] sm:$0xff]
  %v1414 = vld [vmem:[#allocation2 + $0x1e8] sm:$0xff]
  %v1415 = vld [vmem:[#allocation2 + $0x1f8] sm:$0xff]
  %v1416 = vld [vmem:[#allocation2 + $0x200] sm:$0xff]
  %v1417 = vld [vmem:[#allocation2 + $0x210] sm:$0xff]
  %v1418 = vld [vmem:[#allocation2 + $0x218] sm:$0xff]
  %v1419 = vld [vmem:[#allocation2 + $0x228] sm:$0xff]
  %v1420 = vld [vmem:[#allocation2 + $0x230] sm:$0xff]
  %v1421 = vld [vmem:[#allocation2 + $0x240] sm:$0xff]
  %v1422 = vld [vmem:[#allocation2 + $0x248] sm:$0xff]
  %v1423 = vld [vmem:[#allocation2 + $0x258] sm:$0xff]
  %v1424 = vld [vmem:[#allocation2 + $0x260] sm:$0xff]
  %v1425 = vld [vmem:[#allocation2 + $0x270] sm:$0xff]
  %v1426 = vld [vmem:[#allocation2 + $0x278] sm:$0xff]
  %v1427 = vld [vmem:[#allocation2 + $0x288] sm:$0xff]
  %v1428 = vld [vmem:[#allocation2 + $0x290] sm:$0xff]
  %v1429 = vld [vmem:[#allocation2 + $0x2a0] sm:$0xff]
  %v1430 = vld [vmem:[#allocation2 + $0x2a8] sm:$0xff]
  %v1431 = vld [vmem:[#allocation2 + $0x2b8] sm:$0xff]
  %v1432 = vld [vmem:[#allocation2 + $0x2c0] sm:$0xff]
  %v1433 = vld [vmem:[#allocation2 + $0x2d0] sm:$0xff]
  %v1434 = vld [vmem:[#allocation2 + $0x2d8] sm:$0xff]
  %v1435 = vld [vmem:[#allocation2 + $0x2e8] sm:$0xff]
  %v1436 = vld [vmem:[#allocation2 + $0x2f0] sm:$0xff]
  %v1437 = vld [vmem:[#allocation2 + $0x300] sm:$0xff]
  %v1438 = vld [vmem:[#allocation2 + $0x308] sm:$0xff]
  %v1439 = vld [vmem:[#allocation2 + $0x318] sm:$0xff]
  %v1440 = vld [vmem:[#allocation2 + $0x320] sm:$0xff]
  %v1441 = vld [vmem:[#allocation2 + $0x1] sm:$0xff]
  %v1442 = vld [vmem:[#allocation2 + $0x9] sm:$0xff]
  %v1443 = vld [vmem:[#allocation2 + $0x19] sm:$0xff]
  %v1444 = vld [vmem:[#allocation2 + $0x21] sm:$0xff]
  %v1445 = vld [vmem:[#allocation2 + $0x31] sm:$0xff]
  %v1446 = vld [vmem:[#allocation2 + $0x39] sm:$0xff]
  %v1447 = vld [vmem:[#allocation2 + $0x49] sm:$0xff]
  %v1448 = vld [vmem:[#allocation2 + $0x51] sm:$0xff]
  %v1449 = vld [vmem:[#allocation2 + $0x61] sm:$0xff]
  %v1450 = vld [vmem:[#allocation2 + $0x69] sm:$0xff]
  %v1451 = vld [vmem:[#allocation2 + $0x79] sm:$0xff]
  %v1452 = vld [vmem:[#allocation2 + $0x81] sm:$0xff]
  %v1453 = vld [vmem:[#allocation2 + $0x91] sm:$0xff]
  %v1454 = vld [vmem:[#allocation2 + $0x99] sm:$0xff]
  %v1455 = vld [vmem:[#allocation2 + $0xa9] sm:$0xff]
  %v1456 = vld [vmem:[#allocation2 + $0xb1] sm:$0xff]
  %v1457 = vld [vmem:[#allocation2 + $0xc1] sm:$0xff]
  %v1458 = vld [vmem:[#allocation2 + $0xc9] sm:$0xff]
  %v1459 = vld [vmem:[#allocation2 + $0xd9] sm:$0xff]
  %v1460 = vld [vmem:[#allocation2 + $0xe1] sm:$0xff]
  %v1461 = vld [vmem:[#allocation2 + $0xf1] sm:$0xff]
  %v1462 = vld [vmem:[#allocation2 + $0xf9] sm:$0xff]
  %v1463 = vld [vmem:[#allocation2 + $0x109] sm:$0xff]
  %v1464 = vld [vmem:[#allocation2 + $0x111] sm:$0xff]
  %v1465 = vld [vmem:[#allocation2 + $0x121] sm:$0xff]
  %v1466 = vld [vmem:[#allocation2 + $0x129] sm:$0xff]
  %v1467 = vld [vmem:[#allocation2 + $0x139] sm:$0xff]
  %v1468 = vld [vmem:[#allocation2 + $0x141] sm:$0xff]
  %v1469 = vld [vmem:[#allocation2 + $0x151] sm:$0xff]
  %v1470 = vld [vmem:[#allocation2 + $0x159] sm:$0xff]
  %v1471 = vld [vmem:[#allocation2 + $0x169] sm:$0xff]
  %v1472 = vld [vmem:[#allocation2 + $0x171] sm:$0xff]
  %v1473 = vld [vmem:[#allocation2 + $0x1b1] sm:$0xff]
  %v1474 = vld [vmem:[#allocation2 + $0x1b9] sm:$0xff]
  %v1475 = vld [vmem:[#allocation2 + $0x1c9] sm:$0xff]
  %v1476 = vld [vmem:[#allocation2 + $0x1d1] sm:$0xff]
  %v1477 = vld [vmem:[#allocation2 + $0x1e1] sm:$0xff]
  %v1478 = vld [vmem:[#allocation2 + $0x1e9] sm:$0xff]
  %v1479 = vld [vmem:[#allocation2 + $0x1f9] sm:$0xff]
  %v1480 = vld [vmem:[#allocation2 + $0x201] sm:$0xff]
  %v1481 = vld [vmem:[#allocation2 + $0x211] sm:$0xff]
  %v1482 = vld [vmem:[#allocation2 + $0x219] sm:$0xff]
  %v1483 = vld [vmem:[#allocation2 + $0x229] sm:$0xff]
  %v1484 = vld [vmem:[#allocation2 + $0x231] sm:$0xff]
  %v1485 = vld [vmem:[#allocation2 + $0x241] sm:$0xff]
  %v1486 = vld [vmem:[#allocation2 + $0x249] sm:$0xff]
  %v1487 = vld [vmem:[#allocation2 + $0x259] sm:$0xff]
  %v1488 = vld [vmem:[#allocation2 + $0x261] sm:$0xff]
  %v1489 = vld [vmem:[#allocation2 + $0x271] sm:$0xff]
  %v1490 = vld [vmem:[#allocation2 + $0x279] sm:$0xff]
  %v1491 = vld [vmem:[#allocation2 + $0x289] sm:$0xff]
  %v1492 = vld [vmem:[#allocation2 + $0x291] sm:$0xff]
  %v1493 = vld [vmem:[#allocation2 + $0x2a1] sm:$0xff]
  %v1494 = vld [vmem:[#allocation2 + $0x2a9] sm:$0xff]
  %v1495 = vld [vmem:[#allocation2 + $0x2b9] sm:$0xff]
  %v1496 = vld [vmem:[#allocation2 + $0x2c1] sm:$0xff]
  %v1497 = vld [vmem:[#allocation2 + $0x2d1] sm:$0xff]
  %v1498 = vld [vmem:[#allocation2 + $0x2d9] sm:$0xff]
  %v1499 = vld [vmem:[#allocation2 + $0x2e9] sm:$0xff]
  %v1500 = vld [vmem:[#allocation2 + $0x2f1] sm:$0xff]
  %v1501 = vld [vmem:[#allocation2 + $0x301] sm:$0xff]
  %v1502 = vld [vmem:[#allocation2 + $0x309] sm:$0xff]
  %v1503 = vld [vmem:[#allocation2 + $0x319] sm:$0xff]
  %v1504 = vld [vmem:[#allocation2 + $0x321] sm:$0xff]
  %v1505 = vld [vmem:[#allocation2 + $0x2] sm:$0xff]
  %v1506 = vld [vmem:[#allocation2 + $0xa] sm:$0xff]
  %v1507 = vld [vmem:[#allocation2 + $0x1a] sm:$0xff]
  %v1508 = vld [vmem:[#allocation2 + $0x22] sm:$0xff]
  %v1509 = vld [vmem:[#allocation2 + $0x32] sm:$0xff]
  %v1510 = vld [vmem:[#allocation2 + $0x3a] sm:$0xff]
  %v1511 = vld [vmem:[#allocation2 + $0x4a] sm:$0xff]
  %v1512 = vld [vmem:[#allocation2 + $0x52] sm:$0xff]
  %v1513 = vld [vmem:[#allocation2 + $0x62] sm:$0xff]
  %v1514 = vld [vmem:[#allocation2 + $0x6a] sm:$0xff]
  %v1515 = vld [vmem:[#allocation2 + $0x7a] sm:$0xff]
  %v1516 = vld [vmem:[#allocation2 + $0x82] sm:$0xff]
  %v1517 = vld [vmem:[#allocation2 + $0x92] sm:$0xff]
  %v1518 = vld [vmem:[#allocation2 + $0x9a] sm:$0xff]
  %v1519 = vld [vmem:[#allocation2 + $0xaa] sm:$0xff]
  %v1520 = vld [vmem:[#allocation2 + $0xb2] sm:$0xff]
  %v1521 = vld [vmem:[#allocation2 + $0xc2] sm:$0xff]
  %v1522 = vld [vmem:[#allocation2 + $0xca] sm:$0xff]
  %v1523 = vld [vmem:[#allocation2 + $0xda] sm:$0xff]
  %v1524 = vld [vmem:[#allocation2 + $0xe2] sm:$0xff]
  %v1525 = vld [vmem:[#allocation2 + $0xf2] sm:$0xff]
  %v1526 = vld [vmem:[#allocation2 + $0xfa] sm:$0xff]
  %v1527 = vld [vmem:[#allocation2 + $0x10a] sm:$0xff]
  %v1528 = vld [vmem:[#allocation2 + $0x112] sm:$0xff]
  %v1529 = vld [vmem:[#allocation2 + $0x122] sm:$0xff]
  %v1530 = vld [vmem:[#allocation2 + $0x12a] sm:$0xff]
  %v1531 = vld [vmem:[#allocation2 + $0x13a] sm:$0xff]
  %v1532 = vld [vmem:[#allocation2 + $0x142] sm:$0xff]
  %v1533 = vld [vmem:[#allocation2 + $0x152] sm:$0xff]
  %v1534 = vld [vmem:[#allocation2 + $0x15a] sm:$0xff]
  %v1535 = vld [vmem:[#allocation2 + $0x16a] sm:$0xff]
  %v1536 = vld [vmem:[#allocation2 + $0x172] sm:$0xff]
  %v1537 = vld [vmem:[#allocation2 + $0x1b2] sm:$0xff]
  %v1538 = vld [vmem:[#allocation2 + $0x1ba] sm:$0xff]
  %v1539 = vld [vmem:[#allocation2 + $0x1ca] sm:$0xff]
  %v1540 = vld [vmem:[#allocation2 + $0x1d2] sm:$0xff]
  %v1541 = vld [vmem:[#allocation2 + $0x1e2] sm:$0xff]
  %v1542 = vld [vmem:[#allocation2 + $0x1ea] sm:$0xff]
  %v1543 = vld [vmem:[#allocation2 + $0x1fa] sm:$0xff]
  %v1544 = vld [vmem:[#allocation2 + $0x202] sm:$0xff]
  %v1545 = vld [vmem:[#allocation2 + $0x212] sm:$0xff]
  %v1546 = vld [vmem:[#allocation2 + $0x21a] sm:$0xff]
  %v1547 = vld [vmem:[#allocation2 + $0x22a] sm:$0xff]
  %v1548 = vld [vmem:[#allocation2 + $0x232] sm:$0xff]
  %v1549 = vld [vmem:[#allocation2 + $0x242] sm:$0xff]
  %v1550 = vld [vmem:[#allocation2 + $0x24a] sm:$0xff]
  %v1551 = vld [vmem:[#allocation2 + $0x25a] sm:$0xff]
  %v1552 = vld [vmem:[#allocation2 + $0x262] sm:$0xff]
  %v1553 = vld [vmem:[#allocation2 + $0x272] sm:$0xff]
  %v1554 = vld [vmem:[#allocation2 + $0x27a] sm:$0xff]
  %v1555 = vld [vmem:[#allocation2 + $0x28a] sm:$0xff]
  %v1556 = vld [vmem:[#allocation2 + $0x292] sm:$0xff]
  %v1557 = vld [vmem:[#allocation2 + $0x2a2] sm:$0xff]
  %v1558 = vld [vmem:[#allocation2 + $0x2aa] sm:$0xff]
  %v1559 = vld [vmem:[#allocation2 + $0x2ba] sm:$0xff]
  %v1560 = vld [vmem:[#allocation2 + $0x2c2] sm:$0xff]
  %v1561 = vld [vmem:[#allocation2 + $0x2d2] sm:$0xff]
  %v1562 = vld [vmem:[#allocation2 + $0x2da] sm:$0xff]
  %v1563 = vld [vmem:[#allocation2 + $0x2ea] sm:$0xff]
  %v1564 = vld [vmem:[#allocation2 + $0x2f2] sm:$0xff]
  %v1565 = vld [vmem:[#allocation2 + $0x302] sm:$0xff]
  %v1566 = vld [vmem:[#allocation2 + $0x30a] sm:$0xff]
  %v1567 = vld [vmem:[#allocation2 + $0x31a] sm:$0xff]
  %v1568 = vld [vmem:[#allocation2 + $0x322] sm:$0xff]
  %v1569 = vld [vmem:[%s756] sm:$0xff]
  %v1570 = vld [vmem:[%s756 + $0x8] sm:$0xff]
  %v1571 = vld [vmem:[%s756 + $0x18] sm:$0xff]
  %v1572 = vld [vmem:[%s756 + $0x20] sm:$0xff]
  %v1573 = vld [vmem:[%s756 + $0x30] sm:$0xff]
  %v1574 = vld [vmem:[%s756 + $0x38] sm:$0xff]
  %v1575 = vld [vmem:[%s756 + $0x48] sm:$0xff]
  %v1576 = vld [vmem:[%s756 + $0x50] sm:$0xff]
  %v1577 = vld [vmem:[%s756 + $0x60] sm:$0xff]
  %v1578 = vld [vmem:[%s756 + $0x68] sm:$0xff]
  %v1579 = vld [vmem:[%s756 + $0x78] sm:$0xff]
  %v1580 = vld [vmem:[%s756 + $0x80] sm:$0xff]
  %v1581 = vld [vmem:[%s756 + $0x90] sm:$0xff]
  %v1582 = vld [vmem:[%s756 + $0x98] sm:$0xff]
  %v1583 = vld [vmem:[%s756 + $0xa8] sm:$0xff]
  %v1584 = vld [vmem:[%s756 + $0xb0] sm:$0xff]
  %v1585 = vld [vmem:[%s756 + $0xc0] sm:$0xff]
  %v1586 = vld [vmem:[%s756 + $0xc8] sm:$0xff]
  %v1587 = vld [vmem:[%s756 + $0xd8] sm:$0xff]
  %v1588 = vld [vmem:[%s756 + $0xe0] sm:$0xff]
  %v1589 = vld [vmem:[%s756 + $0xf0] sm:$0xff]
  %v1590 = vld [vmem:[%s756 + $0xf8] sm:$0xff]
  %v1591 = vld [vmem:[%s756 + $0x108] sm:$0xff]
  %v1592 = vld [vmem:[%s756 + $0x110] sm:$0xff]
  %v1593 = vld [vmem:[%s756 + $0x120] sm:$0xff]
  %v1594 = vld [vmem:[%s756 + $0x128] sm:$0xff]
  %v1595 = vld [vmem:[%s756 + $0x138] sm:$0xff]
  %v1596 = vld [vmem:[%s756 + $0x140] sm:$0xff]
  %v1597 = vld [vmem:[%s756 + $0x150] sm:$0xff]
  %v1598 = vld [vmem:[%s756 + $0x158] sm:$0xff]
  %v1599 = vld [vmem:[%s756 + $0x168] sm:$0xff]
  %v1600 = vld [vmem:[%s756 + $0x170] sm:$0xff]
  %v1601 = vld [vmem:[%s756 + $0x1b0] sm:$0xff]
  %v1602 = vld [vmem:[%s756 + $0x1b8] sm:$0xff]
  %v1603 = vld [vmem:[%s756 + $0x1c8] sm:$0xff]
  %v1604 = vld [vmem:[%s756 + $0x1d0] sm:$0xff]
  %v1605 = vld [vmem:[%s756 + $0x1e0] sm:$0xff]
  %v1606 = vld [vmem:[%s756 + $0x1e8] sm:$0xff]
  %v1607 = vld [vmem:[%s756 + $0x1f8] sm:$0xff]
  %v1608 = vld [vmem:[%s756 + $0x200] sm:$0xff]
  %v1609 = vld [vmem:[%s756 + $0x210] sm:$0xff]
  %v1610 = vld [vmem:[%s756 + $0x218] sm:$0xff]
  %v1611 = vld [vmem:[%s756 + $0x228] sm:$0xff]
  %v1612 = vld [vmem:[%s756 + $0x230] sm:$0xff]
  %v1613 = vld [vmem:[%s756 + $0x240] sm:$0xff]
  %v1614 = vld [vmem:[%s756 + $0x248] sm:$0xff]
  %v1615 = vld [vmem:[%s756 + $0x258] sm:$0xff]
  %v1616 = vld [vmem:[%s756 + $0x260] sm:$0xff]
  %v1617 = vld [vmem:[%s756 + $0x270] sm:$0xff]
  %v1618 = vld [vmem:[%s756 + $0x278] sm:$0xff]
  %v1619 = vld [vmem:[%s756 + $0x288] sm:$0xff]
  %v1620 = vld [vmem:[%s756 + $0x290] sm:$0xff]
  %v1621 = vld [vmem:[%s756 + $0x2a0] sm:$0xff]
  %v1622 = vld [vmem:[%s756 + $0x2a8] sm:$0xff]
  %v1623 = vld [vmem:[%s756 + $0x2b8] sm:$0xff]
  %v1624 = vld [vmem:[%s756 + $0x2c0] sm:$0xff]
  %v1625 = vld [vmem:[%s756 + $0x2d0] sm:$0xff]
  %v1626 = vld [vmem:[%s756 + $0x2d8] sm:$0xff]
  %v1627 = vld [vmem:[%s756 + $0x2e8] sm:$0xff]
  %v1628 = vld [vmem:[%s756 + $0x2f0] sm:$0xff]
  %v1629 = vld [vmem:[%s756 + $0x300] sm:$0xff]
  %v1630 = vld [vmem:[%s756 + $0x308] sm:$0xff]
  %v1631 = vld [vmem:[%s756 + $0x318] sm:$0xff]
  %v1632 = vld [vmem:[%s756 + $0x320] sm:$0xff]
  %v1633 = vld [vmem:[%s756 + $0x1] sm:$0xff]
  %v1634 = vld [vmem:[%s756 + $0x9] sm:$0xff]
  %v1635 = vld [vmem:[%s756 + $0x19] sm:$0xff]
  %v1636 = vld [vmem:[%s756 + $0x21] sm:$0xff]
  %v1637 = vld [vmem:[%s756 + $0x31] sm:$0xff]
  %v1638 = vld [vmem:[%s756 + $0x39] sm:$0xff]
  %v1639 = vld [vmem:[%s756 + $0x49] sm:$0xff]
  %v1640 = vld [vmem:[%s756 + $0x51] sm:$0xff]
  %v1641 = vld [vmem:[%s756 + $0x61] sm:$0xff]
  %v1642 = vld [vmem:[%s756 + $0x69] sm:$0xff]
  %v1643 = vld [vmem:[%s756 + $0x79] sm:$0xff]
  %v1644 = vld [vmem:[%s756 + $0x81] sm:$0xff]
  %v1645 = vld [vmem:[%s756 + $0x91] sm:$0xff]
  %v1646 = vld [vmem:[%s756 + $0x99] sm:$0xff]
  %v1647 = vld [vmem:[%s756 + $0xa9] sm:$0xff]
  %v1648 = vld [vmem:[%s756 + $0xb1] sm:$0xff]
  %v1649 = vld [vmem:[%s756 + $0xc1] sm:$0xff]
  %v1650 = vld [vmem:[%s756 + $0xc9] sm:$0xff]
  %v1651 = vld [vmem:[%s756 + $0xd9] sm:$0xff]
  %v1652 = vld [vmem:[%s756 + $0xe1] sm:$0xff]
  %v1653 = vld [vmem:[%s756 + $0xf1] sm:$0xff]
  %v1654 = vld [vmem:[%s756 + $0xf9] sm:$0xff]
  %v1655 = vld [vmem:[%s756 + $0x109] sm:$0xff]
  %v1656 = vld [vmem:[%s756 + $0x111] sm:$0xff]
  %v1657 = vld [vmem:[%s756 + $0x121] sm:$0xff]
  %v1658 = vld [vmem:[%s756 + $0x129] sm:$0xff]
  %v1659 = vld [vmem:[%s756 + $0x139] sm:$0xff]
  %v1660 = vld [vmem:[%s756 + $0x141] sm:$0xff]
  %v1661 = vld [vmem:[%s756 + $0x151] sm:$0xff]
  %v1662 = vld [vmem:[%s756 + $0x159] sm:$0xff]
  %v1663 = vld [vmem:[%s756 + $0x169] sm:$0xff]
  %v1664 = vld [vmem:[%s756 + $0x171] sm:$0xff]
  %v1665 = vld [vmem:[%s756 + $0x1b1] sm:$0xff]
  %v1666 = vld [vmem:[%s756 + $0x1b9] sm:$0xff]
  %v1667 = vld [vmem:[%s756 + $0x1c9] sm:$0xff]
  %v1668 = vld [vmem:[%s756 + $0x1d1] sm:$0xff]
  %v1669 = vld [vmem:[%s756 + $0x1e1] sm:$0xff]
  %v1670 = vld [vmem:[%s756 + $0x1e9] sm:$0xff]
  %v1671 = vld [vmem:[%s756 + $0x1f9] sm:$0xff]
  %v1672 = vld [vmem:[%s756 + $0x201] sm:$0xff]
  %v1673 = vld [vmem:[%s756 + $0x211] sm:$0xff]
  %v1674 = vld [vmem:[%s756 + $0x219] sm:$0xff]
  %v1675 = vld [vmem:[%s756 + $0x229] sm:$0xff]
  %v1676 = vld [vmem:[%s756 + $0x231] sm:$0xff]
  %v1677 = vld [vmem:[%s756 + $0x241] sm:$0xff]
  %v1678 = vld [vmem:[%s756 + $0x249] sm:$0xff]
  %v1679 = vld [vmem:[%s756 + $0x259] sm:$0xff]
  %v1680 = vld [vmem:[%s756 + $0x261] sm:$0xff]
  %v1681 = vld [vmem:[%s756 + $0x271] sm:$0xff]
  %v1682 = vld [vmem:[%s756 + $0x279] sm:$0xff]
  %v1683 = vld [vmem:[%s756 + $0x289] sm:$0xff]
  %v1684 = vld [vmem:[%s756 + $0x291] sm:$0xff]
  %v1685 = vld [vmem:[%s756 + $0x2a1] sm:$0xff]
  %v1686 = vld [vmem:[%s756 + $0x2a9] sm:$0xff]
  %v1687 = vld [vmem:[%s756 + $0x2b9] sm:$0xff]
  %v1688 = vld [vmem:[%s756 + $0x2c1] sm:$0xff]
  %v1689 = vld [vmem:[%s756 + $0x2d1] sm:$0xff]
  %v1690 = vld [vmem:[%s756 + $0x2d9] sm:$0xff]
  %v1691 = vld [vmem:[%s756 + $0x2e9] sm:$0xff]
  %v1692 = vld [vmem:[%s756 + $0x2f1] sm:$0xff]
  %v1693 = vld [vmem:[%s756 + $0x301] sm:$0xff]
  %v1694 = vld [vmem:[%s756 + $0x309] sm:$0xff]
  %v1695 = vld [vmem:[%s756 + $0x319] sm:$0xff]
  %v1696 = vld [vmem:[%s756 + $0x321] sm:$0xff]
  %v1697 = vld [vmem:[%s756 + $0x2] sm:$0xff]
  %v1698 = vld [vmem:[%s756 + $0xa] sm:$0xff]
  %v1699 = vld [vmem:[%s756 + $0x1a] sm:$0xff]
  %v1700 = vld [vmem:[%s756 + $0x22] sm:$0xff]
  %v1701 = vld [vmem:[%s756 + $0x32] sm:$0xff]
  %v1702 = vld [vmem:[%s756 + $0x3a] sm:$0xff]
  %v1703 = vld [vmem:[%s756 + $0x4a] sm:$0xff]
  %v1704 = vld [vmem:[%s756 + $0x52] sm:$0xff]
  %v1705 = vld [vmem:[%s756 + $0x62] sm:$0xff]
  %v1706 = vld [vmem:[%s756 + $0x6a] sm:$0xff]
  %v1707 = vld [vmem:[%s756 + $0x7a] sm:$0xff]
  %v1708 = vld [vmem:[%s756 + $0x82] sm:$0xff]
  %v1709 = vld [vmem:[%s756 + $0x92] sm:$0xff]
  %v1710 = vld [vmem:[%s756 + $0x9a] sm:$0xff]
  %v1711 = vld [vmem:[%s756 + $0xaa] sm:$0xff]
  %v1712 = vld [vmem:[%s756 + $0xb2] sm:$0xff]
  %v1713 = vld [vmem:[%s756 + $0xc2] sm:$0xff]
  %v1714 = vld [vmem:[%s756 + $0xca] sm:$0xff]
  %v1715 = vld [vmem:[%s756 + $0xda] sm:$0xff]
  %v1716 = vld [vmem:[%s756 + $0xe2] sm:$0xff]
  %v1717 = vld [vmem:[%s756 + $0xf2] sm:$0xff]
  %v1718 = vld [vmem:[%s756 + $0xfa] sm:$0xff]
  %v1719 = vld [vmem:[%s756 + $0x10a] sm:$0xff]
  %v1720 = vld [vmem:[%s756 + $0x112] sm:$0xff]
  %v1721 = vld [vmem:[%s756 + $0x122] sm:$0xff]
  %v1722 = vld [vmem:[%s756 + $0x12a] sm:$0xff]
  %v1723 = vld [vmem:[%s756 + $0x13a] sm:$0xff]
  %v1724 = vld [vmem:[%s756 + $0x142] sm:$0xff]
  %v1725 = vld [vmem:[%s756 + $0x152] sm:$0xff]
  %v1726 = vld [vmem:[%s756 + $0x15a] sm:$0xff]
  %v1727 = vld [vmem:[%s756 + $0x16a] sm:$0xff]
  %v1728 = vld [vmem:[%s756 + $0x172] sm:$0xff]
  %v1729 = vld [vmem:[%s756 + $0x1b2] sm:$0xff]
  %v1730 = vld [vmem:[%s756 + $0x1ba] sm:$0xff]
  %v1731 = vld [vmem:[%s756 + $0x1ca] sm:$0xff]
  %v1732 = vld [vmem:[%s756 + $0x1d2] sm:$0xff]
  %v1733 = vld [vmem:[%s756 + $0x1e2] sm:$0xff]
  %v1734 = vld [vmem:[%s756 + $0x1ea] sm:$0xff]
  %v1735 = vld [vmem:[%s756 + $0x1fa] sm:$0xff]
  %v1736 = vld [vmem:[%s756 + $0x202] sm:$0xff]
  %v1737 = vld [vmem:[%s756 + $0x212] sm:$0xff]
  %v1738 = vld [vmem:[%s756 + $0x21a] sm:$0xff]
  %v1739 = vld [vmem:[%s756 + $0x22a] sm:$0xff]
  %v1740 = vld [vmem:[%s756 + $0x232] sm:$0xff]
  %v1741 = vld [vmem:[%s756 + $0x242] sm:$0xff]
  %v1742 = vld [vmem:[%s756 + $0x24a] sm:$0xff]
  %v1743 = vld [vmem:[%s756 + $0x25a] sm:$0xff]
  %v1744 = vld [vmem:[%s756 + $0x262] sm:$0xff]
  %v1745 = vld [vmem:[%s756 + $0x272] sm:$0xff]
  %v1746 = vld [vmem:[%s756 + $0x27a] sm:$0xff]
  %v1747 = vld [vmem:[%s756 + $0x28a] sm:$0xff]
  %v1748 = vld [vmem:[%s756 + $0x292] sm:$0xff]
  %v1749 = vld [vmem:[%s756 + $0x2a2] sm:$0xff]
  %v1750 = vld [vmem:[%s756 + $0x2aa] sm:$0xff]
  %v1751 = vld [vmem:[%s756 + $0x2ba] sm:$0xff]
  %v1752 = vld [vmem:[%s756 + $0x2c2] sm:$0xff]
  %v1753 = vld [vmem:[%s756 + $0x2d2] sm:$0xff]
  %v1754 = vld [vmem:[%s756 + $0x2da] sm:$0xff]
  %v1755 = vld [vmem:[%s756 + $0x2ea] sm:$0xff]
  %v1756 = vld [vmem:[%s756 + $0x2f2] sm:$0xff]
  %v1757 = vld [vmem:[%s756 + $0x302] sm:$0xff]
  %v1758 = vld [vmem:[%s756 + $0x30a] sm:$0xff]
  %v1759 = vld [vmem:[%s756 + $0x31a] sm:$0xff]
  %v1760 = vld [vmem:[%s756 + $0x322] sm:$0xff]
  %s1761 = scalar_lea.vmem [#allocation2], 48
  %v1762 = vld [vmem:[%s1761] sm:$0xff]
  %v1763 = vld [vmem:[%s1761 + $0x8] sm:$0xff]
  %v1764 = vld [vmem:[%s1761 + $0x18] sm:$0xff]
  %v1765 = vld [vmem:[%s1761 + $0x20] sm:$0xff]
  %v1766 = vld [vmem:[%s1761 + $0x30] sm:$0xff]
  %v1767 = vld [vmem:[%s1761 + $0x38] sm:$0xff]
  %v1768 = vld [vmem:[%s1761 + $0x48] sm:$0xff]
  %v1769 = vld [vmem:[%s1761 + $0x50] sm:$0xff]
  %v1770 = vld [vmem:[%s1761 + $0x60] sm:$0xff]
  %v1771 = vld [vmem:[%s1761 + $0x68] sm:$0xff]
  %v1772 = vld [vmem:[%s1761 + $0x78] sm:$0xff]
  %v1773 = vld [vmem:[%s1761 + $0x80] sm:$0xff]
  %v1774 = vld [vmem:[%s1761 + $0x90] sm:$0xff]
  %v1775 = vld [vmem:[%s1761 + $0x98] sm:$0xff]
  %v1776 = vld [vmem:[%s1761 + $0xa8] sm:$0xff]
  %v1777 = vld [vmem:[%s1761 + $0xb0] sm:$0xff]
  %v1778 = vld [vmem:[%s1761 + $0xc0] sm:$0xff]
  %v1779 = vld [vmem:[%s1761 + $0xc8] sm:$0xff]
  %v1780 = vld [vmem:[%s1761 + $0xd8] sm:$0xff]
  %v1781 = vld [vmem:[%s1761 + $0xe0] sm:$0xff]
  %v1782 = vld [vmem:[%s1761 + $0xf0] sm:$0xff]
  %v1783 = vld [vmem:[%s1761 + $0xf8] sm:$0xff]
  %v1784 = vld [vmem:[%s1761 + $0x108] sm:$0xff]
  %v1785 = vld [vmem:[%s1761 + $0x110] sm:$0xff]
  %v1786 = vld [vmem:[%s1761 + $0x120] sm:$0xff]
  %v1787 = vld [vmem:[%s1761 + $0x128] sm:$0xff]
  %v1788 = vld [vmem:[%s1761 + $0x138] sm:$0xff]
  %v1789 = vld [vmem:[%s1761 + $0x140] sm:$0xff]
  %v1790 = vld [vmem:[%s1761 + $0x150] sm:$0xff]
  %v1791 = vld [vmem:[%s1761 + $0x158] sm:$0xff]
  %v1792 = vld [vmem:[%s1761 + $0x168] sm:$0xff]
  %v1793 = vld [vmem:[%s1761 + $0x170] sm:$0xff]
  %v1794 = vld [vmem:[%s1761 + $0x1b0] sm:$0xff]
  %v1795 = vld [vmem:[%s1761 + $0x1b8] sm:$0xff]
  %v1796 = vld [vmem:[%s1761 + $0x1c8] sm:$0xff]
  %v1797 = vld [vmem:[%s1761 + $0x1d0] sm:$0xff]
  %v1798 = vld [vmem:[%s1761 + $0x1e0] sm:$0xff]
  %v1799 = vld [vmem:[%s1761 + $0x1e8] sm:$0xff]
  %v1800 = vld [vmem:[%s1761 + $0x1f8] sm:$0xff]
  %v1801 = vld [vmem:[%s1761 + $0x200] sm:$0xff]
  %v1802 = vld [vmem:[%s1761 + $0x210] sm:$0xff]
  %v1803 = vld [vmem:[%s1761 + $0x218] sm:$0xff]
  %v1804 = vld [vmem:[%s1761 + $0x228] sm:$0xff]
  %v1805 = vld [vmem:[%s1761 + $0x230] sm:$0xff]
  %v1806 = vld [vmem:[%s1761 + $0x240] sm:$0xff]
  %v1807 = vld [vmem:[%s1761 + $0x248] sm:$0xff]
  %v1808 = vld [vmem:[%s1761 + $0x258] sm:$0xff]
  %v1809 = vld [vmem:[%s1761 + $0x260] sm:$0xff]
  %v1810 = vld [vmem:[%s1761 + $0x270] sm:$0xff]
  %v1811 = vld [vmem:[%s1761 + $0x278] sm:$0xff]
  %v1812 = vld [vmem:[%s1761 + $0x288] sm:$0xff]
  %v1813 = vld [vmem:[%s1761 + $0x290] sm:$0xff]
  %v1814 = vld [vmem:[%s1761 + $0x2a0] sm:$0xff]
  %v1815 = vld [vmem:[%s1761 + $0x2a8] sm:$0xff]
  %v1816 = vld [vmem:[%s1761 + $0x2b8] sm:$0xff]
  %v1817 = vld [vmem:[%s1761 + $0x2c0] sm:$0xff]
  %v1818 = vld [vmem:[%s1761 + $0x2d0] sm:$0xff]
  %v1819 = vld [vmem:[%s1761 + $0x2d8] sm:$0xff]
  %v1820 = vld [vmem:[%s1761 + $0x2e8] sm:$0xff]
  %v1821 = vld [vmem:[%s1761 + $0x2f0] sm:$0xff]
  %v1822 = vld [vmem:[%s1761 + $0x300] sm:$0xff]
  %v1823 = vld [vmem:[%s1761 + $0x308] sm:$0xff]
  %v1824 = vld [vmem:[%s1761 + $0x318] sm:$0xff]
  %v1825 = vld [vmem:[%s1761 + $0x320] sm:$0xff]
  %v1826 = vld [vmem:[%s1761 + $0x1] sm:$0xff]
  %v1827 = vld [vmem:[%s1761 + $0x9] sm:$0xff]
  %v1828 = vld [vmem:[%s1761 + $0x19] sm:$0xff]
  %v1829 = vld [vmem:[%s1761 + $0x21] sm:$0xff]
  %v1830 = vld [vmem:[%s1761 + $0x31] sm:$0xff]
  %v1831 = vld [vmem:[%s1761 + $0x39] sm:$0xff]
  %v1832 = vld [vmem:[%s1761 + $0x49] sm:$0xff]
  %v1833 = vld [vmem:[%s1761 + $0x51] sm:$0xff]
  %v1834 = vld [vmem:[%s1761 + $0x61] sm:$0xff]
  %v1835 = vld [vmem:[%s1761 + $0x69] sm:$0xff]
  %v1836 = vld [vmem:[%s1761 + $0x79] sm:$0xff]
  %v1837 = vld [vmem:[%s1761 + $0x81] sm:$0xff]
  %v1838 = vld [vmem:[%s1761 + $0x91] sm:$0xff]
  %v1839 = vld [vmem:[%s1761 + $0x99] sm:$0xff]
  %v1840 = vld [vmem:[%s1761 + $0xa9] sm:$0xff]
  %v1841 = vld [vmem:[%s1761 + $0xb1] sm:$0xff]
  %v1842 = vld [vmem:[%s1761 + $0xc1] sm:$0xff]
  %v1843 = vld [vmem:[%s1761 + $0xc9] sm:$0xff]
  %v1844 = vld [vmem:[%s1761 + $0xd9] sm:$0xff]
  %v1845 = vld [vmem:[%s1761 + $0xe1] sm:$0xff]
  %v1846 = vld [vmem:[%s1761 + $0xf1] sm:$0xff]
  %v1847 = vld [vmem:[%s1761 + $0xf9] sm:$0xff]
  %v1848 = vld [vmem:[%s1761 + $0x109] sm:$0xff]
  %v1849 = vld [vmem:[%s1761 + $0x111] sm:$0xff]
  %v1850 = vld [vmem:[%s1761 + $0x121] sm:$0xff]
  %v1851 = vld [vmem:[%s1761 + $0x129] sm:$0xff]
  %v1852 = vld [vmem:[%s1761 + $0x139] sm:$0xff]
  %v1853 = vld [vmem:[%s1761 + $0x141] sm:$0xff]
  %v1854 = vld [vmem:[%s1761 + $0x151] sm:$0xff]
  %v1855 = vld [vmem:[%s1761 + $0x159] sm:$0xff]
  %v1856 = vld [vmem:[%s1761 + $0x169] sm:$0xff]
  %v1857 = vld [vmem:[%s1761 + $0x171] sm:$0xff]
  %v1858 = vld [vmem:[%s1761 + $0x1b1] sm:$0xff]
  %v1859 = vld [vmem:[%s1761 + $0x1b9] sm:$0xff]
  %v1860 = vld [vmem:[%s1761 + $0x1c9] sm:$0xff]
  %v1861 = vld [vmem:[%s1761 + $0x1d1] sm:$0xff]
  %v1862 = vld [vmem:[%s1761 + $0x1e1] sm:$0xff]
  %v1863 = vld [vmem:[%s1761 + $0x1e9] sm:$0xff]
  %v1864 = vld [vmem:[%s1761 + $0x1f9] sm:$0xff]
  %v1865 = vld [vmem:[%s1761 + $0x201] sm:$0xff]
  %v1866 = vld [vmem:[%s1761 + $0x211] sm:$0xff]
  %v1867 = vld [vmem:[%s1761 + $0x219] sm:$0xff]
  %v1868 = vld [vmem:[%s1761 + $0x229] sm:$0xff]
  %v1869 = vld [vmem:[%s1761 + $0x231] sm:$0xff]
  %v1870 = vld [vmem:[%s1761 + $0x241] sm:$0xff]
  %v1871 = vld [vmem:[%s1761 + $0x249] sm:$0xff]
  %v1872 = vld [vmem:[%s1761 + $0x259] sm:$0xff]
  %v1873 = vld [vmem:[%s1761 + $0x261] sm:$0xff]
  %v1874 = vld [vmem:[%s1761 + $0x271] sm:$0xff]
  %v1875 = vld [vmem:[%s1761 + $0x279] sm:$0xff]
  %v1876 = vld [vmem:[%s1761 + $0x289] sm:$0xff]
  %v1877 = vld [vmem:[%s1761 + $0x291] sm:$0xff]
  %v1878 = vld [vmem:[%s1761 + $0x2a1] sm:$0xff]
  %v1879 = vld [vmem:[%s1761 + $0x2a9] sm:$0xff]
  %v1880 = vld [vmem:[%s1761 + $0x2b9] sm:$0xff]
  %v1881 = vld [vmem:[%s1761 + $0x2c1] sm:$0xff]
  %v1882 = vld [vmem:[%s1761 + $0x2d1] sm:$0xff]
  %v1883 = vld [vmem:[%s1761 + $0x2d9] sm:$0xff]
  %v1884 = vld [vmem:[%s1761 + $0x2e9] sm:$0xff]
  %v1885 = vld [vmem:[%s1761 + $0x2f1] sm:$0xff]
  %v1886 = vld [vmem:[%s1761 + $0x301] sm:$0xff]
  %v1887 = vld [vmem:[%s1761 + $0x309] sm:$0xff]
  %v1888 = vld [vmem:[%s1761 + $0x319] sm:$0xff]
  %v1889 = vld [vmem:[%s1761 + $0x321] sm:$0xff]
  %v1890 = vld [vmem:[%s1761 + $0x2] sm:$0xff]
  %v1891 = vld [vmem:[%s1761 + $0xa] sm:$0xff]
  %v1892 = vld [vmem:[%s1761 + $0x1a] sm:$0xff]
  %v1893 = vld [vmem:[%s1761 + $0x22] sm:$0xff]
  %v1894 = vld [vmem:[%s1761 + $0x32] sm:$0xff]
  %v1895 = vld [vmem:[%s1761 + $0x3a] sm:$0xff]
  %v1896 = vld [vmem:[%s1761 + $0x4a] sm:$0xff]
  %v1897 = vld [vmem:[%s1761 + $0x52] sm:$0xff]
  %v1898 = vld [vmem:[%s1761 + $0x62] sm:$0xff]
  %v1899 = vld [vmem:[%s1761 + $0x6a] sm:$0xff]
  %v1900 = vld [vmem:[%s1761 + $0x7a] sm:$0xff]
  %v1901 = vld [vmem:[%s1761 + $0x82] sm:$0xff]
  %v1902 = vld [vmem:[%s1761 + $0x92] sm:$0xff]
  %v1903 = vld [vmem:[%s1761 + $0x9a] sm:$0xff]
  %v1904 = vld [vmem:[%s1761 + $0xaa] sm:$0xff]
  %v1905 = vld [vmem:[%s1761 + $0xb2] sm:$0xff]
  %v1906 = vld [vmem:[%s1761 + $0xc2] sm:$0xff]
  %v1907 = vld [vmem:[%s1761 + $0xca] sm:$0xff]
  %v1908 = vld [vmem:[%s1761 + $0xda] sm:$0xff]
  %v1909 = vld [vmem:[%s1761 + $0xe2] sm:$0xff]
  %v1910 = vld [vmem:[%s1761 + $0xf2] sm:$0xff]
  %v1911 = vld [vmem:[%s1761 + $0xfa] sm:$0xff]
  %v1912 = vld [vmem:[%s1761 + $0x10a] sm:$0xff]
  %v1913 = vld [vmem:[%s1761 + $0x112] sm:$0xff]
  %v1914 = vld [vmem:[%s1761 + $0x122] sm:$0xff]
  %v1915 = vld [vmem:[%s1761 + $0x12a] sm:$0xff]
  %v1916 = vld [vmem:[%s1761 + $0x13a] sm:$0xff]
  %v1917 = vld [vmem:[%s1761 + $0x142] sm:$0xff]
  %v1918 = vld [vmem:[%s1761 + $0x152] sm:$0xff]
  %v1919 = vld [vmem:[%s1761 + $0x15a] sm:$0xff]
  %v1920 = vld [vmem:[%s1761 + $0x16a] sm:$0xff]
  %v1921 = vld [vmem:[%s1761 + $0x172] sm:$0xff]
  %v1922 = vld [vmem:[%s1761 + $0x1b2] sm:$0xff]
  %v1923 = vld [vmem:[%s1761 + $0x1ba] sm:$0xff]
  %v1924 = vld [vmem:[%s1761 + $0x1ca] sm:$0xff]
  %v1925 = vld [vmem:[%s1761 + $0x1d2] sm:$0xff]
  %v1926 = vld [vmem:[%s1761 + $0x1e2] sm:$0xff]
  %v1927 = vld [vmem:[%s1761 + $0x1ea] sm:$0xff]
  %v1928 = vld [vmem:[%s1761 + $0x1fa] sm:$0xff]
  %v1929 = vld [vmem:[%s1761 + $0x202] sm:$0xff]
  %v1930 = vld [vmem:[%s1761 + $0x212] sm:$0xff]
  %v1931 = vld [vmem:[%s1761 + $0x21a] sm:$0xff]
  %v1932 = vld [vmem:[%s1761 + $0x22a] sm:$0xff]
  %v1933 = vld [vmem:[%s1761 + $0x232] sm:$0xff]
  %v1934 = vld [vmem:[%s1761 + $0x242] sm:$0xff]
  %v1935 = vld [vmem:[%s1761 + $0x24a] sm:$0xff]
  %v1936 = vld [vmem:[%s1761 + $0x25a] sm:$0xff]
  %v1937 = vld [vmem:[%s1761 + $0x262] sm:$0xff]
  %v1938 = vld [vmem:[%s1761 + $0x272] sm:$0xff]
  %v1939 = vld [vmem:[%s1761 + $0x27a] sm:$0xff]
  %v1940 = vld [vmem:[%s1761 + $0x28a] sm:$0xff]
  %v1941 = vld [vmem:[%s1761 + $0x292] sm:$0xff]
  %v1942 = vld [vmem:[%s1761 + $0x2a2] sm:$0xff]
  %v1943 = vld [vmem:[%s1761 + $0x2aa] sm:$0xff]
  %v1944 = vld [vmem:[%s1761 + $0x2ba] sm:$0xff]
  %v1945 = vld [vmem:[%s1761 + $0x2c2] sm:$0xff]
  %v1946 = vld [vmem:[%s1761 + $0x2d2] sm:$0xff]
  %v1947 = vld [vmem:[%s1761 + $0x2da] sm:$0xff]
  %v1948 = vld [vmem:[%s1761 + $0x2ea] sm:$0xff]
  %v1949 = vld [vmem:[%s1761 + $0x2f2] sm:$0xff]
  %v1950 = vld [vmem:[%s1761 + $0x302] sm:$0xff]
  %v1951 = vld [vmem:[%s1761 + $0x30a] sm:$0xff]
  %v1952 = vld [vmem:[%s1761 + $0x31a] sm:$0xff]
  %v1953 = vld [vmem:[%s1761 + $0x322] sm:$0xff]
  %2018 = vrot.lane.b32.xlu0 %v1441, 8
  %v2019 = vpop.permute.xlu0 %2018
  %2020 = vrot.lane.b32.xlu0 %v1442, 8
  %v2021 = vpop.permute.xlu0 %2020
  %2022 = vrot.lane.b32.xlu0 %v1443, 8
  %v2023 = vpop.permute.xlu0 %2022
  %2024 = vrot.lane.b32.xlu0 %v1444, 8
  %v2025 = vpop.permute.xlu0 %2024
  %2026 = vrot.lane.b32.xlu0 %v1445, 8
  %v2027 = vpop.permute.xlu0 %2026
  %2028 = vrot.lane.b32.xlu0 %v1446, 8
  %v2029 = vpop.permute.xlu0 %2028
  %2030 = vrot.lane.b32.xlu0 %v1447, 8
  %v2031 = vpop.permute.xlu0 %2030
  %2032 = vrot.lane.b32.xlu0 %v1448, 8
  %v2033 = vpop.permute.xlu0 %2032
  %2034 = vrot.lane.b32.xlu0 %v1449, 8
  %v2035 = vpop.permute.xlu0 %2034
  %2036 = vrot.lane.b32.xlu0 %v1450, 8
  %v2037 = vpop.permute.xlu0 %2036
  %2038 = vrot.lane.b32.xlu0 %v1451, 8
  %v2039 = vpop.permute.xlu0 %2038
  %2040 = vrot.lane.b32.xlu0 %v1452, 8
  %v2041 = vpop.permute.xlu0 %2040
  %2042 = vrot.lane.b32.xlu0 %v1453, 8
  %v2043 = vpop.permute.xlu0 %2042
  %2044 = vrot.lane.b32.xlu0 %v1454, 8
  %v2045 = vpop.permute.xlu0 %2044
  %2046 = vrot.lane.b32.xlu0 %v1455, 8
  %v2047 = vpop.permute.xlu0 %2046
  %2048 = vrot.lane.b32.xlu0 %v1456, 8
  %v2049 = vpop.permute.xlu0 %2048
  %2050 = vrot.lane.b32.xlu0 %v1457, 8
  %v2051 = vpop.permute.xlu0 %2050
  %2052 = vrot.lane.b32.xlu0 %v1458, 8
  %v2053 = vpop.permute.xlu0 %2052
  %2054 = vrot.lane.b32.xlu0 %v1459, 8
  %v2055 = vpop.permute.xlu0 %2054
  %2056 = vrot.lane.b32.xlu0 %v1460, 8
  %v2057 = vpop.permute.xlu0 %2056
  %2058 = vrot.lane.b32.xlu0 %v1461, 8
  %v2059 = vpop.permute.xlu0 %2058
  %2060 = vrot.lane.b32.xlu0 %v1462, 8
  %v2061 = vpop.permute.xlu0 %2060
  %2062 = vrot.lane.b32.xlu0 %v1463, 8
  %v2063 = vpop.permute.xlu0 %2062
  %2064 = vrot.lane.b32.xlu0 %v1464, 8
  %v2065 = vpop.permute.xlu0 %2064
  %2066 = vrot.lane.b32.xlu0 %v1465, 8
  %v2067 = vpop.permute.xlu0 %2066
  %2068 = vrot.lane.b32.xlu0 %v1466, 8
  %v2069 = vpop.permute.xlu0 %2068
  %2070 = vrot.lane.b32.xlu0 %v1467, 8
  %v2071 = vpop.permute.xlu0 %2070
  %2072 = vrot.lane.b32.xlu0 %v1468, 8
  %v2073 = vpop.permute.xlu0 %2072
  %2074 = vrot.lane.b32.xlu0 %v1469, 8
  %v2075 = vpop.permute.xlu0 %2074
  %2076 = vrot.lane.b32.xlu0 %v1470, 8
  %v2077 = vpop.permute.xlu0 %2076
  %2078 = vrot.lane.b32.xlu0 %v1471, 8
  %v2079 = vpop.permute.xlu0 %2078
  %2080 = vrot.lane.b32.xlu0 %v1472, 8
  %v2081 = vpop.permute.xlu0 %2080
  %2082 = vrot.lane.b32.xlu0 %v1473, 8
  %v2083 = vpop.permute.xlu0 %2082
  %2084 = vrot.lane.b32.xlu0 %v1474, 8
  %v2085 = vpop.permute.xlu0 %2084
  %2086 = vrot.lane.b32.xlu0 %v1475, 8
  %v2087 = vpop.permute.xlu0 %2086
  %2088 = vrot.lane.b32.xlu0 %v1476, 8
  %v2089 = vpop.permute.xlu0 %2088
  %2090 = vrot.lane.b32.xlu0 %v1477, 8
  %v2091 = vpop.permute.xlu0 %2090
  %2092 = vrot.lane.b32.xlu0 %v1478, 8
  %v2093 = vpop.permute.xlu0 %2092
  %2094 = vrot.lane.b32.xlu0 %v1479, 8
  %v2095 = vpop.permute.xlu0 %2094
  %2096 = vrot.lane.b32.xlu0 %v1480, 8
  %v2097 = vpop.permute.xlu0 %2096
  %2098 = vrot.lane.b32.xlu0 %v1481, 8
  %v2099 = vpop.permute.xlu0 %2098
  %2100 = vrot.lane.b32.xlu0 %v1482, 8
  %v2101 = vpop.permute.xlu0 %2100
  %2102 = vrot.lane.b32.xlu0 %v1483, 8
  %v2103 = vpop.permute.xlu0 %2102
  %2104 = vrot.lane.b32.xlu0 %v1484, 8
  %v2105 = vpop.permute.xlu0 %2104
  %2106 = vrot.lane.b32.xlu0 %v1485, 8
  %v2107 = vpop.permute.xlu0 %2106
  %2108 = vrot.lane.b32.xlu0 %v1486, 8
  %v2109 = vpop.permute.xlu0 %2108
  %2110 = vrot.lane.b32.xlu0 %v1487, 8
  %v2111 = vpop.permute.xlu0 %2110
  %2112 = vrot.lane.b32.xlu0 %v1488, 8
  %v2113 = vpop.permute.xlu0 %2112
  %2114 = vrot.lane.b32.xlu0 %v1489, 8
  %v2115 = vpop.permute.xlu0 %2114
  %2116 = vrot.lane.b32.xlu0 %v1490, 8
  %v2117 = vpop.permute.xlu0 %2116
  %2118 = vrot.lane.b32.xlu0 %v1491, 8
  %v2119 = vpop.permute.xlu0 %2118
  %2120 = vrot.lane.b32.xlu0 %v1492, 8
  %v2121 = vpop.permute.xlu0 %2120
  %2122 = vrot.lane.b32.xlu0 %v1493, 8
  %v2123 = vpop.permute.xlu0 %2122
  %2124 = vrot.lane.b32.xlu0 %v1494, 8
  %v2125 = vpop.permute.xlu0 %2124
  %2126 = vrot.lane.b32.xlu0 %v1495, 8
  %v2127 = vpop.permute.xlu0 %2126
  %2128 = vrot.lane.b32.xlu0 %v1496, 8
  %v2129 = vpop.permute.xlu0 %2128
  %2130 = vrot.lane.b32.xlu0 %v1497, 8
  %v2131 = vpop.permute.xlu0 %2130
  %2132 = vrot.lane.b32.xlu0 %v1498, 8
  %v2133 = vpop.permute.xlu0 %2132
  %2134 = vrot.lane.b32.xlu0 %v1499, 8
  %v2135 = vpop.permute.xlu0 %2134
  %2136 = vrot.lane.b32.xlu0 %v1500, 8
  %v2137 = vpop.permute.xlu0 %2136
  %2138 = vrot.lane.b32.xlu0 %v1501, 8
  %v2139 = vpop.permute.xlu0 %2138
  %2140 = vrot.lane.b32.xlu0 %v1502, 8
  %v2141 = vpop.permute.xlu0 %2140
  %2142 = vrot.lane.b32.xlu0 %v1503, 8
  %v2143 = vpop.permute.xlu0 %2142
  %2144 = vrot.lane.b32.xlu0 %v1504, 8
  %v2145 = vpop.permute.xlu0 %2144
  %2274 = vrot.lane.b32.xlu0 %v1505, 16
  %v2275 = vpop.permute.xlu0 %2274
  %2276 = vrot.lane.b32.xlu0 %v1506, 16
  %v2277 = vpop.permute.xlu0 %2276
  %2278 = vrot.lane.b32.xlu0 %v1507, 16
  %v2279 = vpop.permute.xlu0 %2278
  %2280 = vrot.lane.b32.xlu0 %v1508, 16
  %v2281 = vpop.permute.xlu0 %2280
  %2282 = vrot.lane.b32.xlu0 %v1509, 16
  %v2283 = vpop.permute.xlu0 %2282
  %2284 = vrot.lane.b32.xlu0 %v1510, 16
  %v2285 = vpop.permute.xlu0 %2284
  %2286 = vrot.lane.b32.xlu0 %v1511, 16
  %v2287 = vpop.permute.xlu0 %2286
  %2288 = vrot.lane.b32.xlu0 %v1512, 16
  %v2289 = vpop.permute.xlu0 %2288
  %2290 = vrot.lane.b32.xlu0 %v1513, 16
  %v2291 = vpop.permute.xlu0 %2290
  %2292 = vrot.lane.b32.xlu0 %v1514, 16
  %v2293 = vpop.permute.xlu0 %2292
  %2294 = vrot.lane.b32.xlu0 %v1515, 16
  %v2295 = vpop.permute.xlu0 %2294
  %2296 = vrot.lane.b32.xlu0 %v1516, 16
  %v2297 = vpop.permute.xlu0 %2296
  %2298 = vrot.lane.b32.xlu0 %v1517, 16
  %v2299 = vpop.permute.xlu0 %2298
  %2300 = vrot.lane.b32.xlu0 %v1518, 16
  %v2301 = vpop.permute.xlu0 %2300
  %2302 = vrot.lane.b32.xlu0 %v1519, 16
  %v2303 = vpop.permute.xlu0 %2302
  %2304 = vrot.lane.b32.xlu0 %v1520, 16
  %v2305 = vpop.permute.xlu0 %2304
  %2306 = vrot.lane.b32.xlu0 %v1521, 16
  %v2307 = vpop.permute.xlu0 %2306
  %2308 = vrot.lane.b32.xlu0 %v1522, 16
  %v2309 = vpop.permute.xlu0 %2308
  %2310 = vrot.lane.b32.xlu0 %v1523, 16
  %v2311 = vpop.permute.xlu0 %2310
  %2312 = vrot.lane.b32.xlu0 %v1524, 16
  %v2313 = vpop.permute.xlu0 %2312
  %2314 = vrot.lane.b32.xlu0 %v1525, 16
  %v2315 = vpop.permute.xlu0 %2314
  %2316 = vrot.lane.b32.xlu0 %v1526, 16
  %v2317 = vpop.permute.xlu0 %2316
  %2318 = vrot.lane.b32.xlu0 %v1527, 16
  %v2319 = vpop.permute.xlu0 %2318
  %2320 = vrot.lane.b32.xlu0 %v1528, 16
  %v2321 = vpop.permute.xlu0 %2320
  %2322 = vrot.lane.b32.xlu0 %v1529, 16
  %v2323 = vpop.permute.xlu0 %2322
  %2324 = vrot.lane.b32.xlu0 %v1530, 16
  %v2325 = vpop.permute.xlu0 %2324
  %2326 = vrot.lane.b32.xlu0 %v1531, 16
  %v2327 = vpop.permute.xlu0 %2326
  %2328 = vrot.lane.b32.xlu0 %v1532, 16
  %v2329 = vpop.permute.xlu0 %2328
  %2330 = vrot.lane.b32.xlu0 %v1533, 16
  %v2331 = vpop.permute.xlu0 %2330
  %2332 = vrot.lane.b32.xlu0 %v1534, 16
  %v2333 = vpop.permute.xlu0 %2332
  %2334 = vrot.lane.b32.xlu0 %v1535, 16
  %v2335 = vpop.permute.xlu0 %2334
  %2336 = vrot.lane.b32.xlu0 %v1536, 16
  %v2337 = vpop.permute.xlu0 %2336
  %2338 = vrot.lane.b32.xlu0 %v1537, 16
  %v2339 = vpop.permute.xlu0 %2338
  %2340 = vrot.lane.b32.xlu0 %v1538, 16
  %v2341 = vpop.permute.xlu0 %2340
  %2342 = vrot.lane.b32.xlu0 %v1539, 16
  %v2343 = vpop.permute.xlu0 %2342
  %2344 = vrot.lane.b32.xlu0 %v1540, 16
  %v2345 = vpop.permute.xlu0 %2344
  %2346 = vrot.lane.b32.xlu0 %v1541, 16
  %v2347 = vpop.permute.xlu0 %2346
  %2348 = vrot.lane.b32.xlu0 %v1542, 16
  %v2349 = vpop.permute.xlu0 %2348
  %2350 = vrot.lane.b32.xlu0 %v1543, 16
  %v2351 = vpop.permute.xlu0 %2350
  %2352 = vrot.lane.b32.xlu0 %v1544, 16
  %v2353 = vpop.permute.xlu0 %2352
  %2354 = vrot.lane.b32.xlu0 %v1545, 16
  %v2355 = vpop.permute.xlu0 %2354
  %2356 = vrot.lane.b32.xlu0 %v1546, 16
  %v2357 = vpop.permute.xlu0 %2356
  %2358 = vrot.lane.b32.xlu0 %v1547, 16
  %v2359 = vpop.permute.xlu0 %2358
  %2360 = vrot.lane.b32.xlu0 %v1548, 16
  %v2361 = vpop.permute.xlu0 %2360
  %2362 = vrot.lane.b32.xlu0 %v1549, 16
  %v2363 = vpop.permute.xlu0 %2362
  %2364 = vrot.lane.b32.xlu0 %v1550, 16
  %v2365 = vpop.permute.xlu0 %2364
  %2366 = vrot.lane.b32.xlu0 %v1551, 16
  %v2367 = vpop.permute.xlu0 %2366
  %2368 = vrot.lane.b32.xlu0 %v1552, 16
  %v2369 = vpop.permute.xlu0 %2368
  %2370 = vrot.lane.b32.xlu0 %v1553, 16
  %v2371 = vpop.permute.xlu0 %2370
  %2372 = vrot.lane.b32.xlu0 %v1554, 16
  %v2373 = vpop.permute.xlu0 %2372
  %2374 = vrot.lane.b32.xlu0 %v1555, 16
  %v2375 = vpop.permute.xlu0 %2374
  %2376 = vrot.lane.b32.xlu0 %v1556, 16
  %v2377 = vpop.permute.xlu0 %2376
  %2378 = vrot.lane.b32.xlu0 %v1557, 16
  %v2379 = vpop.permute.xlu0 %2378
  %2380 = vrot.lane.b32.xlu0 %v1558, 16
  %v2381 = vpop.permute.xlu0 %2380
  %2382 = vrot.lane.b32.xlu0 %v1559, 16
  %v2383 = vpop.permute.xlu0 %2382
  %2384 = vrot.lane.b32.xlu0 %v1560, 16
  %v2385 = vpop.permute.xlu0 %2384
  %2386 = vrot.lane.b32.xlu0 %v1561, 16
  %v2387 = vpop.permute.xlu0 %2386
  %2388 = vrot.lane.b32.xlu0 %v1562, 16
  %v2389 = vpop.permute.xlu0 %2388
  %2390 = vrot.lane.b32.xlu0 %v1563, 16
  %v2391 = vpop.permute.xlu0 %2390
  %2392 = vrot.lane.b32.xlu0 %v1564, 16
  %v2393 = vpop.permute.xlu0 %2392
  %2394 = vrot.lane.b32.xlu0 %v1565, 16
  %v2395 = vpop.permute.xlu0 %2394
  %2396 = vrot.lane.b32.xlu0 %v1566, 16
  %v2397 = vpop.permute.xlu0 %2396
  %2398 = vrot.lane.b32.xlu0 %v1567, 16
  %v2399 = vpop.permute.xlu0 %2398
  %2400 = vrot.lane.b32.xlu0 %v1568, 16
  %v2401 = vpop.permute.xlu0 %2400
  %2530 = vrot.lane.b32.xlu0 %v1569, 24
  %v2531 = vpop.permute.xlu0 %2530
  %2532 = vrot.lane.b32.xlu0 %v1570, 24
  %v2533 = vpop.permute.xlu0 %2532
  %2534 = vrot.lane.b32.xlu0 %v1571, 24
  %v2535 = vpop.permute.xlu0 %2534
  %2536 = vrot.lane.b32.xlu0 %v1572, 24
  %v2537 = vpop.permute.xlu0 %2536
  %2538 = vrot.lane.b32.xlu0 %v1573, 24
  %v2539 = vpop.permute.xlu0 %2538
  %2540 = vrot.lane.b32.xlu0 %v1574, 24
  %v2541 = vpop.permute.xlu0 %2540
  %2542 = vrot.lane.b32.xlu0 %v1575, 24
  %v2543 = vpop.permute.xlu0 %2542
  %2544 = vrot.lane.b32.xlu0 %v1576, 24
  %v2545 = vpop.permute.xlu0 %2544
  %2546 = vrot.lane.b32.xlu0 %v1577, 24
  %v2547 = vpop.permute.xlu0 %2546
  %2548 = vrot.lane.b32.xlu0 %v1578, 24
  %v2549 = vpop.permute.xlu0 %2548
  %2550 = vrot.lane.b32.xlu0 %v1579, 24
  %v2551 = vpop.permute.xlu0 %2550
  %2552 = vrot.lane.b32.xlu0 %v1580, 24
  %v2553 = vpop.permute.xlu0 %2552
  %2554 = vrot.lane.b32.xlu0 %v1581, 24
  %v2555 = vpop.permute.xlu0 %2554
  %2556 = vrot.lane.b32.xlu0 %v1582, 24
  %v2557 = vpop.permute.xlu0 %2556
  %2558 = vrot.lane.b32.xlu0 %v1583, 24
  %v2559 = vpop.permute.xlu0 %2558
  %2560 = vrot.lane.b32.xlu0 %v1584, 24
  %v2561 = vpop.permute.xlu0 %2560
  %2562 = vrot.lane.b32.xlu0 %v1585, 24
  %v2563 = vpop.permute.xlu0 %2562
  %2564 = vrot.lane.b32.xlu0 %v1586, 24
  %v2565 = vpop.permute.xlu0 %2564
  %2566 = vrot.lane.b32.xlu0 %v1587, 24
  %v2567 = vpop.permute.xlu0 %2566
  %2568 = vrot.lane.b32.xlu0 %v1588, 24
  %v2569 = vpop.permute.xlu0 %2568
  %2570 = vrot.lane.b32.xlu0 %v1589, 24
  %v2571 = vpop.permute.xlu0 %2570
  %2572 = vrot.lane.b32.xlu0 %v1590, 24
  %v2573 = vpop.permute.xlu0 %2572
  %2574 = vrot.lane.b32.xlu0 %v1591, 24
  %v2575 = vpop.permute.xlu0 %2574
  %2576 = vrot.lane.b32.xlu0 %v1592, 24
  %v2577 = vpop.permute.xlu0 %2576
  %2578 = vrot.lane.b32.xlu0 %v1593, 24
  %v2579 = vpop.permute.xlu0 %2578
  %2580 = vrot.lane.b32.xlu0 %v1594, 24
  %v2581 = vpop.permute.xlu0 %2580
  %2582 = vrot.lane.b32.xlu0 %v1595, 24
  %v2583 = vpop.permute.xlu0 %2582
  %2584 = vrot.lane.b32.xlu0 %v1596, 24
  %v2585 = vpop.permute.xlu0 %2584
  %2586 = vrot.lane.b32.xlu0 %v1597, 24
  %v2587 = vpop.permute.xlu0 %2586
  %2588 = vrot.lane.b32.xlu0 %v1598, 24
  %v2589 = vpop.permute.xlu0 %2588
  %2590 = vrot.lane.b32.xlu0 %v1599, 24
  %v2591 = vpop.permute.xlu0 %2590
  %2592 = vrot.lane.b32.xlu0 %v1600, 24
  %v2593 = vpop.permute.xlu0 %2592
  %2594 = vrot.lane.b32.xlu0 %v1601, 24
  %v2595 = vpop.permute.xlu0 %2594
  %2596 = vrot.lane.b32.xlu0 %v1602, 24
  %v2597 = vpop.permute.xlu0 %2596
  %2598 = vrot.lane.b32.xlu0 %v1603, 24
  %v2599 = vpop.permute.xlu0 %2598
  %2600 = vrot.lane.b32.xlu0 %v1604, 24
  %v2601 = vpop.permute.xlu0 %2600
  %2602 = vrot.lane.b32.xlu0 %v1605, 24
  %v2603 = vpop.permute.xlu0 %2602
  %2604 = vrot.lane.b32.xlu0 %v1606, 24
  %v2605 = vpop.permute.xlu0 %2604
  %2606 = vrot.lane.b32.xlu0 %v1607, 24
  %v2607 = vpop.permute.xlu0 %2606
  %2608 = vrot.lane.b32.xlu0 %v1608, 24
  %v2609 = vpop.permute.xlu0 %2608
  %2610 = vrot.lane.b32.xlu0 %v1609, 24
  %v2611 = vpop.permute.xlu0 %2610
  %2612 = vrot.lane.b32.xlu0 %v1610, 24
  %v2613 = vpop.permute.xlu0 %2612
  %2614 = vrot.lane.b32.xlu0 %v1611, 24
  %v2615 = vpop.permute.xlu0 %2614
  %2616 = vrot.lane.b32.xlu0 %v1612, 24
  %v2617 = vpop.permute.xlu0 %2616
  %2618 = vrot.lane.b32.xlu0 %v1613, 24
  %v2619 = vpop.permute.xlu0 %2618
  %2620 = vrot.lane.b32.xlu0 %v1614, 24
  %v2621 = vpop.permute.xlu0 %2620
  %2622 = vrot.lane.b32.xlu0 %v1615, 24
  %v2623 = vpop.permute.xlu0 %2622
  %2624 = vrot.lane.b32.xlu0 %v1616, 24
  %v2625 = vpop.permute.xlu0 %2624
  %2626 = vrot.lane.b32.xlu0 %v1617, 24
  %v2627 = vpop.permute.xlu0 %2626
  %2628 = vrot.lane.b32.xlu0 %v1618, 24
  %v2629 = vpop.permute.xlu0 %2628
  %2630 = vrot.lane.b32.xlu0 %v1619, 24
  %v2631 = vpop.permute.xlu0 %2630
  %2632 = vrot.lane.b32.xlu0 %v1620, 24
  %v2633 = vpop.permute.xlu0 %2632
  %2634 = vrot.lane.b32.xlu0 %v1621, 24
  %v2635 = vpop.permute.xlu0 %2634
  %2636 = vrot.lane.b32.xlu0 %v1622, 24
  %v2637 = vpop.permute.xlu0 %2636
  %2638 = vrot.lane.b32.xlu0 %v1623, 24
  %v2639 = vpop.permute.xlu0 %2638
  %2640 = vrot.lane.b32.xlu0 %v1624, 24
  %v2641 = vpop.permute.xlu0 %2640
  %2642 = vrot.lane.b32.xlu0 %v1625, 24
  %v2643 = vpop.permute.xlu0 %2642
  %2644 = vrot.lane.b32.xlu0 %v1626, 24
  %v2645 = vpop.permute.xlu0 %2644
  %2646 = vrot.lane.b32.xlu0 %v1627, 24
  %v2647 = vpop.permute.xlu0 %2646
  %2648 = vrot.lane.b32.xlu0 %v1628, 24
  %v2649 = vpop.permute.xlu0 %2648
  %2650 = vrot.lane.b32.xlu0 %v1629, 24
  %v2651 = vpop.permute.xlu0 %2650
  %2652 = vrot.lane.b32.xlu0 %v1630, 24
  %v2653 = vpop.permute.xlu0 %2652
  %2654 = vrot.lane.b32.xlu0 %v1631, 24
  %v2655 = vpop.permute.xlu0 %2654
  %2656 = vrot.lane.b32.xlu0 %v1632, 24
  %v2657 = vpop.permute.xlu0 %2656
  %2786 = vrot.lane.b32.xlu0 %v1633, 32
  %v2787 = vpop.permute.xlu0 %2786
  %2788 = vrot.lane.b32.xlu0 %v1634, 32
  %v2789 = vpop.permute.xlu0 %2788
  %2790 = vrot.lane.b32.xlu0 %v1635, 32
  %v2791 = vpop.permute.xlu0 %2790
  %2792 = vrot.lane.b32.xlu0 %v1636, 32
  %v2793 = vpop.permute.xlu0 %2792
  %2794 = vrot.lane.b32.xlu0 %v1637, 32
  %v2795 = vpop.permute.xlu0 %2794
  %2796 = vrot.lane.b32.xlu0 %v1638, 32
  %v2797 = vpop.permute.xlu0 %2796
  %2798 = vrot.lane.b32.xlu0 %v1639, 32
  %v2799 = vpop.permute.xlu0 %2798
  %2800 = vrot.lane.b32.xlu0 %v1640, 32
  %v2801 = vpop.permute.xlu0 %2800
  %2802 = vrot.lane.b32.xlu0 %v1641, 32
  %v2803 = vpop.permute.xlu0 %2802
  %2804 = vrot.lane.b32.xlu0 %v1642, 32
  %v2805 = vpop.permute.xlu0 %2804
  %2806 = vrot.lane.b32.xlu0 %v1643, 32
  %v2807 = vpop.permute.xlu0 %2806
  %2808 = vrot.lane.b32.xlu0 %v1644, 32
  %v2809 = vpop.permute.xlu0 %2808
  %2810 = vrot.lane.b32.xlu0 %v1645, 32
  %v2811 = vpop.permute.xlu0 %2810
  %2812 = vrot.lane.b32.xlu0 %v1646, 32
  %v2813 = vpop.permute.xlu0 %2812
  %2814 = vrot.lane.b32.xlu0 %v1647, 32
  %v2815 = vpop.permute.xlu0 %2814
  %2816 = vrot.lane.b32.xlu0 %v1648, 32
  %v2817 = vpop.permute.xlu0 %2816
  %2818 = vrot.lane.b32.xlu0 %v1649, 32
  %v2819 = vpop.permute.xlu0 %2818
  %2820 = vrot.lane.b32.xlu0 %v1650, 32
  %v2821 = vpop.permute.xlu0 %2820
  %2822 = vrot.lane.b32.xlu0 %v1651, 32
  %v2823 = vpop.permute.xlu0 %2822
  %2824 = vrot.lane.b32.xlu0 %v1652, 32
  %v2825 = vpop.permute.xlu0 %2824
  %2826 = vrot.lane.b32.xlu0 %v1653, 32
  %v2827 = vpop.permute.xlu0 %2826
  %2828 = vrot.lane.b32.xlu0 %v1654, 32
  %v2829 = vpop.permute.xlu0 %2828
  %2830 = vrot.lane.b32.xlu0 %v1655, 32
  %v2831 = vpop.permute.xlu0 %2830
  %2832 = vrot.lane.b32.xlu0 %v1656, 32
  %v2833 = vpop.permute.xlu0 %2832
  %2834 = vrot.lane.b32.xlu0 %v1657, 32
  %v2835 = vpop.permute.xlu0 %2834
  %2836 = vrot.lane.b32.xlu0 %v1658, 32
  %v2837 = vpop.permute.xlu0 %2836
  %2838 = vrot.lane.b32.xlu0 %v1659, 32
  %v2839 = vpop.permute.xlu0 %2838
  %2840 = vrot.lane.b32.xlu0 %v1660, 32
  %v2841 = vpop.permute.xlu0 %2840
  %2842 = vrot.lane.b32.xlu0 %v1661, 32
  %v2843 = vpop.permute.xlu0 %2842
  %2844 = vrot.lane.b32.xlu0 %v1662, 32
  %v2845 = vpop.permute.xlu0 %2844
  %2846 = vrot.lane.b32.xlu0 %v1663, 32
  %v2847 = vpop.permute.xlu0 %2846
  %2848 = vrot.lane.b32.xlu0 %v1664, 32
  %v2849 = vpop.permute.xlu0 %2848
  %2850 = vrot.lane.b32.xlu0 %v1665, 32
  %v2851 = vpop.permute.xlu0 %2850
  %2852 = vrot.lane.b32.xlu0 %v1666, 32
  %v2853 = vpop.permute.xlu0 %2852
  %2854 = vrot.lane.b32.xlu0 %v1667, 32
  %v2855 = vpop.permute.xlu0 %2854
  %2856 = vrot.lane.b32.xlu0 %v1668, 32
  %v2857 = vpop.permute.xlu0 %2856
  %2858 = vrot.lane.b32.xlu0 %v1669, 32
  %v2859 = vpop.permute.xlu0 %2858
  %2860 = vrot.lane.b32.xlu0 %v1670, 32
  %v2861 = vpop.permute.xlu0 %2860
  %2862 = vrot.lane.b32.xlu0 %v1671, 32
  %v2863 = vpop.permute.xlu0 %2862
  %2864 = vrot.lane.b32.xlu0 %v1672, 32
  %v2865 = vpop.permute.xlu0 %2864
  %2866 = vrot.lane.b32.xlu0 %v1673, 32
  %v2867 = vpop.permute.xlu0 %2866
  %2868 = vrot.lane.b32.xlu0 %v1674, 32
  %v2869 = vpop.permute.xlu0 %2868
  %2870 = vrot.lane.b32.xlu0 %v1675, 32
  %v2871 = vpop.permute.xlu0 %2870
  %2872 = vrot.lane.b32.xlu0 %v1676, 32
  %v2873 = vpop.permute.xlu0 %2872
  %2874 = vrot.lane.b32.xlu0 %v1677, 32
  %v2875 = vpop.permute.xlu0 %2874
  %2876 = vrot.lane.b32.xlu0 %v1678, 32
  %v2877 = vpop.permute.xlu0 %2876
  %2878 = vrot.lane.b32.xlu0 %v1679, 32
  %v2879 = vpop.permute.xlu0 %2878
  %2880 = vrot.lane.b32.xlu0 %v1680, 32
  %v2881 = vpop.permute.xlu0 %2880
  %2882 = vrot.lane.b32.xlu0 %v1681, 32
  %v2883 = vpop.permute.xlu0 %2882
  %2884 = vrot.lane.b32.xlu0 %v1682, 32
  %v2885 = vpop.permute.xlu0 %2884
  %2886 = vrot.lane.b32.xlu0 %v1683, 32
  %v2887 = vpop.permute.xlu0 %2886
  %2888 = vrot.lane.b32.xlu0 %v1684, 32
  %v2889 = vpop.permute.xlu0 %2888
  %2890 = vrot.lane.b32.xlu0 %v1685, 32
  %v2891 = vpop.permute.xlu0 %2890
  %2892 = vrot.lane.b32.xlu0 %v1686, 32
  %v2893 = vpop.permute.xlu0 %2892
  %2894 = vrot.lane.b32.xlu0 %v1687, 32
  %v2895 = vpop.permute.xlu0 %2894
  %2896 = vrot.lane.b32.xlu0 %v1688, 32
  %v2897 = vpop.permute.xlu0 %2896
  %2898 = vrot.lane.b32.xlu0 %v1689, 32
  %v2899 = vpop.permute.xlu0 %2898
  %2900 = vrot.lane.b32.xlu0 %v1690, 32
  %v2901 = vpop.permute.xlu0 %2900
  %2902 = vrot.lane.b32.xlu0 %v1691, 32
  %v2903 = vpop.permute.xlu0 %2902
  %2904 = vrot.lane.b32.xlu0 %v1692, 32
  %v2905 = vpop.permute.xlu0 %2904
  %2906 = vrot.lane.b32.xlu0 %v1693, 32
  %v2907 = vpop.permute.xlu0 %2906
  %2908 = vrot.lane.b32.xlu0 %v1694, 32
  %v2909 = vpop.permute.xlu0 %2908
  %2910 = vrot.lane.b32.xlu0 %v1695, 32
  %v2911 = vpop.permute.xlu0 %2910
  %2912 = vrot.lane.b32.xlu0 %v1696, 32
  %v2913 = vpop.permute.xlu0 %2912
  %3042 = vrot.lane.b32.xlu0 %v1697, 40
  %v3043 = vpop.permute.xlu0 %3042
  %3044 = vrot.lane.b32.xlu0 %v1698, 40
  %v3045 = vpop.permute.xlu0 %3044
  %3046 = vrot.lane.b32.xlu0 %v1699, 40
  %v3047 = vpop.permute.xlu0 %3046
  %3048 = vrot.lane.b32.xlu0 %v1700, 40
  %v3049 = vpop.permute.xlu0 %3048
  %3050 = vrot.lane.b32.xlu0 %v1701, 40
  %v3051 = vpop.permute.xlu0 %3050
  %3052 = vrot.lane.b32.xlu0 %v1702, 40
  %v3053 = vpop.permute.xlu0 %3052
  %3054 = vrot.lane.b32.xlu0 %v1703, 40
  %v3055 = vpop.permute.xlu0 %3054
  %3056 = vrot.lane.b32.xlu0 %v1704, 40
  %v3057 = vpop.permute.xlu0 %3056
  %3058 = vrot.lane.b32.xlu0 %v1705, 40
  %v3059 = vpop.permute.xlu0 %3058
  %3060 = vrot.lane.b32.xlu0 %v1706, 40
  %v3061 = vpop.permute.xlu0 %3060
  %3062 = vrot.lane.b32.xlu0 %v1707, 40
  %v3063 = vpop.permute.xlu0 %3062
  %3064 = vrot.lane.b32.xlu0 %v1708, 40
  %v3065 = vpop.permute.xlu0 %3064
  %3066 = vrot.lane.b32.xlu0 %v1709, 40
  %v3067 = vpop.permute.xlu0 %3066
  %3068 = vrot.lane.b32.xlu0 %v1710, 40
  %v3069 = vpop.permute.xlu0 %3068
  %3070 = vrot.lane.b32.xlu0 %v1711, 40
  %v3071 = vpop.permute.xlu0 %3070
  %3072 = vrot.lane.b32.xlu0 %v1712, 40
  %v3073 = vpop.permute.xlu0 %3072
  %3074 = vrot.lane.b32.xlu0 %v1713, 40
  %v3075 = vpop.permute.xlu0 %3074
  %3076 = vrot.lane.b32.xlu0 %v1714, 40
  %v3077 = vpop.permute.xlu0 %3076
  %3078 = vrot.lane.b32.xlu0 %v1715, 40
  %v3079 = vpop.permute.xlu0 %3078
  %3080 = vrot.lane.b32.xlu0 %v1716, 40
  %v3081 = vpop.permute.xlu0 %3080
  %3082 = vrot.lane.b32.xlu0 %v1717, 40
  %v3083 = vpop.permute.xlu0 %3082
  %3084 = vrot.lane.b32.xlu0 %v1718, 40
  %v3085 = vpop.permute.xlu0 %3084
  %3086 = vrot.lane.b32.xlu0 %v1719, 40
  %v3087 = vpop.permute.xlu0 %3086
  %3088 = vrot.lane.b32.xlu0 %v1720, 40
  %v3089 = vpop.permute.xlu0 %3088
  %3090 = vrot.lane.b32.xlu0 %v1721, 40
  %v3091 = vpop.permute.xlu0 %3090
  %3092 = vrot.lane.b32.xlu0 %v1722, 40
  %v3093 = vpop.permute.xlu0 %3092
  %3094 = vrot.lane.b32.xlu0 %v1723, 40
  %v3095 = vpop.permute.xlu0 %3094
  %3096 = vrot.lane.b32.xlu0 %v1724, 40
  %v3097 = vpop.permute.xlu0 %3096
  %3098 = vrot.lane.b32.xlu0 %v1725, 40
  %v3099 = vpop.permute.xlu0 %3098
  %3100 = vrot.lane.b32.xlu0 %v1726, 40
  %v3101 = vpop.permute.xlu0 %3100
  %3102 = vrot.lane.b32.xlu0 %v1727, 40
  %v3103 = vpop.permute.xlu0 %3102
  %3104 = vrot.lane.b32.xlu0 %v1728, 40
  %v3105 = vpop.permute.xlu0 %3104
  %3106 = vrot.lane.b32.xlu0 %v1729, 40
  %v3107 = vpop.permute.xlu0 %3106
  %3108 = vrot.lane.b32.xlu0 %v1730, 40
  %v3109 = vpop.permute.xlu0 %3108
  %3110 = vrot.lane.b32.xlu0 %v1731, 40
  %v3111 = vpop.permute.xlu0 %3110
  %3112 = vrot.lane.b32.xlu0 %v1732, 40
  %v3113 = vpop.permute.xlu0 %3112
  %3114 = vrot.lane.b32.xlu0 %v1733, 40
  %v3115 = vpop.permute.xlu0 %3114
  %3116 = vrot.lane.b32.xlu0 %v1734, 40
  %v3117 = vpop.permute.xlu0 %3116
  %3118 = vrot.lane.b32.xlu0 %v1735, 40
  %v3119 = vpop.permute.xlu0 %3118
  %3120 = vrot.lane.b32.xlu0 %v1736, 40
  %v3121 = vpop.permute.xlu0 %3120
  %3122 = vrot.lane.b32.xlu0 %v1737, 40
  %v3123 = vpop.permute.xlu0 %3122
  %3124 = vrot.lane.b32.xlu0 %v1738, 40
  %v3125 = vpop.permute.xlu0 %3124
  %3126 = vrot.lane.b32.xlu0 %v1739, 40
  %v3127 = vpop.permute.xlu0 %3126
  %3128 = vrot.lane.b32.xlu0 %v1740, 40
  %v3129 = vpop.permute.xlu0 %3128
  %3130 = vrot.lane.b32.xlu0 %v1741, 40
  %v3131 = vpop.permute.xlu0 %3130
  %3132 = vrot.lane.b32.xlu0 %v1742, 40
  %v3133 = vpop.permute.xlu0 %3132
  %3134 = vrot.lane.b32.xlu0 %v1743, 40
  %v3135 = vpop.permute.xlu0 %3134
  %3136 = vrot.lane.b32.xlu0 %v1744, 40
  %v3137 = vpop.permute.xlu0 %3136
  %3138 = vrot.lane.b32.xlu0 %v1745, 40
  %v3139 = vpop.permute.xlu0 %3138
  %3140 = vrot.lane.b32.xlu0 %v1746, 40
  %v3141 = vpop.permute.xlu0 %3140
  %3142 = vrot.lane.b32.xlu0 %v1747, 40
  %v3143 = vpop.permute.xlu0 %3142
  %3144 = vrot.lane.b32.xlu0 %v1748, 40
  %v3145 = vpop.permute.xlu0 %3144
  %3146 = vrot.lane.b32.xlu0 %v1749, 40
  %v3147 = vpop.permute.xlu0 %3146
  %3148 = vrot.lane.b32.xlu0 %v1750, 40
  %v3149 = vpop.permute.xlu0 %3148
  %3150 = vrot.lane.b32.xlu0 %v1751, 40
  %v3151 = vpop.permute.xlu0 %3150
  %3152 = vrot.lane.b32.xlu0 %v1752, 40
  %v3153 = vpop.permute.xlu0 %3152
  %3154 = vrot.lane.b32.xlu0 %v1753, 40
  %v3155 = vpop.permute.xlu0 %3154
  %3156 = vrot.lane.b32.xlu0 %v1754, 40
  %v3157 = vpop.permute.xlu0 %3156
  %3158 = vrot.lane.b32.xlu0 %v1755, 40
  %v3159 = vpop.permute.xlu0 %3158
  %3160 = vrot.lane.b32.xlu0 %v1756, 40
  %v3161 = vpop.permute.xlu0 %3160
  %3162 = vrot.lane.b32.xlu0 %v1757, 40
  %v3163 = vpop.permute.xlu0 %3162
  %3164 = vrot.lane.b32.xlu0 %v1758, 40
  %v3165 = vpop.permute.xlu0 %3164
  %3166 = vrot.lane.b32.xlu0 %v1759, 40
  %v3167 = vpop.permute.xlu0 %3166
  %3168 = vrot.lane.b32.xlu0 %v1760, 40
  %v3169 = vpop.permute.xlu0 %3168
  %3298 = vrot.lane.b32.xlu0 %v1762, 48
  %v3299 = vpop.permute.xlu0 %3298
  %3300 = vrot.lane.b32.xlu0 %v1763, 48
  %v3301 = vpop.permute.xlu0 %3300
  %3302 = vrot.lane.b32.xlu0 %v1764, 48
  %v3303 = vpop.permute.xlu0 %3302
  %3304 = vrot.lane.b32.xlu0 %v1765, 48
  %v3305 = vpop.permute.xlu0 %3304
  %3306 = vrot.lane.b32.xlu0 %v1766, 48
  %v3307 = vpop.permute.xlu0 %3306
  %3308 = vrot.lane.b32.xlu0 %v1767, 48
  %v3309 = vpop.permute.xlu0 %3308
  %3310 = vrot.lane.b32.xlu0 %v1768, 48
  %v3311 = vpop.permute.xlu0 %3310
  %3312 = vrot.lane.b32.xlu0 %v1769, 48
  %v3313 = vpop.permute.xlu0 %3312
  %3314 = vrot.lane.b32.xlu0 %v1770, 48
  %v3315 = vpop.permute.xlu0 %3314
  %3316 = vrot.lane.b32.xlu0 %v1771, 48
  %v3317 = vpop.permute.xlu0 %3316
  %3318 = vrot.lane.b32.xlu0 %v1772, 48
  %v3319 = vpop.permute.xlu0 %3318
  %3320 = vrot.lane.b32.xlu0 %v1773, 48
  %v3321 = vpop.permute.xlu0 %3320
  %3322 = vrot.lane.b32.xlu0 %v1774, 48
  %v3323 = vpop.permute.xlu0 %3322
  %3324 = vrot.lane.b32.xlu0 %v1775, 48
  %v3325 = vpop.permute.xlu0 %3324
  %3326 = vrot.lane.b32.xlu0 %v1776, 48
  %v3327 = vpop.permute.xlu0 %3326
  %3328 = vrot.lane.b32.xlu0 %v1777, 48
  %v3329 = vpop.permute.xlu0 %3328
  %3330 = vrot.lane.b32.xlu0 %v1778, 48
  %v3331 = vpop.permute.xlu0 %3330
  %3332 = vrot.lane.b32.xlu0 %v1779, 48
  %v3333 = vpop.permute.xlu0 %3332
  %3334 = vrot.lane.b32.xlu0 %v1780, 48
  %v3335 = vpop.permute.xlu0 %3334
  %3336 = vrot.lane.b32.xlu0 %v1781, 48
  %v3337 = vpop.permute.xlu0 %3336
  %3338 = vrot.lane.b32.xlu0 %v1782, 48
  %v3339 = vpop.permute.xlu0 %3338
  %3340 = vrot.lane.b32.xlu0 %v1783, 48
  %v3341 = vpop.permute.xlu0 %3340
  %3342 = vrot.lane.b32.xlu0 %v1784, 48
  %v3343 = vpop.permute.xlu0 %3342
  %3344 = vrot.lane.b32.xlu0 %v1785, 48
  %v3345 = vpop.permute.xlu0 %3344
  %3346 = vrot.lane.b32.xlu0 %v1786, 48
  %v3347 = vpop.permute.xlu0 %3346
  %3348 = vrot.lane.b32.xlu0 %v1787, 48
  %v3349 = vpop.permute.xlu0 %3348
  %3350 = vrot.lane.b32.xlu0 %v1788, 48
  %v3351 = vpop.permute.xlu0 %3350
  %3352 = vrot.lane.b32.xlu0 %v1789, 48
  %v3353 = vpop.permute.xlu0 %3352
  %3354 = vrot.lane.b32.xlu0 %v1790, 48
  %v3355 = vpop.permute.xlu0 %3354
  %3356 = vrot.lane.b32.xlu0 %v1791, 48
  %v3357 = vpop.permute.xlu0 %3356
  %3358 = vrot.lane.b32.xlu0 %v1792, 48
  %v3359 = vpop.permute.xlu0 %3358
  %3360 = vrot.lane.b32.xlu0 %v1793, 48
  %v3361 = vpop.permute.xlu0 %3360
  %3362 = vrot.lane.b32.xlu0 %v1794, 48
  %v3363 = vpop.permute.xlu0 %3362
  %3364 = vrot.lane.b32.xlu0 %v1795, 48
  %v3365 = vpop.permute.xlu0 %3364
  %3366 = vrot.lane.b32.xlu0 %v1796, 48
  %v3367 = vpop.permute.xlu0 %3366
  %3368 = vrot.lane.b32.xlu0 %v1797, 48
  %v3369 = vpop.permute.xlu0 %3368
  %3370 = vrot.lane.b32.xlu0 %v1798, 48
  %v3371 = vpop.permute.xlu0 %3370
  %3372 = vrot.lane.b32.xlu0 %v1799, 48
  %v3373 = vpop.permute.xlu0 %3372
  %3374 = vrot.lane.b32.xlu0 %v1800, 48
  %v3375 = vpop.permute.xlu0 %3374
  %3376 = vrot.lane.b32.xlu0 %v1801, 48
  %v3377 = vpop.permute.xlu0 %3376
  %3378 = vrot.lane.b32.xlu0 %v1802, 48
  %v3379 = vpop.permute.xlu0 %3378
  %3380 = vrot.lane.b32.xlu0 %v1803, 48
  %v3381 = vpop.permute.xlu0 %3380
  %3382 = vrot.lane.b32.xlu0 %v1804, 48
  %v3383 = vpop.permute.xlu0 %3382
  %3384 = vrot.lane.b32.xlu0 %v1805, 48
  %v3385 = vpop.permute.xlu0 %3384
  %3386 = vrot.lane.b32.xlu0 %v1806, 48
  %v3387 = vpop.permute.xlu0 %3386
  %3388 = vrot.lane.b32.xlu0 %v1807, 48
  %v3389 = vpop.permute.xlu0 %3388
  %3390 = vrot.lane.b32.xlu0 %v1808, 48
  %v3391 = vpop.permute.xlu0 %3390
  %3392 = vrot.lane.b32.xlu0 %v1809, 48
  %v3393 = vpop.permute.xlu0 %3392
  %3394 = vrot.lane.b32.xlu0 %v1810, 48
  %v3395 = vpop.permute.xlu0 %3394
  %3396 = vrot.lane.b32.xlu0 %v1811, 48
  %v3397 = vpop.permute.xlu0 %3396
  %3398 = vrot.lane.b32.xlu0 %v1812, 48
  %v3399 = vpop.permute.xlu0 %3398
  %3400 = vrot.lane.b32.xlu0 %v1813, 48
  %v3401 = vpop.permute.xlu0 %3400
  %3402 = vrot.lane.b32.xlu0 %v1814, 48
  %v3403 = vpop.permute.xlu0 %3402
  %3404 = vrot.lane.b32.xlu0 %v1815, 48
  %v3405 = vpop.permute.xlu0 %3404
  %3406 = vrot.lane.b32.xlu0 %v1816, 48
  %v3407 = vpop.permute.xlu0 %3406
  %3408 = vrot.lane.b32.xlu0 %v1817, 48
  %v3409 = vpop.permute.xlu0 %3408
  %3410 = vrot.lane.b32.xlu0 %v1818, 48
  %v3411 = vpop.permute.xlu0 %3410
  %3412 = vrot.lane.b32.xlu0 %v1819, 48
  %v3413 = vpop.permute.xlu0 %3412
  %3414 = vrot.lane.b32.xlu0 %v1820, 48
  %v3415 = vpop.permute.xlu0 %3414
  %3416 = vrot.lane.b32.xlu0 %v1821, 48
  %v3417 = vpop.permute.xlu0 %3416
  %3418 = vrot.lane.b32.xlu0 %v1822, 48
  %v3419 = vpop.permute.xlu0 %3418
  %3420 = vrot.lane.b32.xlu0 %v1823, 48
  %v3421 = vpop.permute.xlu0 %3420
  %3422 = vrot.lane.b32.xlu0 %v1824, 48
  %v3423 = vpop.permute.xlu0 %3422
  %3424 = vrot.lane.b32.xlu0 %v1825, 48
  %v3425 = vpop.permute.xlu0 %3424
  %3554 = vrot.lane.b32.xlu0 %v1826, 56
  %v3555 = vpop.permute.xlu0 %3554
  %3556 = vrot.lane.b32.xlu0 %v1827, 56
  %v3557 = vpop.permute.xlu0 %3556
  %3558 = vrot.lane.b32.xlu0 %v1828, 56
  %v3559 = vpop.permute.xlu0 %3558
  %3560 = vrot.lane.b32.xlu0 %v1829, 56
  %v3561 = vpop.permute.xlu0 %3560
  %3562 = vrot.lane.b32.xlu0 %v1830, 56
  %v3563 = vpop.permute.xlu0 %3562
  %3564 = vrot.lane.b32.xlu0 %v1831, 56
  %v3565 = vpop.permute.xlu0 %3564
  %3566 = vrot.lane.b32.xlu0 %v1832, 56
  %v3567 = vpop.permute.xlu0 %3566
  %3568 = vrot.lane.b32.xlu0 %v1833, 56
  %v3569 = vpop.permute.xlu0 %3568
  %3570 = vrot.lane.b32.xlu0 %v1834, 56
  %v3571 = vpop.permute.xlu0 %3570
  %3572 = vrot.lane.b32.xlu0 %v1835, 56
  %v3573 = vpop.permute.xlu0 %3572
  %3574 = vrot.lane.b32.xlu0 %v1836, 56
  %v3575 = vpop.permute.xlu0 %3574
  %3576 = vrot.lane.b32.xlu0 %v1837, 56
  %v3577 = vpop.permute.xlu0 %3576
  %3578 = vrot.lane.b32.xlu0 %v1838, 56
  %v3579 = vpop.permute.xlu0 %3578
  %3580 = vrot.lane.b32.xlu0 %v1839, 56
  %v3581 = vpop.permute.xlu0 %3580
  %3582 = vrot.lane.b32.xlu0 %v1840, 56
  %v3583 = vpop.permute.xlu0 %3582
  %3584 = vrot.lane.b32.xlu0 %v1841, 56
  %v3585 = vpop.permute.xlu0 %3584
  %3586 = vrot.lane.b32.xlu0 %v1842, 56
  %v3587 = vpop.permute.xlu0 %3586
  %3588 = vrot.lane.b32.xlu0 %v1843, 56
  %v3589 = vpop.permute.xlu0 %3588
  %3590 = vrot.lane.b32.xlu0 %v1844, 56
  %v3591 = vpop.permute.xlu0 %3590
  %3592 = vrot.lane.b32.xlu0 %v1845, 56
  %v3593 = vpop.permute.xlu0 %3592
  %3594 = vrot.lane.b32.xlu0 %v1846, 56
  %v3595 = vpop.permute.xlu0 %3594
  %3596 = vrot.lane.b32.xlu0 %v1847, 56
  %v3597 = vpop.permute.xlu0 %3596
  %3598 = vrot.lane.b32.xlu0 %v1848, 56
  %v3599 = vpop.permute.xlu0 %3598
  %3600 = vrot.lane.b32.xlu0 %v1849, 56
  %v3601 = vpop.permute.xlu0 %3600
  %3602 = vrot.lane.b32.xlu0 %v1850, 56
  %v3603 = vpop.permute.xlu0 %3602
  %3604 = vrot.lane.b32.xlu0 %v1851, 56
  %v3605 = vpop.permute.xlu0 %3604
  %3606 = vrot.lane.b32.xlu0 %v1852, 56
  %v3607 = vpop.permute.xlu0 %3606
  %3608 = vrot.lane.b32.xlu0 %v1853, 56
  %v3609 = vpop.permute.xlu0 %3608
  %3610 = vrot.lane.b32.xlu0 %v1854, 56
  %v3611 = vpop.permute.xlu0 %3610
  %3612 = vrot.lane.b32.xlu0 %v1855, 56
  %v3613 = vpop.permute.xlu0 %3612
  %3614 = vrot.lane.b32.xlu0 %v1856, 56
  %v3615 = vpop.permute.xlu0 %3614
  %3616 = vrot.lane.b32.xlu0 %v1857, 56
  %v3617 = vpop.permute.xlu0 %3616
  %3618 = vrot.lane.b32.xlu0 %v1858, 56
  %v3619 = vpop.permute.xlu0 %3618
  %3620 = vrot.lane.b32.xlu0 %v1859, 56
  %v3621 = vpop.permute.xlu0 %3620
  %3622 = vrot.lane.b32.xlu0 %v1860, 56
  %v3623 = vpop.permute.xlu0 %3622
  %3624 = vrot.lane.b32.xlu0 %v1861, 56
  %v3625 = vpop.permute.xlu0 %3624
  %3626 = vrot.lane.b32.xlu0 %v1862, 56
  %v3627 = vpop.permute.xlu0 %3626
  %3628 = vrot.lane.b32.xlu0 %v1863, 56
  %v3629 = vpop.permute.xlu0 %3628
  %3630 = vrot.lane.b32.xlu0 %v1864, 56
  %v3631 = vpop.permute.xlu0 %3630
  %3632 = vrot.lane.b32.xlu0 %v1865, 56
  %v3633 = vpop.permute.xlu0 %3632
  %3634 = vrot.lane.b32.xlu0 %v1866, 56
  %v3635 = vpop.permute.xlu0 %3634
  %3636 = vrot.lane.b32.xlu0 %v1867, 56
  %v3637 = vpop.permute.xlu0 %3636
  %3638 = vrot.lane.b32.xlu0 %v1868, 56
  %v3639 = vpop.permute.xlu0 %3638
  %3640 = vrot.lane.b32.xlu0 %v1869, 56
  %v3641 = vpop.permute.xlu0 %3640
  %3642 = vrot.lane.b32.xlu0 %v1870, 56
  %v3643 = vpop.permute.xlu0 %3642
  %3644 = vrot.lane.b32.xlu0 %v1871, 56
  %v3645 = vpop.permute.xlu0 %3644
  %3646 = vrot.lane.b32.xlu0 %v1872, 56
  %v3647 = vpop.permute.xlu0 %3646
  %3648 = vrot.lane.b32.xlu0 %v1873, 56
  %v3649 = vpop.permute.xlu0 %3648
  %3650 = vrot.lane.b32.xlu0 %v1874, 56
  %v3651 = vpop.permute.xlu0 %3650
  %3652 = vrot.lane.b32.xlu0 %v1875, 56
  %v3653 = vpop.permute.xlu0 %3652
  %3654 = vrot.lane.b32.xlu0 %v1876, 56
  %v3655 = vpop.permute.xlu0 %3654
  %3656 = vrot.lane.b32.xlu0 %v1877, 56
  %v3657 = vpop.permute.xlu0 %3656
  %3658 = vrot.lane.b32.xlu0 %v1878, 56
  %v3659 = vpop.permute.xlu0 %3658
  %3660 = vrot.lane.b32.xlu0 %v1879, 56
  %v3661 = vpop.permute.xlu0 %3660
  %3662 = vrot.lane.b32.xlu0 %v1880, 56
  %v3663 = vpop.permute.xlu0 %3662
  %3664 = vrot.lane.b32.xlu0 %v1881, 56
  %v3665 = vpop.permute.xlu0 %3664
  %3666 = vrot.lane.b32.xlu0 %v1882, 56
  %v3667 = vpop.permute.xlu0 %3666
  %3668 = vrot.lane.b32.xlu0 %v1883, 56
  %v3669 = vpop.permute.xlu0 %3668
  %3670 = vrot.lane.b32.xlu0 %v1884, 56
  %v3671 = vpop.permute.xlu0 %3670
  %3672 = vrot.lane.b32.xlu0 %v1885, 56
  %v3673 = vpop.permute.xlu0 %3672
  %3674 = vrot.lane.b32.xlu0 %v1886, 56
  %v3675 = vpop.permute.xlu0 %3674
  %3676 = vrot.lane.b32.xlu0 %v1887, 56
  %v3677 = vpop.permute.xlu0 %3676
  %3678 = vrot.lane.b32.xlu0 %v1888, 56
  %v3679 = vpop.permute.xlu0 %3678
  %3680 = vrot.lane.b32.xlu0 %v1889, 56
  %v3681 = vpop.permute.xlu0 %3680
  %3810 = vrot.lane.b32.xlu0 %v1890, 64
  %v3811 = vpop.permute.xlu0 %3810
  %3812 = vrot.lane.b32.xlu0 %v1891, 64
  %v3813 = vpop.permute.xlu0 %3812
  %3814 = vrot.lane.b32.xlu0 %v1892, 64
  %v3815 = vpop.permute.xlu0 %3814
  %3816 = vrot.lane.b32.xlu0 %v1893, 64
  %v3817 = vpop.permute.xlu0 %3816
  %3818 = vrot.lane.b32.xlu0 %v1894, 64
  %v3819 = vpop.permute.xlu0 %3818
  %3820 = vrot.lane.b32.xlu0 %v1895, 64
  %v3821 = vpop.permute.xlu0 %3820
  %3822 = vrot.lane.b32.xlu0 %v1896, 64
  %v3823 = vpop.permute.xlu0 %3822
  %3824 = vrot.lane.b32.xlu0 %v1897, 64
  %v3825 = vpop.permute.xlu0 %3824
  %3826 = vrot.lane.b32.xlu0 %v1898, 64
  %v3827 = vpop.permute.xlu0 %3826
  %3828 = vrot.lane.b32.xlu0 %v1899, 64
  %v3829 = vpop.permute.xlu0 %3828
  %3830 = vrot.lane.b32.xlu0 %v1900, 64
  %v3831 = vpop.permute.xlu0 %3830
  %3832 = vrot.lane.b32.xlu0 %v1901, 64
  %v3833 = vpop.permute.xlu0 %3832
  %3834 = vrot.lane.b32.xlu0 %v1902, 64
  %v3835 = vpop.permute.xlu0 %3834
  %3836 = vrot.lane.b32.xlu0 %v1903, 64
  %v3837 = vpop.permute.xlu0 %3836
  %3838 = vrot.lane.b32.xlu0 %v1904, 64
  %v3839 = vpop.permute.xlu0 %3838
  %3840 = vrot.lane.b32.xlu0 %v1905, 64
  %v3841 = vpop.permute.xlu0 %3840
  %3842 = vrot.lane.b32.xlu0 %v1906, 64
  %v3843 = vpop.permute.xlu0 %3842
  %3844 = vrot.lane.b32.xlu0 %v1907, 64
  %v3845 = vpop.permute.xlu0 %3844
  %3846 = vrot.lane.b32.xlu0 %v1908, 64
  %v3847 = vpop.permute.xlu0 %3846
  %3848 = vrot.lane.b32.xlu0 %v1909, 64
  %v3849 = vpop.permute.xlu0 %3848
  %3850 = vrot.lane.b32.xlu0 %v1910, 64
  %v3851 = vpop.permute.xlu0 %3850
  %3852 = vrot.lane.b32.xlu0 %v1911, 64
  %v3853 = vpop.permute.xlu0 %3852
  %3854 = vrot.lane.b32.xlu0 %v1912, 64
  %v3855 = vpop.permute.xlu0 %3854
  %3856 = vrot.lane.b32.xlu0 %v1913, 64
  %v3857 = vpop.permute.xlu0 %3856
  %3858 = vrot.lane.b32.xlu0 %v1914, 64
  %v3859 = vpop.permute.xlu0 %3858
  %3860 = vrot.lane.b32.xlu0 %v1915, 64
  %v3861 = vpop.permute.xlu0 %3860
  %3862 = vrot.lane.b32.xlu0 %v1916, 64
  %v3863 = vpop.permute.xlu0 %3862
  %3864 = vrot.lane.b32.xlu0 %v1917, 64
  %v3865 = vpop.permute.xlu0 %3864
  %3866 = vrot.lane.b32.xlu0 %v1918, 64
  %v3867 = vpop.permute.xlu0 %3866
  %3868 = vrot.lane.b32.xlu0 %v1919, 64
  %v3869 = vpop.permute.xlu0 %3868
  %3870 = vrot.lane.b32.xlu0 %v1920, 64
  %v3871 = vpop.permute.xlu0 %3870
  %3872 = vrot.lane.b32.xlu0 %v1921, 64
  %v3873 = vpop.permute.xlu0 %3872
  %3874 = vrot.lane.b32.xlu0 %v1922, 64
  %v3875 = vpop.permute.xlu0 %3874
  %3876 = vrot.lane.b32.xlu0 %v1923, 64
  %v3877 = vpop.permute.xlu0 %3876
  %3878 = vrot.lane.b32.xlu0 %v1924, 64
  %v3879 = vpop.permute.xlu0 %3878
  %3880 = vrot.lane.b32.xlu0 %v1925, 64
  %v3881 = vpop.permute.xlu0 %3880
  %3882 = vrot.lane.b32.xlu0 %v1926, 64
  %v3883 = vpop.permute.xlu0 %3882
  %3884 = vrot.lane.b32.xlu0 %v1927, 64
  %v3885 = vpop.permute.xlu0 %3884
  %3886 = vrot.lane.b32.xlu0 %v1928, 64
  %v3887 = vpop.permute.xlu0 %3886
  %3888 = vrot.lane.b32.xlu0 %v1929, 64
  %v3889 = vpop.permute.xlu0 %3888
  %3890 = vrot.lane.b32.xlu0 %v1930, 64
  %v3891 = vpop.permute.xlu0 %3890
  %3892 = vrot.lane.b32.xlu0 %v1931, 64
  %v3893 = vpop.permute.xlu0 %3892
  %3894 = vrot.lane.b32.xlu0 %v1932, 64
  %v3895 = vpop.permute.xlu0 %3894
  %3896 = vrot.lane.b32.xlu0 %v1933, 64
  %v3897 = vpop.permute.xlu0 %3896
  %3898 = vrot.lane.b32.xlu0 %v1934, 64
  %v3899 = vpop.permute.xlu0 %3898
  %3900 = vrot.lane.b32.xlu0 %v1935, 64
  %v3901 = vpop.permute.xlu0 %3900
  %3902 = vrot.lane.b32.xlu0 %v1936, 64
  %v3903 = vpop.permute.xlu0 %3902
  %3904 = vrot.lane.b32.xlu0 %v1937, 64
  %v3905 = vpop.permute.xlu0 %3904
  %3906 = vrot.lane.b32.xlu0 %v1938, 64
  %v3907 = vpop.permute.xlu0 %3906
  %3908 = vrot.lane.b32.xlu0 %v1939, 64
  %v3909 = vpop.permute.xlu0 %3908
  %3910 = vrot.lane.b32.xlu0 %v1940, 64
  %v3911 = vpop.permute.xlu0 %3910
  %3912 = vrot.lane.b32.xlu0 %v1941, 64
  %v3913 = vpop.permute.xlu0 %3912
  %3914 = vrot.lane.b32.xlu0 %v1942, 64
  %v3915 = vpop.permute.xlu0 %3914
  %3916 = vrot.lane.b32.xlu0 %v1943, 64
  %v3917 = vpop.permute.xlu0 %3916
  %3918 = vrot.lane.b32.xlu0 %v1944, 64
  %v3919 = vpop.permute.xlu0 %3918
  %3920 = vrot.lane.b32.xlu0 %v1945, 64
  %v3921 = vpop.permute.xlu0 %3920
  %3922 = vrot.lane.b32.xlu0 %v1946, 64
  %v3923 = vpop.permute.xlu0 %3922
  %3924 = vrot.lane.b32.xlu0 %v1947, 64
  %v3925 = vpop.permute.xlu0 %3924
  %3926 = vrot.lane.b32.xlu0 %v1948, 64
  %v3927 = vpop.permute.xlu0 %3926
  %3928 = vrot.lane.b32.xlu0 %v1949, 64
  %v3929 = vpop.permute.xlu0 %3928
  %3930 = vrot.lane.b32.xlu0 %v1950, 64
  %v3931 = vpop.permute.xlu0 %3930
  %3932 = vrot.lane.b32.xlu0 %v1951, 64
  %v3933 = vpop.permute.xlu0 %3932
  %3934 = vrot.lane.b32.xlu0 %v1952, 64
  %v3935 = vpop.permute.xlu0 %3934
  %3936 = vrot.lane.b32.xlu0 %v1953, 64
  %v3937 = vpop.permute.xlu0 %3936
  %v4002 = vsel %vm26, %v1377, %v2019
  %v4003 = vsel %vm26, %v1378, %v2021
  %v4004 = vsel %vm26, %v1379, %v2023
  %v4005 = vsel %vm26, %v1380, %v2025
  %v4006 = vsel %vm26, %v1381, %v2027
  %v4007 = vsel %vm26, %v1382, %v2029
  %v4008 = vsel %vm26, %v1383, %v2031
  %v4009 = vsel %vm26, %v1384, %v2033
  %v4010 = vsel %vm26, %v1385, %v2035
  %v4011 = vsel %vm26, %v1386, %v2037
  %v4012 = vsel %vm26, %v1387, %v2039
  %v4013 = vsel %vm26, %v1388, %v2041
  %v4014 = vsel %vm26, %v1389, %v2043
  %v4015 = vsel %vm26, %v1390, %v2045
  %v4016 = vsel %vm26, %v1391, %v2047
  %v4017 = vsel %vm26, %v1392, %v2049
  %v4018 = vsel %vm26, %v1393, %v2051
  %v4019 = vsel %vm26, %v1394, %v2053
  %v4020 = vsel %vm26, %v1395, %v2055
  %v4021 = vsel %vm26, %v1396, %v2057
  %v4022 = vsel %vm26, %v1397, %v2059
  %v4023 = vsel %vm26, %v1398, %v2061
  %v4024 = vsel %vm26, %v1399, %v2063
  %v4025 = vsel %vm26, %v1400, %v2065
  %v4026 = vsel %vm26, %v1401, %v2067
  %v4027 = vsel %vm26, %v1402, %v2069
  %v4028 = vsel %vm26, %v1403, %v2071
  %v4029 = vsel %vm26, %v1404, %v2073
  %v4030 = vsel %vm26, %v1405, %v2075
  %v4031 = vsel %vm26, %v1406, %v2077
  %v4032 = vsel %vm26, %v1407, %v2079
  %v4033 = vsel %vm26, %v1408, %v2081
  %v4034 = vsel %vm26, %v1409, %v2083
  %v4035 = vsel %vm26, %v1410, %v2085
  %v4036 = vsel %vm26, %v1411, %v2087
  %v4037 = vsel %vm26, %v1412, %v2089
  %v4038 = vsel %vm26, %v1413, %v2091
  %v4039 = vsel %vm26, %v1414, %v2093
  %v4040 = vsel %vm26, %v1415, %v2095
  %v4041 = vsel %vm26, %v1416, %v2097
  %v4042 = vsel %vm26, %v1417, %v2099
  %v4043 = vsel %vm26, %v1418, %v2101
  %v4044 = vsel %vm26, %v1419, %v2103
  %v4045 = vsel %vm26, %v1420, %v2105
  %v4046 = vsel %vm26, %v1421, %v2107
  %v4047 = vsel %vm26, %v1422, %v2109
  %v4048 = vsel %vm26, %v1423, %v2111
  %v4049 = vsel %vm26, %v1424, %v2113
  %v4050 = vsel %vm26, %v1425, %v2115
  %v4051 = vsel %vm26, %v1426, %v2117
  %v4052 = vsel %vm26, %v1427, %v2119
  %v4053 = vsel %vm26, %v1428, %v2121
  %v4054 = vsel %vm26, %v1429, %v2123
  %v4055 = vsel %vm26, %v1430, %v2125
  %v4056 = vsel %vm26, %v1431, %v2127
  %v4057 = vsel %vm26, %v1432, %v2129
  %v4058 = vsel %vm26, %v1433, %v2131
  %v4059 = vsel %vm26, %v1434, %v2133
  %v4060 = vsel %vm26, %v1435, %v2135
  %v4061 = vsel %vm26, %v1436, %v2137
  %v4062 = vsel %vm26, %v1437, %v2139
  %v4063 = vsel %vm26, %v1438, %v2141
  %v4064 = vsel %vm26, %v1439, %v2143
  %v4065 = vsel %vm26, %v1440, %v2145
  %vm4066 = vcmask 130048
  %v4067 = vsel %vm4066, %v4002, %v2275
  %v4068 = vsel %vm4066, %v4003, %v2277
  %v4069 = vsel %vm4066, %v4004, %v2279
  %v4070 = vsel %vm4066, %v4005, %v2281
  %v4071 = vsel %vm4066, %v4006, %v2283
  %v4072 = vsel %vm4066, %v4007, %v2285
  %v4073 = vsel %vm4066, %v4008, %v2287
  %v4074 = vsel %vm4066, %v4009, %v2289
  %v4075 = vsel %vm4066, %v4010, %v2291
  %v4076 = vsel %vm4066, %v4011, %v2293
  %v4077 = vsel %vm4066, %v4012, %v2295
  %v4078 = vsel %vm4066, %v4013, %v2297
  %v4079 = vsel %vm4066, %v4014, %v2299
  %v4080 = vsel %vm4066, %v4015, %v2301
  %v4081 = vsel %vm4066, %v4016, %v2303
  %v4082 = vsel %vm4066, %v4017, %v2305
  %v4083 = vsel %vm4066, %v4018, %v2307
  %v4084 = vsel %vm4066, %v4019, %v2309
  %v4085 = vsel %vm4066, %v4020, %v2311
  %v4086 = vsel %vm4066, %v4021, %v2313
  %v4087 = vsel %vm4066, %v4022, %v2315
  %v4088 = vsel %vm4066, %v4023, %v2317
  %v4089 = vsel %vm4066, %v4024, %v2319
  %v4090 = vsel %vm4066, %v4025, %v2321
  %v4091 = vsel %vm4066, %v4026, %v2323
  %v4092 = vsel %vm4066, %v4027, %v2325
  %v4093 = vsel %vm4066, %v4028, %v2327
  %v4094 = vsel %vm4066, %v4029, %v2329
  %v4095 = vsel %vm4066, %v4030, %v2331
  %v4096 = vsel %vm4066, %v4031, %v2333
  %v4097 = vsel %vm4066, %v4032, %v2335
  %v4098 = vsel %vm4066, %v4033, %v2337
  %v4099 = vsel %vm4066, %v4034, %v2339
  %v4100 = vsel %vm4066, %v4035, %v2341
  %v4101 = vsel %vm4066, %v4036, %v2343
  %v4102 = vsel %vm4066, %v4037, %v2345
  %v4103 = vsel %vm4066, %v4038, %v2347
  %v4104 = vsel %vm4066, %v4039, %v2349
  %v4105 = vsel %vm4066, %v4040, %v2351
  %v4106 = vsel %vm4066, %v4041, %v2353
  %v4107 = vsel %vm4066, %v4042, %v2355
  %v4108 = vsel %vm4066, %v4043, %v2357
  %v4109 = vsel %vm4066, %v4044, %v2359
  %v4110 = vsel %vm4066, %v4045, %v2361
  %v4111 = vsel %vm4066, %v4046, %v2363
  %v4112 = vsel %vm4066, %v4047, %v2365
  %v4113 = vsel %vm4066, %v4048, %v2367
  %v4114 = vsel %vm4066, %v4049, %v2369
  %v4115 = vsel %vm4066, %v4050, %v2371
  %v4116 = vsel %vm4066, %v4051, %v2373
  %v4117 = vsel %vm4066, %v4052, %v2375
  %v4118 = vsel %vm4066, %v4053, %v2377
  %v4119 = vsel %vm4066, %v4054, %v2379
  %v4120 = vsel %vm4066, %v4055, %v2381
  %v4121 = vsel %vm4066, %v4056, %v2383
  %v4122 = vsel %vm4066, %v4057, %v2385
  %v4123 = vsel %vm4066, %v4058, %v2387
  %v4124 = vsel %vm4066, %v4059, %v2389
  %v4125 = vsel %vm4066, %v4060, %v2391
  %v4126 = vsel %vm4066, %v4061, %v2393
  %v4127 = vsel %vm4066, %v4062, %v2395
  %v4128 = vsel %vm4066, %v4063, %v2397
  %v4129 = vsel %vm4066, %v4064, %v2399
  %v4130 = vsel %vm4066, %v4065, %v2401
  %vm4131 = vcmask 195584
  %v4132 = vsel %vm4131, %v4067, %v2531
  %v4133 = vsel %vm4131, %v4068, %v2533
  %v4134 = vsel %vm4131, %v4069, %v2535
  %v4135 = vsel %vm4131, %v4070, %v2537
  %v4136 = vsel %vm4131, %v4071, %v2539
  %v4137 = vsel %vm4131, %v4072, %v2541
  %v4138 = vsel %vm4131, %v4073, %v2543
  %v4139 = vsel %vm4131, %v4074, %v2545
  %v4140 = vsel %vm4131, %v4075, %v2547
  %v4141 = vsel %vm4131, %v4076, %v2549
  %v4142 = vsel %vm4131, %v4077, %v2551
  %v4143 = vsel %vm4131, %v4078, %v2553
  %v4144 = vsel %vm4131, %v4079, %v2555
  %v4145 = vsel %vm4131, %v4080, %v2557
  %v4146 = vsel %vm4131, %v4081, %v2559
  %v4147 = vsel %vm4131, %v4082, %v2561
  %v4148 = vsel %vm4131, %v4083, %v2563
  %v4149 = vsel %vm4131, %v4084, %v2565
  %v4150 = vsel %vm4131, %v4085, %v2567
  %v4151 = vsel %vm4131, %v4086, %v2569
  %v4152 = vsel %vm4131, %v4087, %v2571
  %v4153 = vsel %vm4131, %v4088, %v2573
  %v4154 = vsel %vm4131, %v4089, %v2575
  %v4155 = vsel %vm4131, %v4090, %v2577
  %v4156 = vsel %vm4131, %v4091, %v2579
  %v4157 = vsel %vm4131, %v4092, %v2581
  %v4158 = vsel %vm4131, %v4093, %v2583
  %v4159 = vsel %vm4131, %v4094, %v2585
  %v4160 = vsel %vm4131, %v4095, %v2587
  %v4161 = vsel %vm4131, %v4096, %v2589
  %v4162 = vsel %vm4131, %v4097, %v2591
  %v4163 = vsel %vm4131, %v4098, %v2593
  %v4164 = vsel %vm4131, %v4099, %v2595
  %v4165 = vsel %vm4131, %v4100, %v2597
  %v4166 = vsel %vm4131, %v4101, %v2599
  %v4167 = vsel %vm4131, %v4102, %v2601
  %v4168 = vsel %vm4131, %v4103, %v2603
  %v4169 = vsel %vm4131, %v4104, %v2605
  %v4170 = vsel %vm4131, %v4105, %v2607
  %v4171 = vsel %vm4131, %v4106, %v2609
  %v4172 = vsel %vm4131, %v4107, %v2611
  %v4173 = vsel %vm4131, %v4108, %v2613
  %v4174 = vsel %vm4131, %v4109, %v2615
  %v4175 = vsel %vm4131, %v4110, %v2617
  %v4176 = vsel %vm4131, %v4111, %v2619
  %v4177 = vsel %vm4131, %v4112, %v2621
  %v4178 = vsel %vm4131, %v4113, %v2623
  %v4179 = vsel %vm4131, %v4114, %v2625
  %v4180 = vsel %vm4131, %v4115, %v2627
  %v4181 = vsel %vm4131, %v4116, %v2629
  %v4182 = vsel %vm4131, %v4117, %v2631
  %v4183 = vsel %vm4131, %v4118, %v2633
  %v4184 = vsel %vm4131, %v4119, %v2635
  %v4185 = vsel %vm4131, %v4120, %v2637
  %v4186 = vsel %vm4131, %v4121, %v2639
  %v4187 = vsel %vm4131, %v4122, %v2641
  %v4188 = vsel %vm4131, %v4123, %v2643
  %v4189 = vsel %vm4131, %v4124, %v2645
  %v4190 = vsel %vm4131, %v4125, %v2647
  %v4191 = vsel %vm4131, %v4126, %v2649
  %v4192 = vsel %vm4131, %v4127, %v2651
  %v4193 = vsel %vm4131, %v4128, %v2653
  %v4194 = vsel %vm4131, %v4129, %v2655
  %v4195 = vsel %vm4131, %v4130, %v2657
  %vm4196 = vcmask 261120
  %v4197 = vsel %vm4196, %v4132, %v2787
  %v4198 = vsel %vm4196, %v4133, %v2789
  %v4199 = vsel %vm4196, %v4134, %v2791
  %v4200 = vsel %vm4196, %v4135, %v2793
  %v4201 = vsel %vm4196, %v4136, %v2795
  %v4202 = vsel %vm4196, %v4137, %v2797
  %v4203 = vsel %vm4196, %v4138, %v2799
  %v4204 = vsel %vm4196, %v4139, %v2801
  %v4205 = vsel %vm4196, %v4140, %v2803
  %v4206 = vsel %vm4196, %v4141, %v2805
  %v4207 = vsel %vm4196, %v4142, %v2807
  %v4208 = vsel %vm4196, %v4143, %v2809
  %v4209 = vsel %vm4196, %v4144, %v2811
  %v4210 = vsel %vm4196, %v4145, %v2813
  %v4211 = vsel %vm4196, %v4146, %v2815
  %v4212 = vsel %vm4196, %v4147, %v2817
  %v4213 = vsel %vm4196, %v4148, %v2819
  %v4214 = vsel %vm4196, %v4149, %v2821
  %v4215 = vsel %vm4196, %v4150, %v2823
  %v4216 = vsel %vm4196, %v4151, %v2825
  %v4217 = vsel %vm4196, %v4152, %v2827
  %v4218 = vsel %vm4196, %v4153, %v2829
  %v4219 = vsel %vm4196, %v4154, %v2831
  %v4220 = vsel %vm4196, %v4155, %v2833
  %v4221 = vsel %vm4196, %v4156, %v2835
  %v4222 = vsel %vm4196, %v4157, %v2837
  %v4223 = vsel %vm4196, %v4158, %v2839
  %v4224 = vsel %vm4196, %v4159, %v2841
  %v4225 = vsel %vm4196, %v4160, %v2843
  %v4226 = vsel %vm4196, %v4161, %v2845
  %v4227 = vsel %vm4196, %v4162, %v2847
  %v4228 = vsel %vm4196, %v4163, %v2849
  %v4229 = vsel %vm4196, %v4164, %v2851
  %v4230 = vsel %vm4196, %v4165, %v2853
  %v4231 = vsel %vm4196, %v4166, %v2855
  %v4232 = vsel %vm4196, %v4167, %v2857
  %v4233 = vsel %vm4196, %v4168, %v2859
  %v4234 = vsel %vm4196, %v4169, %v2861
  %v4235 = vsel %vm4196, %v4170, %v2863
  %v4236 = vsel %vm4196, %v4171, %v2865
  %v4237 = vsel %vm4196, %v4172, %v2867
  %v4238 = vsel %vm4196, %v4173, %v2869
  %v4239 = vsel %vm4196, %v4174, %v2871
  %v4240 = vsel %vm4196, %v4175, %v2873
  %v4241 = vsel %vm4196, %v4176, %v2875
  %v4242 = vsel %vm4196, %v4177, %v2877
  %v4243 = vsel %vm4196, %v4178, %v2879
  %v4244 = vsel %vm4196, %v4179, %v2881
  %v4245 = vsel %vm4196, %v4180, %v2883
  %v4246 = vsel %vm4196, %v4181, %v2885
  %v4247 = vsel %vm4196, %v4182, %v2887
  %v4248 = vsel %vm4196, %v4183, %v2889
  %v4249 = vsel %vm4196, %v4184, %v2891
  %v4250 = vsel %vm4196, %v4185, %v2893
  %v4251 = vsel %vm4196, %v4186, %v2895
  %v4252 = vsel %vm4196, %v4187, %v2897
  %v4253 = vsel %vm4196, %v4188, %v2899
  %v4254 = vsel %vm4196, %v4189, %v2901
  %v4255 = vsel %vm4196, %v4190, %v2903
  %v4256 = vsel %vm4196, %v4191, %v2905
  %v4257 = vsel %vm4196, %v4192, %v2907
  %v4258 = vsel %vm4196, %v4193, %v2909
  %v4259 = vsel %vm4196, %v4194, %v2911
  %v4260 = vsel %vm4196, %v4195, %v2913
  %vm4261 = vcmask 326656
  %v4262 = vsel %vm4261, %v4197, %v3043
  %v4263 = vsel %vm4261, %v4198, %v3045
  %v4264 = vsel %vm4261, %v4199, %v3047
  %v4265 = vsel %vm4261, %v4200, %v3049
  %v4266 = vsel %vm4261, %v4201, %v3051
  %v4267 = vsel %vm4261, %v4202, %v3053
  %v4268 = vsel %vm4261, %v4203, %v3055
  %v4269 = vsel %vm4261, %v4204, %v3057
  %v4270 = vsel %vm4261, %v4205, %v3059
  %v4271 = vsel %vm4261, %v4206, %v3061
  %v4272 = vsel %vm4261, %v4207, %v3063
  %v4273 = vsel %vm4261, %v4208, %v3065
  %v4274 = vsel %vm4261, %v4209, %v3067
  %v4275 = vsel %vm4261, %v4210, %v3069
  %v4276 = vsel %vm4261, %v4211, %v3071
  %v4277 = vsel %vm4261, %v4212, %v3073
  %v4278 = vsel %vm4261, %v4213, %v3075
  %v4279 = vsel %vm4261, %v4214, %v3077
  %v4280 = vsel %vm4261, %v4215, %v3079
  %v4281 = vsel %vm4261, %v4216, %v3081
  %v4282 = vsel %vm4261, %v4217, %v3083
  %v4283 = vsel %vm4261, %v4218, %v3085
  %v4284 = vsel %vm4261, %v4219, %v3087
  %v4285 = vsel %vm4261, %v4220, %v3089
  %v4286 = vsel %vm4261, %v4221, %v3091
  %v4287 = vsel %vm4261, %v4222, %v3093
  %v4288 = vsel %vm4261, %v4223, %v3095
  %v4289 = vsel %vm4261, %v4224, %v3097
  %v4290 = vsel %vm4261, %v4225, %v3099
  %v4291 = vsel %vm4261, %v4226, %v3101
  %v4292 = vsel %vm4261, %v4227, %v3103
  %v4293 = vsel %vm4261, %v4228, %v3105
  %v4294 = vsel %vm4261, %v4229, %v3107
  %v4295 = vsel %vm4261, %v4230, %v3109
  %v4296 = vsel %vm4261, %v4231, %v3111
  %v4297 = vsel %vm4261, %v4232, %v3113
  %v4298 = vsel %vm4261, %v4233, %v3115
  %v4299 = vsel %vm4261, %v4234, %v3117
  %v4300 = vsel %vm4261, %v4235, %v3119
  %v4301 = vsel %vm4261, %v4236, %v3121
  %v4302 = vsel %vm4261, %v4237, %v3123
  %v4303 = vsel %vm4261, %v4238, %v3125
  %v4304 = vsel %vm4261, %v4239, %v3127
  %v4305 = vsel %vm4261, %v4240, %v3129
  %v4306 = vsel %vm4261, %v4241, %v3131
  %v4307 = vsel %vm4261, %v4242, %v3133
  %v4308 = vsel %vm4261, %v4243, %v3135
  %v4309 = vsel %vm4261, %v4244, %v3137
  %v4310 = vsel %vm4261, %v4245, %v3139
  %v4311 = vsel %vm4261, %v4246, %v3141
  %v4312 = vsel %vm4261, %v4247, %v3143
  %v4313 = vsel %vm4261, %v4248, %v3145
  %v4314 = vsel %vm4261, %v4249, %v3147
  %v4315 = vsel %vm4261, %v4250, %v3149
  %v4316 = vsel %vm4261, %v4251, %v3151
  %v4317 = vsel %vm4261, %v4252, %v3153
  %v4318 = vsel %vm4261, %v4253, %v3155
  %v4319 = vsel %vm4261, %v4254, %v3157
  %v4320 = vsel %vm4261, %v4255, %v3159
  %v4321 = vsel %vm4261, %v4256, %v3161
  %v4322 = vsel %vm4261, %v4257, %v3163
  %v4323 = vsel %vm4261, %v4258, %v3165
  %v4324 = vsel %vm4261, %v4259, %v3167
  %v4325 = vsel %vm4261, %v4260, %v3169
  %vm4326 = vcmask 392192
  %v4327 = vsel %vm4326, %v4262, %v3299
  %v4328 = vsel %vm4326, %v4263, %v3301
  %v4329 = vsel %vm4326, %v4264, %v3303
  %v4330 = vsel %vm4326, %v4265, %v3305
  %v4331 = vsel %vm4326, %v4266, %v3307
  %v4332 = vsel %vm4326, %v4267, %v3309
  %v4333 = vsel %vm4326, %v4268, %v3311
  %v4334 = vsel %vm4326, %v4269, %v3313
  %v4335 = vsel %vm4326, %v4270, %v3315
  %v4336 = vsel %vm4326, %v4271, %v3317
  %v4337 = vsel %vm4326, %v4272, %v3319
  %v4338 = vsel %vm4326, %v4273, %v3321
  %v4339 = vsel %vm4326, %v4274, %v3323
  %v4340 = vsel %vm4326, %v4275, %v3325
  %v4341 = vsel %vm4326, %v4276, %v3327
  %v4342 = vsel %vm4326, %v4277, %v3329
  %v4343 = vsel %vm4326, %v4278, %v3331
  %v4344 = vsel %vm4326, %v4279, %v3333
  %v4345 = vsel %vm4326, %v4280, %v3335
  %v4346 = vsel %vm4326, %v4281, %v3337
  %v4347 = vsel %vm4326, %v4282, %v3339
  %v4348 = vsel %vm4326, %v4283, %v3341
  %v4349 = vsel %vm4326, %v4284, %v3343
  %v4350 = vsel %vm4326, %v4285, %v3345
  %v4351 = vsel %vm4326, %v4286, %v3347
  %v4352 = vsel %vm4326, %v4287, %v3349
  %v4353 = vsel %vm4326, %v4288, %v3351
  %v4354 = vsel %vm4326, %v4289, %v3353
  %v4355 = vsel %vm4326, %v4290, %v3355
  %v4356 = vsel %vm4326, %v4291, %v3357
  %v4357 = vsel %vm4326, %v4292, %v3359
  %v4358 = vsel %vm4326, %v4293, %v3361
  %v4359 = vsel %vm4326, %v4294, %v3363
  %v4360 = vsel %vm4326, %v4295, %v3365
  %v4361 = vsel %vm4326, %v4296, %v3367
  %v4362 = vsel %vm4326, %v4297, %v3369
  %v4363 = vsel %vm4326, %v4298, %v3371
  %v4364 = vsel %vm4326, %v4299, %v3373
  %v4365 = vsel %vm4326, %v4300, %v3375
  %v4366 = vsel %vm4326, %v4301, %v3377
  %v4367 = vsel %vm4326, %v4302, %v3379
  %v4368 = vsel %vm4326, %v4303, %v3381
  %v4369 = vsel %vm4326, %v4304, %v3383
  %v4370 = vsel %vm4326, %v4305, %v3385
  %v4371 = vsel %vm4326, %v4306, %v3387
  %v4372 = vsel %vm4326, %v4307, %v3389
  %v4373 = vsel %vm4326, %v4308, %v3391
  %v4374 = vsel %vm4326, %v4309, %v3393
  %v4375 = vsel %vm4326, %v4310, %v3395
  %v4376 = vsel %vm4326, %v4311, %v3397
  %v4377 = vsel %vm4326, %v4312, %v3399
  %v4378 = vsel %vm4326, %v4313, %v3401
  %v4379 = vsel %vm4326, %v4314, %v3403
  %v4380 = vsel %vm4326, %v4315, %v3405
  %v4381 = vsel %vm4326, %v4316, %v3407
  %v4382 = vsel %vm4326, %v4317, %v3409
  %v4383 = vsel %vm4326, %v4318, %v3411
  %v4384 = vsel %vm4326, %v4319, %v3413
  %v4385 = vsel %vm4326, %v4320, %v3415
  %v4386 = vsel %vm4326, %v4321, %v3417
  %v4387 = vsel %vm4326, %v4322, %v3419
  %v4388 = vsel %vm4326, %v4323, %v3421
  %v4389 = vsel %vm4326, %v4324, %v3423
  %v4390 = vsel %vm4326, %v4325, %v3425
  %vm4391 = vcmask 457728
  %v4392 = vsel %vm4391, %v4327, %v3555
  %v4393 = vsel %vm4391, %v4328, %v3557
  %v4394 = vsel %vm4391, %v4329, %v3559
  %v4395 = vsel %vm4391, %v4330, %v3561
  %v4396 = vsel %vm4391, %v4331, %v3563
  %v4397 = vsel %vm4391, %v4332, %v3565
  %v4398 = vsel %vm4391, %v4333, %v3567
  %v4399 = vsel %vm4391, %v4334, %v3569
  %v4400 = vsel %vm4391, %v4335, %v3571
  %v4401 = vsel %vm4391, %v4336, %v3573
  %v4402 = vsel %vm4391, %v4337, %v3575
  %v4403 = vsel %vm4391, %v4338, %v3577
  %v4404 = vsel %vm4391, %v4339, %v3579
  %v4405 = vsel %vm4391, %v4340, %v3581
  %v4406 = vsel %vm4391, %v4341, %v3583
  %v4407 = vsel %vm4391, %v4342, %v3585
  %v4408 = vsel %vm4391, %v4343, %v3587
  %v4409 = vsel %vm4391, %v4344, %v3589
  %v4410 = vsel %vm4391, %v4345, %v3591
  %v4411 = vsel %vm4391, %v4346, %v3593
  %v4412 = vsel %vm4391, %v4347, %v3595
  %v4413 = vsel %vm4391, %v4348, %v3597
  %v4414 = vsel %vm4391, %v4349, %v3599
  %v4415 = vsel %vm4391, %v4350, %v3601
  %v4416 = vsel %vm4391, %v4351, %v3603
  %v4417 = vsel %vm4391, %v4352, %v3605
  %v4418 = vsel %vm4391, %v4353, %v3607
  %v4419 = vsel %vm4391, %v4354, %v3609
  %v4420 = vsel %vm4391, %v4355, %v3611
  %v4421 = vsel %vm4391, %v4356, %v3613
  %v4422 = vsel %vm4391, %v4357, %v3615
  %v4423 = vsel %vm4391, %v4358, %v3617
  %v4424 = vsel %vm4391, %v4359, %v3619
  %v4425 = vsel %vm4391, %v4360, %v3621
  %v4426 = vsel %vm4391, %v4361, %v3623
  %v4427 = vsel %vm4391, %v4362, %v3625
  %v4428 = vsel %vm4391, %v4363, %v3627
  %v4429 = vsel %vm4391, %v4364, %v3629
  %v4430 = vsel %vm4391, %v4365, %v3631
  %v4431 = vsel %vm4391, %v4366, %v3633
  %v4432 = vsel %vm4391, %v4367, %v3635
  %v4433 = vsel %vm4391, %v4368, %v3637
  %v4434 = vsel %vm4391, %v4369, %v3639
  %v4435 = vsel %vm4391, %v4370, %v3641
  %v4436 = vsel %vm4391, %v4371, %v3643
  %v4437 = vsel %vm4391, %v4372, %v3645
  %v4438 = vsel %vm4391, %v4373, %v3647
  %v4439 = vsel %vm4391, %v4374, %v3649
  %v4440 = vsel %vm4391, %v4375, %v3651
  %v4441 = vsel %vm4391, %v4376, %v3653
  %v4442 = vsel %vm4391, %v4377, %v3655
  %v4443 = vsel %vm4391, %v4378, %v3657
  %v4444 = vsel %vm4391, %v4379, %v3659
  %v4445 = vsel %vm4391, %v4380, %v3661
  %v4446 = vsel %vm4391, %v4381, %v3663
  %v4447 = vsel %vm4391, %v4382, %v3665
  %v4448 = vsel %vm4391, %v4383, %v3667
  %v4449 = vsel %vm4391, %v4384, %v3669
  %v4450 = vsel %vm4391, %v4385, %v3671
  %v4451 = vsel %vm4391, %v4386, %v3673
  %v4452 = vsel %vm4391, %v4387, %v3675
  %v4453 = vsel %vm4391, %v4388, %v3677
  %v4454 = vsel %vm4391, %v4389, %v3679
  %v4455 = vsel %vm4391, %v4390, %v3681
  %v4456 = vsel %vm242, %v4392, %v3811
  %v4457 = vsel %vm242, %v4393, %v3813
  %v4458 = vsel %vm242, %v4394, %v3815
  %v4459 = vsel %vm242, %v4395, %v3817
  %v4460 = vsel %vm242, %v4396, %v3819
  %v4461 = vsel %vm242, %v4397, %v3821
  %v4462 = vsel %vm242, %v4398, %v3823
  %v4463 = vsel %vm242, %v4399, %v3825
  %v4464 = vsel %vm242, %v4400, %v3827
  %v4465 = vsel %vm242, %v4401, %v3829
  %v4466 = vsel %vm242, %v4402, %v3831
  %v4467 = vsel %vm242, %v4403, %v3833
  %v4468 = vsel %vm242, %v4404, %v3835
  %v4469 = vsel %vm242, %v4405, %v3837
  %v4470 = vsel %vm242, %v4406, %v3839
  %v4471 = vsel %vm242, %v4407, %v3841
  %v4472 = vsel %vm242, %v4408, %v3843
  %v4473 = vsel %vm242, %v4409, %v3845
  %v4474 = vsel %vm242, %v4410, %v3847
  %v4475 = vsel %vm242, %v4411, %v3849
  %v4476 = vsel %vm242, %v4412, %v3851
  %v4477 = vsel %vm242, %v4413, %v3853
  %v4478 = vsel %vm242, %v4414, %v3855
  %v4479 = vsel %vm242, %v4415, %v3857
  %v4480 = vsel %vm242, %v4416, %v3859
  %v4481 = vsel %vm242, %v4417, %v3861
  %v4482 = vsel %vm242, %v4418, %v3863
  %v4483 = vsel %vm242, %v4419, %v3865
  %v4484 = vsel %vm242, %v4420, %v3867
  %v4485 = vsel %vm242, %v4421, %v3869
  %v4486 = vsel %vm242, %v4422, %v3871
  %v4487 = vsel %vm242, %v4423, %v3873
  %v4488 = vsel %vm242, %v4424, %v3875
  %v4489 = vsel %vm242, %v4425, %v3877
  %v4490 = vsel %vm242, %v4426, %v3879
  %v4491 = vsel %vm242, %v4427, %v3881
  %v4492 = vsel %vm242, %v4428, %v3883
  %v4493 = vsel %vm242, %v4429, %v3885
  %v4494 = vsel %vm242, %v4430, %v3887
  %v4495 = vsel %vm242, %v4431, %v3889
  %v4496 = vsel %vm242, %v4432, %v3891
  %v4497 = vsel %vm242, %v4433, %v3893
  %v4498 = vsel %vm242, %v4434, %v3895
  %v4499 = vsel %vm242, %v4435, %v3897
  %v4500 = vsel %vm242, %v4436, %v3899
  %v4501 = vsel %vm242, %v4437, %v3901
  %v4502 = vsel %vm242, %v4438, %v3903
  %v4503 = vsel %vm242, %v4439, %v3905
  %v4504 = vsel %vm242, %v4440, %v3907
  %v4505 = vsel %vm242, %v4441, %v3909
  %v4506 = vsel %vm242, %v4442, %v3911
  %v4507 = vsel %vm242, %v4443, %v3913
  %v4508 = vsel %vm242, %v4444, %v3915
  %v4509 = vsel %vm242, %v4445, %v3917
  %v4510 = vsel %vm242, %v4446, %v3919
  %v4511 = vsel %vm242, %v4447, %v3921
  %v4512 = vsel %vm242, %v4448, %v3923
  %v4513 = vsel %vm242, %v4449, %v3925
  %v4514 = vsel %vm242, %v4450, %v3927
  %v4515 = vsel %vm242, %v4451, %v3929
  %v4516 = vsel %vm242, %v4452, %v3931
  %v4517 = vsel %vm242, %v4453, %v3933
  %v4518 = vsel %vm242, %v4454, %v3935
  %v4519 = vsel %vm242, %v4455, %v3937
  %v4520 = vld [vmem:[%s3] sm:$0xff]
  %v4521 = vld [vmem:[%s3 + $0x8] sm:$0xff]
  %v4522 = vld [vmem:[%s3 + $0x10] sm:$0xff]
  %v4523 = vld [vmem:[%s3 + $0x18] sm:$0xff]
  %v4524 = vld [vmem:[%s3 + $0x20] sm:$0xff]
  %v4525 = vld [vmem:[%s3 + $0x28] sm:$0xff]
  %v4526 = vld [vmem:[%s3 + $0x30] sm:$0xff]
  %v4527 = vld [vmem:[%s3 + $0x38] sm:$0xff]
  %v4528 = vld [vmem:[%s3 + $0x40] sm:$0xff]
  %v4529 = vld [vmem:[%s4] sm:$0x1]
  %v4531 = vlaneseq
  %v4532 = vshrl.u32 %v4531, 7
  %v4533 = vsub.s32 0, %v4532
  %v4534 = vrot.slane %v4529, %v4533
  %vm4536 = vcmask 588800
  %v4538 = vsel %vm4536, %v4456, 0
  %v4541 = vsel %vm4536, %v4457, 0
  %v4544 = vsel %vm4536, %v4458, 0
  %v4547 = vsel %vm4536, %v4459, 0
  %v4550 = vsel %vm4536, %v4460, 0
  %v4553 = vsel %vm4536, %v4461, 0
  %v4556 = vsel %vm4536, %v4462, 0
  %v4559 = vsel %vm4536, %v4463, 0
  %v4562 = vsel %vm4536, %v4464, 0
  %v4565 = vsel %vm4536, %v4465, 0
  %v4568 = vsel %vm4536, %v4466, 0
  %v4571 = vsel %vm4536, %v4467, 0
  %v4574 = vsel %vm4536, %v4468, 0
  %v4577 = vsel %vm4536, %v4469, 0
  %v4580 = vsel %vm4536, %v4470, 0
  %v4583 = vsel %vm4536, %v4471, 0
  %v4586 = vsel %vm4536, %v4472, 0
  %v4589 = vsel %vm4536, %v4473, 0
  %v4592 = vsel %vm4536, %v4474, 0
  %v4595 = vsel %vm4536, %v4475, 0
  %v4598 = vsel %vm4536, %v4476, 0
  %v4601 = vsel %vm4536, %v4477, 0
  %v4604 = vsel %vm4536, %v4478, 0
  %v4607 = vsel %vm4536, %v4479, 0
  %v4610 = vsel %vm4536, %v4480, 0
  %v4613 = vsel %vm4536, %v4481, 0
  %v4616 = vsel %vm4536, %v4482, 0
  %v4619 = vsel %vm4536, %v4483, 0
  %v4622 = vsel %vm4536, %v4484, 0
  %v4625 = vsel %vm4536, %v4485, 0
  %v4628 = vsel %vm4536, %v4486, 0
  %v4631 = vsel %vm4536, %v4487, 0
  %v4634 = vsel %vm4536, %v4488, 0
  %v4637 = vsel %vm4536, %v4489, 0
  %v4640 = vsel %vm4536, %v4490, 0
  %v4643 = vsel %vm4536, %v4491, 0
  %v4646 = vsel %vm4536, %v4492, 0
  %v4649 = vsel %vm4536, %v4493, 0
  %v4652 = vsel %vm4536, %v4494, 0
  %v4655 = vsel %vm4536, %v4495, 0
  %v4658 = vsel %vm4536, %v4496, 0
  %v4661 = vsel %vm4536, %v4497, 0
  %v4664 = vsel %vm4536, %v4498, 0
  %v4667 = vsel %vm4536, %v4499, 0
  %v4670 = vsel %vm4536, %v4500, 0
  %v4673 = vsel %vm4536, %v4501, 0
  %v4676 = vsel %vm4536, %v4502, 0
  %v4679 = vsel %vm4536, %v4503, 0
  %v4682 = vsel %vm4536, %v4504, 0
  %v4685 = vsel %vm4536, %v4505, 0
  %v4688 = vsel %vm4536, %v4506, 0
  %v4691 = vsel %vm4536, %v4507, 0
  %v4694 = vsel %vm4536, %v4508, 0
  %v4697 = vsel %vm4536, %v4509, 0
  %v4700 = vsel %vm4536, %v4510, 0
  %v4703 = vsel %vm4536, %v4511, 0
  %v4706 = vsel %vm4536, %v4512, 0
  %v4709 = vsel %vm4536, %v4513, 0
  %v4712 = vsel %vm4536, %v4514, 0
  %v4715 = vsel %vm4536, %v4515, 0
  %v4718 = vsel %vm4536, %v4516, 0
  %v4721 = vsel %vm4536, %v4517, 0
  %v4724 = vsel %vm4536, %v4518, 0
  %v4727 = vsel %vm4536, %v4519, 0
  %4729 = vmatprep.subr.mxu0 0.0
  %4730 = vmatpush1.msra.mxu0 %v4520
  %4731 = vmatprep.subr.mxu0 0.0
  %4732 = vmatpush1.msra.mxu0 %v4521
  %4733 = vmatprep.subr.mxu0 0.0
  %4734 = vmatpush1.msra.mxu0 %v4522
  %4735 = vmatprep.subr.mxu0 0.0
  %4736 = vmatpush1.msra.mxu0 %v4523
  %4737 = vmatprep.subr.mxu0 0.0
  %4738 = vmatpush1.msra.mxu0 %v4524
  %4739 = vmatprep.subr.mxu0 0.0
  %4740 = vmatpush1.msra.mxu0 %v4525
  %4741 = vmatprep.subr.mxu0 0.0
  %4742 = vmatpush1.msra.mxu0 %v4526
  %4743 = vmatprep.subr.mxu0 0.0
  %4744 = vmatpush1.msra.mxu0 %v4527
  %4745 = vmatprep.subr.mxu0 0.0
  %4746 = vmatpush1.msra.mxu0 %v4528
  %4747 = vmatprep.subr.mxu0 0.0
  %4748 = vmatpush1.msra.mxu0 0.0
  %4749 = vmatprep.subr.mxu0 0.0
  %4750 = vmatpush1.msra.mxu0 0.0
  %4751 = vmatprep.subr.mxu0 0.0
  %4752 = vmatpush1.msra.mxu0 0.0
  %4753 = vmatprep.subr.mxu0 0.0
  %4754 = vmatpush1.msra.mxu0 0.0
  %4755 = vmatprep.subr.mxu0 0.0
  %4756 = vmatpush1.msra.mxu0 0.0
  %4757 = vmatprep.subr.mxu0 0.0
  %4758 = vmatpush1.msra.mxu0 0.0
  %4759 = vmatprep.subr.mxu0 0.0
  %4760 = vmatpush1.msra.mxu0 0.0
  %4761 = vmatprep.subr.mxu0 0.0
  %4762 = vmatpush1.msra.mxu0 0.0
  %4763 = vmatprep.subr.mxu0 0.0
  %4764 = vmatpush1.msra.mxu0 0.0
  %4765 = vmatprep.subr.mxu0 0.0
  %4766 = vmatpush1.msra.mxu0 0.0
  %4767 = vmatprep.subr.mxu0 0.0
  %4768 = vmatpush1.msra.mxu0 0.0
  %4769 = vmatprep.subr.mxu0 0.0
  %4770 = vmatpush1.msra.mxu0 0.0
  %4771 = vmatprep.subr.mxu0 0.0
  %4772 = vmatpush1.msra.mxu0 0.0
  %4773 = vmatprep.subr.mxu0 0.0
  %4774 = vmatpush1.msra.mxu0 0.0
  %4775 = vmatprep.subr.mxu0 0.0
  %4776 = vmatpush1.msra.mxu0 0.0
  %4777 = vmatprep.subr.mxu0 0.0
  %4778 = vmatpush1.msra.mxu0 0.0
  %4779 = vmatprep.subr.mxu0 0.0
  %4780 = vmatpush1.msra.mxu0 0.0
  %4781 = vmatprep.subr.mxu0 0.0
  %4782 = vmatpush1.msra.mxu0 0.0
  %4783 = vmatprep.subr.mxu0 0.0
  %4784 = vmatpush1.msra.mxu0 0.0
  %4785 = vmatprep.subr.mxu0 0.0
  %4786 = vmatpush1.msra.mxu0 0.0
  %4787 = vmatprep.subr.mxu0 0.0
  %4788 = vmatpush1.msra.mxu0 0.0
  %4789 = vmatprep.subr.mxu0 0.0
  %4790 = vmatpush1.msra.mxu0 0.0
  %4791 = vmatprep.subr.mxu0 0.0
  %4792 = vmatpush1.msra.mxu0 0.0
  %4793 = vmatprep.mubr.f32.mxu0 0.0
  %4794 = vmatmul.mubr.f32.gmra.mrb[0].mxu0 %v4538
  %v4795 = vpop.f32.mrb[0].mxu0
  %v4796 = vadd.f32 %v4534, %v4795
  %v4797 = vpop.f32.mrb[0].mxu0
  %4798 = vmatprep.mubr.f32.mxu0 0.0
  %4799 = vmatmul.mubr.f32.gmra.mrb[0].mxu0 %v4541
  %v4800 = vpop.f32.mrb[0].mxu0
  %v4801 = vadd.f32 %v4534, %v4800
  %v4802 = vpop.f32.mrb[0].mxu0
  %4803 = vmatprep.mubr.f32.mxu0 0.0
  %4804 = vmatmul.mubr.f32.gmra.mrb[0].mxu0 %v4544
  %v4805 = vpop.f32.mrb[0].mxu0
  %v4806 = vadd.f32 %v4534, %v4805
  %v4807 = vpop.f32.mrb[0].mxu0
  %4808 = vmatprep.mubr.f32.mxu0 0.0
  %4809 = vmatmul.mubr.f32.gmra.mrb[0].mxu0 %v4547
  %v4810 = vpop.f32.mrb[0].mxu0
  %v4811 = vadd.f32 %v4534, %v4810
  %v4812 = vpop.f32.mrb[0].mxu0
  %4813 = vmatprep.mubr.f32.mxu0 0.0
  %4814 = vmatmul.mubr.f32.gmra.mrb[0].mxu0 %v4550
  %v4815 = vpop.f32.mrb[0].mxu0
  %v4816 = vadd.f32 %v4534, %v4815
  %v4817 = vpop.f32.mrb[0].mxu0
  %4818 = vmatprep.mubr.f32.mxu0 0.0
  %4819 = vmatmul.mubr.f32.gmra.mrb[0].mxu0 %v4553
  %v4820 = vpop.f32.mrb[0].mxu0
  %v4821 = vadd.f32 %v4534, %v4820
  %v4822 = vpop.f32.mrb[0].mxu0
  %4823 = vmatprep.mubr.f32.mxu0 0.0
  %4824 = vmatmul.mubr.f32.gmra.mrb[0].mxu0 %v4556
  %v4825 = vpop.f32.mrb[0].mxu0
  %v4826 = vadd.f32 %v4534, %v4825
  %v4827 = vpop.f32.mrb[0].mxu0
  %4828 = vmatprep.mubr.f32.mxu0 0.0
  %4829 = vmatmul.mubr.f32.gmra.mrb[0].mxu0 %v4559
  %v4830 = vpop.f32.mrb[0].mxu0
  %v4831 = vadd.f32 %v4534, %v4830
  %v4832 = vpop.f32.mrb[0].mxu0
  %4833 = vmatprep.mubr.f32.mxu0 0.0
  %4834 = vmatmul.mubr.f32.gmra.mrb[0].mxu0 %v4562
  %v4835 = vpop.f32.mrb[0].mxu0
  %v4836 = vadd.f32 %v4534, %v4835
  %v4837 = vpop.f32.mrb[0].mxu0
  %4838 = vmatprep.mubr.f32.mxu0 0.0
  %4839 = vmatmul.mubr.f32.gmra.mrb[0].mxu0 %v4565
  %v4840 = vpop.f32.mrb[0].mxu0
  %v4841 = vadd.f32 %v4534, %v4840
  %v4842 = vpop.f32.mrb[0].mxu0
  %4843 = vmatprep.mubr.f32.mxu0 0.0
  %4844 = vmatmul.mubr.f32.gmra.mrb[0].mxu0 %v4568
  %v4845 = vpop.f32.mrb[0].mxu0
  %v4846 = vadd.f32 %v4534, %v4845
  %v4847 = vpop.f32.mrb[0].mxu0
  %4848 = vmatprep.mubr.f32.mxu0 0.0
  %4849 = vmatmul.mubr.f32.gmra.mrb[0].mxu0 %v4571
  %v4850 = vpop.f32.mrb[0].mxu0
  %v4851 = vadd.f32 %v4534, %v4850
  %v4852 = vpop.f32.mrb[0].mxu0
  %4853 = vmatprep.mubr.f32.mxu0 0.0
  %4854 = vmatmul.mubr.f32.gmra.mrb[0].mxu0 %v4574
  %v4855 = vpop.f32.mrb[0].mxu0
  %v4856 = vadd.f32 %v4534, %v4855
  %v4857 = vpop.f32.mrb[0].mxu0
  %4858 = vmatprep.mubr.f32.mxu0 0.0
  %4859 = vmatmul.mubr.f32.gmra.mrb[0].mxu0 %v4577
  %v4860 = vpop.f32.mrb[0].mxu0
  %v4861 = vadd.f32 %v4534, %v4860
  %v4862 = vpop.f32.mrb[0].mxu0
  %4863 = vmatprep.mubr.f32.mxu0 0.0
  %4864 = vmatmul.mubr.f32.gmra.mrb[0].mxu0 %v4580
  %v4865 = vpop.f32.mrb[0].mxu0
  %v4866 = vadd.f32 %v4534, %v4865
  %v4867 = vpop.f32.mrb[0].mxu0
  %4868 = vmatprep.mubr.f32.mxu0 0.0
  %4869 = vmatmul.mubr.f32.gmra.mrb[0].mxu0 %v4583
  %v4870 = vpop.f32.mrb[0].mxu0
  %v4871 = vadd.f32 %v4534, %v4870
  %v4872 = vpop.f32.mrb[0].mxu0
  %4873 = vmatprep.mubr.f32.mxu0 0.0
  %4874 = vmatmul.mubr.f32.gmra.mrb[0].mxu0 %v4586
  %v4875 = vpop.f32.mrb[0].mxu0
  %v4876 = vadd.f32 %v4534, %v4875
  %v4877 = vpop.f32.mrb[0].mxu0
  %4878 = vmatprep.mubr.f32.mxu0 0.0
  %4879 = vmatmul.mubr.f32.gmra.mrb[0].mxu0 %v4589
  %v4880 = vpop.f32.mrb[0].mxu0
  %v4881 = vadd.f32 %v4534, %v4880
  %v4882 = vpop.f32.mrb[0].mxu0
  %4883 = vmatprep.mubr.f32.mxu0 0.0
  %4884 = vmatmul.mubr.f32.gmra.mrb[0].mxu0 %v4592
  %v4885 = vpop.f32.mrb[0].mxu0
  %v4886 = vadd.f32 %v4534, %v4885
  %v4887 = vpop.f32.mrb[0].mxu0
  %4888 = vmatprep.mubr.f32.mxu0 0.0
  %4889 = vmatmul.mubr.f32.gmra.mrb[0].mxu0 %v4595
  %v4890 = vpop.f32.mrb[0].mxu0
  %v4891 = vadd.f32 %v4534, %v4890
  %v4892 = vpop.f32.mrb[0].mxu0
  %4893 = vmatprep.mubr.f32.mxu0 0.0
  %4894 = vmatmul.mubr.f32.gmra.mrb[0].mxu0 %v4598
  %v4895 = vpop.f32.mrb[0].mxu0
  %v4896 = vadd.f32 %v4534, %v4895
  %v4897 = vpop.f32.mrb[0].mxu0
  %4898 = vmatprep.mubr.f32.mxu0 0.0
  %4899 = vmatmul.mubr.f32.gmra.mrb[0].mxu0 %v4601
  %v4900 = vpop.f32.mrb[0].mxu0
  %v4901 = vadd.f32 %v4534, %v4900
  %v4902 = vpop.f32.mrb[0].mxu0
  %4903 = vmatprep.mubr.f32.mxu0 0.0
  %4904 = vmatmul.mubr.f32.gmra.mrb[0].mxu0 %v4604
  %v4905 = vpop.f32.mrb[0].mxu0
  %v4906 = vadd.f32 %v4534, %v4905
  %v4907 = vpop.f32.mrb[0].mxu0
  %4908 = vmatprep.mubr.f32.mxu0 0.0
  %4909 = vmatmul.mubr.f32.gmra.mrb[0].mxu0 %v4607
  %v4910 = vpop.f32.mrb[0].mxu0
  %v4911 = vadd.f32 %v4534, %v4910
  %v4912 = vpop.f32.mrb[0].mxu0
  %4913 = vmatprep.mubr.f32.mxu0 0.0
  %4914 = vmatmul.mubr.f32.gmra.mrb[0].mxu0 %v4610
  %v4915 = vpop.f32.mrb[0].mxu0
  %v4916 = vadd.f32 %v4534, %v4915
  %v4917 = vpop.f32.mrb[0].mxu0
  %4918 = vmatprep.mubr.f32.mxu0 0.0
  %4919 = vmatmul.mubr.f32.gmra.mrb[0].mxu0 %v4613
  %v4920 = vpop.f32.mrb[0].mxu0
  %v4921 = vadd.f32 %v4534, %v4920
  %v4922 = vpop.f32.mrb[0].mxu0
  %4923 = vmatprep.mubr.f32.mxu0 0.0
  %4924 = vmatmul.mubr.f32.gmra.mrb[0].mxu0 %v4616
  %v4925 = vpop.f32.mrb[0].mxu0
  %v4926 = vadd.f32 %v4534, %v4925
  %v4927 = vpop.f32.mrb[0].mxu0
  %4928 = vmatprep.mubr.f32.mxu0 0.0
  %4929 = vmatmul.mubr.f32.gmra.mrb[0].mxu0 %v4619
  %v4930 = vpop.f32.mrb[0].mxu0
  %v4931 = vadd.f32 %v4534, %v4930
  %v4932 = vpop.f32.mrb[0].mxu0
  %4933 = vmatprep.mubr.f32.mxu0 0.0
  %4934 = vmatmul.mubr.f32.gmra.mrb[0].mxu0 %v4622
  %v4935 = vpop.f32.mrb[0].mxu0
  %v4936 = vadd.f32 %v4534, %v4935
  %v4937 = vpop.f32.mrb[0].mxu0
  %4938 = vmatprep.mubr.f32.mxu0 0.0
  %4939 = vmatmul.mubr.f32.gmra.mrb[0].mxu0 %v4625
  %v4940 = vpop.f32.mrb[0].mxu0
  %v4941 = vadd.f32 %v4534, %v4940
  %v4942 = vpop.f32.mrb[0].mxu0
  %4943 = vmatprep.mubr.f32.mxu0 0.0
  %4944 = vmatmul.mubr.f32.gmra.mrb[0].mxu0 %v4628
  %v4945 = vpop.f32.mrb[0].mxu0
  %v4946 = vadd.f32 %v4534, %v4945
  %v4947 = vpop.f32.mrb[0].mxu0
  %4948 = vmatprep.mubr.f32.mxu0 0.0
  %4949 = vmatmul.mubr.f32.gmra.mrb[0].mxu0 %v4631
  %v4950 = vpop.f32.mrb[0].mxu0
  %v4951 = vadd.f32 %v4534, %v4950
  %v4952 = vpop.f32.mrb[0].mxu0
  %4953 = vmatprep.mubr.f32.mxu0 0.0
  %4954 = vmatmul.mubr.f32.gmra.mrb[0].mxu0 %v4634
  %v4955 = vpop.f32.mrb[0].mxu0
  %v4956 = vadd.f32 %v4534, %v4955
  %v4957 = vpop.f32.mrb[0].mxu0
  %4958 = vmatprep.mubr.f32.mxu0 0.0
  %4959 = vmatmul.mubr.f32.gmra.mrb[0].mxu0 %v4637
  %v4960 = vpop.f32.mrb[0].mxu0
  %v4961 = vadd.f32 %v4534, %v4960
  %v4962 = vpop.f32.mrb[0].mxu0
  %4963 = vmatprep.mubr.f32.mxu0 0.0
  %4964 = vmatmul.mubr.f32.gmra.mrb[0].mxu0 %v4640
  %v4965 = vpop.f32.mrb[0].mxu0
  %v4966 = vadd.f32 %v4534, %v4965
  %v4967 = vpop.f32.mrb[0].mxu0
  %4968 = vmatprep.mubr.f32.mxu0 0.0
  %4969 = vmatmul.mubr.f32.gmra.mrb[0].mxu0 %v4643
  %v4970 = vpop.f32.mrb[0].mxu0
  %v4971 = vadd.f32 %v4534, %v4970
  %v4972 = vpop.f32.mrb[0].mxu0
  %4973 = vmatprep.mubr.f32.mxu0 0.0
  %4974 = vmatmul.mubr.f32.gmra.mrb[0].mxu0 %v4646
  %v4975 = vpop.f32.mrb[0].mxu0
  %v4976 = vadd.f32 %v4534, %v4975
  %v4977 = vpop.f32.mrb[0].mxu0
  %4978 = vmatprep.mubr.f32.mxu0 0.0
  %4979 = vmatmul.mubr.f32.gmra.mrb[0].mxu0 %v4649
  %v4980 = vpop.f32.mrb[0].mxu0
  %v4981 = vadd.f32 %v4534, %v4980
  %v4982 = vpop.f32.mrb[0].mxu0
  %4983 = vmatprep.mubr.f32.mxu0 0.0
  %4984 = vmatmul.mubr.f32.gmra.mrb[0].mxu0 %v4652
  %v4985 = vpop.f32.mrb[0].mxu0
  %v4986 = vadd.f32 %v4534, %v4985
  %v4987 = vpop.f32.mrb[0].mxu0
  %4988 = vmatprep.mubr.f32.mxu0 0.0
  %4989 = vmatmul.mubr.f32.gmra.mrb[0].mxu0 %v4655
  %v4990 = vpop.f32.mrb[0].mxu0
  %v4991 = vadd.f32 %v4534, %v4990
  %v4992 = vpop.f32.mrb[0].mxu0
  %4993 = vmatprep.mubr.f32.mxu0 0.0
  %4994 = vmatmul.mubr.f32.gmra.mrb[0].mxu0 %v4658
  %v4995 = vpop.f32.mrb[0].mxu0
  %v4996 = vadd.f32 %v4534, %v4995
  %v4997 = vpop.f32.mrb[0].mxu0
  %4998 = vmatprep.mubr.f32.mxu0 0.0
  %4999 = vmatmul.mubr.f32.gmra.mrb[0].mxu0 %v4661
  %v5000 = vpop.f32.mrb[0].mxu0
  %v5001 = vadd.f32 %v4534, %v5000
  %v5002 = vpop.f32.mrb[0].mxu0
  %5003 = vmatprep.mubr.f32.mxu0 0.0
  %5004 = vmatmul.mubr.f32.gmra.mrb[0].mxu0 %v4664
  %v5005 = vpop.f32.mrb[0].mxu0
  %v5006 = vadd.f32 %v4534, %v5005
  %v5007 = vpop.f32.mrb[0].mxu0
  %5008 = vmatprep.mubr.f32.mxu0 0.0
  %5009 = vmatmul.mubr.f32.gmra.mrb[0].mxu0 %v4667
  %v5010 = vpop.f32.mrb[0].mxu0
  %v5011 = vadd.f32 %v4534, %v5010
  %v5012 = vpop.f32.mrb[0].mxu0
  %5013 = vmatprep.mubr.f32.mxu0 0.0
  %5014 = vmatmul.mubr.f32.gmra.mrb[0].mxu0 %v4670
  %v5015 = vpop.f32.mrb[0].mxu0
  %v5016 = vadd.f32 %v4534, %v5015
  %v5017 = vpop.f32.mrb[0].mxu0
  %5018 = vmatprep.mubr.f32.mxu0 0.0
  %5019 = vmatmul.mubr.f32.gmra.mrb[0].mxu0 %v4673
  %v5020 = vpop.f32.mrb[0].mxu0
  %v5021 = vadd.f32 %v4534, %v5020
  %v5022 = vpop.f32.mrb[0].mxu0
  %5023 = vmatprep.mubr.f32.mxu0 0.0
  %5024 = vmatmul.mubr.f32.gmra.mrb[0].mxu0 %v4676
  %v5025 = vpop.f32.mrb[0].mxu0
  %v5026 = vadd.f32 %v4534, %v5025
  %v5027 = vpop.f32.mrb[0].mxu0
  %5028 = vmatprep.mubr.f32.mxu0 0.0
  %5029 = vmatmul.mubr.f32.gmra.mrb[0].mxu0 %v4679
  %v5030 = vpop.f32.mrb[0].mxu0
  %v5031 = vadd.f32 %v4534, %v5030
  %v5032 = vpop.f32.mrb[0].mxu0
  %5033 = vmatprep.mubr.f32.mxu0 0.0
  %5034 = vmatmul.mubr.f32.gmra.mrb[0].mxu0 %v4682
  %v5035 = vpop.f32.mrb[0].mxu0
  %v5036 = vadd.f32 %v4534, %v5035
  %v5037 = vpop.f32.mrb[0].mxu0
  %5038 = vmatprep.mubr.f32.mxu0 0.0
  %5039 = vmatmul.mubr.f32.gmra.mrb[0].mxu0 %v4685
  %v5040 = vpop.f32.mrb[0].mxu0
  %v5041 = vadd.f32 %v4534, %v5040
  %v5042 = vpop.f32.mrb[0].mxu0
  %5043 = vmatprep.mubr.f32.mxu0 0.0
  %5044 = vmatmul.mubr.f32.gmra.mrb[0].mxu0 %v4688
  %v5045 = vpop.f32.mrb[0].mxu0
  %v5046 = vadd.f32 %v4534, %v5045
  %v5047 = vpop.f32.mrb[0].mxu0
  %5048 = vmatprep.mubr.f32.mxu0 0.0
  %5049 = vmatmul.mubr.f32.gmra.mrb[0].mxu0 %v4691
  %v5050 = vpop.f32.mrb[0].mxu0
  %v5051 = vadd.f32 %v4534, %v5050
  %v5052 = vpop.f32.mrb[0].mxu0
  %5053 = vmatprep.mubr.f32.mxu0 0.0
  %5054 = vmatmul.mubr.f32.gmra.mrb[0].mxu0 %v4694
  %v5055 = vpop.f32.mrb[0].mxu0
  %v5056 = vadd.f32 %v4534, %v5055
  %v5057 = vpop.f32.mrb[0].mxu0
  %5058 = vmatprep.mubr.f32.mxu0 0.0
  %5059 = vmatmul.mubr.f32.gmra.mrb[0].mxu0 %v4697
  %v5060 = vpop.f32.mrb[0].mxu0
  %v5061 = vadd.f32 %v4534, %v5060
  %v5062 = vpop.f32.mrb[0].mxu0
  %5063 = vmatprep.mubr.f32.mxu0 0.0
  %5064 = vmatmul.mubr.f32.gmra.mrb[0].mxu0 %v4700
  %v5065 = vpop.f32.mrb[0].mxu0
  %v5066 = vadd.f32 %v4534, %v5065
  %v5067 = vpop.f32.mrb[0].mxu0
  %5068 = vmatprep.mubr.f32.mxu0 0.0
  %5069 = vmatmul.mubr.f32.gmra.mrb[0].mxu0 %v4703
  %v5070 = vpop.f32.mrb[0].mxu0
  %v5071 = vadd.f32 %v4534, %v5070
  %v5072 = vpop.f32.mrb[0].mxu0
  %5073 = vmatprep.mubr.f32.mxu0 0.0
  %5074 = vmatmul.mubr.f32.gmra.mrb[0].mxu0 %v4706
  %v5075 = vpop.f32.mrb[0].mxu0
  %v5076 = vadd.f32 %v4534, %v5075
  %v5077 = vpop.f32.mrb[0].mxu0
  %5078 = vmatprep.mubr.f32.mxu0 0.0
  %5079 = vmatmul.mubr.f32.gmra.mrb[0].mxu0 %v4709
  %v5080 = vpop.f32.mrb[0].mxu0
  %v5081 = vadd.f32 %v4534, %v5080
  %v5082 = vpop.f32.mrb[0].mxu0
  %5083 = vmatprep.mubr.f32.mxu0 0.0
  %5084 = vmatmul.mubr.f32.gmra.mrb[0].mxu0 %v4712
  %v5085 = vpop.f32.mrb[0].mxu0
  %v5086 = vadd.f32 %v4534, %v5085
  %v5087 = vpop.f32.mrb[0].mxu0
  %5088 = vmatprep.mubr.f32.mxu0 0.0
  %5089 = vmatmul.mubr.f32.gmra.mrb[0].mxu0 %v4715
  %v5090 = vpop.f32.mrb[0].mxu0
  %v5091 = vadd.f32 %v4534, %v5090
  %v5092 = vpop.f32.mrb[0].mxu0
  %5093 = vmatprep.mubr.f32.mxu0 0.0
  %5094 = vmatmul.mubr.f32.gmra.mrb[0].mxu0 %v4718
  %v5095 = vpop.f32.mrb[0].mxu0
  %v5096 = vadd.f32 %v4534, %v5095
  %v5097 = vpop.f32.mrb[0].mxu0
  %5098 = vmatprep.mubr.f32.mxu0 0.0
  %5099 = vmatmul.mubr.f32.gmra.mrb[0].mxu0 %v4721
  %v5100 = vpop.f32.mrb[0].mxu0
  %v5101 = vadd.f32 %v4534, %v5100
  %v5102 = vpop.f32.mrb[0].mxu0
  %5103 = vmatprep.mubr.f32.mxu0 0.0
  %5104 = vmatmul.mubr.f32.gmra.mrb[0].mxu0 %v4724
  %v5105 = vpop.f32.mrb[0].mxu0
  %v5106 = vadd.f32 %v4534, %v5105
  %v5107 = vpop.f32.mrb[0].mxu0
  %5108 = vmatprep.mubr.f32.mxu0 0.0
  %5109 = vmatmul.mubr.f32.gmra.mrb[0].mxu0 %v4727
  %v5110 = vpop.f32.mrb[0].mxu0
  %v5111 = vadd.f32 %v4534, %v5110
  %v5112 = vpop.f32.mrb[0].mxu0
  %5113 = vdwg.mxu0
  %v5114 = vmax.f32 %v4796, 0.0
  %v5115 = vmax.f32 %v4801, 0.0
  %v5116 = vmax.f32 %v4806, 0.0
  %v5117 = vmax.f32 %v4811, 0.0
  %v5118 = vmax.f32 %v4816, 0.0
  %v5119 = vmax.f32 %v4821, 0.0
  %v5120 = vmax.f32 %v4826, 0.0
  %v5121 = vmax.f32 %v4831, 0.0
  %v5122 = vmax.f32 %v4836, 0.0
  %v5123 = vmax.f32 %v4841, 0.0
  %v5124 = vmax.f32 %v4846, 0.0
  %v5125 = vmax.f32 %v4851, 0.0
  %v5126 = vmax.f32 %v4856, 0.0
  %v5127 = vmax.f32 %v4861, 0.0
  %v5128 = vmax.f32 %v4866, 0.0
  %v5129 = vmax.f32 %v4871, 0.0
  %v5130 = vmax.f32 %v4876, 0.0
  %v5131 = vmax.f32 %v4881, 0.0
  %v5132 = vmax.f32 %v4886, 0.0
  %v5133 = vmax.f32 %v4891, 0.0
  %v5134 = vmax.f32 %v4896, 0.0
  %v5135 = vmax.f32 %v4901, 0.0
  %v5136 = vmax.f32 %v4906, 0.0
  %v5137 = vmax.f32 %v4911, 0.0
  %v5138 = vmax.f32 %v4916, 0.0
  %v5139 = vmax.f32 %v4921, 0.0
  %v5140 = vmax.f32 %v4926, 0.0
  %v5141 = vmax.f32 %v4931, 0.0
  %v5142 = vmax.f32 %v4936, 0.0
  %v5143 = vmax.f32 %v4941, 0.0
  %v5144 = vmax.f32 %v4946, 0.0
  %v5145 = vmax.f32 %v4951, 0.0
  %v5146 = vmax.f32 %v4956, 0.0
  %v5147 = vmax.f32 %v4961, 0.0
  %v5148 = vmax.f32 %v4966, 0.0
  %v5149 = vmax.f32 %v4971, 0.0
  %v5150 = vmax.f32 %v4976, 0.0
  %v5151 = vmax.f32 %v4981, 0.0
  %v5152 = vmax.f32 %v4986, 0.0
  %v5153 = vmax.f32 %v4991, 0.0
  %v5154 = vmax.f32 %v4996, 0.0
  %v5155 = vmax.f32 %v5001, 0.0
  %v5156 = vmax.f32 %v5006, 0.0
  %v5157 = vmax.f32 %v5011, 0.0
  %v5158 = vmax.f32 %v5016, 0.0
  %v5159 = vmax.f32 %v5021, 0.0
  %v5160 = vmax.f32 %v5026, 0.0
  %v5161 = vmax.f32 %v5031, 0.0
  %v5162 = vmax.f32 %v5036, 0.0
  %v5163 = vmax.f32 %v5041, 0.0
  %v5164 = vmax.f32 %v5046, 0.0
  %v5165 = vmax.f32 %v5051, 0.0
  %v5166 = vmax.f32 %v5056, 0.0
  %v5167 = vmax.f32 %v5061, 0.0
  %v5168 = vmax.f32 %v5066, 0.0
  %v5169 = vmax.f32 %v5071, 0.0
  %v5170 = vmax.f32 %v5076, 0.0
  %v5171 = vmax.f32 %v5081, 0.0
  %v5172 = vmax.f32 %v5086, 0.0
  %v5173 = vmax.f32 %v5091, 0.0
  %v5174 = vmax.f32 %v5096, 0.0
  %v5175 = vmax.f32 %v5101, 0.0
  %v5176 = vmax.f32 %v5106, 0.0
  %v5177 = vmax.f32 %v5111, 0.0
  %s5178 = scalar_lea.vmem [#allocation3], 24
  %5179 = vst.msk [vmem:[%s5178 + $0x1] sm:$0xff] %vm114, %v5114
  %5180 = vst.msk [vmem:[%s5178 + $0x9] sm:$0xff] %vm114, %v5115
  %5181 = vst.msk [vmem:[%s5178 + $0x19] sm:$0xff] %vm114, %v5116
  %5182 = vst.msk [vmem:[%s5178 + $0x21] sm:$0xff] %vm114, %v5117
  %5183 = vst.msk [vmem:[%s5178 + $0x31] sm:$0xff] %vm114, %v5118
  %5184 = vst.msk [vmem:[%s5178 + $0x39] sm:$0xff] %vm114, %v5119
  %5185 = vst.msk [vmem:[%s5178 + $0x49] sm:$0xff] %vm114, %v5120
  %5186 = vst.msk [vmem:[%s5178 + $0x51] sm:$0xff] %vm114, %v5121
  %5187 = vst.msk [vmem:[%s5178 + $0x61] sm:$0xff] %vm114, %v5122
  %5188 = vst.msk [vmem:[%s5178 + $0x69] sm:$0xff] %vm114, %v5123
  %5189 = vst.msk [vmem:[%s5178 + $0x79] sm:$0xff] %vm114, %v5124
  %5190 = vst.msk [vmem:[%s5178 + $0x81] sm:$0xff] %vm114, %v5125
  %5191 = vst.msk [vmem:[%s5178 + $0x91] sm:$0xff] %vm114, %v5126
  %5192 = vst.msk [vmem:[%s5178 + $0x99] sm:$0xff] %vm114, %v5127
  %5193 = vst.msk [vmem:[%s5178 + $0xa9] sm:$0xff] %vm114, %v5128
  %5194 = vst.msk [vmem:[%s5178 + $0xb1] sm:$0xff] %vm114, %v5129
  %5195 = vst.msk [vmem:[%s5178 + $0xc1] sm:$0xff] %vm114, %v5130
  %5196 = vst.msk [vmem:[%s5178 + $0xc9] sm:$0xff] %vm114, %v5131
  %5197 = vst.msk [vmem:[%s5178 + $0xd9] sm:$0xff] %vm114, %v5132
  %5198 = vst.msk [vmem:[%s5178 + $0xe1] sm:$0xff] %vm114, %v5133
  %5199 = vst.msk [vmem:[%s5178 + $0xf1] sm:$0xff] %vm114, %v5134
  %5200 = vst.msk [vmem:[%s5178 + $0xf9] sm:$0xff] %vm114, %v5135
  %5201 = vst.msk [vmem:[%s5178 + $0x109] sm:$0xff] %vm114, %v5136
  %5202 = vst.msk [vmem:[%s5178 + $0x111] sm:$0xff] %vm114, %v5137
  %5203 = vst.msk [vmem:[%s5178 + $0x121] sm:$0xff] %vm114, %v5138
  %5204 = vst.msk [vmem:[%s5178 + $0x129] sm:$0xff] %vm114, %v5139
  %5205 = vst.msk [vmem:[%s5178 + $0x139] sm:$0xff] %vm114, %v5140
  %5206 = vst.msk [vmem:[%s5178 + $0x141] sm:$0xff] %vm114, %v5141
  %5207 = vst.msk [vmem:[%s5178 + $0x151] sm:$0xff] %vm114, %v5142
  %5208 = vst.msk [vmem:[%s5178 + $0x159] sm:$0xff] %vm114, %v5143
  %5209 = vst.msk [vmem:[%s5178 + $0x169] sm:$0xff] %vm114, %v5144
  %5210 = vst.msk [vmem:[%s5178 + $0x171] sm:$0xff] %vm114, %v5145
  %5211 = vst.msk [vmem:[%s5178 + $0x1b1] sm:$0xff] %vm114, %v5146
  %5212 = vst.msk [vmem:[%s5178 + $0x1b9] sm:$0xff] %vm114, %v5147
  %5213 = vst.msk [vmem:[%s5178 + $0x1c9] sm:$0xff] %vm114, %v5148
  %5214 = vst.msk [vmem:[%s5178 + $0x1d1] sm:$0xff] %vm114, %v5149
  %5215 = vst.msk [vmem:[%s5178 + $0x1e1] sm:$0xff] %vm114, %v5150
  %5216 = vst.msk [vmem:[%s5178 + $0x1e9] sm:$0xff] %vm114, %v5151
  %5217 = vst.msk [vmem:[%s5178 + $0x1f9] sm:$0xff] %vm114, %v5152
  %5218 = vst.msk [vmem:[%s5178 + $0x201] sm:$0xff] %vm114, %v5153
  %5219 = vst.msk [vmem:[%s5178 + $0x211] sm:$0xff] %vm114, %v5154
  %5220 = vst.msk [vmem:[%s5178 + $0x219] sm:$0xff] %vm114, %v5155
  %5221 = vst.msk [vmem:[%s5178 + $0x229] sm:$0xff] %vm114, %v5156
  %5222 = vst.msk [vmem:[%s5178 + $0x231] sm:$0xff] %vm114, %v5157
  %5223 = vst.msk [vmem:[%s5178 + $0x241] sm:$0xff] %vm114, %v5158
  %5224 = vst.msk [vmem:[%s5178 + $0x249] sm:$0xff] %vm114, %v5159
  %5225 = vst.msk [vmem:[%s5178 + $0x259] sm:$0xff] %vm114, %v5160
  %5226 = vst.msk [vmem:[%s5178 + $0x261] sm:$0xff] %vm114, %v5161
  %5227 = vst.msk [vmem:[%s5178 + $0x271] sm:$0xff] %vm114, %v5162
  %5228 = vst.msk [vmem:[%s5178 + $0x279] sm:$0xff] %vm114, %v5163
  %5229 = vst.msk [vmem:[%s5178 + $0x289] sm:$0xff] %vm114, %v5164
  %5230 = vst.msk [vmem:[%s5178 + $0x291] sm:$0xff] %vm114, %v5165
  %5231 = vst.msk [vmem:[%s5178 + $0x2a1] sm:$0xff] %vm114, %v5166
  %5232 = vst.msk [vmem:[%s5178 + $0x2a9] sm:$0xff] %vm114, %v5167
  %5233 = vst.msk [vmem:[%s5178 + $0x2b9] sm:$0xff] %vm114, %v5168
  %5234 = vst.msk [vmem:[%s5178 + $0x2c1] sm:$0xff] %vm114, %v5169
  %5235 = vst.msk [vmem:[%s5178 + $0x2d1] sm:$0xff] %vm114, %v5170
  %5236 = vst.msk [vmem:[%s5178 + $0x2d9] sm:$0xff] %vm114, %v5171
  %5237 = vst.msk [vmem:[%s5178 + $0x2e9] sm:$0xff] %vm114, %v5172
  %5238 = vst.msk [vmem:[%s5178 + $0x2f1] sm:$0xff] %vm114, %v5173
  %5239 = vst.msk [vmem:[%s5178 + $0x301] sm:$0xff] %vm114, %v5174
  %5240 = vst.msk [vmem:[%s5178 + $0x309] sm:$0xff] %vm114, %v5175
  %5241 = vst.msk [vmem:[%s5178 + $0x319] sm:$0xff] %vm114, %v5176
  %5242 = vst.msk [vmem:[%s5178 + $0x321] sm:$0xff] %vm114, %v5177
  %v5243 = vld [vmem:[#allocation3] sm:$0xff]
  %v5244 = vld [vmem:[#allocation3 + $0x8] sm:$0xff]
  %v5245 = vld [vmem:[#allocation3 + $0x18] sm:$0xff]
  %v5246 = vld [vmem:[#allocation3 + $0x20] sm:$0xff]
  %v5247 = vld [vmem:[#allocation3 + $0x30] sm:$0xff]
  %v5248 = vld [vmem:[#allocation3 + $0x38] sm:$0xff]
  %v5249 = vld [vmem:[#allocation3 + $0x48] sm:$0xff]
  %v5250 = vld [vmem:[#allocation3 + $0x50] sm:$0xff]
  %v5251 = vld [vmem:[#allocation3 + $0x60] sm:$0xff]
  %v5252 = vld [vmem:[#allocation3 + $0x68] sm:$0xff]
  %v5253 = vld [vmem:[#allocation3 + $0x78] sm:$0xff]
  %v5254 = vld [vmem:[#allocation3 + $0x80] sm:$0xff]
  %v5255 = vld [vmem:[#allocation3 + $0x90] sm:$0xff]
  %v5256 = vld [vmem:[#allocation3 + $0x98] sm:$0xff]
  %v5257 = vld [vmem:[#allocation3 + $0xa8] sm:$0xff]
  %v5258 = vld [vmem:[#allocation3 + $0xb0] sm:$0xff]
  %v5259 = vld [vmem:[#allocation3 + $0xc0] sm:$0xff]
  %v5260 = vld [vmem:[#allocation3 + $0xc8] sm:$0xff]
  %v5261 = vld [vmem:[#allocation3 + $0xd8] sm:$0xff]
  %v5262 = vld [vmem:[#allocation3 + $0xe0] sm:$0xff]
  %v5263 = vld [vmem:[#allocation3 + $0xf0] sm:$0xff]
  %v5264 = vld [vmem:[#allocation3 + $0xf8] sm:$0xff]
  %v5265 = vld [vmem:[#allocation3 + $0x108] sm:$0xff]
  %v5266 = vld [vmem:[#allocation3 + $0x110] sm:$0xff]
  %v5267 = vld [vmem:[#allocation3 + $0x120] sm:$0xff]
  %v5268 = vld [vmem:[#allocation3 + $0x128] sm:$0xff]
  %v5269 = vld [vmem:[#allocation3 + $0x138] sm:$0xff]
  %v5270 = vld [vmem:[#allocation3 + $0x140] sm:$0xff]
  %v5271 = vld [vmem:[#allocation3 + $0x150] sm:$0xff]
  %v5272 = vld [vmem:[#allocation3 + $0x158] sm:$0xff]
  %v5273 = vld [vmem:[#allocation3 + $0x168] sm:$0xff]
  %v5274 = vld [vmem:[#allocation3 + $0x170] sm:$0xff]
  %v5275 = vld [vmem:[#allocation3 + $0x1b0] sm:$0xff]
  %v5276 = vld [vmem:[#allocation3 + $0x1b8] sm:$0xff]
  %v5277 = vld [vmem:[#allocation3 + $0x1c8] sm:$0xff]
  %v5278 = vld [vmem:[#allocation3 + $0x1d0] sm:$0xff]
  %v5279 = vld [vmem:[#allocation3 + $0x1e0] sm:$0xff]
  %v5280 = vld [vmem:[#allocation3 + $0x1e8] sm:$0xff]
  %v5281 = vld [vmem:[#allocation3 + $0x1f8] sm:$0xff]
  %v5282 = vld [vmem:[#allocation3 + $0x200] sm:$0xff]
  %v5283 = vld [vmem:[#allocation3 + $0x210] sm:$0xff]
  %v5284 = vld [vmem:[#allocation3 + $0x218] sm:$0xff]
  %v5285 = vld [vmem:[#allocation3 + $0x228] sm:$0xff]
  %v5286 = vld [vmem:[#allocation3 + $0x230] sm:$0xff]
  %v5287 = vld [vmem:[#allocation3 + $0x240] sm:$0xff]
  %v5288 = vld [vmem:[#allocation3 + $0x248] sm:$0xff]
  %v5289 = vld [vmem:[#allocation3 + $0x258] sm:$0xff]
  %v5290 = vld [vmem:[#allocation3 + $0x260] sm:$0xff]
  %v5291 = vld [vmem:[#allocation3 + $0x270] sm:$0xff]
  %v5292 = vld [vmem:[#allocation3 + $0x278] sm:$0xff]
  %v5293 = vld [vmem:[#allocation3 + $0x288] sm:$0xff]
  %v5294 = vld [vmem:[#allocation3 + $0x290] sm:$0xff]
  %v5295 = vld [vmem:[#allocation3 + $0x2a0] sm:$0xff]
  %v5296 = vld [vmem:[#allocation3 + $0x2a8] sm:$0xff]
  %v5297 = vld [vmem:[#allocation3 + $0x2b8] sm:$0xff]
  %v5298 = vld [vmem:[#allocation3 + $0x2c0] sm:$0xff]
  %v5299 = vld [vmem:[#allocation3 + $0x2d0] sm:$0xff]
  %v5300 = vld [vmem:[#allocation3 + $0x2d8] sm:$0xff]
  %v5301 = vld [vmem:[#allocation3 + $0x2e8] sm:$0xff]
  %v5302 = vld [vmem:[#allocation3 + $0x2f0] sm:$0xff]
  %v5303 = vld [vmem:[#allocation3 + $0x300] sm:$0xff]
  %v5304 = vld [vmem:[#allocation3 + $0x308] sm:$0xff]
  %v5305 = vld [vmem:[#allocation3 + $0x318] sm:$0xff]
  %v5306 = vld [vmem:[#allocation3 + $0x320] sm:$0xff]
  %v5307 = vld [vmem:[#allocation3 + $0x1] sm:$0xff]
  %v5308 = vld [vmem:[#allocation3 + $0x9] sm:$0xff]
  %v5309 = vld [vmem:[#allocation3 + $0x19] sm:$0xff]
  %v5310 = vld [vmem:[#allocation3 + $0x21] sm:$0xff]
  %v5311 = vld [vmem:[#allocation3 + $0x31] sm:$0xff]
  %v5312 = vld [vmem:[#allocation3 + $0x39] sm:$0xff]
  %v5313 = vld [vmem:[#allocation3 + $0x49] sm:$0xff]
  %v5314 = vld [vmem:[#allocation3 + $0x51] sm:$0xff]
  %v5315 = vld [vmem:[#allocation3 + $0x61] sm:$0xff]
  %v5316 = vld [vmem:[#allocation3 + $0x69] sm:$0xff]
  %v5317 = vld [vmem:[#allocation3 + $0x79] sm:$0xff]
  %v5318 = vld [vmem:[#allocation3 + $0x81] sm:$0xff]
  %v5319 = vld [vmem:[#allocation3 + $0x91] sm:$0xff]
  %v5320 = vld [vmem:[#allocation3 + $0x99] sm:$0xff]
  %v5321 = vld [vmem:[#allocation3 + $0xa9] sm:$0xff]
  %v5322 = vld [vmem:[#allocation3 + $0xb1] sm:$0xff]
  %v5323 = vld [vmem:[#allocation3 + $0xc1] sm:$0xff]
  %v5324 = vld [vmem:[#allocation3 + $0xc9] sm:$0xff]
  %v5325 = vld [vmem:[#allocation3 + $0xd9] sm:$0xff]
  %v5326 = vld [vmem:[#allocation3 + $0xe1] sm:$0xff]
  %v5327 = vld [vmem:[#allocation3 + $0xf1] sm:$0xff]
  %v5328 = vld [vmem:[#allocation3 + $0xf9] sm:$0xff]
  %v5329 = vld [vmem:[#allocation3 + $0x109] sm:$0xff]
  %v5330 = vld [vmem:[#allocation3 + $0x111] sm:$0xff]
  %v5331 = vld [vmem:[#allocation3 + $0x121] sm:$0xff]
  %v5332 = vld [vmem:[#allocation3 + $0x129] sm:$0xff]
  %v5333 = vld [vmem:[#allocation3 + $0x139] sm:$0xff]
  %v5334 = vld [vmem:[#allocation3 + $0x141] sm:$0xff]
  %v5335 = vld [vmem:[#allocation3 + $0x151] sm:$0xff]
  %v5336 = vld [vmem:[#allocation3 + $0x159] sm:$0xff]
  %v5337 = vld [vmem:[#allocation3 + $0x169] sm:$0xff]
  %v5338 = vld [vmem:[#allocation3 + $0x171] sm:$0xff]
  %v5339 = vld [vmem:[#allocation3 + $0x1b1] sm:$0xff]
  %v5340 = vld [vmem:[#allocation3 + $0x1b9] sm:$0xff]
  %v5341 = vld [vmem:[#allocation3 + $0x1c9] sm:$0xff]
  %v5342 = vld [vmem:[#allocation3 + $0x1d1] sm:$0xff]
  %v5343 = vld [vmem:[#allocation3 + $0x1e1] sm:$0xff]
  %v5344 = vld [vmem:[#allocation3 + $0x1e9] sm:$0xff]
  %v5345 = vld [vmem:[#allocation3 + $0x1f9] sm:$0xff]
  %v5346 = vld [vmem:[#allocation3 + $0x201] sm:$0xff]
  %v5347 = vld [vmem:[#allocation3 + $0x211] sm:$0xff]
  %v5348 = vld [vmem:[#allocation3 + $0x219] sm:$0xff]
  %v5349 = vld [vmem:[#allocation3 + $0x229] sm:$0xff]
  %v5350 = vld [vmem:[#allocation3 + $0x231] sm:$0xff]
  %v5351 = vld [vmem:[#allocation3 + $0x241] sm:$0xff]
  %v5352 = vld [vmem:[#allocation3 + $0x249] sm:$0xff]
  %v5353 = vld [vmem:[#allocation3 + $0x259] sm:$0xff]
  %v5354 = vld [vmem:[#allocation3 + $0x261] sm:$0xff]
  %v5355 = vld [vmem:[#allocation3 + $0x271] sm:$0xff]
  %v5356 = vld [vmem:[#allocation3 + $0x279] sm:$0xff]
  %v5357 = vld [vmem:[#allocation3 + $0x289] sm:$0xff]
  %v5358 = vld [vmem:[#allocation3 + $0x291] sm:$0xff]
  %v5359 = vld [vmem:[#allocation3 + $0x2a1] sm:$0xff]
  %v5360 = vld [vmem:[#allocation3 + $0x2a9] sm:$0xff]
  %v5361 = vld [vmem:[#allocation3 + $0x2b9] sm:$0xff]
  %v5362 = vld [vmem:[#allocation3 + $0x2c1] sm:$0xff]
  %v5363 = vld [vmem:[#allocation3 + $0x2d1] sm:$0xff]
  %v5364 = vld [vmem:[#allocation3 + $0x2d9] sm:$0xff]
  %v5365 = vld [vmem:[#allocation3 + $0x2e9] sm:$0xff]
  %v5366 = vld [vmem:[#allocation3 + $0x2f1] sm:$0xff]
  %v5367 = vld [vmem:[#allocation3 + $0x301] sm:$0xff]
  %v5368 = vld [vmem:[#allocation3 + $0x309] sm:$0xff]
  %v5369 = vld [vmem:[#allocation3 + $0x319] sm:$0xff]
  %v5370 = vld [vmem:[#allocation3 + $0x321] sm:$0xff]
  %v5371 = vld [vmem:[#allocation3 + $0x2] sm:$0xff]
  %v5372 = vld [vmem:[#allocation3 + $0xa] sm:$0xff]
  %v5373 = vld [vmem:[#allocation3 + $0x1a] sm:$0xff]
  %v5374 = vld [vmem:[#allocation3 + $0x22] sm:$0xff]
  %v5375 = vld [vmem:[#allocation3 + $0x32] sm:$0xff]
  %v5376 = vld [vmem:[#allocation3 + $0x3a] sm:$0xff]
  %v5377 = vld [vmem:[#allocation3 + $0x4a] sm:$0xff]
  %v5378 = vld [vmem:[#allocation3 + $0x52] sm:$0xff]
  %v5379 = vld [vmem:[#allocation3 + $0x62] sm:$0xff]
  %v5380 = vld [vmem:[#allocation3 + $0x6a] sm:$0xff]
  %v5381 = vld [vmem:[#allocation3 + $0x7a] sm:$0xff]
  %v5382 = vld [vmem:[#allocation3 + $0x82] sm:$0xff]
  %v5383 = vld [vmem:[#allocation3 + $0x92] sm:$0xff]
  %v5384 = vld [vmem:[#allocation3 + $0x9a] sm:$0xff]
  %v5385 = vld [vmem:[#allocation3 + $0xaa] sm:$0xff]
  %v5386 = vld [vmem:[#allocation3 + $0xb2] sm:$0xff]
  %v5387 = vld [vmem:[#allocation3 + $0xc2] sm:$0xff]
  %v5388 = vld [vmem:[#allocation3 + $0xca] sm:$0xff]
  %v5389 = vld [vmem:[#allocation3 + $0xda] sm:$0xff]
  %v5390 = vld [vmem:[#allocation3 + $0xe2] sm:$0xff]
  %v5391 = vld [vmem:[#allocation3 + $0xf2] sm:$0xff]
  %v5392 = vld [vmem:[#allocation3 + $0xfa] sm:$0xff]
  %v5393 = vld [vmem:[#allocation3 + $0x10a] sm:$0xff]
  %v5394 = vld [vmem:[#allocation3 + $0x112] sm:$0xff]
  %v5395 = vld [vmem:[#allocation3 + $0x122] sm:$0xff]
  %v5396 = vld [vmem:[#allocation3 + $0x12a] sm:$0xff]
  %v5397 = vld [vmem:[#allocation3 + $0x13a] sm:$0xff]
  %v5398 = vld [vmem:[#allocation3 + $0x142] sm:$0xff]
  %v5399 = vld [vmem:[#allocation3 + $0x152] sm:$0xff]
  %v5400 = vld [vmem:[#allocation3 + $0x15a] sm:$0xff]
  %v5401 = vld [vmem:[#allocation3 + $0x16a] sm:$0xff]
  %v5402 = vld [vmem:[#allocation3 + $0x172] sm:$0xff]
  %v5403 = vld [vmem:[#allocation3 + $0x1b2] sm:$0xff]
  %v5404 = vld [vmem:[#allocation3 + $0x1ba] sm:$0xff]
  %v5405 = vld [vmem:[#allocation3 + $0x1ca] sm:$0xff]
  %v5406 = vld [vmem:[#allocation3 + $0x1d2] sm:$0xff]
  %v5407 = vld [vmem:[#allocation3 + $0x1e2] sm:$0xff]
  %v5408 = vld [vmem:[#allocation3 + $0x1ea] sm:$0xff]
  %v5409 = vld [vmem:[#allocation3 + $0x1fa] sm:$0xff]
  %v5410 = vld [vmem:[#allocation3 + $0x202] sm:$0xff]
  %v5411 = vld [vmem:[#allocation3 + $0x212] sm:$0xff]
  %v5412 = vld [vmem:[#allocation3 + $0x21a] sm:$0xff]
  %v5413 = vld [vmem:[#allocation3 + $0x22a] sm:$0xff]
  %v5414 = vld [vmem:[#allocation3 + $0x232] sm:$0xff]
  %v5415 = vld [vmem:[#allocation3 + $0x242] sm:$0xff]
  %v5416 = vld [vmem:[#allocation3 + $0x24a] sm:$0xff]
  %v5417 = vld [vmem:[#allocation3 + $0x25a] sm:$0xff]
  %v5418 = vld [vmem:[#allocation3 + $0x262] sm:$0xff]
  %v5419 = vld [vmem:[#allocation3 + $0x272] sm:$0xff]
  %v5420 = vld [vmem:[#allocation3 + $0x27a] sm:$0xff]
  %v5421 = vld [vmem:[#allocation3 + $0x28a] sm:$0xff]
  %v5422 = vld [vmem:[#allocation3 + $0x292] sm:$0xff]
  %v5423 = vld [vmem:[#allocation3 + $0x2a2] sm:$0xff]
  %v5424 = vld [vmem:[#allocation3 + $0x2aa] sm:$0xff]
  %v5425 = vld [vmem:[#allocation3 + $0x2ba] sm:$0xff]
  %v5426 = vld [vmem:[#allocation3 + $0x2c2] sm:$0xff]
  %v5427 = vld [vmem:[#allocation3 + $0x2d2] sm:$0xff]
  %v5428 = vld [vmem:[#allocation3 + $0x2da] sm:$0xff]
  %v5429 = vld [vmem:[#allocation3 + $0x2ea] sm:$0xff]
  %v5430 = vld [vmem:[#allocation3 + $0x2f2] sm:$0xff]
  %v5431 = vld [vmem:[#allocation3 + $0x302] sm:$0xff]
  %v5432 = vld [vmem:[#allocation3 + $0x30a] sm:$0xff]
  %v5433 = vld [vmem:[#allocation3 + $0x31a] sm:$0xff]
  %v5434 = vld [vmem:[#allocation3 + $0x322] sm:$0xff]
  %v5435 = vld [vmem:[%s5178] sm:$0xff]
  %v5436 = vld [vmem:[%s5178 + $0x8] sm:$0xff]
  %v5437 = vld [vmem:[%s5178 + $0x18] sm:$0xff]
  %v5438 = vld [vmem:[%s5178 + $0x20] sm:$0xff]
  %v5439 = vld [vmem:[%s5178 + $0x30] sm:$0xff]
  %v5440 = vld [vmem:[%s5178 + $0x38] sm:$0xff]
  %v5441 = vld [vmem:[%s5178 + $0x48] sm:$0xff]
  %v5442 = vld [vmem:[%s5178 + $0x50] sm:$0xff]
  %v5443 = vld [vmem:[%s5178 + $0x60] sm:$0xff]
  %v5444 = vld [vmem:[%s5178 + $0x68] sm:$0xff]
  %v5445 = vld [vmem:[%s5178 + $0x78] sm:$0xff]
  %v5446 = vld [vmem:[%s5178 + $0x80] sm:$0xff]
  %v5447 = vld [vmem:[%s5178 + $0x90] sm:$0xff]
  %v5448 = vld [vmem:[%s5178 + $0x98] sm:$0xff]
  %v5449 = vld [vmem:[%s5178 + $0xa8] sm:$0xff]
  %v5450 = vld [vmem:[%s5178 + $0xb0] sm:$0xff]
  %v5451 = vld [vmem:[%s5178 + $0xc0] sm:$0xff]
  %v5452 = vld [vmem:[%s5178 + $0xc8] sm:$0xff]
  %v5453 = vld [vmem:[%s5178 + $0xd8] sm:$0xff]
  %v5454 = vld [vmem:[%s5178 + $0xe0] sm:$0xff]
  %v5455 = vld [vmem:[%s5178 + $0xf0] sm:$0xff]
  %v5456 = vld [vmem:[%s5178 + $0xf8] sm:$0xff]
  %v5457 = vld [vmem:[%s5178 + $0x108] sm:$0xff]
  %v5458 = vld [vmem:[%s5178 + $0x110] sm:$0xff]
  %v5459 = vld [vmem:[%s5178 + $0x120] sm:$0xff]
  %v5460 = vld [vmem:[%s5178 + $0x128] sm:$0xff]
  %v5461 = vld [vmem:[%s5178 + $0x138] sm:$0xff]
  %v5462 = vld [vmem:[%s5178 + $0x140] sm:$0xff]
  %v5463 = vld [vmem:[%s5178 + $0x150] sm:$0xff]
  %v5464 = vld [vmem:[%s5178 + $0x158] sm:$0xff]
  %v5465 = vld [vmem:[%s5178 + $0x168] sm:$0xff]
  %v5466 = vld [vmem:[%s5178 + $0x170] sm:$0xff]
  %v5467 = vld [vmem:[%s5178 + $0x1b0] sm:$0xff]
  %v5468 = vld [vmem:[%s5178 + $0x1b8] sm:$0xff]
  %v5469 = vld [vmem:[%s5178 + $0x1c8] sm:$0xff]
  %v5470 = vld [vmem:[%s5178 + $0x1d0] sm:$0xff]
  %v5471 = vld [vmem:[%s5178 + $0x1e0] sm:$0xff]
  %v5472 = vld [vmem:[%s5178 + $0x1e8] sm:$0xff]
  %v5473 = vld [vmem:[%s5178 + $0x1f8] sm:$0xff]
  %v5474 = vld [vmem:[%s5178 + $0x200] sm:$0xff]
  %v5475 = vld [vmem:[%s5178 + $0x210] sm:$0xff]
  %v5476 = vld [vmem:[%s5178 + $0x218] sm:$0xff]
  %v5477 = vld [vmem:[%s5178 + $0x228] sm:$0xff]
  %v5478 = vld [vmem:[%s5178 + $0x230] sm:$0xff]
  %v5479 = vld [vmem:[%s5178 + $0x240] sm:$0xff]
  %v5480 = vld [vmem:[%s5178 + $0x248] sm:$0xff]
  %v5481 = vld [vmem:[%s5178 + $0x258] sm:$0xff]
  %v5482 = vld [vmem:[%s5178 + $0x260] sm:$0xff]
  %v5483 = vld [vmem:[%s5178 + $0x270] sm:$0xff]
  %v5484 = vld [vmem:[%s5178 + $0x278] sm:$0xff]
  %v5485 = vld [vmem:[%s5178 + $0x288] sm:$0xff]
  %v5486 = vld [vmem:[%s5178 + $0x290] sm:$0xff]
  %v5487 = vld [vmem:[%s5178 + $0x2a0] sm:$0xff]
  %v5488 = vld [vmem:[%s5178 + $0x2a8] sm:$0xff]
  %v5489 = vld [vmem:[%s5178 + $0x2b8] sm:$0xff]
  %v5490 = vld [vmem:[%s5178 + $0x2c0] sm:$0xff]
  %v5491 = vld [vmem:[%s5178 + $0x2d0] sm:$0xff]
  %v5492 = vld [vmem:[%s5178 + $0x2d8] sm:$0xff]
  %v5493 = vld [vmem:[%s5178 + $0x2e8] sm:$0xff]
  %v5494 = vld [vmem:[%s5178 + $0x2f0] sm:$0xff]
  %v5495 = vld [vmem:[%s5178 + $0x300] sm:$0xff]
  %v5496 = vld [vmem:[%s5178 + $0x308] sm:$0xff]
  %v5497 = vld [vmem:[%s5178 + $0x318] sm:$0xff]
  %v5498 = vld [vmem:[%s5178 + $0x320] sm:$0xff]
  %v5499 = vld [vmem:[%s5178 + $0x1] sm:$0xff]
  %v5500 = vld [vmem:[%s5178 + $0x9] sm:$0xff]
  %v5501 = vld [vmem:[%s5178 + $0x19] sm:$0xff]
  %v5502 = vld [vmem:[%s5178 + $0x21] sm:$0xff]
  %v5503 = vld [vmem:[%s5178 + $0x31] sm:$0xff]
  %v5504 = vld [vmem:[%s5178 + $0x39] sm:$0xff]
  %v5505 = vld [vmem:[%s5178 + $0x49] sm:$0xff]
  %v5506 = vld [vmem:[%s5178 + $0x51] sm:$0xff]
  %v5507 = vld [vmem:[%s5178 + $0x61] sm:$0xff]
  %v5508 = vld [vmem:[%s5178 + $0x69] sm:$0xff]
  %v5509 = vld [vmem:[%s5178 + $0x79] sm:$0xff]
  %v5510 = vld [vmem:[%s5178 + $0x81] sm:$0xff]
  %v5511 = vld [vmem:[%s5178 + $0x91] sm:$0xff]
  %v5512 = vld [vmem:[%s5178 + $0x99] sm:$0xff]
  %v5513 = vld [vmem:[%s5178 + $0xa9] sm:$0xff]
  %v5514 = vld [vmem:[%s5178 + $0xb1] sm:$0xff]
  %v5515 = vld [vmem:[%s5178 + $0xc1] sm:$0xff]
  %v5516 = vld [vmem:[%s5178 + $0xc9] sm:$0xff]
  %v5517 = vld [vmem:[%s5178 + $0xd9] sm:$0xff]
  %v5518 = vld [vmem:[%s5178 + $0xe1] sm:$0xff]
  %v5519 = vld [vmem:[%s5178 + $0xf1] sm:$0xff]
  %v5520 = vld [vmem:[%s5178 + $0xf9] sm:$0xff]
  %v5521 = vld [vmem:[%s5178 + $0x109] sm:$0xff]
  %v5522 = vld [vmem:[%s5178 + $0x111] sm:$0xff]
  %v5523 = vld [vmem:[%s5178 + $0x121] sm:$0xff]
  %v5524 = vld [vmem:[%s5178 + $0x129] sm:$0xff]
  %v5525 = vld [vmem:[%s5178 + $0x139] sm:$0xff]
  %v5526 = vld [vmem:[%s5178 + $0x141] sm:$0xff]
  %v5527 = vld [vmem:[%s5178 + $0x151] sm:$0xff]
  %v5528 = vld [vmem:[%s5178 + $0x159] sm:$0xff]
  %v5529 = vld [vmem:[%s5178 + $0x169] sm:$0xff]
  %v5530 = vld [vmem:[%s5178 + $0x171] sm:$0xff]
  %v5531 = vld [vmem:[%s5178 + $0x1b1] sm:$0xff]
  %v5532 = vld [vmem:[%s5178 + $0x1b9] sm:$0xff]
  %v5533 = vld [vmem:[%s5178 + $0x1c9] sm:$0xff]
  %v5534 = vld [vmem:[%s5178 + $0x1d1] sm:$0xff]
  %v5535 = vld [vmem:[%s5178 + $0x1e1] sm:$0xff]
  %v5536 = vld [vmem:[%s5178 + $0x1e9] sm:$0xff]
  %v5537 = vld [vmem:[%s5178 + $0x1f9] sm:$0xff]
  %v5538 = vld [vmem:[%s5178 + $0x201] sm:$0xff]
  %v5539 = vld [vmem:[%s5178 + $0x211] sm:$0xff]
  %v5540 = vld [vmem:[%s5178 + $0x219] sm:$0xff]
  %v5541 = vld [vmem:[%s5178 + $0x229] sm:$0xff]
  %v5542 = vld [vmem:[%s5178 + $0x231] sm:$0xff]
  %v5543 = vld [vmem:[%s5178 + $0x241] sm:$0xff]
  %v5544 = vld [vmem:[%s5178 + $0x249] sm:$0xff]
  %v5545 = vld [vmem:[%s5178 + $0x259] sm:$0xff]
  %v5546 = vld [vmem:[%s5178 + $0x261] sm:$0xff]
  %v5547 = vld [vmem:[%s5178 + $0x271] sm:$0xff]
  %v5548 = vld [vmem:[%s5178 + $0x279] sm:$0xff]
  %v5549 = vld [vmem:[%s5178 + $0x289] sm:$0xff]
  %v5550 = vld [vmem:[%s5178 + $0x291] sm:$0xff]
  %v5551 = vld [vmem:[%s5178 + $0x2a1] sm:$0xff]
  %v5552 = vld [vmem:[%s5178 + $0x2a9] sm:$0xff]
  %v5553 = vld [vmem:[%s5178 + $0x2b9] sm:$0xff]
  %v5554 = vld [vmem:[%s5178 + $0x2c1] sm:$0xff]
  %v5555 = vld [vmem:[%s5178 + $0x2d1] sm:$0xff]
  %v5556 = vld [vmem:[%s5178 + $0x2d9] sm:$0xff]
  %v5557 = vld [vmem:[%s5178 + $0x2e9] sm:$0xff]
  %v5558 = vld [vmem:[%s5178 + $0x2f1] sm:$0xff]
  %v5559 = vld [vmem:[%s5178 + $0x301] sm:$0xff]
  %v5560 = vld [vmem:[%s5178 + $0x309] sm:$0xff]
  %v5561 = vld [vmem:[%s5178 + $0x319] sm:$0xff]
  %v5562 = vld [vmem:[%s5178 + $0x321] sm:$0xff]
  %v5563 = vld [vmem:[%s5178 + $0x2] sm:$0xff]
  %v5564 = vld [vmem:[%s5178 + $0xa] sm:$0xff]
  %v5565 = vld [vmem:[%s5178 + $0x1a] sm:$0xff]
  %v5566 = vld [vmem:[%s5178 + $0x22] sm:$0xff]
  %v5567 = vld [vmem:[%s5178 + $0x32] sm:$0xff]
  %v5568 = vld [vmem:[%s5178 + $0x3a] sm:$0xff]
  %v5569 = vld [vmem:[%s5178 + $0x4a] sm:$0xff]
  %v5570 = vld [vmem:[%s5178 + $0x52] sm:$0xff]
  %v5571 = vld [vmem:[%s5178 + $0x62] sm:$0xff]
  %v5572 = vld [vmem:[%s5178 + $0x6a] sm:$0xff]
  %v5573 = vld [vmem:[%s5178 + $0x7a] sm:$0xff]
  %v5574 = vld [vmem:[%s5178 + $0x82] sm:$0xff]
  %v5575 = vld [vmem:[%s5178 + $0x92] sm:$0xff]
  %v5576 = vld [vmem:[%s5178 + $0x9a] sm:$0xff]
  %v5577 = vld [vmem:[%s5178 + $0xaa] sm:$0xff]
  %v5578 = vld [vmem:[%s5178 + $0xb2] sm:$0xff]
  %v5579 = vld [vmem:[%s5178 + $0xc2] sm:$0xff]
  %v5580 = vld [vmem:[%s5178 + $0xca] sm:$0xff]
  %v5581 = vld [vmem:[%s5178 + $0xda] sm:$0xff]
  %v5582 = vld [vmem:[%s5178 + $0xe2] sm:$0xff]
  %v5583 = vld [vmem:[%s5178 + $0xf2] sm:$0xff]
  %v5584 = vld [vmem:[%s5178 + $0xfa] sm:$0xff]
  %v5585 = vld [vmem:[%s5178 + $0x10a] sm:$0xff]
  %v5586 = vld [vmem:[%s5178 + $0x112] sm:$0xff]
  %v5587 = vld [vmem:[%s5178 + $0x122] sm:$0xff]
  %v5588 = vld [vmem:[%s5178 + $0x12a] sm:$0xff]
  %v5589 = vld [vmem:[%s5178 + $0x13a] sm:$0xff]
  %v5590 = vld [vmem:[%s5178 + $0x142] sm:$0xff]
  %v5591 = vld [vmem:[%s5178 + $0x152] sm:$0xff]
  %v5592 = vld [vmem:[%s5178 + $0x15a] sm:$0xff]
  %v5593 = vld [vmem:[%s5178 + $0x16a] sm:$0xff]
  %v5594 = vld [vmem:[%s5178 + $0x172] sm:$0xff]
  %v5595 = vld [vmem:[%s5178 + $0x1b2] sm:$0xff]
  %v5596 = vld [vmem:[%s5178 + $0x1ba] sm:$0xff]
  %v5597 = vld [vmem:[%s5178 + $0x1ca] sm:$0xff]
  %v5598 = vld [vmem:[%s5178 + $0x1d2] sm:$0xff]
  %v5599 = vld [vmem:[%s5178 + $0x1e2] sm:$0xff]
  %v5600 = vld [vmem:[%s5178 + $0x1ea] sm:$0xff]
  %v5601 = vld [vmem:[%s5178 + $0x1fa] sm:$0xff]
  %v5602 = vld [vmem:[%s5178 + $0x202] sm:$0xff]
  %v5603 = vld [vmem:[%s5178 + $0x212] sm:$0xff]
  %v5604 = vld [vmem:[%s5178 + $0x21a] sm:$0xff]
  %v5605 = vld [vmem:[%s5178 + $0x22a] sm:$0xff]
  %v5606 = vld [vmem:[%s5178 + $0x232] sm:$0xff]
  %v5607 = vld [vmem:[%s5178 + $0x242] sm:$0xff]
  %v5608 = vld [vmem:[%s5178 + $0x24a] sm:$0xff]
  %v5609 = vld [vmem:[%s5178 + $0x25a] sm:$0xff]
  %v5610 = vld [vmem:[%s5178 + $0x262] sm:$0xff]
  %v5611 = vld [vmem:[%s5178 + $0x272] sm:$0xff]
  %v5612 = vld [vmem:[%s5178 + $0x27a] sm:$0xff]
  %v5613 = vld [vmem:[%s5178 + $0x28a] sm:$0xff]
  %v5614 = vld [vmem:[%s5178 + $0x292] sm:$0xff]
  %v5615 = vld [vmem:[%s5178 + $0x2a2] sm:$0xff]
  %v5616 = vld [vmem:[%s5178 + $0x2aa] sm:$0xff]
  %v5617 = vld [vmem:[%s5178 + $0x2ba] sm:$0xff]
  %v5618 = vld [vmem:[%s5178 + $0x2c2] sm:$0xff]
  %v5619 = vld [vmem:[%s5178 + $0x2d2] sm:$0xff]
  %v5620 = vld [vmem:[%s5178 + $0x2da] sm:$0xff]
  %v5621 = vld [vmem:[%s5178 + $0x2ea] sm:$0xff]
  %v5622 = vld [vmem:[%s5178 + $0x2f2] sm:$0xff]
  %v5623 = vld [vmem:[%s5178 + $0x302] sm:$0xff]
  %v5624 = vld [vmem:[%s5178 + $0x30a] sm:$0xff]
  %v5625 = vld [vmem:[%s5178 + $0x31a] sm:$0xff]
  %v5626 = vld [vmem:[%s5178 + $0x322] sm:$0xff]
  %s5627 = scalar_lea.vmem [#allocation3], 48
  %v5628 = vld [vmem:[%s5627] sm:$0xff]
  %v5629 = vld [vmem:[%s5627 + $0x8] sm:$0xff]
  %v5630 = vld [vmem:[%s5627 + $0x18] sm:$0xff]
  %v5631 = vld [vmem:[%s5627 + $0x20] sm:$0xff]
  %v5632 = vld [vmem:[%s5627 + $0x30] sm:$0xff]
  %v5633 = vld [vmem:[%s5627 + $0x38] sm:$0xff]
  %v5634 = vld [vmem:[%s5627 + $0x48] sm:$0xff]
  %v5635 = vld [vmem:[%s5627 + $0x50] sm:$0xff]
  %v5636 = vld [vmem:[%s5627 + $0x60] sm:$0xff]
  %v5637 = vld [vmem:[%s5627 + $0x68] sm:$0xff]
  %v5638 = vld [vmem:[%s5627 + $0x78] sm:$0xff]
  %v5639 = vld [vmem:[%s5627 + $0x80] sm:$0xff]
  %v5640 = vld [vmem:[%s5627 + $0x90] sm:$0xff]
  %v5641 = vld [vmem:[%s5627 + $0x98] sm:$0xff]
  %v5642 = vld [vmem:[%s5627 + $0xa8] sm:$0xff]
  %v5643 = vld [vmem:[%s5627 + $0xb0] sm:$0xff]
  %v5644 = vld [vmem:[%s5627 + $0xc0] sm:$0xff]
  %v5645 = vld [vmem:[%s5627 + $0xc8] sm:$0xff]
  %v5646 = vld [vmem:[%s5627 + $0xd8] sm:$0xff]
  %v5647 = vld [vmem:[%s5627 + $0xe0] sm:$0xff]
  %v5648 = vld [vmem:[%s5627 + $0xf0] sm:$0xff]
  %v5649 = vld [vmem:[%s5627 + $0xf8] sm:$0xff]
  %v5650 = vld [vmem:[%s5627 + $0x108] sm:$0xff]
  %v5651 = vld [vmem:[%s5627 + $0x110] sm:$0xff]
  %v5652 = vld [vmem:[%s5627 + $0x120] sm:$0xff]
  %v5653 = vld [vmem:[%s5627 + $0x128] sm:$0xff]
  %v5654 = vld [vmem:[%s5627 + $0x138] sm:$0xff]
  %v5655 = vld [vmem:[%s5627 + $0x140] sm:$0xff]
  %v5656 = vld [vmem:[%s5627 + $0x150] sm:$0xff]
  %v5657 = vld [vmem:[%s5627 + $0x158] sm:$0xff]
  %v5658 = vld [vmem:[%s5627 + $0x168] sm:$0xff]
  %v5659 = vld [vmem:[%s5627 + $0x170] sm:$0xff]
  %v5660 = vld [vmem:[%s5627 + $0x1b0] sm:$0xff]
  %v5661 = vld [vmem:[%s5627 + $0x1b8] sm:$0xff]
  %v5662 = vld [vmem:[%s5627 + $0x1c8] sm:$0xff]
  %v5663 = vld [vmem:[%s5627 + $0x1d0] sm:$0xff]
  %v5664 = vld [vmem:[%s5627 + $0x1e0] sm:$0xff]
  %v5665 = vld [vmem:[%s5627 + $0x1e8] sm:$0xff]
  %v5666 = vld [vmem:[%s5627 + $0x1f8] sm:$0xff]
  %v5667 = vld [vmem:[%s5627 + $0x200] sm:$0xff]
  %v5668 = vld [vmem:[%s5627 + $0x210] sm:$0xff]
  %v5669 = vld [vmem:[%s5627 + $0x218] sm:$0xff]
  %v5670 = vld [vmem:[%s5627 + $0x228] sm:$0xff]
  %v5671 = vld [vmem:[%s5627 + $0x230] sm:$0xff]
  %v5672 = vld [vmem:[%s5627 + $0x240] sm:$0xff]
  %v5673 = vld [vmem:[%s5627 + $0x248] sm:$0xff]
  %v5674 = vld [vmem:[%s5627 + $0x258] sm:$0xff]
  %v5675 = vld [vmem:[%s5627 + $0x260] sm:$0xff]
  %v5676 = vld [vmem:[%s5627 + $0x270] sm:$0xff]
  %v5677 = vld [vmem:[%s5627 + $0x278] sm:$0xff]
  %v5678 = vld [vmem:[%s5627 + $0x288] sm:$0xff]
  %v5679 = vld [vmem:[%s5627 + $0x290] sm:$0xff]
  %v5680 = vld [vmem:[%s5627 + $0x2a0] sm:$0xff]
  %v5681 = vld [vmem:[%s5627 + $0x2a8] sm:$0xff]
  %v5682 = vld [vmem:[%s5627 + $0x2b8] sm:$0xff]
  %v5683 = vld [vmem:[%s5627 + $0x2c0] sm:$0xff]
  %v5684 = vld [vmem:[%s5627 + $0x2d0] sm:$0xff]
  %v5685 = vld [vmem:[%s5627 + $0x2d8] sm:$0xff]
  %v5686 = vld [vmem:[%s5627 + $0x2e8] sm:$0xff]
  %v5687 = vld [vmem:[%s5627 + $0x2f0] sm:$0xff]
  %v5688 = vld [vmem:[%s5627 + $0x300] sm:$0xff]
  %v5689 = vld [vmem:[%s5627 + $0x308] sm:$0xff]
  %v5690 = vld [vmem:[%s5627 + $0x318] sm:$0xff]
  %v5691 = vld [vmem:[%s5627 + $0x320] sm:$0xff]
  %v5692 = vld [vmem:[%s5627 + $0x1] sm:$0xff]
  %v5693 = vld [vmem:[%s5627 + $0x9] sm:$0xff]
  %v5694 = vld [vmem:[%s5627 + $0x19] sm:$0xff]
  %v5695 = vld [vmem:[%s5627 + $0x21] sm:$0xff]
  %v5696 = vld [vmem:[%s5627 + $0x31] sm:$0xff]
  %v5697 = vld [vmem:[%s5627 + $0x39] sm:$0xff]
  %v5698 = vld [vmem:[%s5627 + $0x49] sm:$0xff]
  %v5699 = vld [vmem:[%s5627 + $0x51] sm:$0xff]
  %v5700 = vld [vmem:[%s5627 + $0x61] sm:$0xff]
  %v5701 = vld [vmem:[%s5627 + $0x69] sm:$0xff]
  %v5702 = vld [vmem:[%s5627 + $0x79] sm:$0xff]
  %v5703 = vld [vmem:[%s5627 + $0x81] sm:$0xff]
  %v5704 = vld [vmem:[%s5627 + $0x91] sm:$0xff]
  %v5705 = vld [vmem:[%s5627 + $0x99] sm:$0xff]
  %v5706 = vld [vmem:[%s5627 + $0xa9] sm:$0xff]
  %v5707 = vld [vmem:[%s5627 + $0xb1] sm:$0xff]
  %v5708 = vld [vmem:[%s5627 + $0xc1] sm:$0xff]
  %v5709 = vld [vmem:[%s5627 + $0xc9] sm:$0xff]
  %v5710 = vld [vmem:[%s5627 + $0xd9] sm:$0xff]
  %v5711 = vld [vmem:[%s5627 + $0xe1] sm:$0xff]
  %v5712 = vld [vmem:[%s5627 + $0xf1] sm:$0xff]
  %v5713 = vld [vmem:[%s5627 + $0xf9] sm:$0xff]
  %v5714 = vld [vmem:[%s5627 + $0x109] sm:$0xff]
  %v5715 = vld [vmem:[%s5627 + $0x111] sm:$0xff]
  %v5716 = vld [vmem:[%s5627 + $0x121] sm:$0xff]
  %v5717 = vld [vmem:[%s5627 + $0x129] sm:$0xff]
  %v5718 = vld [vmem:[%s5627 + $0x139] sm:$0xff]
  %v5719 = vld [vmem:[%s5627 + $0x141] sm:$0xff]
  %v5720 = vld [vmem:[%s5627 + $0x151] sm:$0xff]
  %v5721 = vld [vmem:[%s5627 + $0x159] sm:$0xff]
  %v5722 = vld [vmem:[%s5627 + $0x169] sm:$0xff]
  %v5723 = vld [vmem:[%s5627 + $0x171] sm:$0xff]
  %v5724 = vld [vmem:[%s5627 + $0x1b1] sm:$0xff]
  %v5725 = vld [vmem:[%s5627 + $0x1b9] sm:$0xff]
  %v5726 = vld [vmem:[%s5627 + $0x1c9] sm:$0xff]
  %v5727 = vld [vmem:[%s5627 + $0x1d1] sm:$0xff]
  %v5728 = vld [vmem:[%s5627 + $0x1e1] sm:$0xff]
  %v5729 = vld [vmem:[%s5627 + $0x1e9] sm:$0xff]
  %v5730 = vld [vmem:[%s5627 + $0x1f9] sm:$0xff]
  %v5731 = vld [vmem:[%s5627 + $0x201] sm:$0xff]
  %v5732 = vld [vmem:[%s5627 + $0x211] sm:$0xff]
  %v5733 = vld [vmem:[%s5627 + $0x219] sm:$0xff]
  %v5734 = vld [vmem:[%s5627 + $0x229] sm:$0xff]
  %v5735 = vld [vmem:[%s5627 + $0x231] sm:$0xff]
  %v5736 = vld [vmem:[%s5627 + $0x241] sm:$0xff]
  %v5737 = vld [vmem:[%s5627 + $0x249] sm:$0xff]
  %v5738 = vld [vmem:[%s5627 + $0x259] sm:$0xff]
  %v5739 = vld [vmem:[%s5627 + $0x261] sm:$0xff]
  %v5740 = vld [vmem:[%s5627 + $0x271] sm:$0xff]
  %v5741 = vld [vmem:[%s5627 + $0x279] sm:$0xff]
  %v5742 = vld [vmem:[%s5627 + $0x289] sm:$0xff]
  %v5743 = vld [vmem:[%s5627 + $0x291] sm:$0xff]
  %v5744 = vld [vmem:[%s5627 + $0x2a1] sm:$0xff]
  %v5745 = vld [vmem:[%s5627 + $0x2a9] sm:$0xff]
  %v5746 = vld [vmem:[%s5627 + $0x2b9] sm:$0xff]
  %v5747 = vld [vmem:[%s5627 + $0x2c1] sm:$0xff]
  %v5748 = vld [vmem:[%s5627 + $0x2d1] sm:$0xff]
  %v5749 = vld [vmem:[%s5627 + $0x2d9] sm:$0xff]
  %v5750 = vld [vmem:[%s5627 + $0x2e9] sm:$0xff]
  %v5751 = vld [vmem:[%s5627 + $0x2f1] sm:$0xff]
  %v5752 = vld [vmem:[%s5627 + $0x301] sm:$0xff]
  %v5753 = vld [vmem:[%s5627 + $0x309] sm:$0xff]
  %v5754 = vld [vmem:[%s5627 + $0x319] sm:$0xff]
  %v5755 = vld [vmem:[%s5627 + $0x321] sm:$0xff]
  %v5756 = vld [vmem:[%s5627 + $0x2] sm:$0xff]
  %v5757 = vld [vmem:[%s5627 + $0xa] sm:$0xff]
  %v5758 = vld [vmem:[%s5627 + $0x1a] sm:$0xff]
  %v5759 = vld [vmem:[%s5627 + $0x22] sm:$0xff]
  %v5760 = vld [vmem:[%s5627 + $0x32] sm:$0xff]
  %v5761 = vld [vmem:[%s5627 + $0x3a] sm:$0xff]
  %v5762 = vld [vmem:[%s5627 + $0x4a] sm:$0xff]
  %v5763 = vld [vmem:[%s5627 + $0x52] sm:$0xff]
  %v5764 = vld [vmem:[%s5627 + $0x62] sm:$0xff]
  %v5765 = vld [vmem:[%s5627 + $0x6a] sm:$0xff]
  %v5766 = vld [vmem:[%s5627 + $0x7a] sm:$0xff]
  %v5767 = vld [vmem:[%s5627 + $0x82] sm:$0xff]
  %v5768 = vld [vmem:[%s5627 + $0x92] sm:$0xff]
  %v5769 = vld [vmem:[%s5627 + $0x9a] sm:$0xff]
  %v5770 = vld [vmem:[%s5627 + $0xaa] sm:$0xff]
  %v5771 = vld [vmem:[%s5627 + $0xb2] sm:$0xff]
  %v5772 = vld [vmem:[%s5627 + $0xc2] sm:$0xff]
  %v5773 = vld [vmem:[%s5627 + $0xca] sm:$0xff]
  %v5774 = vld [vmem:[%s5627 + $0xda] sm:$0xff]
  %v5775 = vld [vmem:[%s5627 + $0xe2] sm:$0xff]
  %v5776 = vld [vmem:[%s5627 + $0xf2] sm:$0xff]
  %v5777 = vld [vmem:[%s5627 + $0xfa] sm:$0xff]
  %v5778 = vld [vmem:[%s5627 + $0x10a] sm:$0xff]
  %v5779 = vld [vmem:[%s5627 + $0x112] sm:$0xff]
  %v5780 = vld [vmem:[%s5627 + $0x122] sm:$0xff]
  %v5781 = vld [vmem:[%s5627 + $0x12a] sm:$0xff]
  %v5782 = vld [vmem:[%s5627 + $0x13a] sm:$0xff]
  %v5783 = vld [vmem:[%s5627 + $0x142] sm:$0xff]
  %v5784 = vld [vmem:[%s5627 + $0x152] sm:$0xff]
  %v5785 = vld [vmem:[%s5627 + $0x15a] sm:$0xff]
  %v5786 = vld [vmem:[%s5627 + $0x16a] sm:$0xff]
  %v5787 = vld [vmem:[%s5627 + $0x172] sm:$0xff]
  %v5788 = vld [vmem:[%s5627 + $0x1b2] sm:$0xff]
  %v5789 = vld [vmem:[%s5627 + $0x1ba] sm:$0xff]
  %v5790 = vld [vmem:[%s5627 + $0x1ca] sm:$0xff]
  %v5791 = vld [vmem:[%s5627 + $0x1d2] sm:$0xff]
  %v5792 = vld [vmem:[%s5627 + $0x1e2] sm:$0xff]
  %v5793 = vld [vmem:[%s5627 + $0x1ea] sm:$0xff]
  %v5794 = vld [vmem:[%s5627 + $0x1fa] sm:$0xff]
  %v5795 = vld [vmem:[%s5627 + $0x202] sm:$0xff]
  %v5796 = vld [vmem:[%s5627 + $0x212] sm:$0xff]
  %v5797 = vld [vmem:[%s5627 + $0x21a] sm:$0xff]
  %v5798 = vld [vmem:[%s5627 + $0x22a] sm:$0xff]
  %v5799 = vld [vmem:[%s5627 + $0x232] sm:$0xff]
  %v5800 = vld [vmem:[%s5627 + $0x242] sm:$0xff]
  %v5801 = vld [vmem:[%s5627 + $0x24a] sm:$0xff]
  %v5802 = vld [vmem:[%s5627 + $0x25a] sm:$0xff]
  %v5803 = vld [vmem:[%s5627 + $0x262] sm:$0xff]
  %v5804 = vld [vmem:[%s5627 + $0x272] sm:$0xff]
  %v5805 = vld [vmem:[%s5627 + $0x27a] sm:$0xff]
  %v5806 = vld [vmem:[%s5627 + $0x28a] sm:$0xff]
  %v5807 = vld [vmem:[%s5627 + $0x292] sm:$0xff]
  %v5808 = vld [vmem:[%s5627 + $0x2a2] sm:$0xff]
  %v5809 = vld [vmem:[%s5627 + $0x2aa] sm:$0xff]
  %v5810 = vld [vmem:[%s5627 + $0x2ba] sm:$0xff]
  %v5811 = vld [vmem:[%s5627 + $0x2c2] sm:$0xff]
  %v5812 = vld [vmem:[%s5627 + $0x2d2] sm:$0xff]
  %v5813 = vld [vmem:[%s5627 + $0x2da] sm:$0xff]
  %v5814 = vld [vmem:[%s5627 + $0x2ea] sm:$0xff]
  %v5815 = vld [vmem:[%s5627 + $0x2f2] sm:$0xff]
  %v5816 = vld [vmem:[%s5627 + $0x302] sm:$0xff]
  %v5817 = vld [vmem:[%s5627 + $0x30a] sm:$0xff]
  %v5818 = vld [vmem:[%s5627 + $0x31a] sm:$0xff]
  %v5819 = vld [vmem:[%s5627 + $0x322] sm:$0xff]
  %5884 = vrot.lane.b32.xlu0 %v5307, 4
  %v5885 = vpop.permute.xlu0 %5884
  %5886 = vrot.lane.b32.xlu0 %v5308, 4
  %v5887 = vpop.permute.xlu0 %5886
  %5888 = vrot.lane.b32.xlu0 %v5309, 4
  %v5889 = vpop.permute.xlu0 %5888
  %5890 = vrot.lane.b32.xlu0 %v5310, 4
  %v5891 = vpop.permute.xlu0 %5890
  %5892 = vrot.lane.b32.xlu0 %v5311, 4
  %v5893 = vpop.permute.xlu0 %5892
  %5894 = vrot.lane.b32.xlu0 %v5312, 4
  %v5895 = vpop.permute.xlu0 %5894
  %5896 = vrot.lane.b32.xlu0 %v5313, 4
  %v5897 = vpop.permute.xlu0 %5896
  %5898 = vrot.lane.b32.xlu0 %v5314, 4
  %v5899 = vpop.permute.xlu0 %5898
  %5900 = vrot.lane.b32.xlu0 %v5315, 4
  %v5901 = vpop.permute.xlu0 %5900
  %5902 = vrot.lane.b32.xlu0 %v5316, 4
  %v5903 = vpop.permute.xlu0 %5902
  %5904 = vrot.lane.b32.xlu0 %v5317, 4
  %v5905 = vpop.permute.xlu0 %5904
  %5906 = vrot.lane.b32.xlu0 %v5318, 4
  %v5907 = vpop.permute.xlu0 %5906
  %5908 = vrot.lane.b32.xlu0 %v5319, 4
  %v5909 = vpop.permute.xlu0 %5908
  %5910 = vrot.lane.b32.xlu0 %v5320, 4
  %v5911 = vpop.permute.xlu0 %5910
  %5912 = vrot.lane.b32.xlu0 %v5321, 4
  %v5913 = vpop.permute.xlu0 %5912
  %5914 = vrot.lane.b32.xlu0 %v5322, 4
  %v5915 = vpop.permute.xlu0 %5914
  %5916 = vrot.lane.b32.xlu0 %v5323, 4
  %v5917 = vpop.permute.xlu0 %5916
  %5918 = vrot.lane.b32.xlu0 %v5324, 4
  %v5919 = vpop.permute.xlu0 %5918
  %5920 = vrot.lane.b32.xlu0 %v5325, 4
  %v5921 = vpop.permute.xlu0 %5920
  %5922 = vrot.lane.b32.xlu0 %v5326, 4
  %v5923 = vpop.permute.xlu0 %5922
  %5924 = vrot.lane.b32.xlu0 %v5327, 4
  %v5925 = vpop.permute.xlu0 %5924
  %5926 = vrot.lane.b32.xlu0 %v5328, 4
  %v5927 = vpop.permute.xlu0 %5926
  %5928 = vrot.lane.b32.xlu0 %v5329, 4
  %v5929 = vpop.permute.xlu0 %5928
  %5930 = vrot.lane.b32.xlu0 %v5330, 4
  %v5931 = vpop.permute.xlu0 %5930
  %5932 = vrot.lane.b32.xlu0 %v5331, 4
  %v5933 = vpop.permute.xlu0 %5932
  %5934 = vrot.lane.b32.xlu0 %v5332, 4
  %v5935 = vpop.permute.xlu0 %5934
  %5936 = vrot.lane.b32.xlu0 %v5333, 4
  %v5937 = vpop.permute.xlu0 %5936
  %5938 = vrot.lane.b32.xlu0 %v5334, 4
  %v5939 = vpop.permute.xlu0 %5938
  %5940 = vrot.lane.b32.xlu0 %v5335, 4
  %v5941 = vpop.permute.xlu0 %5940
  %5942 = vrot.lane.b32.xlu0 %v5336, 4
  %v5943 = vpop.permute.xlu0 %5942
  %5944 = vrot.lane.b32.xlu0 %v5337, 4
  %v5945 = vpop.permute.xlu0 %5944
  %5946 = vrot.lane.b32.xlu0 %v5338, 4
  %v5947 = vpop.permute.xlu0 %5946
  %5948 = vrot.lane.b32.xlu0 %v5339, 4
  %v5949 = vpop.permute.xlu0 %5948
  %5950 = vrot.lane.b32.xlu0 %v5340, 4
  %v5951 = vpop.permute.xlu0 %5950
  %5952 = vrot.lane.b32.xlu0 %v5341, 4
  %v5953 = vpop.permute.xlu0 %5952
  %5954 = vrot.lane.b32.xlu0 %v5342, 4
  %v5955 = vpop.permute.xlu0 %5954
  %5956 = vrot.lane.b32.xlu0 %v5343, 4
  %v5957 = vpop.permute.xlu0 %5956
  %5958 = vrot.lane.b32.xlu0 %v5344, 4
  %v5959 = vpop.permute.xlu0 %5958
  %5960 = vrot.lane.b32.xlu0 %v5345, 4
  %v5961 = vpop.permute.xlu0 %5960
  %5962 = vrot.lane.b32.xlu0 %v5346, 4
  %v5963 = vpop.permute.xlu0 %5962
  %5964 = vrot.lane.b32.xlu0 %v5347, 4
  %v5965 = vpop.permute.xlu0 %5964
  %5966 = vrot.lane.b32.xlu0 %v5348, 4
  %v5967 = vpop.permute.xlu0 %5966
  %5968 = vrot.lane.b32.xlu0 %v5349, 4
  %v5969 = vpop.permute.xlu0 %5968
  %5970 = vrot.lane.b32.xlu0 %v5350, 4
  %v5971 = vpop.permute.xlu0 %5970
  %5972 = vrot.lane.b32.xlu0 %v5351, 4
  %v5973 = vpop.permute.xlu0 %5972
  %5974 = vrot.lane.b32.xlu0 %v5352, 4
  %v5975 = vpop.permute.xlu0 %5974
  %5976 = vrot.lane.b32.xlu0 %v5353, 4
  %v5977 = vpop.permute.xlu0 %5976
  %5978 = vrot.lane.b32.xlu0 %v5354, 4
  %v5979 = vpop.permute.xlu0 %5978
  %5980 = vrot.lane.b32.xlu0 %v5355, 4
  %v5981 = vpop.permute.xlu0 %5980
  %5982 = vrot.lane.b32.xlu0 %v5356, 4
  %v5983 = vpop.permute.xlu0 %5982
  %5984 = vrot.lane.b32.xlu0 %v5357, 4
  %v5985 = vpop.permute.xlu0 %5984
  %5986 = vrot.lane.b32.xlu0 %v5358, 4
  %v5987 = vpop.permute.xlu0 %5986
  %5988 = vrot.lane.b32.xlu0 %v5359, 4
  %v5989 = vpop.permute.xlu0 %5988
  %5990 = vrot.lane.b32.xlu0 %v5360, 4
  %v5991 = vpop.permute.xlu0 %5990
  %5992 = vrot.lane.b32.xlu0 %v5361, 4
  %v5993 = vpop.permute.xlu0 %5992
  %5994 = vrot.lane.b32.xlu0 %v5362, 4
  %v5995 = vpop.permute.xlu0 %5994
  %5996 = vrot.lane.b32.xlu0 %v5363, 4
  %v5997 = vpop.permute.xlu0 %5996
  %5998 = vrot.lane.b32.xlu0 %v5364, 4
  %v5999 = vpop.permute.xlu0 %5998
  %6000 = vrot.lane.b32.xlu0 %v5365, 4
  %v6001 = vpop.permute.xlu0 %6000
  %6002 = vrot.lane.b32.xlu0 %v5366, 4
  %v6003 = vpop.permute.xlu0 %6002
  %6004 = vrot.lane.b32.xlu0 %v5367, 4
  %v6005 = vpop.permute.xlu0 %6004
  %6006 = vrot.lane.b32.xlu0 %v5368, 4
  %v6007 = vpop.permute.xlu0 %6006
  %6008 = vrot.lane.b32.xlu0 %v5369, 4
  %v6009 = vpop.permute.xlu0 %6008
  %6010 = vrot.lane.b32.xlu0 %v5370, 4
  %v6011 = vpop.permute.xlu0 %6010
  %6140 = vrot.lane.b32.xlu0 %v5371, 8
  %v6141 = vpop.permute.xlu0 %6140
  %6142 = vrot.lane.b32.xlu0 %v5372, 8
  %v6143 = vpop.permute.xlu0 %6142
  %6144 = vrot.lane.b32.xlu0 %v5373, 8
  %v6145 = vpop.permute.xlu0 %6144
  %6146 = vrot.lane.b32.xlu0 %v5374, 8
  %v6147 = vpop.permute.xlu0 %6146
  %6148 = vrot.lane.b32.xlu0 %v5375, 8
  %v6149 = vpop.permute.xlu0 %6148
  %6150 = vrot.lane.b32.xlu0 %v5376, 8
  %v6151 = vpop.permute.xlu0 %6150
  %6152 = vrot.lane.b32.xlu0 %v5377, 8
  %v6153 = vpop.permute.xlu0 %6152
  %6154 = vrot.lane.b32.xlu0 %v5378, 8
  %v6155 = vpop.permute.xlu0 %6154
  %6156 = vrot.lane.b32.xlu0 %v5379, 8
  %v6157 = vpop.permute.xlu0 %6156
  %6158 = vrot.lane.b32.xlu0 %v5380, 8
  %v6159 = vpop.permute.xlu0 %6158
  %6160 = vrot.lane.b32.xlu0 %v5381, 8
  %v6161 = vpop.permute.xlu0 %6160
  %6162 = vrot.lane.b32.xlu0 %v5382, 8
  %v6163 = vpop.permute.xlu0 %6162
  %6164 = vrot.lane.b32.xlu0 %v5383, 8
  %v6165 = vpop.permute.xlu0 %6164
  %6166 = vrot.lane.b32.xlu0 %v5384, 8
  %v6167 = vpop.permute.xlu0 %6166
  %6168 = vrot.lane.b32.xlu0 %v5385, 8
  %v6169 = vpop.permute.xlu0 %6168
  %6170 = vrot.lane.b32.xlu0 %v5386, 8
  %v6171 = vpop.permute.xlu0 %6170
  %6172 = vrot.lane.b32.xlu0 %v5387, 8
  %v6173 = vpop.permute.xlu0 %6172
  %6174 = vrot.lane.b32.xlu0 %v5388, 8
  %v6175 = vpop.permute.xlu0 %6174
  %6176 = vrot.lane.b32.xlu0 %v5389, 8
  %v6177 = vpop.permute.xlu0 %6176
  %6178 = vrot.lane.b32.xlu0 %v5390, 8
  %v6179 = vpop.permute.xlu0 %6178
  %6180 = vrot.lane.b32.xlu0 %v5391, 8
  %v6181 = vpop.permute.xlu0 %6180
  %6182 = vrot.lane.b32.xlu0 %v5392, 8
  %v6183 = vpop.permute.xlu0 %6182
  %6184 = vrot.lane.b32.xlu0 %v5393, 8
  %v6185 = vpop.permute.xlu0 %6184
  %6186 = vrot.lane.b32.xlu0 %v5394, 8
  %v6187 = vpop.permute.xlu0 %6186
  %6188 = vrot.lane.b32.xlu0 %v5395, 8
  %v6189 = vpop.permute.xlu0 %6188
  %6190 = vrot.lane.b32.xlu0 %v5396, 8
  %v6191 = vpop.permute.xlu0 %6190
  %6192 = vrot.lane.b32.xlu0 %v5397, 8
  %v6193 = vpop.permute.xlu0 %6192
  %6194 = vrot.lane.b32.xlu0 %v5398, 8
  %v6195 = vpop.permute.xlu0 %6194
  %6196 = vrot.lane.b32.xlu0 %v5399, 8
  %v6197 = vpop.permute.xlu0 %6196
  %6198 = vrot.lane.b32.xlu0 %v5400, 8
  %v6199 = vpop.permute.xlu0 %6198
  %6200 = vrot.lane.b32.xlu0 %v5401, 8
  %v6201 = vpop.permute.xlu0 %6200
  %6202 = vrot.lane.b32.xlu0 %v5402, 8
  %v6203 = vpop.permute.xlu0 %6202
  %6204 = vrot.lane.b32.xlu0 %v5403, 8
  %v6205 = vpop.permute.xlu0 %6204
  %6206 = vrot.lane.b32.xlu0 %v5404, 8
  %v6207 = vpop.permute.xlu0 %6206
  %6208 = vrot.lane.b32.xlu0 %v5405, 8
  %v6209 = vpop.permute.xlu0 %6208
  %6210 = vrot.lane.b32.xlu0 %v5406, 8
  %v6211 = vpop.permute.xlu0 %6210
  %6212 = vrot.lane.b32.xlu0 %v5407, 8
  %v6213 = vpop.permute.xlu0 %6212
  %6214 = vrot.lane.b32.xlu0 %v5408, 8
  %v6215 = vpop.permute.xlu0 %6214
  %6216 = vrot.lane.b32.xlu0 %v5409, 8
  %v6217 = vpop.permute.xlu0 %6216
  %6218 = vrot.lane.b32.xlu0 %v5410, 8
  %v6219 = vpop.permute.xlu0 %6218
  %6220 = vrot.lane.b32.xlu0 %v5411, 8
  %v6221 = vpop.permute.xlu0 %6220
  %6222 = vrot.lane.b32.xlu0 %v5412, 8
  %v6223 = vpop.permute.xlu0 %6222
  %6224 = vrot.lane.b32.xlu0 %v5413, 8
  %v6225 = vpop.permute.xlu0 %6224
  %6226 = vrot.lane.b32.xlu0 %v5414, 8
  %v6227 = vpop.permute.xlu0 %6226
  %6228 = vrot.lane.b32.xlu0 %v5415, 8
  %v6229 = vpop.permute.xlu0 %6228
  %6230 = vrot.lane.b32.xlu0 %v5416, 8
  %v6231 = vpop.permute.xlu0 %6230
  %6232 = vrot.lane.b32.xlu0 %v5417, 8
  %v6233 = vpop.permute.xlu0 %6232
  %6234 = vrot.lane.b32.xlu0 %v5418, 8
  %v6235 = vpop.permute.xlu0 %6234
  %6236 = vrot.lane.b32.xlu0 %v5419, 8
  %v6237 = vpop.permute.xlu0 %6236
  %6238 = vrot.lane.b32.xlu0 %v5420, 8
  %v6239 = vpop.permute.xlu0 %6238
  %6240 = vrot.lane.b32.xlu0 %v5421, 8
  %v6241 = vpop.permute.xlu0 %6240
  %6242 = vrot.lane.b32.xlu0 %v5422, 8
  %v6243 = vpop.permute.xlu0 %6242
  %6244 = vrot.lane.b32.xlu0 %v5423, 8
  %v6245 = vpop.permute.xlu0 %6244
  %6246 = vrot.lane.b32.xlu0 %v5424, 8
  %v6247 = vpop.permute.xlu0 %6246
  %6248 = vrot.lane.b32.xlu0 %v5425, 8
  %v6249 = vpop.permute.xlu0 %6248
  %6250 = vrot.lane.b32.xlu0 %v5426, 8
  %v6251 = vpop.permute.xlu0 %6250
  %6252 = vrot.lane.b32.xlu0 %v5427, 8
  %v6253 = vpop.permute.xlu0 %6252
  %6254 = vrot.lane.b32.xlu0 %v5428, 8
  %v6255 = vpop.permute.xlu0 %6254
  %6256 = vrot.lane.b32.xlu0 %v5429, 8
  %v6257 = vpop.permute.xlu0 %6256
  %6258 = vrot.lane.b32.xlu0 %v5430, 8
  %v6259 = vpop.permute.xlu0 %6258
  %6260 = vrot.lane.b32.xlu0 %v5431, 8
  %v6261 = vpop.permute.xlu0 %6260
  %6262 = vrot.lane.b32.xlu0 %v5432, 8
  %v6263 = vpop.permute.xlu0 %6262
  %6264 = vrot.lane.b32.xlu0 %v5433, 8
  %v6265 = vpop.permute.xlu0 %6264
  %6266 = vrot.lane.b32.xlu0 %v5434, 8
  %v6267 = vpop.permute.xlu0 %6266
  %6396 = vrot.lane.b32.xlu0 %v5435, 12
  %v6397 = vpop.permute.xlu0 %6396
  %6398 = vrot.lane.b32.xlu0 %v5436, 12
  %v6399 = vpop.permute.xlu0 %6398
  %6400 = vrot.lane.b32.xlu0 %v5437, 12
  %v6401 = vpop.permute.xlu0 %6400
  %6402 = vrot.lane.b32.xlu0 %v5438, 12
  %v6403 = vpop.permute.xlu0 %6402
  %6404 = vrot.lane.b32.xlu0 %v5439, 12
  %v6405 = vpop.permute.xlu0 %6404
  %6406 = vrot.lane.b32.xlu0 %v5440, 12
  %v6407 = vpop.permute.xlu0 %6406
  %6408 = vrot.lane.b32.xlu0 %v5441, 12
  %v6409 = vpop.permute.xlu0 %6408
  %6410 = vrot.lane.b32.xlu0 %v5442, 12
  %v6411 = vpop.permute.xlu0 %6410
  %6412 = vrot.lane.b32.xlu0 %v5443, 12
  %v6413 = vpop.permute.xlu0 %6412
  %6414 = vrot.lane.b32.xlu0 %v5444, 12
  %v6415 = vpop.permute.xlu0 %6414
  %6416 = vrot.lane.b32.xlu0 %v5445, 12
  %v6417 = vpop.permute.xlu0 %6416
  %6418 = vrot.lane.b32.xlu0 %v5446, 12
  %v6419 = vpop.permute.xlu0 %6418
  %6420 = vrot.lane.b32.xlu0 %v5447, 12
  %v6421 = vpop.permute.xlu0 %6420
  %6422 = vrot.lane.b32.xlu0 %v5448, 12
  %v6423 = vpop.permute.xlu0 %6422
  %6424 = vrot.lane.b32.xlu0 %v5449, 12
  %v6425 = vpop.permute.xlu0 %6424
  %6426 = vrot.lane.b32.xlu0 %v5450, 12
  %v6427 = vpop.permute.xlu0 %6426
  %6428 = vrot.lane.b32.xlu0 %v5451, 12
  %v6429 = vpop.permute.xlu0 %6428
  %6430 = vrot.lane.b32.xlu0 %v5452, 12
  %v6431 = vpop.permute.xlu0 %6430
  %6432 = vrot.lane.b32.xlu0 %v5453, 12
  %v6433 = vpop.permute.xlu0 %6432
  %6434 = vrot.lane.b32.xlu0 %v5454, 12
  %v6435 = vpop.permute.xlu0 %6434
  %6436 = vrot.lane.b32.xlu0 %v5455, 12
  %v6437 = vpop.permute.xlu0 %6436
  %6438 = vrot.lane.b32.xlu0 %v5456, 12
  %v6439 = vpop.permute.xlu0 %6438
  %6440 = vrot.lane.b32.xlu0 %v5457, 12
  %v6441 = vpop.permute.xlu0 %6440
  %6442 = vrot.lane.b32.xlu0 %v5458, 12
  %v6443 = vpop.permute.xlu0 %6442
  %6444 = vrot.lane.b32.xlu0 %v5459, 12
  %v6445 = vpop.permute.xlu0 %6444
  %6446 = vrot.lane.b32.xlu0 %v5460, 12
  %v6447 = vpop.permute.xlu0 %6446
  %6448 = vrot.lane.b32.xlu0 %v5461, 12
  %v6449 = vpop.permute.xlu0 %6448
  %6450 = vrot.lane.b32.xlu0 %v5462, 12
  %v6451 = vpop.permute.xlu0 %6450
  %6452 = vrot.lane.b32.xlu0 %v5463, 12
  %v6453 = vpop.permute.xlu0 %6452
  %6454 = vrot.lane.b32.xlu0 %v5464, 12
  %v6455 = vpop.permute.xlu0 %6454
  %6456 = vrot.lane.b32.xlu0 %v5465, 12
  %v6457 = vpop.permute.xlu0 %6456
  %6458 = vrot.lane.b32.xlu0 %v5466, 12
  %v6459 = vpop.permute.xlu0 %6458
  %6460 = vrot.lane.b32.xlu0 %v5467, 12
  %v6461 = vpop.permute.xlu0 %6460
  %6462 = vrot.lane.b32.xlu0 %v5468, 12
  %v6463 = vpop.permute.xlu0 %6462
  %6464 = vrot.lane.b32.xlu0 %v5469, 12
  %v6465 = vpop.permute.xlu0 %6464
  %6466 = vrot.lane.b32.xlu0 %v5470, 12
  %v6467 = vpop.permute.xlu0 %6466
  %6468 = vrot.lane.b32.xlu0 %v5471, 12
  %v6469 = vpop.permute.xlu0 %6468
  %6470 = vrot.lane.b32.xlu0 %v5472, 12
  %v6471 = vpop.permute.xlu0 %6470
  %6472 = vrot.lane.b32.xlu0 %v5473, 12
  %v6473 = vpop.permute.xlu0 %6472
  %6474 = vrot.lane.b32.xlu0 %v5474, 12
  %v6475 = vpop.permute.xlu0 %6474
  %6476 = vrot.lane.b32.xlu0 %v5475, 12
  %v6477 = vpop.permute.xlu0 %6476
  %6478 = vrot.lane.b32.xlu0 %v5476, 12
  %v6479 = vpop.permute.xlu0 %6478
  %6480 = vrot.lane.b32.xlu0 %v5477, 12
  %v6481 = vpop.permute.xlu0 %6480
  %6482 = vrot.lane.b32.xlu0 %v5478, 12
  %v6483 = vpop.permute.xlu0 %6482
  %6484 = vrot.lane.b32.xlu0 %v5479, 12
  %v6485 = vpop.permute.xlu0 %6484
  %6486 = vrot.lane.b32.xlu0 %v5480, 12
  %v6487 = vpop.permute.xlu0 %6486
  %6488 = vrot.lane.b32.xlu0 %v5481, 12
  %v6489 = vpop.permute.xlu0 %6488
  %6490 = vrot.lane.b32.xlu0 %v5482, 12
  %v6491 = vpop.permute.xlu0 %6490
  %6492 = vrot.lane.b32.xlu0 %v5483, 12
  %v6493 = vpop.permute.xlu0 %6492
  %6494 = vrot.lane.b32.xlu0 %v5484, 12
  %v6495 = vpop.permute.xlu0 %6494
  %6496 = vrot.lane.b32.xlu0 %v5485, 12
  %v6497 = vpop.permute.xlu0 %6496
  %6498 = vrot.lane.b32.xlu0 %v5486, 12
  %v6499 = vpop.permute.xlu0 %6498
  %6500 = vrot.lane.b32.xlu0 %v5487, 12
  %v6501 = vpop.permute.xlu0 %6500
  %6502 = vrot.lane.b32.xlu0 %v5488, 12
  %v6503 = vpop.permute.xlu0 %6502
  %6504 = vrot.lane.b32.xlu0 %v5489, 12
  %v6505 = vpop.permute.xlu0 %6504
  %6506 = vrot.lane.b32.xlu0 %v5490, 12
  %v6507 = vpop.permute.xlu0 %6506
  %6508 = vrot.lane.b32.xlu0 %v5491, 12
  %v6509 = vpop.permute.xlu0 %6508
  %6510 = vrot.lane.b32.xlu0 %v5492, 12
  %v6511 = vpop.permute.xlu0 %6510
  %6512 = vrot.lane.b32.xlu0 %v5493, 12
  %v6513 = vpop.permute.xlu0 %6512
  %6514 = vrot.lane.b32.xlu0 %v5494, 12
  %v6515 = vpop.permute.xlu0 %6514
  %6516 = vrot.lane.b32.xlu0 %v5495, 12
  %v6517 = vpop.permute.xlu0 %6516
  %6518 = vrot.lane.b32.xlu0 %v5496, 12
  %v6519 = vpop.permute.xlu0 %6518
  %6520 = vrot.lane.b32.xlu0 %v5497, 12
  %v6521 = vpop.permute.xlu0 %6520
  %6522 = vrot.lane.b32.xlu0 %v5498, 12
  %v6523 = vpop.permute.xlu0 %6522
  %6652 = vrot.lane.b32.xlu0 %v5499, 16
  %v6653 = vpop.permute.xlu0 %6652
  %6654 = vrot.lane.b32.xlu0 %v5500, 16
  %v6655 = vpop.permute.xlu0 %6654
  %6656 = vrot.lane.b32.xlu0 %v5501, 16
  %v6657 = vpop.permute.xlu0 %6656
  %6658 = vrot.lane.b32.xlu0 %v5502, 16
  %v6659 = vpop.permute.xlu0 %6658
  %6660 = vrot.lane.b32.xlu0 %v5503, 16
  %v6661 = vpop.permute.xlu0 %6660
  %6662 = vrot.lane.b32.xlu0 %v5504, 16
  %v6663 = vpop.permute.xlu0 %6662
  %6664 = vrot.lane.b32.xlu0 %v5505, 16
  %v6665 = vpop.permute.xlu0 %6664
  %6666 = vrot.lane.b32.xlu0 %v5506, 16
  %v6667 = vpop.permute.xlu0 %6666
  %6668 = vrot.lane.b32.xlu0 %v5507, 16
  %v6669 = vpop.permute.xlu0 %6668
  %6670 = vrot.lane.b32.xlu0 %v5508, 16
  %v6671 = vpop.permute.xlu0 %6670
  %6672 = vrot.lane.b32.xlu0 %v5509, 16
  %v6673 = vpop.permute.xlu0 %6672
  %6674 = vrot.lane.b32.xlu0 %v5510, 16
  %v6675 = vpop.permute.xlu0 %6674
  %6676 = vrot.lane.b32.xlu0 %v5511, 16
  %v6677 = vpop.permute.xlu0 %6676
  %6678 = vrot.lane.b32.xlu0 %v5512, 16
  %v6679 = vpop.permute.xlu0 %6678
  %6680 = vrot.lane.b32.xlu0 %v5513, 16
  %v6681 = vpop.permute.xlu0 %6680
  %6682 = vrot.lane.b32.xlu0 %v5514, 16
  %v6683 = vpop.permute.xlu0 %6682
  %6684 = vrot.lane.b32.xlu0 %v5515, 16
  %v6685 = vpop.permute.xlu0 %6684
  %6686 = vrot.lane.b32.xlu0 %v5516, 16
  %v6687 = vpop.permute.xlu0 %6686
  %6688 = vrot.lane.b32.xlu0 %v5517, 16
  %v6689 = vpop.permute.xlu0 %6688
  %6690 = vrot.lane.b32.xlu0 %v5518, 16
  %v6691 = vpop.permute.xlu0 %6690
  %6692 = vrot.lane.b32.xlu0 %v5519, 16
  %v6693 = vpop.permute.xlu0 %6692
  %6694 = vrot.lane.b32.xlu0 %v5520, 16
  %v6695 = vpop.permute.xlu0 %6694
  %6696 = vrot.lane.b32.xlu0 %v5521, 16
  %v6697 = vpop.permute.xlu0 %6696
  %6698 = vrot.lane.b32.xlu0 %v5522, 16
  %v6699 = vpop.permute.xlu0 %6698
  %6700 = vrot.lane.b32.xlu0 %v5523, 16
  %v6701 = vpop.permute.xlu0 %6700
  %6702 = vrot.lane.b32.xlu0 %v5524, 16
  %v6703 = vpop.permute.xlu0 %6702
  %6704 = vrot.lane.b32.xlu0 %v5525, 16
  %v6705 = vpop.permute.xlu0 %6704
  %6706 = vrot.lane.b32.xlu0 %v5526, 16
  %v6707 = vpop.permute.xlu0 %6706
  %6708 = vrot.lane.b32.xlu0 %v5527, 16
  %v6709 = vpop.permute.xlu0 %6708
  %6710 = vrot.lane.b32.xlu0 %v5528, 16
  %v6711 = vpop.permute.xlu0 %6710
  %6712 = vrot.lane.b32.xlu0 %v5529, 16
  %v6713 = vpop.permute.xlu0 %6712
  %6714 = vrot.lane.b32.xlu0 %v5530, 16
  %v6715 = vpop.permute.xlu0 %6714
  %6716 = vrot.lane.b32.xlu0 %v5531, 16
  %v6717 = vpop.permute.xlu0 %6716
  %6718 = vrot.lane.b32.xlu0 %v5532, 16
  %v6719 = vpop.permute.xlu0 %6718
  %6720 = vrot.lane.b32.xlu0 %v5533, 16
  %v6721 = vpop.permute.xlu0 %6720
  %6722 = vrot.lane.b32.xlu0 %v5534, 16
  %v6723 = vpop.permute.xlu0 %6722
  %6724 = vrot.lane.b32.xlu0 %v5535, 16
  %v6725 = vpop.permute.xlu0 %6724
  %6726 = vrot.lane.b32.xlu0 %v5536, 16
  %v6727 = vpop.permute.xlu0 %6726
  %6728 = vrot.lane.b32.xlu0 %v5537, 16
  %v6729 = vpop.permute.xlu0 %6728
  %6730 = vrot.lane.b32.xlu0 %v5538, 16
  %v6731 = vpop.permute.xlu0 %6730
  %6732 = vrot.lane.b32.xlu0 %v5539, 16
  %v6733 = vpop.permute.xlu0 %6732
  %6734 = vrot.lane.b32.xlu0 %v5540, 16
  %v6735 = vpop.permute.xlu0 %6734
  %6736 = vrot.lane.b32.xlu0 %v5541, 16
  %v6737 = vpop.permute.xlu0 %6736
  %6738 = vrot.lane.b32.xlu0 %v5542, 16
  %v6739 = vpop.permute.xlu0 %6738
  %6740 = vrot.lane.b32.xlu0 %v5543, 16
  %v6741 = vpop.permute.xlu0 %6740
  %6742 = vrot.lane.b32.xlu0 %v5544, 16
  %v6743 = vpop.permute.xlu0 %6742
  %6744 = vrot.lane.b32.xlu0 %v5545, 16
  %v6745 = vpop.permute.xlu0 %6744
  %6746 = vrot.lane.b32.xlu0 %v5546, 16
  %v6747 = vpop.permute.xlu0 %6746
  %6748 = vrot.lane.b32.xlu0 %v5547, 16
  %v6749 = vpop.permute.xlu0 %6748
  %6750 = vrot.lane.b32.xlu0 %v5548, 16
  %v6751 = vpop.permute.xlu0 %6750
  %6752 = vrot.lane.b32.xlu0 %v5549, 16
  %v6753 = vpop.permute.xlu0 %6752
  %6754 = vrot.lane.b32.xlu0 %v5550, 16
  %v6755 = vpop.permute.xlu0 %6754
  %6756 = vrot.lane.b32.xlu0 %v5551, 16
  %v6757 = vpop.permute.xlu0 %6756
  %6758 = vrot.lane.b32.xlu0 %v5552, 16
  %v6759 = vpop.permute.xlu0 %6758
  %6760 = vrot.lane.b32.xlu0 %v5553, 16
  %v6761 = vpop.permute.xlu0 %6760
  %6762 = vrot.lane.b32.xlu0 %v5554, 16
  %v6763 = vpop.permute.xlu0 %6762
  %6764 = vrot.lane.b32.xlu0 %v5555, 16
  %v6765 = vpop.permute.xlu0 %6764
  %6766 = vrot.lane.b32.xlu0 %v5556, 16
  %v6767 = vpop.permute.xlu0 %6766
  %6768 = vrot.lane.b32.xlu0 %v5557, 16
  %v6769 = vpop.permute.xlu0 %6768
  %6770 = vrot.lane.b32.xlu0 %v5558, 16
  %v6771 = vpop.permute.xlu0 %6770
  %6772 = vrot.lane.b32.xlu0 %v5559, 16
  %v6773 = vpop.permute.xlu0 %6772
  %6774 = vrot.lane.b32.xlu0 %v5560, 16
  %v6775 = vpop.permute.xlu0 %6774
  %6776 = vrot.lane.b32.xlu0 %v5561, 16
  %v6777 = vpop.permute.xlu0 %6776
  %6778 = vrot.lane.b32.xlu0 %v5562, 16
  %v6779 = vpop.permute.xlu0 %6778
  %6908 = vrot.lane.b32.xlu0 %v5563, 20
  %v6909 = vpop.permute.xlu0 %6908
  %6910 = vrot.lane.b32.xlu0 %v5564, 20
  %v6911 = vpop.permute.xlu0 %6910
  %6912 = vrot.lane.b32.xlu0 %v5565, 20
  %v6913 = vpop.permute.xlu0 %6912
  %6914 = vrot.lane.b32.xlu0 %v5566, 20
  %v6915 = vpop.permute.xlu0 %6914
  %6916 = vrot.lane.b32.xlu0 %v5567, 20
  %v6917 = vpop.permute.xlu0 %6916
  %6918 = vrot.lane.b32.xlu0 %v5568, 20
  %v6919 = vpop.permute.xlu0 %6918
  %6920 = vrot.lane.b32.xlu0 %v5569, 20
  %v6921 = vpop.permute.xlu0 %6920
  %6922 = vrot.lane.b32.xlu0 %v5570, 20
  %v6923 = vpop.permute.xlu0 %6922
  %6924 = vrot.lane.b32.xlu0 %v5571, 20
  %v6925 = vpop.permute.xlu0 %6924
  %6926 = vrot.lane.b32.xlu0 %v5572, 20
  %v6927 = vpop.permute.xlu0 %6926
  %6928 = vrot.lane.b32.xlu0 %v5573, 20
  %v6929 = vpop.permute.xlu0 %6928
  %6930 = vrot.lane.b32.xlu0 %v5574, 20
  %v6931 = vpop.permute.xlu0 %6930
  %6932 = vrot.lane.b32.xlu0 %v5575, 20
  %v6933 = vpop.permute.xlu0 %6932
  %6934 = vrot.lane.b32.xlu0 %v5576, 20
  %v6935 = vpop.permute.xlu0 %6934
  %6936 = vrot.lane.b32.xlu0 %v5577, 20
  %v6937 = vpop.permute.xlu0 %6936
  %6938 = vrot.lane.b32.xlu0 %v5578, 20
  %v6939 = vpop.permute.xlu0 %6938
  %6940 = vrot.lane.b32.xlu0 %v5579, 20
  %v6941 = vpop.permute.xlu0 %6940
  %6942 = vrot.lane.b32.xlu0 %v5580, 20
  %v6943 = vpop.permute.xlu0 %6942
  %6944 = vrot.lane.b32.xlu0 %v5581, 20
  %v6945 = vpop.permute.xlu0 %6944
  %6946 = vrot.lane.b32.xlu0 %v5582, 20
  %v6947 = vpop.permute.xlu0 %6946
  %6948 = vrot.lane.b32.xlu0 %v5583, 20
  %v6949 = vpop.permute.xlu0 %6948
  %6950 = vrot.lane.b32.xlu0 %v5584, 20
  %v6951 = vpop.permute.xlu0 %6950
  %6952 = vrot.lane.b32.xlu0 %v5585, 20
  %v6953 = vpop.permute.xlu0 %6952
  %6954 = vrot.lane.b32.xlu0 %v5586, 20
  %v6955 = vpop.permute.xlu0 %6954
  %6956 = vrot.lane.b32.xlu0 %v5587, 20
  %v6957 = vpop.permute.xlu0 %6956
  %6958 = vrot.lane.b32.xlu0 %v5588, 20
  %v6959 = vpop.permute.xlu0 %6958
  %6960 = vrot.lane.b32.xlu0 %v5589, 20
  %v6961 = vpop.permute.xlu0 %6960
  %6962 = vrot.lane.b32.xlu0 %v5590, 20
  %v6963 = vpop.permute.xlu0 %6962
  %6964 = vrot.lane.b32.xlu0 %v5591, 20
  %v6965 = vpop.permute.xlu0 %6964
  %6966 = vrot.lane.b32.xlu0 %v5592, 20
  %v6967 = vpop.permute.xlu0 %6966
  %6968 = vrot.lane.b32.xlu0 %v5593, 20
  %v6969 = vpop.permute.xlu0 %6968
  %6970 = vrot.lane.b32.xlu0 %v5594, 20
  %v6971 = vpop.permute.xlu0 %6970
  %6972 = vrot.lane.b32.xlu0 %v5595, 20
  %v6973 = vpop.permute.xlu0 %6972
  %6974 = vrot.lane.b32.xlu0 %v5596, 20
  %v6975 = vpop.permute.xlu0 %6974
  %6976 = vrot.lane.b32.xlu0 %v5597, 20
  %v6977 = vpop.permute.xlu0 %6976
  %6978 = vrot.lane.b32.xlu0 %v5598, 20
  %v6979 = vpop.permute.xlu0 %6978
  %6980 = vrot.lane.b32.xlu0 %v5599, 20
  %v6981 = vpop.permute.xlu0 %6980
  %6982 = vrot.lane.b32.xlu0 %v5600, 20
  %v6983 = vpop.permute.xlu0 %6982
  %6984 = vrot.lane.b32.xlu0 %v5601, 20
  %v6985 = vpop.permute.xlu0 %6984
  %6986 = vrot.lane.b32.xlu0 %v5602, 20
  %v6987 = vpop.permute.xlu0 %6986
  %6988 = vrot.lane.b32.xlu0 %v5603, 20
  %v6989 = vpop.permute.xlu0 %6988
  %6990 = vrot.lane.b32.xlu0 %v5604, 20
  %v6991 = vpop.permute.xlu0 %6990
  %6992 = vrot.lane.b32.xlu0 %v5605, 20
  %v6993 = vpop.permute.xlu0 %6992
  %6994 = vrot.lane.b32.xlu0 %v5606, 20
  %v6995 = vpop.permute.xlu0 %6994
  %6996 = vrot.lane.b32.xlu0 %v5607, 20
  %v6997 = vpop.permute.xlu0 %6996
  %6998 = vrot.lane.b32.xlu0 %v5608, 20
  %v6999 = vpop.permute.xlu0 %6998
  %7000 = vrot.lane.b32.xlu0 %v5609, 20
  %v7001 = vpop.permute.xlu0 %7000
  %7002 = vrot.lane.b32.xlu0 %v5610, 20
  %v7003 = vpop.permute.xlu0 %7002
  %7004 = vrot.lane.b32.xlu0 %v5611, 20
  %v7005 = vpop.permute.xlu0 %7004
  %7006 = vrot.lane.b32.xlu0 %v5612, 20
  %v7007 = vpop.permute.xlu0 %7006
  %7008 = vrot.lane.b32.xlu0 %v5613, 20
  %v7009 = vpop.permute.xlu0 %7008
  %7010 = vrot.lane.b32.xlu0 %v5614, 20
  %v7011 = vpop.permute.xlu0 %7010
  %7012 = vrot.lane.b32.xlu0 %v5615, 20
  %v7013 = vpop.permute.xlu0 %7012
  %7014 = vrot.lane.b32.xlu0 %v5616, 20
  %v7015 = vpop.permute.xlu0 %7014
  %7016 = vrot.lane.b32.xlu0 %v5617, 20
  %v7017 = vpop.permute.xlu0 %7016
  %7018 = vrot.lane.b32.xlu0 %v5618, 20
  %v7019 = vpop.permute.xlu0 %7018
  %7020 = vrot.lane.b32.xlu0 %v5619, 20
  %v7021 = vpop.permute.xlu0 %7020
  %7022 = vrot.lane.b32.xlu0 %v5620, 20
  %v7023 = vpop.permute.xlu0 %7022
  %7024 = vrot.lane.b32.xlu0 %v5621, 20
  %v7025 = vpop.permute.xlu0 %7024
  %7026 = vrot.lane.b32.xlu0 %v5622, 20
  %v7027 = vpop.permute.xlu0 %7026
  %7028 = vrot.lane.b32.xlu0 %v5623, 20
  %v7029 = vpop.permute.xlu0 %7028
  %7030 = vrot.lane.b32.xlu0 %v5624, 20
  %v7031 = vpop.permute.xlu0 %7030
  %7032 = vrot.lane.b32.xlu0 %v5625, 20
  %v7033 = vpop.permute.xlu0 %7032
  %7034 = vrot.lane.b32.xlu0 %v5626, 20
  %v7035 = vpop.permute.xlu0 %7034
  %7164 = vrot.lane.b32.xlu0 %v5628, 24
  %v7165 = vpop.permute.xlu0 %7164
  %7166 = vrot.lane.b32.xlu0 %v5629, 24
  %v7167 = vpop.permute.xlu0 %7166
  %7168 = vrot.lane.b32.xlu0 %v5630, 24
  %v7169 = vpop.permute.xlu0 %7168
  %7170 = vrot.lane.b32.xlu0 %v5631, 24
  %v7171 = vpop.permute.xlu0 %7170
  %7172 = vrot.lane.b32.xlu0 %v5632, 24
  %v7173 = vpop.permute.xlu0 %7172
  %7174 = vrot.lane.b32.xlu0 %v5633, 24
  %v7175 = vpop.permute.xlu0 %7174
  %7176 = vrot.lane.b32.xlu0 %v5634, 24
  %v7177 = vpop.permute.xlu0 %7176
  %7178 = vrot.lane.b32.xlu0 %v5635, 24
  %v7179 = vpop.permute.xlu0 %7178
  %7180 = vrot.lane.b32.xlu0 %v5636, 24
  %v7181 = vpop.permute.xlu0 %7180
  %7182 = vrot.lane.b32.xlu0 %v5637, 24
  %v7183 = vpop.permute.xlu0 %7182
  %7184 = vrot.lane.b32.xlu0 %v5638, 24
  %v7185 = vpop.permute.xlu0 %7184
  %7186 = vrot.lane.b32.xlu0 %v5639, 24
  %v7187 = vpop.permute.xlu0 %7186
  %7188 = vrot.lane.b32.xlu0 %v5640, 24
  %v7189 = vpop.permute.xlu0 %7188
  %7190 = vrot.lane.b32.xlu0 %v5641, 24
  %v7191 = vpop.permute.xlu0 %7190
  %7192 = vrot.lane.b32.xlu0 %v5642, 24
  %v7193 = vpop.permute.xlu0 %7192
  %7194 = vrot.lane.b32.xlu0 %v5643, 24
  %v7195 = vpop.permute.xlu0 %7194
  %7196 = vrot.lane.b32.xlu0 %v5644, 24
  %v7197 = vpop.permute.xlu0 %7196
  %7198 = vrot.lane.b32.xlu0 %v5645, 24
  %v7199 = vpop.permute.xlu0 %7198
  %7200 = vrot.lane.b32.xlu0 %v5646, 24
  %v7201 = vpop.permute.xlu0 %7200
  %7202 = vrot.lane.b32.xlu0 %v5647, 24
  %v7203 = vpop.permute.xlu0 %7202
  %7204 = vrot.lane.b32.xlu0 %v5648, 24
  %v7205 = vpop.permute.xlu0 %7204
  %7206 = vrot.lane.b32.xlu0 %v5649, 24
  %v7207 = vpop.permute.xlu0 %7206
  %7208 = vrot.lane.b32.xlu0 %v5650, 24
  %v7209 = vpop.permute.xlu0 %7208
  %7210 = vrot.lane.b32.xlu0 %v5651, 24
  %v7211 = vpop.permute.xlu0 %7210
  %7212 = vrot.lane.b32.xlu0 %v5652, 24
  %v7213 = vpop.permute.xlu0 %7212
  %7214 = vrot.lane.b32.xlu0 %v5653, 24
  %v7215 = vpop.permute.xlu0 %7214
  %7216 = vrot.lane.b32.xlu0 %v5654, 24
  %v7217 = vpop.permute.xlu0 %7216
  %7218 = vrot.lane.b32.xlu0 %v5655, 24
  %v7219 = vpop.permute.xlu0 %7218
  %7220 = vrot.lane.b32.xlu0 %v5656, 24
  %v7221 = vpop.permute.xlu0 %7220
  %7222 = vrot.lane.b32.xlu0 %v5657, 24
  %v7223 = vpop.permute.xlu0 %7222
  %7224 = vrot.lane.b32.xlu0 %v5658, 24
  %v7225 = vpop.permute.xlu0 %7224
  %7226 = vrot.lane.b32.xlu0 %v5659, 24
  %v7227 = vpop.permute.xlu0 %7226
  %7228 = vrot.lane.b32.xlu0 %v5660, 24
  %v7229 = vpop.permute.xlu0 %7228
  %7230 = vrot.lane.b32.xlu0 %v5661, 24
  %v7231 = vpop.permute.xlu0 %7230
  %7232 = vrot.lane.b32.xlu0 %v5662, 24
  %v7233 = vpop.permute.xlu0 %7232
  %7234 = vrot.lane.b32.xlu0 %v5663, 24
  %v7235 = vpop.permute.xlu0 %7234
  %7236 = vrot.lane.b32.xlu0 %v5664, 24
  %v7237 = vpop.permute.xlu0 %7236
  %7238 = vrot.lane.b32.xlu0 %v5665, 24
  %v7239 = vpop.permute.xlu0 %7238
  %7240 = vrot.lane.b32.xlu0 %v5666, 24
  %v7241 = vpop.permute.xlu0 %7240
  %7242 = vrot.lane.b32.xlu0 %v5667, 24
  %v7243 = vpop.permute.xlu0 %7242
  %7244 = vrot.lane.b32.xlu0 %v5668, 24
  %v7245 = vpop.permute.xlu0 %7244
  %7246 = vrot.lane.b32.xlu0 %v5669, 24
  %v7247 = vpop.permute.xlu0 %7246
  %7248 = vrot.lane.b32.xlu0 %v5670, 24
  %v7249 = vpop.permute.xlu0 %7248
  %7250 = vrot.lane.b32.xlu0 %v5671, 24
  %v7251 = vpop.permute.xlu0 %7250
  %7252 = vrot.lane.b32.xlu0 %v5672, 24
  %v7253 = vpop.permute.xlu0 %7252
  %7254 = vrot.lane.b32.xlu0 %v5673, 24
  %v7255 = vpop.permute.xlu0 %7254
  %7256 = vrot.lane.b32.xlu0 %v5674, 24
  %v7257 = vpop.permute.xlu0 %7256
  %7258 = vrot.lane.b32.xlu0 %v5675, 24
  %v7259 = vpop.permute.xlu0 %7258
  %7260 = vrot.lane.b32.xlu0 %v5676, 24
  %v7261 = vpop.permute.xlu0 %7260
  %7262 = vrot.lane.b32.xlu0 %v5677, 24
  %v7263 = vpop.permute.xlu0 %7262
  %7264 = vrot.lane.b32.xlu0 %v5678, 24
  %v7265 = vpop.permute.xlu0 %7264
  %7266 = vrot.lane.b32.xlu0 %v5679, 24
  %v7267 = vpop.permute.xlu0 %7266
  %7268 = vrot.lane.b32.xlu0 %v5680, 24
  %v7269 = vpop.permute.xlu0 %7268
  %7270 = vrot.lane.b32.xlu0 %v5681, 24
  %v7271 = vpop.permute.xlu0 %7270
  %7272 = vrot.lane.b32.xlu0 %v5682, 24
  %v7273 = vpop.permute.xlu0 %7272
  %7274 = vrot.lane.b32.xlu0 %v5683, 24
  %v7275 = vpop.permute.xlu0 %7274
  %7276 = vrot.lane.b32.xlu0 %v5684, 24
  %v7277 = vpop.permute.xlu0 %7276
  %7278 = vrot.lane.b32.xlu0 %v5685, 24
  %v7279 = vpop.permute.xlu0 %7278
  %7280 = vrot.lane.b32.xlu0 %v5686, 24
  %v7281 = vpop.permute.xlu0 %7280
  %7282 = vrot.lane.b32.xlu0 %v5687, 24
  %v7283 = vpop.permute.xlu0 %7282
  %7284 = vrot.lane.b32.xlu0 %v5688, 24
  %v7285 = vpop.permute.xlu0 %7284
  %7286 = vrot.lane.b32.xlu0 %v5689, 24
  %v7287 = vpop.permute.xlu0 %7286
  %7288 = vrot.lane.b32.xlu0 %v5690, 24
  %v7289 = vpop.permute.xlu0 %7288
  %7290 = vrot.lane.b32.xlu0 %v5691, 24
  %v7291 = vpop.permute.xlu0 %7290
  %7420 = vrot.lane.b32.xlu0 %v5692, 28
  %v7421 = vpop.permute.xlu0 %7420
  %7422 = vrot.lane.b32.xlu0 %v5693, 28
  %v7423 = vpop.permute.xlu0 %7422
  %7424 = vrot.lane.b32.xlu0 %v5694, 28
  %v7425 = vpop.permute.xlu0 %7424
  %7426 = vrot.lane.b32.xlu0 %v5695, 28
  %v7427 = vpop.permute.xlu0 %7426
  %7428 = vrot.lane.b32.xlu0 %v5696, 28
  %v7429 = vpop.permute.xlu0 %7428
  %7430 = vrot.lane.b32.xlu0 %v5697, 28
  %v7431 = vpop.permute.xlu0 %7430
  %7432 = vrot.lane.b32.xlu0 %v5698, 28
  %v7433 = vpop.permute.xlu0 %7432
  %7434 = vrot.lane.b32.xlu0 %v5699, 28
  %v7435 = vpop.permute.xlu0 %7434
  %7436 = vrot.lane.b32.xlu0 %v5700, 28
  %v7437 = vpop.permute.xlu0 %7436
  %7438 = vrot.lane.b32.xlu0 %v5701, 28
  %v7439 = vpop.permute.xlu0 %7438
  %7440 = vrot.lane.b32.xlu0 %v5702, 28
  %v7441 = vpop.permute.xlu0 %7440
  %7442 = vrot.lane.b32.xlu0 %v5703, 28
  %v7443 = vpop.permute.xlu0 %7442
  %7444 = vrot.lane.b32.xlu0 %v5704, 28
  %v7445 = vpop.permute.xlu0 %7444
  %7446 = vrot.lane.b32.xlu0 %v5705, 28
  %v7447 = vpop.permute.xlu0 %7446
  %7448 = vrot.lane.b32.xlu0 %v5706, 28
  %v7449 = vpop.permute.xlu0 %7448
  %7450 = vrot.lane.b32.xlu0 %v5707, 28
  %v7451 = vpop.permute.xlu0 %7450
  %7452 = vrot.lane.b32.xlu0 %v5708, 28
  %v7453 = vpop.permute.xlu0 %7452
  %7454 = vrot.lane.b32.xlu0 %v5709, 28
  %v7455 = vpop.permute.xlu0 %7454
  %7456 = vrot.lane.b32.xlu0 %v5710, 28
  %v7457 = vpop.permute.xlu0 %7456
  %7458 = vrot.lane.b32.xlu0 %v5711, 28
  %v7459 = vpop.permute.xlu0 %7458
  %7460 = vrot.lane.b32.xlu0 %v5712, 28
  %v7461 = vpop.permute.xlu0 %7460
  %7462 = vrot.lane.b32.xlu0 %v5713, 28
  %v7463 = vpop.permute.xlu0 %7462
  %7464 = vrot.lane.b32.xlu0 %v5714, 28
  %v7465 = vpop.permute.xlu0 %7464
  %7466 = vrot.lane.b32.xlu0 %v5715, 28
  %v7467 = vpop.permute.xlu0 %7466
  %7468 = vrot.lane.b32.xlu0 %v5716, 28
  %v7469 = vpop.permute.xlu0 %7468
  %7470 = vrot.lane.b32.xlu0 %v5717, 28
  %v7471 = vpop.permute.xlu0 %7470
  %7472 = vrot.lane.b32.xlu0 %v5718, 28
  %v7473 = vpop.permute.xlu0 %7472
  %7474 = vrot.lane.b32.xlu0 %v5719, 28
  %v7475 = vpop.permute.xlu0 %7474
  %7476 = vrot.lane.b32.xlu0 %v5720, 28
  %v7477 = vpop.permute.xlu0 %7476
  %7478 = vrot.lane.b32.xlu0 %v5721, 28
  %v7479 = vpop.permute.xlu0 %7478
  %7480 = vrot.lane.b32.xlu0 %v5722, 28
  %v7481 = vpop.permute.xlu0 %7480
  %7482 = vrot.lane.b32.xlu0 %v5723, 28
  %v7483 = vpop.permute.xlu0 %7482
  %7484 = vrot.lane.b32.xlu0 %v5724, 28
  %v7485 = vpop.permute.xlu0 %7484
  %7486 = vrot.lane.b32.xlu0 %v5725, 28
  %v7487 = vpop.permute.xlu0 %7486
  %7488 = vrot.lane.b32.xlu0 %v5726, 28
  %v7489 = vpop.permute.xlu0 %7488
  %7490 = vrot.lane.b32.xlu0 %v5727, 28
  %v7491 = vpop.permute.xlu0 %7490
  %7492 = vrot.lane.b32.xlu0 %v5728, 28
  %v7493 = vpop.permute.xlu0 %7492
  %7494 = vrot.lane.b32.xlu0 %v5729, 28
  %v7495 = vpop.permute.xlu0 %7494
  %7496 = vrot.lane.b32.xlu0 %v5730, 28
  %v7497 = vpop.permute.xlu0 %7496
  %7498 = vrot.lane.b32.xlu0 %v5731, 28
  %v7499 = vpop.permute.xlu0 %7498
  %7500 = vrot.lane.b32.xlu0 %v5732, 28
  %v7501 = vpop.permute.xlu0 %7500
  %7502 = vrot.lane.b32.xlu0 %v5733, 28
  %v7503 = vpop.permute.xlu0 %7502
  %7504 = vrot.lane.b32.xlu0 %v5734, 28
  %v7505 = vpop.permute.xlu0 %7504
  %7506 = vrot.lane.b32.xlu0 %v5735, 28
  %v7507 = vpop.permute.xlu0 %7506
  %7508 = vrot.lane.b32.xlu0 %v5736, 28
  %v7509 = vpop.permute.xlu0 %7508
  %7510 = vrot.lane.b32.xlu0 %v5737, 28
  %v7511 = vpop.permute.xlu0 %7510
  %7512 = vrot.lane.b32.xlu0 %v5738, 28
  %v7513 = vpop.permute.xlu0 %7512
  %7514 = vrot.lane.b32.xlu0 %v5739, 28
  %v7515 = vpop.permute.xlu0 %7514
  %7516 = vrot.lane.b32.xlu0 %v5740, 28
  %v7517 = vpop.permute.xlu0 %7516
  %7518 = vrot.lane.b32.xlu0 %v5741, 28
  %v7519 = vpop.permute.xlu0 %7518
  %7520 = vrot.lane.b32.xlu0 %v5742, 28
  %v7521 = vpop.permute.xlu0 %7520
  %7522 = vrot.lane.b32.xlu0 %v5743, 28
  %v7523 = vpop.permute.xlu0 %7522
  %7524 = vrot.lane.b32.xlu0 %v5744, 28
  %v7525 = vpop.permute.xlu0 %7524
  %7526 = vrot.lane.b32.xlu0 %v5745, 28
  %v7527 = vpop.permute.xlu0 %7526
  %7528 = vrot.lane.b32.xlu0 %v5746, 28
  %v7529 = vpop.permute.xlu0 %7528
  %7530 = vrot.lane.b32.xlu0 %v5747, 28
  %v7531 = vpop.permute.xlu0 %7530
  %7532 = vrot.lane.b32.xlu0 %v5748, 28
  %v7533 = vpop.permute.xlu0 %7532
  %7534 = vrot.lane.b32.xlu0 %v5749, 28
  %v7535 = vpop.permute.xlu0 %7534
  %7536 = vrot.lane.b32.xlu0 %v5750, 28
  %v7537 = vpop.permute.xlu0 %7536
  %7538 = vrot.lane.b32.xlu0 %v5751, 28
  %v7539 = vpop.permute.xlu0 %7538
  %7540 = vrot.lane.b32.xlu0 %v5752, 28
  %v7541 = vpop.permute.xlu0 %7540
  %7542 = vrot.lane.b32.xlu0 %v5753, 28
  %v7543 = vpop.permute.xlu0 %7542
  %7544 = vrot.lane.b32.xlu0 %v5754, 28
  %v7545 = vpop.permute.xlu0 %7544
  %7546 = vrot.lane.b32.xlu0 %v5755, 28
  %v7547 = vpop.permute.xlu0 %7546
  %7676 = vrot.lane.b32.xlu0 %v5756, 32
  %v7677 = vpop.permute.xlu0 %7676
  %7678 = vrot.lane.b32.xlu0 %v5757, 32
  %v7679 = vpop.permute.xlu0 %7678
  %7680 = vrot.lane.b32.xlu0 %v5758, 32
  %v7681 = vpop.permute.xlu0 %7680
  %7682 = vrot.lane.b32.xlu0 %v5759, 32
  %v7683 = vpop.permute.xlu0 %7682
  %7684 = vrot.lane.b32.xlu0 %v5760, 32
  %v7685 = vpop.permute.xlu0 %7684
  %7686 = vrot.lane.b32.xlu0 %v5761, 32
  %v7687 = vpop.permute.xlu0 %7686
  %7688 = vrot.lane.b32.xlu0 %v5762, 32
  %v7689 = vpop.permute.xlu0 %7688
  %7690 = vrot.lane.b32.xlu0 %v5763, 32
  %v7691 = vpop.permute.xlu0 %7690
  %7692 = vrot.lane.b32.xlu0 %v5764, 32
  %v7693 = vpop.permute.xlu0 %7692
  %7694 = vrot.lane.b32.xlu0 %v5765, 32
  %v7695 = vpop.permute.xlu0 %7694
  %7696 = vrot.lane.b32.xlu0 %v5766, 32
  %v7697 = vpop.permute.xlu0 %7696
  %7698 = vrot.lane.b32.xlu0 %v5767, 32
  %v7699 = vpop.permute.xlu0 %7698
  %7700 = vrot.lane.b32.xlu0 %v5768, 32
  %v7701 = vpop.permute.xlu0 %7700
  %7702 = vrot.lane.b32.xlu0 %v5769, 32
  %v7703 = vpop.permute.xlu0 %7702
  %7704 = vrot.lane.b32.xlu0 %v5770, 32
  %v7705 = vpop.permute.xlu0 %7704
  %7706 = vrot.lane.b32.xlu0 %v5771, 32
  %v7707 = vpop.permute.xlu0 %7706
  %7708 = vrot.lane.b32.xlu0 %v5772, 32
  %v7709 = vpop.permute.xlu0 %7708
  %7710 = vrot.lane.b32.xlu0 %v5773, 32
  %v7711 = vpop.permute.xlu0 %7710
  %7712 = vrot.lane.b32.xlu0 %v5774, 32
  %v7713 = vpop.permute.xlu0 %7712
  %7714 = vrot.lane.b32.xlu0 %v5775, 32
  %v7715 = vpop.permute.xlu0 %7714
  %7716 = vrot.lane.b32.xlu0 %v5776, 32
  %v7717 = vpop.permute.xlu0 %7716
  %7718 = vrot.lane.b32.xlu0 %v5777, 32
  %v7719 = vpop.permute.xlu0 %7718
  %7720 = vrot.lane.b32.xlu0 %v5778, 32
  %v7721 = vpop.permute.xlu0 %7720
  %7722 = vrot.lane.b32.xlu0 %v5779, 32
  %v7723 = vpop.permute.xlu0 %7722
  %7724 = vrot.lane.b32.xlu0 %v5780, 32
  %v7725 = vpop.permute.xlu0 %7724
  %7726 = vrot.lane.b32.xlu0 %v5781, 32
  %v7727 = vpop.permute.xlu0 %7726
  %7728 = vrot.lane.b32.xlu0 %v5782, 32
  %v7729 = vpop.permute.xlu0 %7728
  %7730 = vrot.lane.b32.xlu0 %v5783, 32
  %v7731 = vpop.permute.xlu0 %7730
  %7732 = vrot.lane.b32.xlu0 %v5784, 32
  %v7733 = vpop.permute.xlu0 %7732
  %7734 = vrot.lane.b32.xlu0 %v5785, 32
  %v7735 = vpop.permute.xlu0 %7734
  %7736 = vrot.lane.b32.xlu0 %v5786, 32
  %v7737 = vpop.permute.xlu0 %7736
  %7738 = vrot.lane.b32.xlu0 %v5787, 32
  %v7739 = vpop.permute.xlu0 %7738
  %7740 = vrot.lane.b32.xlu0 %v5788, 32
  %v7741 = vpop.permute.xlu0 %7740
  %7742 = vrot.lane.b32.xlu0 %v5789, 32
  %v7743 = vpop.permute.xlu0 %7742
  %7744 = vrot.lane.b32.xlu0 %v5790, 32
  %v7745 = vpop.permute.xlu0 %7744
  %7746 = vrot.lane.b32.xlu0 %v5791, 32
  %v7747 = vpop.permute.xlu0 %7746
  %7748 = vrot.lane.b32.xlu0 %v5792, 32
  %v7749 = vpop.permute.xlu0 %7748
  %7750 = vrot.lane.b32.xlu0 %v5793, 32
  %v7751 = vpop.permute.xlu0 %7750
  %7752 = vrot.lane.b32.xlu0 %v5794, 32
  %v7753 = vpop.permute.xlu0 %7752
  %7754 = vrot.lane.b32.xlu0 %v5795, 32
  %v7755 = vpop.permute.xlu0 %7754
  %7756 = vrot.lane.b32.xlu0 %v5796, 32
  %v7757 = vpop.permute.xlu0 %7756
  %7758 = vrot.lane.b32.xlu0 %v5797, 32
  %v7759 = vpop.permute.xlu0 %7758
  %7760 = vrot.lane.b32.xlu0 %v5798, 32
  %v7761 = vpop.permute.xlu0 %7760
  %7762 = vrot.lane.b32.xlu0 %v5799, 32
  %v7763 = vpop.permute.xlu0 %7762
  %7764 = vrot.lane.b32.xlu0 %v5800, 32
  %v7765 = vpop.permute.xlu0 %7764
  %7766 = vrot.lane.b32.xlu0 %v5801, 32
  %v7767 = vpop.permute.xlu0 %7766
  %7768 = vrot.lane.b32.xlu0 %v5802, 32
  %v7769 = vpop.permute.xlu0 %7768
  %7770 = vrot.lane.b32.xlu0 %v5803, 32
  %v7771 = vpop.permute.xlu0 %7770
  %7772 = vrot.lane.b32.xlu0 %v5804, 32
  %v7773 = vpop.permute.xlu0 %7772
  %7774 = vrot.lane.b32.xlu0 %v5805, 32
  %v7775 = vpop.permute.xlu0 %7774
  %7776 = vrot.lane.b32.xlu0 %v5806, 32
  %v7777 = vpop.permute.xlu0 %7776
  %7778 = vrot.lane.b32.xlu0 %v5807, 32
  %v7779 = vpop.permute.xlu0 %7778
  %7780 = vrot.lane.b32.xlu0 %v5808, 32
  %v7781 = vpop.permute.xlu0 %7780
  %7782 = vrot.lane.b32.xlu0 %v5809, 32
  %v7783 = vpop.permute.xlu0 %7782
  %7784 = vrot.lane.b32.xlu0 %v5810, 32
  %v7785 = vpop.permute.xlu0 %7784
  %7786 = vrot.lane.b32.xlu0 %v5811, 32
  %v7787 = vpop.permute.xlu0 %7786
  %7788 = vrot.lane.b32.xlu0 %v5812, 32
  %v7789 = vpop.permute.xlu0 %7788
  %7790 = vrot.lane.b32.xlu0 %v5813, 32
  %v7791 = vpop.permute.xlu0 %7790
  %7792 = vrot.lane.b32.xlu0 %v5814, 32
  %v7793 = vpop.permute.xlu0 %7792
  %7794 = vrot.lane.b32.xlu0 %v5815, 32
  %v7795 = vpop.permute.xlu0 %7794
  %7796 = vrot.lane.b32.xlu0 %v5816, 32
  %v7797 = vpop.permute.xlu0 %7796
  %7798 = vrot.lane.b32.xlu0 %v5817, 32
  %v7799 = vpop.permute.xlu0 %7798
  %7800 = vrot.lane.b32.xlu0 %v5818, 32
  %v7801 = vpop.permute.xlu0 %7800
  %7802 = vrot.lane.b32.xlu0 %v5819, 32
  %v7803 = vpop.permute.xlu0 %7802
  %v7868 = vsel %vm114, %v5243, %v5885
  %v7869 = vsel %vm114, %v5244, %v5887
  %v7870 = vsel %vm114, %v5245, %v5889
  %v7871 = vsel %vm114, %v5246, %v5891
  %v7872 = vsel %vm114, %v5247, %v5893
  %v7873 = vsel %vm114, %v5248, %v5895
  %v7874 = vsel %vm114, %v5249, %v5897
  %v7875 = vsel %vm114, %v5250, %v5899
  %v7876 = vsel %vm114, %v5251, %v5901
  %v7877 = vsel %vm114, %v5252, %v5903
  %v7878 = vsel %vm114, %v5253, %v5905
  %v7879 = vsel %vm114, %v5254, %v5907
  %v7880 = vsel %vm114, %v5255, %v5909
  %v7881 = vsel %vm114, %v5256, %v5911
  %v7882 = vsel %vm114, %v5257, %v5913
  %v7883 = vsel %vm114, %v5258, %v5915
  %v7884 = vsel %vm114, %v5259, %v5917
  %v7885 = vsel %vm114, %v5260, %v5919
  %v7886 = vsel %vm114, %v5261, %v5921
  %v7887 = vsel %vm114, %v5262, %v5923
  %v7888 = vsel %vm114, %v5263, %v5925
  %v7889 = vsel %vm114, %v5264, %v5927
  %v7890 = vsel %vm114, %v5265, %v5929
  %v7891 = vsel %vm114, %v5266, %v5931
  %v7892 = vsel %vm114, %v5267, %v5933
  %v7893 = vsel %vm114, %v5268, %v5935
  %v7894 = vsel %vm114, %v5269, %v5937
  %v7895 = vsel %vm114, %v5270, %v5939
  %v7896 = vsel %vm114, %v5271, %v5941
  %v7897 = vsel %vm114, %v5272, %v5943
  %v7898 = vsel %vm114, %v5273, %v5945
  %v7899 = vsel %vm114, %v5274, %v5947
  %v7900 = vsel %vm114, %v5275, %v5949
  %v7901 = vsel %vm114, %v5276, %v5951
  %v7902 = vsel %vm114, %v5277, %v5953
  %v7903 = vsel %vm114, %v5278, %v5955
  %v7904 = vsel %vm114, %v5279, %v5957
  %v7905 = vsel %vm114, %v5280, %v5959
  %v7906 = vsel %vm114, %v5281, %v5961
  %v7907 = vsel %vm114, %v5282, %v5963
  %v7908 = vsel %vm114, %v5283, %v5965
  %v7909 = vsel %vm114, %v5284, %v5967
  %v7910 = vsel %vm114, %v5285, %v5969
  %v7911 = vsel %vm114, %v5286, %v5971
  %v7912 = vsel %vm114, %v5287, %v5973
  %v7913 = vsel %vm114, %v5288, %v5975
  %v7914 = vsel %vm114, %v5289, %v5977
  %v7915 = vsel %vm114, %v5290, %v5979
  %v7916 = vsel %vm114, %v5291, %v5981
  %v7917 = vsel %vm114, %v5292, %v5983
  %v7918 = vsel %vm114, %v5293, %v5985
  %v7919 = vsel %vm114, %v5294, %v5987
  %v7920 = vsel %vm114, %v5295, %v5989
  %v7921 = vsel %vm114, %v5296, %v5991
  %v7922 = vsel %vm114, %v5297, %v5993
  %v7923 = vsel %vm114, %v5298, %v5995
  %v7924 = vsel %vm114, %v5299, %v5997
  %v7925 = vsel %vm114, %v5300, %v5999
  %v7926 = vsel %vm114, %v5301, %v6001
  %v7927 = vsel %vm114, %v5302, %v6003
  %v7928 = vsel %vm114, %v5303, %v6005
  %v7929 = vsel %vm114, %v5304, %v6007
  %v7930 = vsel %vm114, %v5305, %v6009
  %v7931 = vsel %vm114, %v5306, %v6011
  %v7932 = vsel %vm26, %v7868, %v6141
  %v7933 = vsel %vm26, %v7869, %v6143
  %v7934 = vsel %vm26, %v7870, %v6145
  %v7935 = vsel %vm26, %v7871, %v6147
  %v7936 = vsel %vm26, %v7872, %v6149
  %v7937 = vsel %vm26, %v7873, %v6151
  %v7938 = vsel %vm26, %v7874, %v6153
  %v7939 = vsel %vm26, %v7875, %v6155
  %v7940 = vsel %vm26, %v7876, %v6157
  %v7941 = vsel %vm26, %v7877, %v6159
  %v7942 = vsel %vm26, %v7878, %v6161
  %v7943 = vsel %vm26, %v7879, %v6163
  %v7944 = vsel %vm26, %v7880, %v6165
  %v7945 = vsel %vm26, %v7881, %v6167
  %v7946 = vsel %vm26, %v7882, %v6169
  %v7947 = vsel %vm26, %v7883, %v6171
  %v7948 = vsel %vm26, %v7884, %v6173
  %v7949 = vsel %vm26, %v7885, %v6175
  %v7950 = vsel %vm26, %v7886, %v6177
  %v7951 = vsel %vm26, %v7887, %v6179
  %v7952 = vsel %vm26, %v7888, %v6181
  %v7953 = vsel %vm26, %v7889, %v6183
  %v7954 = vsel %vm26, %v7890, %v6185
  %v7955 = vsel %vm26, %v7891, %v6187
  %v7956 = vsel %vm26, %v7892, %v6189
  %v7957 = vsel %vm26, %v7893, %v6191
  %v7958 = vsel %vm26, %v7894, %v6193
  %v7959 = vsel %vm26, %v7895, %v6195
  %v7960 = vsel %vm26, %v7896, %v6197
  %v7961 = vsel %vm26, %v7897, %v6199
  %v7962 = vsel %vm26, %v7898, %v6201
  %v7963 = vsel %vm26, %v7899, %v6203
  %v7964 = vsel %vm26, %v7900, %v6205
  %v7965 = vsel %vm26, %v7901, %v6207
  %v7966 = vsel %vm26, %v7902, %v6209
  %v7967 = vsel %vm26, %v7903, %v6211
  %v7968 = vsel %vm26, %v7904, %v6213
  %v7969 = vsel %vm26, %v7905, %v6215
  %v7970 = vsel %vm26, %v7906, %v6217
  %v7971 = vsel %vm26, %v7907, %v6219
  %v7972 = vsel %vm26, %v7908, %v6221
  %v7973 = vsel %vm26, %v7909, %v6223
  %v7974 = vsel %vm26, %v7910, %v6225
  %v7975 = vsel %vm26, %v7911, %v6227
  %v7976 = vsel %vm26, %v7912, %v6229
  %v7977 = vsel %vm26, %v7913, %v6231
  %v7978 = vsel %vm26, %v7914, %v6233
  %v7979 = vsel %vm26, %v7915, %v6235
  %v7980 = vsel %vm26, %v7916, %v6237
  %v7981 = vsel %vm26, %v7917, %v6239
  %v7982 = vsel %vm26, %v7918, %v6241
  %v7983 = vsel %vm26, %v7919, %v6243
  %v7984 = vsel %vm26, %v7920, %v6245
  %v7985 = vsel %vm26, %v7921, %v6247
  %v7986 = vsel %vm26, %v7922, %v6249
  %v7987 = vsel %vm26, %v7923, %v6251
  %v7988 = vsel %vm26, %v7924, %v6253
  %v7989 = vsel %vm26, %v7925, %v6255
  %v7990 = vsel %vm26, %v7926, %v6257
  %v7991 = vsel %vm26, %v7927, %v6259
  %v7992 = vsel %vm26, %v7928, %v6261
  %v7993 = vsel %vm26, %v7929, %v6263
  %v7994 = vsel %vm26, %v7930, %v6265
  %v7995 = vsel %vm26, %v7931, %v6267
  %vm7996 = vcmask 97280
  %v7997 = vsel %vm7996, %v7932, %v6397
  %v7998 = vsel %vm7996, %v7933, %v6399
  %v7999 = vsel %vm7996, %v7934, %v6401
  %v8000 = vsel %vm7996, %v7935, %v6403
  %v8001 = vsel %vm7996, %v7936, %v6405
  %v8002 = vsel %vm7996, %v7937, %v6407
  %v8003 = vsel %vm7996, %v7938, %v6409
  %v8004 = vsel %vm7996, %v7939, %v6411
  %v8005 = vsel %vm7996, %v7940, %v6413
  %v8006 = vsel %vm7996, %v7941, %v6415
  %v8007 = vsel %vm7996, %v7942, %v6417
  %v8008 = vsel %vm7996, %v7943, %v6419
  %v8009 = vsel %vm7996, %v7944, %v6421
  %v8010 = vsel %vm7996, %v7945, %v6423
  %v8011 = vsel %vm7996, %v7946, %v6425
  %v8012 = vsel %vm7996, %v7947, %v6427
  %v8013 = vsel %vm7996, %v7948, %v6429
  %v8014 = vsel %vm7996, %v7949, %v6431
  %v8015 = vsel %vm7996, %v7950, %v6433
  %v8016 = vsel %vm7996, %v7951, %v6435
  %v8017 = vsel %vm7996, %v7952, %v6437
  %v8018 = vsel %vm7996, %v7953, %v6439
  %v8019 = vsel %vm7996, %v7954, %v6441
  %v8020 = vsel %vm7996, %v7955, %v6443
  %v8021 = vsel %vm7996, %v7956, %v6445
  %v8022 = vsel %vm7996, %v7957, %v6447
  %v8023 = vsel %vm7996, %v7958, %v6449
  %v8024 = vsel %vm7996, %v7959, %v6451
  %v8025 = vsel %vm7996, %v7960, %v6453
  %v8026 = vsel %vm7996, %v7961, %v6455
  %v8027 = vsel %vm7996, %v7962, %v6457
  %v8028 = vsel %vm7996, %v7963, %v6459
  %v8029 = vsel %vm7996, %v7964, %v6461
  %v8030 = vsel %vm7996, %v7965, %v6463
  %v8031 = vsel %vm7996, %v7966, %v6465
  %v8032 = vsel %vm7996, %v7967, %v6467
  %v8033 = vsel %vm7996, %v7968, %v6469
  %v8034 = vsel %vm7996, %v7969, %v6471
  %v8035 = vsel %vm7996, %v7970, %v6473
  %v8036 = vsel %vm7996, %v7971, %v6475
  %v8037 = vsel %vm7996, %v7972, %v6477
  %v8038 = vsel %vm7996, %v7973, %v6479
  %v8039 = vsel %vm7996, %v7974, %v6481
  %v8040 = vsel %vm7996, %v7975, %v6483
  %v8041 = vsel %vm7996, %v7976, %v6485
  %v8042 = vsel %vm7996, %v7977, %v6487
  %v8043 = vsel %vm7996, %v7978, %v6489
  %v8044 = vsel %vm7996, %v7979, %v6491
  %v8045 = vsel %vm7996, %v7980, %v6493
  %v8046 = vsel %vm7996, %v7981, %v6495
  %v8047 = vsel %vm7996, %v7982, %v6497
  %v8048 = vsel %vm7996, %v7983, %v6499
  %v8049 = vsel %vm7996, %v7984, %v6501
  %v8050 = vsel %vm7996, %v7985, %v6503
  %v8051 = vsel %vm7996, %v7986, %v6505
  %v8052 = vsel %vm7996, %v7987, %v6507
  %v8053 = vsel %vm7996, %v7988, %v6509
  %v8054 = vsel %vm7996, %v7989, %v6511
  %v8055 = vsel %vm7996, %v7990, %v6513
  %v8056 = vsel %vm7996, %v7991, %v6515
  %v8057 = vsel %vm7996, %v7992, %v6517
  %v8058 = vsel %vm7996, %v7993, %v6519
  %v8059 = vsel %vm7996, %v7994, %v6521
  %v8060 = vsel %vm7996, %v7995, %v6523
  %v8061 = vsel %vm4066, %v7997, %v6653
  %v8062 = vsel %vm4066, %v7998, %v6655
  %v8063 = vsel %vm4066, %v7999, %v6657
  %v8064 = vsel %vm4066, %v8000, %v6659
  %v8065 = vsel %vm4066, %v8001, %v6661
  %v8066 = vsel %vm4066, %v8002, %v6663
  %v8067 = vsel %vm4066, %v8003, %v6665
  %v8068 = vsel %vm4066, %v8004, %v6667
  %v8069 = vsel %vm4066, %v8005, %v6669
  %v8070 = vsel %vm4066, %v8006, %v6671
  %v8071 = vsel %vm4066, %v8007, %v6673
  %v8072 = vsel %vm4066, %v8008, %v6675
  %v8073 = vsel %vm4066, %v8009, %v6677
  %v8074 = vsel %vm4066, %v8010, %v6679
  %v8075 = vsel %vm4066, %v8011, %v6681
  %v8076 = vsel %vm4066, %v8012, %v6683
  %v8077 = vsel %vm4066, %v8013, %v6685
  %v8078 = vsel %vm4066, %v8014, %v6687
  %v8079 = vsel %vm4066, %v8015, %v6689
  %v8080 = vsel %vm4066, %v8016, %v6691
  %v8081 = vsel %vm4066, %v8017, %v6693
  %v8082 = vsel %vm4066, %v8018, %v6695
  %v8083 = vsel %vm4066, %v8019, %v6697
  %v8084 = vsel %vm4066, %v8020, %v6699
  %v8085 = vsel %vm4066, %v8021, %v6701
  %v8086 = vsel %vm4066, %v8022, %v6703
  %v8087 = vsel %vm4066, %v8023, %v6705
  %v8088 = vsel %vm4066, %v8024, %v6707
  %v8089 = vsel %vm4066, %v8025, %v6709
  %v8090 = vsel %vm4066, %v8026, %v6711
  %v8091 = vsel %vm4066, %v8027, %v6713
  %v8092 = vsel %vm4066, %v8028, %v6715
  %v8093 = vsel %vm4066, %v8029, %v6717
  %v8094 = vsel %vm4066, %v8030, %v6719
  %v8095 = vsel %vm4066, %v8031, %v6721
  %v8096 = vsel %vm4066, %v8032, %v6723
  %v8097 = vsel %vm4066, %v8033, %v6725
  %v8098 = vsel %vm4066, %v8034, %v6727
  %v8099 = vsel %vm4066, %v8035, %v6729
  %v8100 = vsel %vm4066, %v8036, %v6731
  %v8101 = vsel %vm4066, %v8037, %v6733
  %v8102 = vsel %vm4066, %v8038, %v6735
  %v8103 = vsel %vm4066, %v8039, %v6737
  %v8104 = vsel %vm4066, %v8040, %v6739
  %v8105 = vsel %vm4066, %v8041, %v6741
  %v8106 = vsel %vm4066, %v8042, %v6743
  %v8107 = vsel %vm4066, %v8043, %v6745
  %v8108 = vsel %vm4066, %v8044, %v6747
  %v8109 = vsel %vm4066, %v8045, %v6749
  %v8110 = vsel %vm4066, %v8046, %v6751
  %v8111 = vsel %vm4066, %v8047, %v6753
  %v8112 = vsel %vm4066, %v8048, %v6755
  %v8113 = vsel %vm4066, %v8049, %v6757
  %v8114 = vsel %vm4066, %v8050, %v6759
  %v8115 = vsel %vm4066, %v8051, %v6761
  %v8116 = vsel %vm4066, %v8052, %v6763
  %v8117 = vsel %vm4066, %v8053, %v6765
  %v8118 = vsel %vm4066, %v8054, %v6767
  %v8119 = vsel %vm4066, %v8055, %v6769
  %v8120 = vsel %vm4066, %v8056, %v6771
  %v8121 = vsel %vm4066, %v8057, %v6773
  %v8122 = vsel %vm4066, %v8058, %v6775
  %v8123 = vsel %vm4066, %v8059, %v6777
  %v8124 = vsel %vm4066, %v8060, %v6779
  %vm8125 = vcmask 162816
  %v8126 = vsel %vm8125, %v8061, %v6909
  %v8127 = vsel %vm8125, %v8062, %v6911
  %v8128 = vsel %vm8125, %v8063, %v6913
  %v8129 = vsel %vm8125, %v8064, %v6915
  %v8130 = vsel %vm8125, %v8065, %v6917
  %v8131 = vsel %vm8125, %v8066, %v6919
  %v8132 = vsel %vm8125, %v8067, %v6921
  %v8133 = vsel %vm8125, %v8068, %v6923
  %v8134 = vsel %vm8125, %v8069, %v6925
  %v8135 = vsel %vm8125, %v8070, %v6927
  %v8136 = vsel %vm8125, %v8071, %v6929
  %v8137 = vsel %vm8125, %v8072, %v6931
  %v8138 = vsel %vm8125, %v8073, %v6933
  %v8139 = vsel %vm8125, %v8074, %v6935
  %v8140 = vsel %vm8125, %v8075, %v6937
  %v8141 = vsel %vm8125, %v8076, %v6939
  %v8142 = vsel %vm8125, %v8077, %v6941
  %v8143 = vsel %vm8125, %v8078, %v6943
  %v8144 = vsel %vm8125, %v8079, %v6945
  %v8145 = vsel %vm8125, %v8080, %v6947
  %v8146 = vsel %vm8125, %v8081, %v6949
  %v8147 = vsel %vm8125, %v8082, %v6951
  %v8148 = vsel %vm8125, %v8083, %v6953
  %v8149 = vsel %vm8125, %v8084, %v6955
  %v8150 = vsel %vm8125, %v8085, %v6957
  %v8151 = vsel %vm8125, %v8086, %v6959
  %v8152 = vsel %vm8125, %v8087, %v6961
  %v8153 = vsel %vm8125, %v8088, %v6963
  %v8154 = vsel %vm8125, %v8089, %v6965
  %v8155 = vsel %vm8125, %v8090, %v6967
  %v8156 = vsel %vm8125, %v8091, %v6969
  %v8157 = vsel %vm8125, %v8092, %v6971
  %v8158 = vsel %vm8125, %v8093, %v6973
  %v8159 = vsel %vm8125, %v8094, %v6975
  %v8160 = vsel %vm8125, %v8095, %v6977
  %v8161 = vsel %vm8125, %v8096, %v6979
  %v8162 = vsel %vm8125, %v8097, %v6981
  %v8163 = vsel %vm8125, %v8098, %v6983
  %v8164 = vsel %vm8125, %v8099, %v6985
  %v8165 = vsel %vm8125, %v8100, %v6987
  %v8166 = vsel %vm8125, %v8101, %v6989
  %v8167 = vsel %vm8125, %v8102, %v6991
  %v8168 = vsel %vm8125, %v8103, %v6993
  %v8169 = vsel %vm8125, %v8104, %v6995
  %v8170 = vsel %vm8125, %v8105, %v6997
  %v8171 = vsel %vm8125, %v8106, %v6999
  %v8172 = vsel %vm8125, %v8107, %v7001
  %v8173 = vsel %vm8125, %v8108, %v7003
  %v8174 = vsel %vm8125, %v8109, %v7005
  %v8175 = vsel %vm8125, %v8110, %v7007
  %v8176 = vsel %vm8125, %v8111, %v7009
  %v8177 = vsel %vm8125, %v8112, %v7011
  %v8178 = vsel %vm8125, %v8113, %v7013
  %v8179 = vsel %vm8125, %v8114, %v7015
  %v8180 = vsel %vm8125, %v8115, %v7017
  %v8181 = vsel %vm8125, %v8116, %v7019
  %v8182 = vsel %vm8125, %v8117, %v7021
  %v8183 = vsel %vm8125, %v8118, %v7023
  %v8184 = vsel %vm8125, %v8119, %v7025
  %v8185 = vsel %vm8125, %v8120, %v7027
  %v8186 = vsel %vm8125, %v8121, %v7029
  %v8187 = vsel %vm8125, %v8122, %v7031
  %v8188 = vsel %vm8125, %v8123, %v7033
  %v8189 = vsel %vm8125, %v8124, %v7035
  %v8190 = vsel %vm4131, %v8126, %v7165
  %v8191 = vsel %vm4131, %v8127, %v7167
  %v8192 = vsel %vm4131, %v8128, %v7169
  %v8193 = vsel %vm4131, %v8129, %v7171
  %v8194 = vsel %vm4131, %v8130, %v7173
  %v8195 = vsel %vm4131, %v8131, %v7175
  %v8196 = vsel %vm4131, %v8132, %v7177
  %v8197 = vsel %vm4131, %v8133, %v7179
  %v8198 = vsel %vm4131, %v8134, %v7181
  %v8199 = vsel %vm4131, %v8135, %v7183
  %v8200 = vsel %vm4131, %v8136, %v7185
  %v8201 = vsel %vm4131, %v8137, %v7187
  %v8202 = vsel %vm4131, %v8138, %v7189
  %v8203 = vsel %vm4131, %v8139, %v7191
  %v8204 = vsel %vm4131, %v8140, %v7193
  %v8205 = vsel %vm4131, %v8141, %v7195
  %v8206 = vsel %vm4131, %v8142, %v7197
  %v8207 = vsel %vm4131, %v8143, %v7199
  %v8208 = vsel %vm4131, %v8144, %v7201
  %v8209 = vsel %vm4131, %v8145, %v7203
  %v8210 = vsel %vm4131, %v8146, %v7205
  %v8211 = vsel %vm4131, %v8147, %v7207
  %v8212 = vsel %vm4131, %v8148, %v7209
  %v8213 = vsel %vm4131, %v8149, %v7211
  %v8214 = vsel %vm4131, %v8150, %v7213
  %v8215 = vsel %vm4131, %v8151, %v7215
  %v8216 = vsel %vm4131, %v8152, %v7217
  %v8217 = vsel %vm4131, %v8153, %v7219
  %v8218 = vsel %vm4131, %v8154, %v7221
  %v8219 = vsel %vm4131, %v8155, %v7223
  %v8220 = vsel %vm4131, %v8156, %v7225
  %v8221 = vsel %vm4131, %v8157, %v7227
  %v8222 = vsel %vm4131, %v8158, %v7229
  %v8223 = vsel %vm4131, %v8159, %v7231
  %v8224 = vsel %vm4131, %v8160, %v7233
  %v8225 = vsel %vm4131, %v8161, %v7235
  %v8226 = vsel %vm4131, %v8162, %v7237
  %v8227 = vsel %vm4131, %v8163, %v7239
  %v8228 = vsel %vm4131, %v8164, %v7241
  %v8229 = vsel %vm4131, %v8165, %v7243
  %v8230 = vsel %vm4131, %v8166, %v7245
  %v8231 = vsel %vm4131, %v8167, %v7247
  %v8232 = vsel %vm4131, %v8168, %v7249
  %v8233 = vsel %vm4131, %v8169, %v7251
  %v8234 = vsel %vm4131, %v8170, %v7253
  %v8235 = vsel %vm4131, %v8171, %v7255
  %v8236 = vsel %vm4131, %v8172, %v7257
  %v8237 = vsel %vm4131, %v8173, %v7259
  %v8238 = vsel %vm4131, %v8174, %v7261
  %v8239 = vsel %vm4131, %v8175, %v7263
  %v8240 = vsel %vm4131, %v8176, %v7265
  %v8241 = vsel %vm4131, %v8177, %v7267
  %v8242 = vsel %vm4131, %v8178, %v7269
  %v8243 = vsel %vm4131, %v8179, %v7271
  %v8244 = vsel %vm4131, %v8180, %v7273
  %v8245 = vsel %vm4131, %v8181, %v7275
  %v8246 = vsel %vm4131, %v8182, %v7277
  %v8247 = vsel %vm4131, %v8183, %v7279
  %v8248 = vsel %vm4131, %v8184, %v7281
  %v8249 = vsel %vm4131, %v8185, %v7283
  %v8250 = vsel %vm4131, %v8186, %v7285
  %v8251 = vsel %vm4131, %v8187, %v7287
  %v8252 = vsel %vm4131, %v8188, %v7289
  %v8253 = vsel %vm4131, %v8189, %v7291
  %vm8254 = vcmask 228352
  %v8255 = vsel %vm8254, %v8190, %v7421
  %v8256 = vsel %vm8254, %v8191, %v7423
  %v8257 = vsel %vm8254, %v8192, %v7425
  %v8258 = vsel %vm8254, %v8193, %v7427
  %v8259 = vsel %vm8254, %v8194, %v7429
  %v8260 = vsel %vm8254, %v8195, %v7431
  %v8261 = vsel %vm8254, %v8196, %v7433
  %v8262 = vsel %vm8254, %v8197, %v7435
  %v8263 = vsel %vm8254, %v8198, %v7437
  %v8264 = vsel %vm8254, %v8199, %v7439
  %v8265 = vsel %vm8254, %v8200, %v7441
  %v8266 = vsel %vm8254, %v8201, %v7443
  %v8267 = vsel %vm8254, %v8202, %v7445
  %v8268 = vsel %vm8254, %v8203, %v7447
  %v8269 = vsel %vm8254, %v8204, %v7449
  %v8270 = vsel %vm8254, %v8205, %v7451
  %v8271 = vsel %vm8254, %v8206, %v7453
  %v8272 = vsel %vm8254, %v8207, %v7455
  %v8273 = vsel %vm8254, %v8208, %v7457
  %v8274 = vsel %vm8254, %v8209, %v7459
  %v8275 = vsel %vm8254, %v8210, %v7461
  %v8276 = vsel %vm8254, %v8211, %v7463
  %v8277 = vsel %vm8254, %v8212, %v7465
  %v8278 = vsel %vm8254, %v8213, %v7467
  %v8279 = vsel %vm8254, %v8214, %v7469
  %v8280 = vsel %vm8254, %v8215, %v7471
  %v8281 = vsel %vm8254, %v8216, %v7473
  %v8282 = vsel %vm8254, %v8217, %v7475
  %v8283 = vsel %vm8254, %v8218, %v7477
  %v8284 = vsel %vm8254, %v8219, %v7479
  %v8285 = vsel %vm8254, %v8220, %v7481
  %v8286 = vsel %vm8254, %v8221, %v7483
  %v8287 = vsel %vm8254, %v8222, %v7485
  %v8288 = vsel %vm8254, %v8223, %v7487
  %v8289 = vsel %vm8254, %v8224, %v7489
  %v8290 = vsel %vm8254, %v8225, %v7491
  %v8291 = vsel %vm8254, %v8226, %v7493
  %v8292 = vsel %vm8254, %v8227, %v7495
  %v8293 = vsel %vm8254, %v8228, %v7497
  %v8294 = vsel %vm8254, %v8229, %v7499
  %v8295 = vsel %vm8254, %v8230, %v7501
  %v8296 = vsel %vm8254, %v8231, %v7503
  %v8297 = vsel %vm8254, %v8232, %v7505
  %v8298 = vsel %vm8254, %v8233, %v7507
  %v8299 = vsel %vm8254, %v8234, %v7509
  %v8300 = vsel %vm8254, %v8235, %v7511
  %v8301 = vsel %vm8254, %v8236, %v7513
  %v8302 = vsel %vm8254, %v8237, %v7515
  %v8303 = vsel %vm8254, %v8238, %v7517
  %v8304 = vsel %vm8254, %v8239, %v7519
  %v8305 = vsel %vm8254, %v8240, %v7521
  %v8306 = vsel %vm8254, %v8241, %v7523
  %v8307 = vsel %vm8254, %v8242, %v7525
  %v8308 = vsel %vm8254, %v8243, %v7527
  %v8309 = vsel %vm8254, %v8244, %v7529
  %v8310 = vsel %vm8254, %v8245, %v7531
  %v8311 = vsel %vm8254, %v8246, %v7533
  %v8312 = vsel %vm8254, %v8247, %v7535
  %v8313 = vsel %vm8254, %v8248, %v7537
  %v8314 = vsel %vm8254, %v8249, %v7539
  %v8315 = vsel %vm8254, %v8250, %v7541
  %v8316 = vsel %vm8254, %v8251, %v7543
  %v8317 = vsel %vm8254, %v8252, %v7545
  %v8318 = vsel %vm8254, %v8253, %v7547
  %v8319 = vsel %vm4196, %v8255, %v7677
  %v8320 = vsel %vm4196, %v8256, %v7679
  %v8321 = vsel %vm4196, %v8257, %v7681
  %v8322 = vsel %vm4196, %v8258, %v7683
  %v8323 = vsel %vm4196, %v8259, %v7685
  %v8324 = vsel %vm4196, %v8260, %v7687
  %v8325 = vsel %vm4196, %v8261, %v7689
  %v8326 = vsel %vm4196, %v8262, %v7691
  %v8327 = vsel %vm4196, %v8263, %v7693
  %v8328 = vsel %vm4196, %v8264, %v7695
  %v8329 = vsel %vm4196, %v8265, %v7697
  %v8330 = vsel %vm4196, %v8266, %v7699
  %v8331 = vsel %vm4196, %v8267, %v7701
  %v8332 = vsel %vm4196, %v8268, %v7703
  %v8333 = vsel %vm4196, %v8269, %v7705
  %v8334 = vsel %vm4196, %v8270, %v7707
  %v8335 = vsel %vm4196, %v8271, %v7709
  %v8336 = vsel %vm4196, %v8272, %v7711
  %v8337 = vsel %vm4196, %v8273, %v7713
  %v8338 = vsel %vm4196, %v8274, %v7715
  %v8339 = vsel %vm4196, %v8275, %v7717
  %v8340 = vsel %vm4196, %v8276, %v7719
  %v8341 = vsel %vm4196, %v8277, %v7721
  %v8342 = vsel %vm4196, %v8278, %v7723
  %v8343 = vsel %vm4196, %v8279, %v7725
  %v8344 = vsel %vm4196, %v8280, %v7727
  %v8345 = vsel %vm4196, %v8281, %v7729
  %v8346 = vsel %vm4196, %v8282, %v7731
  %v8347 = vsel %vm4196, %v8283, %v7733
  %v8348 = vsel %vm4196, %v8284, %v7735
  %v8349 = vsel %vm4196, %v8285, %v7737
  %v8350 = vsel %vm4196, %v8286, %v7739
  %v8351 = vsel %vm4196, %v8287, %v7741
  %v8352 = vsel %vm4196, %v8288, %v7743
  %v8353 = vsel %vm4196, %v8289, %v7745
  %v8354 = vsel %vm4196, %v8290, %v7747
  %v8355 = vsel %vm4196, %v8291, %v7749
  %v8356 = vsel %vm4196, %v8292, %v7751
  %v8357 = vsel %vm4196, %v8293, %v7753
  %v8358 = vsel %vm4196, %v8294, %v7755
  %v8359 = vsel %vm4196, %v8295, %v7757
  %v8360 = vsel %vm4196, %v8296, %v7759
  %v8361 = vsel %vm4196, %v8297, %v7761
  %v8362 = vsel %vm4196, %v8298, %v7763
  %v8363 = vsel %vm4196, %v8299, %v7765
  %v8364 = vsel %vm4196, %v8300, %v7767
  %v8365 = vsel %vm4196, %v8301, %v7769
  %v8366 = vsel %vm4196, %v8302, %v7771
  %v8367 = vsel %vm4196, %v8303, %v7773
  %v8368 = vsel %vm4196, %v8304, %v7775
  %v8369 = vsel %vm4196, %v8305, %v7777
  %v8370 = vsel %vm4196, %v8306, %v7779
  %v8371 = vsel %vm4196, %v8307, %v7781
  %v8372 = vsel %vm4196, %v8308, %v7783
  %v8373 = vsel %vm4196, %v8309, %v7785
  %v8374 = vsel %vm4196, %v8310, %v7787
  %v8375 = vsel %vm4196, %v8311, %v7789
  %v8376 = vsel %vm4196, %v8312, %v7791
  %v8377 = vsel %vm4196, %v8313, %v7793
  %v8378 = vsel %vm4196, %v8314, %v7795
  %v8379 = vsel %vm4196, %v8315, %v7797
  %v8380 = vsel %vm4196, %v8316, %v7799
  %v8381 = vsel %vm4196, %v8317, %v7801
  %v8382 = vsel %vm4196, %v8318, %v7803
  %v8383 = vld [vmem:[%s5] sm:$0xf]
  %v8384 = vld [vmem:[%s6] sm:$0xf]
  %8386 = vset.pattern.permute.xlu0 0
  %8387 = vperm.xlu0 %8386, %v8384
  %v8388 = vpop.permute.xlu0 %8387
  %vm8390 = vcmask 293888
  %v8392 = vsel %vm8390, %v8383, 0
  %v8395 = vsel %vm8390, %v8319, 0
  %v8398 = vsel %vm8390, %v8320, 0
  %v8401 = vsel %vm8390, %v8321, 0
  %v8404 = vsel %vm8390, %v8322, 0
  %v8407 = vsel %vm8390, %v8323, 0
  %v8410 = vsel %vm8390, %v8324, 0
  %v8413 = vsel %vm8390, %v8325, 0
  %v8416 = vsel %vm8390, %v8326, 0
  %v8419 = vsel %vm8390, %v8327, 0
  %v8422 = vsel %vm8390, %v8328, 0
  %v8425 = vsel %vm8390, %v8329, 0
  %v8428 = vsel %vm8390, %v8330, 0
  %v8431 = vsel %vm8390, %v8331, 0
  %v8434 = vsel %vm8390, %v8332, 0
  %v8437 = vsel %vm8390, %v8333, 0
  %v8440 = vsel %vm8390, %v8334, 0
  %v8443 = vsel %vm8390, %v8335, 0
  %v8446 = vsel %vm8390, %v8336, 0
  %v8449 = vsel %vm8390, %v8337, 0
  %v8452 = vsel %vm8390, %v8338, 0
  %v8455 = vsel %vm8390, %v8339, 0
  %v8458 = vsel %vm8390, %v8340, 0
  %v8461 = vsel %vm8390, %v8341, 0
  %v8464 = vsel %vm8390, %v8342, 0
  %v8467 = vsel %vm8390, %v8343, 0
  %v8470 = vsel %vm8390, %v8344, 0
  %v8473 = vsel %vm8390, %v8345, 0
  %v8476 = vsel %vm8390, %v8346, 0
  %v8479 = vsel %vm8390, %v8347, 0
  %v8482 = vsel %vm8390, %v8348, 0
  %v8485 = vsel %vm8390, %v8349, 0
  %v8488 = vsel %vm8390, %v8350, 0
  %v8491 = vsel %vm8390, %v8351, 0
  %v8494 = vsel %vm8390, %v8352, 0
  %v8497 = vsel %vm8390, %v8353, 0
  %v8500 = vsel %vm8390, %v8354, 0
  %v8503 = vsel %vm8390, %v8355, 0
  %v8506 = vsel %vm8390, %v8356, 0
  %v8509 = vsel %vm8390, %v8357, 0
  %v8512 = vsel %vm8390, %v8358, 0
  %v8515 = vsel %vm8390, %v8359, 0
  %v8518 = vsel %vm8390, %v8360, 0
  %v8521 = vsel %vm8390, %v8361, 0
  %v8524 = vsel %vm8390, %v8362, 0
  %v8527 = vsel %vm8390, %v8363, 0
  %v8530 = vsel %vm8390, %v8364, 0
  %v8533 = vsel %vm8390, %v8365, 0
  %v8536 = vsel %vm8390, %v8366, 0
  %v8539 = vsel %vm8390, %v8367, 0
  %v8542 = vsel %vm8390, %v8368, 0
  %v8545 = vsel %vm8390, %v8369, 0
  %v8548 = vsel %vm8390, %v8370, 0
  %v8551 = vsel %vm8390, %v8371, 0
  %v8554 = vsel %vm8390, %v8372, 0
  %v8557 = vsel %vm8390, %v8373, 0
  %v8560 = vsel %vm8390, %v8374, 0
  %v8563 = vsel %vm8390, %v8375, 0
  %v8566 = vsel %vm8390, %v8376, 0
  %v8569 = vsel %vm8390, %v8377, 0
  %v8572 = vsel %vm8390, %v8378, 0
  %v8575 = vsel %vm8390, %v8379, 0
  %v8578 = vsel %vm8390, %v8380, 0
  %v8581 = vsel %vm8390, %v8381, 0
  %v8584 = vsel %vm8390, %v8382, 0
  %8586 = vmatprep.subr.mxu0 0.0
  %8587 = vmatpush1.xpose.msra.mxu0 %v8395
  %8588 = vmatprep.subr.mxu0 0.0
  %8589 = vmatpush1.xpose.msra.mxu0 %v8398
  %8590 = vmatprep.subr.mxu0 0.0
  %8591 = vmatpush1.xpose.msra.mxu0 %v8401
  %8592 = vmatprep.subr.mxu0 0.0
  %8593 = vmatpush1.xpose.msra.mxu0 %v8404
  %8594 = vmatprep.subr.mxu0 0.0
  %8595 = vmatpush1.xpose.msra.mxu0 %v8407
  %8596 = vmatprep.subr.mxu0 0.0
  %8597 = vmatpush1.xpose.msra.mxu0 %v8410
  %8598 = vmatprep.subr.mxu0 0.0
  %8599 = vmatpush1.xpose.msra.mxu0 %v8413
  %8600 = vmatprep.subr.mxu0 0.0
  %8601 = vmatpush1.xpose.msra.mxu0 %v8416
  %8602 = vmatprep.subr.mxu0 0.0
  %8603 = vmatpush1.xpose.msra.mxu0 %v8419
  %8604 = vmatprep.subr.mxu0 0.0
  %8605 = vmatpush1.xpose.msra.mxu0 %v8422
  %8606 = vmatprep.subr.mxu0 0.0
  %8607 = vmatpush1.xpose.msra.mxu0 %v8425
  %8608 = vmatprep.subr.mxu0 0.0
  %8609 = vmatpush1.xpose.msra.mxu0 %v8428
  %8610 = vmatprep.subr.mxu0 0.0
  %8611 = vmatpush1.xpose.msra.mxu0 %v8431
  %8612 = vmatprep.subr.mxu0 0.0
  %8613 = vmatpush1.xpose.msra.mxu0 %v8434
  %8614 = vmatprep.subr.mxu0 0.0
  %8615 = vmatpush1.xpose.msra.mxu0 %v8437
  %8616 = vmatprep.subr.mxu0 0.0
  %8617 = vmatpush1.xpose.msra.mxu0 %v8440
  %8618 = vmatprep.subr.mxu0 0.0
  %8619 = vmatpush1.xpose.msra.mxu0 %v8443
  %8620 = vmatprep.subr.mxu0 0.0
  %8621 = vmatpush1.xpose.msra.mxu0 %v8446
  %8622 = vmatprep.subr.mxu0 0.0
  %8623 = vmatpush1.xpose.msra.mxu0 %v8449
  %8624 = vmatprep.subr.mxu0 0.0
  %8625 = vmatpush1.xpose.msra.mxu0 %v8452
  %8626 = vmatprep.subr.mxu0 0.0
  %8627 = vmatpush1.xpose.msra.mxu0 %v8455
  %8628 = vmatprep.subr.mxu0 0.0
  %8629 = vmatpush1.xpose.msra.mxu0 %v8458
  %8630 = vmatprep.subr.mxu0 0.0
  %8631 = vmatpush1.xpose.msra.mxu0 %v8461
  %8632 = vmatprep.subr.mxu0 0.0
  %8633 = vmatpush1.xpose.msra.mxu0 %v8464
  %8634 = vmatprep.subr.mxu0 0.0
  %8635 = vmatpush1.xpose.msra.mxu0 %v8467
  %8636 = vmatprep.subr.mxu0 0.0
  %8637 = vmatpush1.xpose.msra.mxu0 %v8470
  %8638 = vmatprep.subr.mxu0 0.0
  %8639 = vmatpush1.xpose.msra.mxu0 %v8473
  %8640 = vmatprep.subr.mxu0 0.0
  %8641 = vmatpush1.xpose.msra.mxu0 %v8476
  %8642 = vmatprep.subr.mxu0 0.0
  %8643 = vmatpush1.xpose.msra.mxu0 %v8479
  %8644 = vmatprep.subr.mxu0 0.0
  %8645 = vmatpush1.xpose.msra.mxu0 %v8482
  %8646 = vmatprep.subr.mxu0 0.0
  %8647 = vmatpush1.xpose.msra.mxu0 %v8485
  %8648 = vmatprep.subr.mxu0 0.0
  %8649 = vmatpush1.xpose.msra.mxu0 %v8488
  %8650 = vmatprep.mubr.f32.mxu0 0.0
  %8651 = vmatmul.mubr.f32.gmra.mrb[0].mxu0 %v8392
  %v8652 = vpop.f32.mrb[0].mxu0
  %v8653 = vadd.f32 %v8388, %v8652
  %v8654 = vpop.f32.mrb[0].mxu0
  %v8655 = vadd.f32 %v8388, %v8654
  %8656 = vdwg.mxu0
  %8657 = vmatprep.subr.mxu0 0.0
  %8658 = vmatpush1.xpose.msra.mxu0 %v8491
  %8659 = vmatprep.subr.mxu0 0.0
  %8660 = vmatpush1.xpose.msra.mxu0 %v8494
  %8661 = vmatprep.subr.mxu0 0.0
  %8662 = vmatpush1.xpose.msra.mxu0 %v8497
  %8663 = vmatprep.subr.mxu0 0.0
  %8664 = vmatpush1.xpose.msra.mxu0 %v8500
  %8665 = vmatprep.subr.mxu0 0.0
  %8666 = vmatpush1.xpose.msra.mxu0 %v8503
  %8667 = vmatprep.subr.mxu0 0.0
  %8668 = vmatpush1.xpose.msra.mxu0 %v8506
  %8669 = vmatprep.subr.mxu0 0.0
  %8670 = vmatpush1.xpose.msra.mxu0 %v8509
  %8671 = vmatprep.subr.mxu0 0.0
  %8672 = vmatpush1.xpose.msra.mxu0 %v8512
  %8673 = vmatprep.subr.mxu0 0.0
  %8674 = vmatpush1.xpose.msra.mxu0 %v8515
  %8675 = vmatprep.subr.mxu0 0.0
  %8676 = vmatpush1.xpose.msra.mxu0 %v8518
  %8677 = vmatprep.subr.mxu0 0.0
  %8678 = vmatpush1.xpose.msra.mxu0 %v8521
  %8679 = vmatprep.subr.mxu0 0.0
  %8680 = vmatpush1.xpose.msra.mxu0 %v8524
  %8681 = vmatprep.subr.mxu0 0.0
  %8682 = vmatpush1.xpose.msra.mxu0 %v8527
  %8683 = vmatprep.subr.mxu0 0.0
  %8684 = vmatpush1.xpose.msra.mxu0 %v8530
  %8685 = vmatprep.subr.mxu0 0.0
  %8686 = vmatpush1.xpose.msra.mxu0 %v8533
  %8687 = vmatprep.subr.mxu0 0.0
  %8688 = vmatpush1.xpose.msra.mxu0 %v8536
  %8689 = vmatprep.subr.mxu0 0.0
  %8690 = vmatpush1.xpose.msra.mxu0 %v8539
  %8691 = vmatprep.subr.mxu0 0.0
  %8692 = vmatpush1.xpose.msra.mxu0 %v8542
  %8693 = vmatprep.subr.mxu0 0.0
  %8694 = vmatpush1.xpose.msra.mxu0 %v8545
  %8695 = vmatprep.subr.mxu0 0.0
  %8696 = vmatpush1.xpose.msra.mxu0 %v8548
  %8697 = vmatprep.subr.mxu0 0.0
  %8698 = vmatpush1.xpose.msra.mxu0 %v8551
  %8699 = vmatprep.subr.mxu0 0.0
  %8700 = vmatpush1.xpose.msra.mxu0 %v8554
  %8701 = vmatprep.subr.mxu0 0.0
  %8702 = vmatpush1.xpose.msra.mxu0 %v8557
  %8703 = vmatprep.subr.mxu0 0.0
  %8704 = vmatpush1.xpose.msra.mxu0 %v8560
  %8705 = vmatprep.subr.mxu0 0.0
  %8706 = vmatpush1.xpose.msra.mxu0 %v8563
  %8707 = vmatprep.subr.mxu0 0.0
  %8708 = vmatpush1.xpose.msra.mxu0 %v8566
  %8709 = vmatprep.subr.mxu0 0.0
  %8710 = vmatpush1.xpose.msra.mxu0 %v8569
  %8711 = vmatprep.subr.mxu0 0.0
  %8712 = vmatpush1.xpose.msra.mxu0 %v8572
  %8713 = vmatprep.subr.mxu0 0.0
  %8714 = vmatpush1.xpose.msra.mxu0 %v8575
  %8715 = vmatprep.subr.mxu0 0.0
  %8716 = vmatpush1.xpose.msra.mxu0 %v8578
  %8717 = vmatprep.subr.mxu0 0.0
  %8718 = vmatpush1.xpose.msra.mxu0 %v8581
  %8719 = vmatprep.subr.mxu0 0.0
  %8720 = vmatpush1.xpose.msra.mxu0 %v8584
  %8721 = vmatprep.mubr.f32.mxu0 0.0
  %8722 = vmatmul.mubr.f32.gmra.mrb[0].mxu0 %v8392
  %v8723 = vpop.f32.mrb[0].mxu0
  %v8724 = vadd.f32 %v8388, %v8723
  %v8725 = vpop.f32.mrb[0].mxu0
  %v8726 = vadd.f32 %v8388, %v8725
  %8727 = vdwg.mxu0
  %v8728 = vmax.f32 %v8653, 0.0
  %v8729 = vmax.f32 %v8655, 0.0
  %v8730 = vmax.f32 %v8724, 0.0
  %v8731 = vmax.f32 %v8726, 0.0
  %v8734 = vcombine.low %v8728, %v8729
  %8736 = vst [vmem:[%s7] sm:$0xff] %v8734
  %v8739 = vcombine.low %v8730, %v8731
  %s8741 = scalar_lea.vmem %s7, 8
  %8742 = vst [vmem:[%s8741] sm:$0xff] %v8739
  // Predicated region
  $region30: #{up_combine_forward.1} parent=0 // pred_check
    _
  $region31: #{up_combine_forward.1} parent=0 // pred_check_branch
    %8744 = sbr.rel (0) target = $region33
  $region32: #{up_combine_forward.1} parent=0 // pred_region
    _
  $region33: #{up_combine_forward.1} parent=0 // pred_fallthru
    _
  // Predicated region
  $region34: #{up_combine_forward.1} parent=0 // pred_check
    _
  $region35: #{up_combine_forward.1} parent=0 // pred_check_branch
    %8746 = sbr.rel (0) target = $region37
  $region36: #{up_combine_forward.1} parent=0 // pred_region
    _
  $region37: #{up_combine_forward.1} parent=0 // pred_fallthru
    _

</llo_original>
